<compile_context>
chip_gen: v7x
topology: tpu7x:2x2x1
jax: 0.10.0
libtpu: 0.0.40
codegen_flags: <defaults>
</compile_context>

<pallas_src>
import functools
import math

import numpy as np

import jax
import jax.numpy as jnp
from jax.experimental import pallas as pl
from jax.experimental.pallas import tpu as pltpu


# ---------------------------------------------------------------------------
# Fixed linear-operator construction (tiny numpy "glue", done once per shape).
# ---------------------------------------------------------------------------
def _adaptive_pool_matrix(out_size, in_size):
    """P (out,in) s.t. pooled = P @ x reproduces nn.AdaptiveAvgPool along 1 axis."""
    P = np.zeros((out_size, in_size), np.float32)
    for i in range(out_size):
        start = (i * in_size) // out_size
        end = ((i + 1) * in_size + out_size - 1) // out_size  # ceil
        P[i, start:end] = 1.0 / (end - start)
    return P


def _upsample_matrix(out_size, in_size):
    """U (out,in): 1-D bilinear interpolation with align_corners=True."""
    U = np.zeros((out_size, in_size), np.float32)
    if in_size == 1:
        U[:, 0] = 1.0
        return U
    scale = (in_size - 1) / (out_size - 1)
    for h in range(out_size):
        src = h * scale
        i0 = min(int(math.floor(src)), in_size - 1)
        i1 = min(i0 + 1, in_size - 1)
        frac = src - i0
        U[h, i0] += 1.0 - frac
        U[h, i1] += frac
    return U


def _build_operators(sizes, H, W, Co, nb):
    """Host-side constants for one batch block of nb images."""
    HW = H * W
    q_sizes = [s * s for s in sizes]
    Q = int(sum(q_sizes))
    offs = np.cumsum([0] + q_sizes)[:-1]
    S = len(sizes)

    pt = np.zeros((HW, Q), np.float32)        # all-stage adaptive-avg-pool (transposed)
    ut = np.zeros((Q, HW), np.float32)        # all-stage bilinear upsample (transposed)
    msk = np.zeros((S * Co, Q), np.float32)   # stage-selection mask on pooled columns
    for si, sz in enumerate(sizes):
        P = np.kron(_adaptive_pool_matrix(sz, H), _adaptive_pool_matrix(sz, W))  # (sz^2, HW)
        U = np.kron(_upsample_matrix(H, sz), _upsample_matrix(W, sz))            # (HW, sz^2)
        lo, hi = int(offs[si]), int(offs[si]) + q_sizes[si]
        pt[:, lo:hi] = P.T
        ut[lo:hi, :] = U.T
        msk[si * Co:(si + 1) * Co, lo:hi] = 1.0

    # 3x3 conv border masks (padding=1), pre-rolled to *input* coordinates so a
    # single elementwise multiply masks all 9 taps before the XLU lane-rolls.
    # The same mask also kills cross-image leakage at batch-block seams.
    L = nb * HW
    lane = np.arange(L)
    p = lane % HW
    yy, xx = p // W, p % W
    premask = np.zeros((9 * Co, L), np.float32)
    for t, (dy, dx) in enumerate((a, b) for a in range(3) for b in range(3)):
        oy, ox = dy - 1, dx - 1
        valid_out = ((yy + oy >= 0) & (yy + oy < H)
                     & (xx + ox >= 0) & (xx + ox < W)).astype(np.float32)
        shift = oy * W + ox
        premask[t * Co:(t + 1) * Co, :] = np.roll(valid_out, shift)[None, :]

    # block-diagonal over the nb images folded onto the lane axis
    eye = np.eye(nb, dtype=np.float32)
    pt_bd = np.kron(eye, pt)                  # (nb*HW, nb*Q)
    ut_bd = np.kron(eye, ut)                  # (nb*Q, nb*HW)
    msk_bd = np.tile(msk, (1, nb))            # (S*Co, nb*Q)
    return pt_bd, ut_bd, msk_bd, premask, Q


# ---------------------------------------------------------------------------
# Pallas kernel (one batch block per grid step; channels x (nb*H*W) layout)
# ---------------------------------------------------------------------------
def _psp_kernel(x_ref, pt_ref, wstk_ref, mask_ref, ut_ref, wall_ref,
                pre_ref, scale_ref, bias_ref, o_ref, *, H, W, Cf, Co, Nb):
    HW = H * W
    L = Nb * HW

    def dot(a, b):
        # f32 x f32 -> full-precision MXU passes; bf16 operands use the native path.
        prec = (jax.lax.Precision.HIGHEST
                if (a.dtype == jnp.float32 and b.dtype == jnp.float32) else None)
        return jnp.dot(a, b, preferred_element_type=jnp.float32, precision=prec)

    x = x_ref[...]                                            # (Cf, L)
    xf = x.astype(jnp.float32)

    # 1) all adaptive-avg-pool stages for all Nb images: one matmul
    pooled = dot(xf, pt_ref[...])                             # (Cf, Nb*Q)

    # 2) all S 1x1 stage convs (stacked on rows).  Cf is tiny, so do it as
    #    outer-product FMAs on the VPU instead of a near-empty K=Cf MXU pass.
    wstk = wstk_ref[...]                                      # (S*Co, Cf) f32
    if Cf <= 16:
        stage_out = wstk[:, 0:1] * pooled[0:1, :]
        for c in range(1, Cf):
            stage_out = stage_out + wstk[:, c:c + 1] * pooled[c:c + 1, :]
    else:
        stage_out = dot(wstk, pooled)                         # (S*Co, Nb*Q)

    # 3) stage-selection mask + ONE fused bilinear-upsample matmul; its output
    #    rows are already the channel-concatenated priors [stage0 .. stageS-1].
    priors = dot(stage_out * mask_ref[...], ut_ref[...])      # (S*Co, L)

    # 4) channel concat [priors, feats] (torch.cat order)
    cat = jnp.concatenate([priors.astype(x.dtype), x], axis=0)   # (Cin, L)

    # 5) 3x3 bottleneck conv (padding=1, bias=False): one matmul over all 9
    #    taps, one fused border/seam premask, then 8 XLU lane-rolls + adds.
    tap = dot(wall_ref[...], cat) * pre_ref[...]              # (9*Co, L)

    acc = tap[4 * Co:5 * Co, :]                               # center tap: no roll
    for t, (dy, dx) in enumerate((a, b) for a in range(3) for b in range(3)):
        if dy == 1 and dx == 1:
            continue
        shift = (dy - 1) * W + (dx - 1)
        blk = tap[t * Co:(t + 1) * Co, :]
        acc = acc + pltpu.roll(blk, shift=(-shift) % L, axis=1)

    # 6) folded inference-mode BatchNorm2d.
    # TODO(synk): nn.Dropout2d(0.1) train-mode channel dropout and BatchNorm2d
    # training-mode batch statistics are not implemented (eval-mode semantics).
    out = acc * scale_ref[...] + bias_ref[...]                # (Co, L)
    o_ref[...] = out.astype(o_ref.dtype)


def psp_module_pallas(x_nchw, w_stage, w_bot, bn_scale, bn_bias, *,
                      sizes=(1, 2, 3, 6), compute_dtype=jnp.bfloat16,
                      batch_block=None):
    """Fused PSPModule forward (inference).

    x_nchw:   (N, Cf, H, W) input feature map (PyTorch NCHW).
    w_stage:  (S, Co, Cf)   1x1 stage-conv weights (bias=False).
    w_bot:    (Co, Cin, 3, 3) bottleneck 3x3 conv weight (OIHW), Cin = Cf + S*Co.
    bn_scale, bn_bias: (Co,) folded inference BatchNorm2d scale / bias.
    compute_dtype: dtype of the big matmul's MXU operands (bf16 is native on
        v6e/v7x); pooling/upsample operators and elementwise math stay f32.
    Returns (N, Co, H, W) float32.
    """
    N, Cf, H, W = x_nchw.shape
    S = len(sizes)
    Co, Cin = int(w_bot.shape[0]), int(w_bot.shape[1])
    assert Cin == Cf + S * Co, (Cin, Cf, S, Co)
    assert tuple(w_stage.shape) == (S, Co, Cf), w_stage.shape
    HW = H * W

    # Batch elements per grid step: fold the batch into the matmul lane
    # dimension to amortize per-step overhead, but keep >= 2 grid steps so both
    # of v7x's TensorCores get work on the "parallel" grid axis.
    if batch_block is None:
        batch_block = max(1, N // 2)
    nb = max(1, min(int(batch_block), N, 8))
    while N % nb:
        nb -= 1
    if nb < N and (nb * HW) % 128 != 0:   # lane blocks must stay 128-aligned
        nb = N
    steps = N // nb
    L = nb * HW

    pt_bd, ut_bd, msk_bd, premask, Q = _build_operators(sizes, H, W, Co, nb)

    # channel-major layout: channels on sublanes, batch*spatial on lanes.
    x_cm = jnp.transpose(x_nchw, (1, 0, 2, 3)).reshape(Cf, N * HW).astype(compute_dtype)
    w_stack = w_stage.reshape(S * Co, Cf).astype(jnp.float32)            # used on the VPU
    w_all = jnp.transpose(w_bot, (2, 3, 0, 1)).reshape(9 * Co, Cin).astype(compute_dtype)
    scale = jnp.asarray(bn_scale, jnp.float32).reshape(Co, 1)
    bias = jnp.asarray(bn_bias, jnp.float32).reshape(Co, 1)

    kernel = functools.partial(_psp_kernel, H=H, W=W, Cf=Cf, Co=Co, Nb=nb)

    itemsize = jnp.dtype(compute_dtype).itemsize
    flops = 2 * N * (Cf * HW * Q + S * Co * Cf * Q + S * Co * Q * HW
                     + 9 * Co * Cin * HW)
    bytes_accessed = (N * HW * (Cf * itemsize + Co * 4)
                      + (pt_bd.size + ut_bd.size + msk_bd.size + premask.size) * 4
                      + w_stack.size * 4 + w_all.size * itemsize
                      + (scale.size + bias.size) * 4)
    cost = pl.CostEstimate(flops=int(flops), transcendentals=0,
                           bytes_accessed=int(bytes_accessed))

    operands = (x_cm, jnp.asarray(pt_bd), w_stack, jnp.asarray(msk_bd),
                jnp.asarray(ut_bd), w_all, jnp.asarray(premask), scale, bias)

    def make_call(single_buffer_consts):
        def const_spec(shape):
            nd = len(shape)
            if single_buffer_consts:
                # grid-invariant operand: no need for double buffering
                return pl.BlockSpec(shape, lambda n: (0,) * nd,
                                    pipeline_mode=pl.Buffered(1))
            return pl.BlockSpec(shape, lambda n: (0,) * nd)

        grid_spec = pltpu.PrefetchScalarGridSpec(
            num_scalar_prefetch=0,
            grid=(steps,),
            in_specs=[
                pl.BlockSpec((Cf, L), lambda n: (0, n)),     # feats (lanes = batch*HW)
                const_spec((nb * HW, nb * Q)),               # pooling operator (block-diag)
                const_spec((S * Co, Cf)),                    # stacked 1x1 stage convs
                const_spec((S * Co, nb * Q)),                # stage-selection mask
                const_spec((nb * Q, nb * HW)),               # fused upsample operator
                const_spec((9 * Co, Cin)),                   # 3x3 conv, taps on rows
                const_spec((9 * Co, L)),                     # 3x3 border/seam premask
                const_spec((Co, 1)),                         # folded BN scale
                const_spec((Co, 1)),                         # folded BN bias
            ],
            out_specs=pl.BlockSpec((Co, L), lambda n: (0, n)),
        )
        return pl.pallas_call(
            kernel,
            out_shape=jax.ShapeDtypeStruct((Co, N * HW), jnp.float32),
            grid_spec=grid_spec,
            compiler_params=pltpu.CompilerParams(
                dimension_semantics=("parallel",)),
            cost_estimate=cost,
        )

    try:
        out = make_call(True)(*operands)
    except Exception:
        # Fallback if this JAX build rejects pipeline_mode=pl.Buffered(1).
        out = make_call(False)(*operands)

    return out.reshape(Co, N, H, W).transpose(1, 0, 2, 3)


# ---------------------------------------------------------------------------
# Pure-JAX reference for verification (NCHW, matches PyTorch semantics)
# ---------------------------------------------------------------------------
def _psp_reference(x_nchw, P_list, U_list, w_stage, w_bot_oihw, bn_scale, bn_bias):
    N, Cf, H, W = x_nchw.shape
    S, Co, _ = w_stage.shape
    hp = jax.lax.Precision.HIGHEST
    xf = x_nchw.reshape(N, Cf, H * W)
    priors = []
    for s in range(S):
        pooled = jnp.einsum('ncp,qp->ncq', xf, P_list[s], precision=hp)
        conv = jnp.einsum('oc,ncq->noq', w_stage[s], pooled, precision=hp)
        up = jnp.einsum('noq,pq->nop', conv, U_list[s], precision=hp)
        priors.append(up.reshape(N, Co, H, W))
    cat = jnp.concatenate(priors + [x_nchw], axis=1)
    y = jax.lax.conv_general_dilated(
        cat, w_bot_oihw, window_strides=(1, 1), padding='SAME',
        dimension_numbers=('NCHW', 'OIHW', 'NCHW'), precision=hp)
    return y * bn_scale.reshape(1, Co, 1, 1) + bn_bias.reshape(1, Co, 1, 1)


if __name__ == "__main__":
    # Small shapes consistent with PSPModule(features=4, out_features=8)
    N, Cf, H, W = 2, 4, 16, 16
    Co = 8
    sizes = (1, 2, 3, 6)
    S = len(sizes)
    Cin = Cf + S * Co
    eps = 1e-5

    key = jax.random.PRNGKey(0)
    k_x, k_ws, k_wb, k_g, k_b, k_m, k_v = jax.random.split(key, 7)

    # input in PyTorch NCHW convention
    x_nchw = jax.random.normal(k_x, (N, Cf, H, W), jnp.float32)

    # stage 1x1 conv weights: torch (Co, Cf, 1, 1) per stage -> (S, Co, Cf)
    w_stage = jax.random.normal(k_ws, (S, Co, Cf), jnp.float32) * 0.1
    # bottleneck 3x3 conv weight in torch OIHW layout (Co, Cin, 3, 3)
    w_bot = jax.random.normal(k_wb, (Co, Cin, 3, 3), jnp.float32) * 0.1
    # BatchNorm2d(Co) inference params, folded into scale/bias
    gamma = 1.0 + 0.1 * jax.random.normal(k_g, (Co,), jnp.float32)
    beta = 0.1 * jax.random.normal(k_b, (Co,), jnp.float32)
    running_mean = 0.1 * jax.random.normal(k_m, (Co,), jnp.float32)
    running_var = jax.random.uniform(k_v, (Co,), jnp.float32, minval=0.5, maxval=1.5)
    inv_std = 1.0 / jnp.sqrt(running_var + eps)
    bn_scale = gamma * inv_std
    bn_bias = beta - running_mean * gamma * inv_std

    # reference operators (per stage, dense form only used by the reference)
    P_list = [jnp.asarray(np.kron(_adaptive_pool_matrix(s, H),
                                  _adaptive_pool_matrix(s, W))) for s in sizes]
    U_list = [jnp.asarray(np.kron(_upsample_matrix(H, s),
                                  _upsample_matrix(W, s))) for s in sizes]
    ref = jax.block_until_ready(
        _psp_reference(x_nchw, P_list, U_list, w_stage, w_bot, bn_scale, bn_bias))

    # f32 MXU-operand path: strict check
    out_f32 = jax.block_until_ready(psp_module_pallas(
        x_nchw, w_stage, w_bot, bn_scale, bn_bias, sizes=sizes,
        compute_dtype=jnp.float32))
    assert out_f32.shape == (N, Co, H, W), out_f32.shape
    err32 = float(jnp.max(jnp.abs(out_f32 - ref)))
    assert jnp.allclose(out_f32, ref, atol=1e-4, rtol=1e-4), f"f32 max_err={err32}"

    # bf16 MXU-operand fast path (v6e/v7x native): looser tolerance
    out_bf16 = jax.block_until_ready(psp_module_pallas(
        x_nchw, w_stage, w_bot, bn_scale, bn_bias, sizes=sizes,
        compute_dtype=jnp.bfloat16))
    assert out_bf16.shape == (N, Co, H, W), out_bf16.shape
    err16 = float(jnp.max(jnp.abs(out_bf16 - ref)))
    assert err16 < 1e-1, f"bf16 max_err={err16}"

    print("KERNEL_OK")
</pallas_src>

<mosaic_0001>
module attributes {stable_mosaic.version = 11 : i64} {
  func.func @_psp_kernel(%arg0: i32, %arg1: memref<4x256xf32, #tpu.memory_space<vmem>>, %arg2: memref<256x50xf32, #tpu.memory_space<vmem>>, %arg3: memref<32x4xf32, #tpu.memory_space<vmem>>, %arg4: memref<32x50xf32, #tpu.memory_space<vmem>>, %arg5: memref<50x256xf32, #tpu.memory_space<vmem>>, %arg6: memref<72x36xf32, #tpu.memory_space<vmem>>, %arg7: memref<72x256xf32, #tpu.memory_space<vmem>>, %arg8: memref<8x1xf32, #tpu.memory_space<vmem>>, %arg9: memref<8x1xf32, #tpu.memory_space<vmem>>, %arg10: memref<8x256xf32, #tpu.memory_space<vmem>>) attributes {dimension_semantics = [#tpu.dimension_semantics<parallel>], iteration_bounds = array<i64: 2>, scalar_prefetch = 0 : i64, scratch_operands = 0 : i64, tpu.core_type = #tpu.core_type<tc>, window_params = [{transform_indices = @transform_0, window_bounds = array<i64: 4, 256>}, {pipeline_mode = #tpu.pipeline_mode<synchronous>, transform_indices = @transform_1, window_bounds = array<i64: 256, 50>}, {pipeline_mode = #tpu.pipeline_mode<synchronous>, transform_indices = @transform_2, window_bounds = array<i64: 32, 4>}, {pipeline_mode = #tpu.pipeline_mode<synchronous>, transform_indices = @transform_3, window_bounds = array<i64: 32, 50>}, {pipeline_mode = #tpu.pipeline_mode<synchronous>, transform_indices = @transform_4, window_bounds = array<i64: 50, 256>}, {pipeline_mode = #tpu.pipeline_mode<synchronous>, transform_indices = @transform_5, window_bounds = array<i64: 72, 36>}, {pipeline_mode = #tpu.pipeline_mode<synchronous>, transform_indices = @transform_6, window_bounds = array<i64: 72, 256>}, {pipeline_mode = #tpu.pipeline_mode<synchronous>, transform_indices = @transform_7, window_bounds = array<i64: 8, 1>}, {pipeline_mode = #tpu.pipeline_mode<synchronous>, transform_indices = @transform_8, window_bounds = array<i64: 8, 1>}, {transform_indices = @transform_9, window_bounds = array<i64: 8, 256>}]} {
    %c0 = arith.constant 0 : index
    %c0_0 = arith.constant 0 : index
    %0 = vector.load %arg1[%c0, %c0_0] : memref<4x256xf32, #tpu.memory_space<vmem>>, vector<4x256xf32>
    %c0_1 = arith.constant 0 : index
    %c0_2 = arith.constant 0 : index
    %1 = vector.load %arg2[%c0_1, %c0_2] : memref<256x50xf32, #tpu.memory_space<vmem>>, vector<256x50xf32>
    %cst = arith.constant dense<0.000000e+00> : vector<4x50xf32>
    %2 = tpu.matmul %0, %1, %cst {dimension_numbers = #tpu.dot_dimension_numbers<[1], [0], [0], [1], [0, 0, 1, 1], [], []>, precision = #tpu.contract_precision<fp32>} : vector<4x256xf32>, vector<256x50xf32>, vector<4x50xf32> -> vector<4x50xf32>
    %c0_3 = arith.constant 0 : index
    %c0_4 = arith.constant 0 : index
    %3 = vector.load %arg3[%c0_3, %c0_4] : memref<32x4xf32, #tpu.memory_space<vmem>>, vector<32x4xf32>
    %4 = vector.extract_strided_slice %3 {offsets = [0, 0], sizes = [32, 1], strides = [1, 1]} : vector<32x4xf32> to vector<32x1xf32>
    %5 = vector.extract_strided_slice %2 {offsets = [0, 0], sizes = [1, 50], strides = [1, 1]} : vector<4x50xf32> to vector<1x50xf32>
    %6 = vector.broadcast %4 : vector<32x1xf32> to vector<32x50xf32>
    %7 = vector.broadcast %5 : vector<1x50xf32> to vector<32x50xf32>
    %8 = arith.mulf %6, %7 : vector<32x50xf32>
    %9 = vector.extract_strided_slice %3 {offsets = [0, 1], sizes = [32, 1], strides = [1, 1]} : vector<32x4xf32> to vector<32x1xf32>
    %10 = vector.extract_strided_slice %2 {offsets = [1, 0], sizes = [1, 50], strides = [1, 1]} : vector<4x50xf32> to vector<1x50xf32>
    %11 = vector.broadcast %9 : vector<32x1xf32> to vector<32x50xf32>
    %12 = vector.broadcast %10 : vector<1x50xf32> to vector<32x50xf32>
    %13 = arith.mulf %11, %12 : vector<32x50xf32>
    %14 = arith.addf %8, %13 : vector<32x50xf32>
    %15 = vector.extract_strided_slice %3 {offsets = [0, 2], sizes = [32, 1], strides = [1, 1]} : vector<32x4xf32> to vector<32x1xf32>
    %16 = vector.extract_strided_slice %2 {offsets = [2, 0], sizes = [1, 50], strides = [1, 1]} : vector<4x50xf32> to vector<1x50xf32>
    %17 = vector.broadcast %15 : vector<32x1xf32> to vector<32x50xf32>
    %18 = vector.broadcast %16 : vector<1x50xf32> to vector<32x50xf32>
    %19 = arith.mulf %17, %18 : vector<32x50xf32>
    %20 = arith.addf %14, %19 : vector<32x50xf32>
    %21 = vector.extract_strided_slice %3 {offsets = [0, 3], sizes = [32, 1], strides = [1, 1]} : vector<32x4xf32> to vector<32x1xf32>
    %22 = vector.extract_strided_slice %2 {offsets = [3, 0], sizes = [1, 50], strides = [1, 1]} : vector<4x50xf32> to vector<1x50xf32>
    %23 = vector.broadcast %21 : vector<32x1xf32> to vector<32x50xf32>
    %24 = vector.broadcast %22 : vector<1x50xf32> to vector<32x50xf32>
    %25 = arith.mulf %23, %24 : vector<32x50xf32>
    %26 = arith.addf %20, %25 : vector<32x50xf32>
    %c0_5 = arith.constant 0 : index
    %c0_6 = arith.constant 0 : index
    %27 = vector.load %arg4[%c0_5, %c0_6] : memref<32x50xf32, #tpu.memory_space<vmem>>, vector<32x50xf32>
    %28 = arith.mulf %26, %27 : vector<32x50xf32>
    %c0_7 = arith.constant 0 : index
    %c0_8 = arith.constant 0 : index
    %29 = vector.load %arg5[%c0_7, %c0_8] : memref<50x256xf32, #tpu.memory_space<vmem>>, vector<50x256xf32>
    %cst_9 = arith.constant dense<0.000000e+00> : vector<32x256xf32>
    %30 = tpu.matmul %28, %29, %cst_9 {dimension_numbers = #tpu.dot_dimension_numbers<[1], [0], [0], [1], [0, 0, 1, 1], [], []>, precision = #tpu.contract_precision<fp32>} : vector<32x50xf32>, vector<50x256xf32>, vector<32x256xf32> -> vector<32x256xf32>
    %31 = tpu.concatenate %30, %0 in 0 : vector<32x256xf32>, vector<4x256xf32> -> vector<36x256xf32>
    %c0_10 = arith.constant 0 : index
    %c0_11 = arith.constant 0 : index
    %32 = vector.load %arg6[%c0_10, %c0_11] : memref<72x36xf32, #tpu.memory_space<vmem>>, vector<72x36xf32>
    %cst_12 = arith.constant dense<0.000000e+00> : vector<72x256xf32>
    %33 = tpu.matmul %32, %31, %cst_12 {dimension_numbers = #tpu.dot_dimension_numbers<[1], [0], [0], [1], [0, 0, 1, 1], [], []>, precision = #tpu.contract_precision<fp32>} : vector<72x36xf32>, vector<36x256xf32>, vector<72x256xf32> -> vector<72x256xf32>
    %c0_13 = arith.constant 0 : index
    %c0_14 = arith.constant 0 : index
    %34 = vector.load %arg7[%c0_13, %c0_14] : memref<72x256xf32, #tpu.memory_space<vmem>>, vector<72x256xf32>
    %35 = arith.mulf %33, %34 : vector<72x256xf32>
    %36 = vector.extract_strided_slice %35 {offsets = [32, 0], sizes = [8, 256], strides = [1, 1]} : vector<72x256xf32> to vector<8x256xf32>
    %37 = vector.extract_strided_slice %35 {offsets = [0, 0], sizes = [8, 256], strides = [1, 1]} : vector<72x256xf32> to vector<8x256xf32>
    %c17_i32 = arith.constant 17 : i32
    %38 = tpu.dynamic_rotate %37 by %c17_i32 dim 1 : vector<8x256xf32>, i32 -> vector<8x256xf32>
    %39 = arith.addf %36, %38 : vector<8x256xf32>
    %40 = vector.extract_strided_slice %35 {offsets = [8, 0], sizes = [8, 256], strides = [1, 1]} : vector<72x256xf32> to vector<8x256xf32>
    %c16_i32 = arith.constant 16 : i32
    %41 = tpu.dynamic_rotate %40 by %c16_i32 dim 1 : vector<8x256xf32>, i32 -> vector<8x256xf32>
    %42 = arith.addf %39, %41 : vector<8x256xf32>
    %43 = vector.extract_strided_slice %35 {offsets = [16, 0], sizes = [8, 256], strides = [1, 1]} : vector<72x256xf32> to vector<8x256xf32>
    %c15_i32 = arith.constant 15 : i32
    %44 = tpu.dynamic_rotate %43 by %c15_i32 dim 1 : vector<8x256xf32>, i32 -> vector<8x256xf32>
    %45 = arith.addf %42, %44 : vector<8x256xf32>
    %46 = vector.extract_strided_slice %35 {offsets = [24, 0], sizes = [8, 256], strides = [1, 1]} : vector<72x256xf32> to vector<8x256xf32>
    %c1_i32 = arith.constant 1 : i32
    %47 = tpu.dynamic_rotate %46 by %c1_i32 dim 1 : vector<8x256xf32>, i32 -> vector<8x256xf32>
    %48 = arith.addf %45, %47 : vector<8x256xf32>
    %49 = vector.extract_strided_slice %35 {offsets = [40, 0], sizes = [8, 256], strides = [1, 1]} : vector<72x256xf32> to vector<8x256xf32>
    %c255_i32 = arith.constant 255 : i32
    %50 = tpu.dynamic_rotate %49 by %c255_i32 dim 1 : vector<8x256xf32>, i32 -> vector<8x256xf32>
    %51 = arith.addf %48, %50 : vector<8x256xf32>
    %52 = vector.extract_strided_slice %35 {offsets = [48, 0], sizes = [8, 256], strides = [1, 1]} : vector<72x256xf32> to vector<8x256xf32>
    %c241_i32 = arith.constant 241 : i32
    %53 = tpu.dynamic_rotate %52 by %c241_i32 dim 1 : vector<8x256xf32>, i32 -> vector<8x256xf32>
    %54 = arith.addf %51, %53 : vector<8x256xf32>
    %55 = vector.extract_strided_slice %35 {offsets = [56, 0], sizes = [8, 256], strides = [1, 1]} : vector<72x256xf32> to vector<8x256xf32>
    %c240_i32 = arith.constant 240 : i32
    %56 = tpu.dynamic_rotate %55 by %c240_i32 dim 1 : vector<8x256xf32>, i32 -> vector<8x256xf32>
    %57 = arith.addf %54, %56 : vector<8x256xf32>
    %58 = vector.extract_strided_slice %35 {offsets = [64, 0], sizes = [8, 256], strides = [1, 1]} : vector<72x256xf32> to vector<8x256xf32>
    %c239_i32 = arith.constant 239 : i32
    %59 = tpu.dynamic_rotate %58 by %c239_i32 dim 1 : vector<8x256xf32>, i32 -> vector<8x256xf32>
    %60 = arith.addf %57, %59 : vector<8x256xf32>
    %c0_15 = arith.constant 0 : index
    %c0_16 = arith.constant 0 : index
    %61 = vector.load %arg8[%c0_15, %c0_16] : memref<8x1xf32, #tpu.memory_space<vmem>>, vector<8x1xf32>
    %62 = vector.broadcast %61 : vector<8x1xf32> to vector<8x256xf32>
    %63 = arith.mulf %60, %62 : vector<8x256xf32>
    %c0_17 = arith.constant 0 : index
    %c0_18 = arith.constant 0 : index
    %64 = vector.load %arg9[%c0_17, %c0_18] : memref<8x1xf32, #tpu.memory_space<vmem>>, vector<8x1xf32>
    %65 = vector.broadcast %64 : vector<8x1xf32> to vector<8x256xf32>
    %66 = arith.addf %63, %65 : vector<8x256xf32>
    %c0_19 = arith.constant 0 : index
    %c0_20 = arith.constant 0 : index
    %67 = vector.load %arg10[%c0_19, %c0_20] : memref<8x256xf32, #tpu.memory_space<vmem>>, vector<8x256xf32>
    tpu.vector_store %arg10[%c0_19, %c0_20], %66 {strides = array<i32>} : memref<8x256xf32, #tpu.memory_space<vmem>>, vector<8x256xf32>,
    return
  }
  func.func @transform_0(%arg0: i32) -> (i32, i32) {
    %c0_i32 = arith.constant 0 : i32
    %c0_i32_0 = arith.constant 0 : i32
    return %c0_i32, %arg0 : i32, i32
  }
  func.func @transform_1(%arg0: i32) -> (i32, i32) {
    %c0_i32 = arith.constant 0 : i32
    %c0_i32_0 = arith.constant 0 : i32
    %c0_i32_1 = arith.constant 0 : i32
    return %c0_i32, %c0_i32_0 : i32, i32
  }
  func.func @transform_2(%arg0: i32) -> (i32, i32) {
    %c0_i32 = arith.constant 0 : i32
    %c0_i32_0 = arith.constant 0 : i32
    %c0_i32_1 = arith.constant 0 : i32
    return %c0_i32, %c0_i32_0 : i32, i32
  }
  func.func @transform_3(%arg0: i32) -> (i32, i32) {
    %c0_i32 = arith.constant 0 : i32
    %c0_i32_0 = arith.constant 0 : i32
    %c0_i32_1 = arith.constant 0 : i32
    return %c0_i32, %c0_i32_0 : i32, i32
  }
  func.func @transform_4(%arg0: i32) -> (i32, i32) {
    %c0_i32 = arith.constant 0 : i32
    %c0_i32_0 = arith.constant 0 : i32
    %c0_i32_1 = arith.constant 0 : i32
    return %c0_i32, %c0_i32_0 : i32, i32
  }
  func.func @transform_5(%arg0: i32) -> (i32, i32) {
    %c0_i32 = arith.constant 0 : i32
    %c0_i32_0 = arith.constant 0 : i32
    %c0_i32_1 = arith.constant 0 : i32
    return %c0_i32, %c0_i32_0 : i32, i32
  }
  func.func @transform_6(%arg0: i32) -> (i32, i32) {
    %c0_i32 = arith.constant 0 : i32
    %c0_i32_0 = arith.constant 0 : i32
    %c0_i32_1 = arith.constant 0 : i32
    return %c0_i32, %c0_i32_0 : i32, i32
  }
  func.func @transform_7(%arg0: i32) -> (i32, i32) {
    %c0_i32 = arith.constant 0 : i32
    %c0_i32_0 = arith.constant 0 : i32
    %c0_i32_1 = arith.constant 0 : i32
    return %c0_i32, %c0_i32_0 : i32, i32
  }
  func.func @transform_8(%arg0: i32) -> (i32, i32) {
    %c0_i32 = arith.constant 0 : i32
    %c0_i32_0 = arith.constant 0 : i32
    %c0_i32_1 = arith.constant 0 : i32
    return %c0_i32, %c0_i32_0 : i32, i32
  }
  func.func @transform_9(%arg0: i32) -> (i32, i32) {
    %c0_i32 = arith.constant 0 : i32
    %c0_i32_0 = arith.constant 0 : i32
    return %c0_i32, %arg0 : i32, i32
  }
}

module attributes {stable_mosaic.version = 11 : i64} {
  func.func @_psp_kernel(%arg0: i32, %arg1: memref<4x256xf32, #tpu.memory_space<vmem>>, %arg2: memref<256x50xf32, #tpu.memory_space<vmem>>, %arg3: memref<32x4xf32, #tpu.memory_space<vmem>>, %arg4: memref<32x50xf32, #tpu.memory_space<vmem>>, %arg5: memref<50x256xf32, #tpu.memory_space<vmem>>, %arg6: memref<72x36xf32, #tpu.memory_space<vmem>>, %arg7: memref<72x256xf32, #tpu.memory_space<vmem>>, %arg8: memref<8x1xf32, #tpu.memory_space<vmem>>, %arg9: memref<8x1xf32, #tpu.memory_space<vmem>>, %arg10: memref<8x256xf32, #tpu.memory_space<vmem>>) attributes {dimension_semantics = [#tpu.dimension_semantics<parallel>], iteration_bounds = array<i64: 2>, scalar_prefetch = 0 : i64, scratch_operands = 0 : i64, tpu.core_type = #tpu.core_type<tc>, window_params = [{transform_indices = @transform_0, window_bounds = array<i64: 4, 256>}, {pipeline_mode = #tpu.pipeline_mode<synchronous>, transform_indices = @transform_1, window_bounds = array<i64: 256, 50>}, {pipeline_mode = #tpu.pipeline_mode<synchronous>, transform_indices = @transform_2, window_bounds = array<i64: 32, 4>}, {pipeline_mode = #tpu.pipeline_mode<synchronous>, transform_indices = @transform_3, window_bounds = array<i64: 32, 50>}, {pipeline_mode = #tpu.pipeline_mode<synchronous>, transform_indices = @transform_4, window_bounds = array<i64: 50, 256>}, {pipeline_mode = #tpu.pipeline_mode<synchronous>, transform_indices = @transform_5, window_bounds = array<i64: 72, 36>}, {pipeline_mode = #tpu.pipeline_mode<synchronous>, transform_indices = @transform_6, window_bounds = array<i64: 72, 256>}, {pipeline_mode = #tpu.pipeline_mode<synchronous>, transform_indices = @transform_7, window_bounds = array<i64: 8, 1>}, {pipeline_mode = #tpu.pipeline_mode<synchronous>, transform_indices = @transform_8, window_bounds = array<i64: 8, 1>}, {transform_indices = @transform_9, window_bounds = array<i64: 8, 256>}]} {
    %c0 = arith.constant 0 : index
    %c0_0 = arith.constant 0 : index
    %0 = vector.load %arg1[%c0, %c0_0] : memref<4x256xf32, #tpu.memory_space<vmem>>, vector<4x256xf32>
    %c0_1 = arith.constant 0 : index
    %c0_2 = arith.constant 0 : index
    %1 = vector.load %arg2[%c0_1, %c0_2] : memref<256x50xf32, #tpu.memory_space<vmem>>, vector<256x50xf32>
    %cst = arith.constant dense<0.000000e+00> : vector<4x50xf32>
    %2 = tpu.matmul %0, %1, %cst {dimension_numbers = #tpu.dot_dimension_numbers<[1], [0], [0], [1], [0, 0, 1, 1], [], []>, precision = #tpu.contract_precision<fp32>} : vector<4x256xf32>, vector<256x50xf32>, vector<4x50xf32> -> vector<4x50xf32>
    %c0_3 = arith.constant 0 : index
    %c0_4 = arith.constant 0 : index
    %3 = vector.load %arg3[%c0_3, %c0_4] : memref<32x4xf32, #tpu.memory_space<vmem>>, vector<32x4xf32>
    %4 = vector.extract_strided_slice %3 {offsets = [0, 0], sizes = [32, 1], strides = [1, 1]} : vector<32x4xf32> to vector<32x1xf32>
    %5 = vector.extract_strided_slice %2 {offsets = [0, 0], sizes = [1, 50], strides = [1, 1]} : vector<4x50xf32> to vector<1x50xf32>
    %6 = vector.broadcast %4 : vector<32x1xf32> to vector<32x50xf32>
    %7 = vector.broadcast %5 : vector<1x50xf32> to vector<32x50xf32>
    %8 = arith.mulf %6, %7 : vector<32x50xf32>
    %9 = vector.extract_strided_slice %3 {offsets = [0, 1], sizes = [32, 1], strides = [1, 1]} : vector<32x4xf32> to vector<32x1xf32>
    %10 = vector.extract_strided_slice %2 {offsets = [1, 0], sizes = [1, 50], strides = [1, 1]} : vector<4x50xf32> to vector<1x50xf32>
    %11 = vector.broadcast %9 : vector<32x1xf32> to vector<32x50xf32>
    %12 = vector.broadcast %10 : vector<1x50xf32> to vector<32x50xf32>
    %13 = arith.mulf %11, %12 : vector<32x50xf32>
    %14 = arith.addf %8, %13 : vector<32x50xf32>
    %15 = vector.extract_strided_slice %3 {offsets = [0, 2], sizes = [32, 1], strides = [1, 1]} : vector<32x4xf32> to vector<32x1xf32>
    %16 = vector.extract_strided_slice %2 {offsets = [2, 0], sizes = [1, 50], strides = [1, 1]} : vector<4x50xf32> to vector<1x50xf32>
    %17 = vector.broadcast %15 : vector<32x1xf32> to vector<32x50xf32>
    %18 = vector.broadcast %16 : vector<1x50xf32> to vector<32x50xf32>
    %19 = arith.mulf %17, %18 : vector<32x50xf32>
    %20 = arith.addf %14, %19 : vector<32x50xf32>
    %21 = vector.extract_strided_slice %3 {offsets = [0, 3], sizes = [32, 1], strides = [1, 1]} : vector<32x4xf32> to vector<32x1xf32>
    %22 = vector.extract_strided_slice %2 {offsets = [3, 0], sizes = [1, 50], strides = [1, 1]} : vector<4x50xf32> to vector<1x50xf32>
    %23 = vector.broadcast %21 : vector<32x1xf32> to vector<32x50xf32>
    %24 = vector.broadcast %22 : vector<1x50xf32> to vector<32x50xf32>
    %25 = arith.mulf %23, %24 : vector<32x50xf32>
    %26 = arith.addf %20, %25 : vector<32x50xf32>
    %c0_5 = arith.constant 0 : index
    %c0_6 = arith.constant 0 : index
    %27 = vector.load %arg4[%c0_5, %c0_6] : memref<32x50xf32, #tpu.memory_space<vmem>>, vector<32x50xf32>
    %28 = arith.mulf %26, %27 : vector<32x50xf32>
    %c0_7 = arith.constant 0 : index
    %c0_8 = arith.constant 0 : index
    %29 = vector.load %arg5[%c0_7, %c0_8] : memref<50x256xf32, #tpu.memory_space<vmem>>, vector<50x256xf32>
    %cst_9 = arith.constant dense<0.000000e+00> : vector<32x256xf32>
    %30 = tpu.matmul %28, %29, %cst_9 {dimension_numbers = #tpu.dot_dimension_numbers<[1], [0], [0], [1], [0, 0, 1, 1], [], []>, precision = #tpu.contract_precision<fp32>} : vector<32x50xf32>, vector<50x256xf32>, vector<32x256xf32> -> vector<32x256xf32>
    %31 = tpu.concatenate %30, %0 in 0 : vector<32x256xf32>, vector<4x256xf32> -> vector<36x256xf32>
    %c0_10 = arith.constant 0 : index
    %c0_11 = arith.constant 0 : index
    %32 = vector.load %arg6[%c0_10, %c0_11] : memref<72x36xf32, #tpu.memory_space<vmem>>, vector<72x36xf32>
    %cst_12 = arith.constant dense<0.000000e+00> : vector<72x256xf32>
    %33 = tpu.matmul %32, %31, %cst_12 {dimension_numbers = #tpu.dot_dimension_numbers<[1], [0], [0], [1], [0, 0, 1, 1], [], []>, precision = #tpu.contract_precision<fp32>} : vector<72x36xf32>, vector<36x256xf32>, vector<72x256xf32> -> vector<72x256xf32>
    %c0_13 = arith.constant 0 : index
    %c0_14 = arith.constant 0 : index
    %34 = vector.load %arg7[%c0_13, %c0_14] : memref<72x256xf32, #tpu.memory_space<vmem>>, vector<72x256xf32>
    %35 = arith.mulf %33, %34 : vector<72x256xf32>
    %36 = vector.extract_strided_slice %35 {offsets = [32, 0], sizes = [8, 256], strides = [1, 1]} : vector<72x256xf32> to vector<8x256xf32>
    %37 = vector.extract_strided_slice %35 {offsets = [0, 0], sizes = [8, 256], strides = [1, 1]} : vector<72x256xf32> to vector<8x256xf32>
    %c17_i32 = arith.constant 17 : i32
    %38 = tpu.dynamic_rotate %37 by %c17_i32 dim 1 : vector<8x256xf32>, i32 -> vector<8x256xf32>
    %39 = arith.addf %36, %38 : vector<8x256xf32>
    %40 = vector.extract_strided_slice %35 {offsets = [8, 0], sizes = [8, 256], strides = [1, 1]} : vector<72x256xf32> to vector<8x256xf32>
    %c16_i32 = arith.constant 16 : i32
    %41 = tpu.dynamic_rotate %40 by %c16_i32 dim 1 : vector<8x256xf32>, i32 -> vector<8x256xf32>
    %42 = arith.addf %39, %41 : vector<8x256xf32>
    %43 = vector.extract_strided_slice %35 {offsets = [16, 0], sizes = [8, 256], strides = [1, 1]} : vector<72x256xf32> to vector<8x256xf32>
    %c15_i32 = arith.constant 15 : i32
    %44 = tpu.dynamic_rotate %43 by %c15_i32 dim 1 : vector<8x256xf32>, i32 -> vector<8x256xf32>
    %45 = arith.addf %42, %44 : vector<8x256xf32>
    %46 = vector.extract_strided_slice %35 {offsets = [24, 0], sizes = [8, 256], strides = [1, 1]} : vector<72x256xf32> to vector<8x256xf32>
    %c1_i32 = arith.constant 1 : i32
    %47 = tpu.dynamic_rotate %46 by %c1_i32 dim 1 : vector<8x256xf32>, i32 -> vector<8x256xf32>
    %48 = arith.addf %45, %47 : vector<8x256xf32>
    %49 = vector.extract_strided_slice %35 {offsets = [40, 0], sizes = [8, 256], strides = [1, 1]} : vector<72x256xf32> to vector<8x256xf32>
    %c255_i32 = arith.constant 255 : i32
    %50 = tpu.dynamic_rotate %49 by %c255_i32 dim 1 : vector<8x256xf32>, i32 -> vector<8x256xf32>
    %51 = arith.addf %48, %50 : vector<8x256xf32>
    %52 = vector.extract_strided_slice %35 {offsets = [48, 0], sizes = [8, 256], strides = [1, 1]} : vector<72x256xf32> to vector<8x256xf32>
    %c241_i32 = arith.constant 241 : i32
    %53 = tpu.dynamic_rotate %52 by %c241_i32 dim 1 : vector<8x256xf32>, i32 -> vector<8x256xf32>
    %54 = arith.addf %51, %53 : vector<8x256xf32>
    %55 = vector.extract_strided_slice %35 {offsets = [56, 0], sizes = [8, 256], strides = [1, 1]} : vector<72x256xf32> to vector<8x256xf32>
    %c240_i32 = arith.constant 240 : i32
    %56 = tpu.dynamic_rotate %55 by %c240_i32 dim 1 : vector<8x256xf32>, i32 -> vector<8x256xf32>
    %57 = arith.addf %54, %56 : vector<8x256xf32>
    %58 = vector.extract_strided_slice %35 {offsets = [64, 0], sizes = [8, 256], strides = [1, 1]} : vector<72x256xf32> to vector<8x256xf32>
    %c239_i32 = arith.constant 239 : i32
    %59 = tpu.dynamic_rotate %58 by %c239_i32 dim 1 : vector<8x256xf32>, i32 -> vector<8x256xf32>
    %60 = arith.addf %57, %59 : vector<8x256xf32>
    %c0_15 = arith.constant 0 : index
    %c0_16 = arith.constant 0 : index
    %61 = vector.load %arg8[%c0_15, %c0_16] : memref<8x1xf32, #tpu.memory_space<vmem>>, vector<8x1xf32>
    %62 = vector.broadcast %61 : vector<8x1xf32> to vector<8x256xf32>
    %63 = arith.mulf %60, %62 : vector<8x256xf32>
    %c0_17 = arith.constant 0 : index
    %c0_18 = arith.constant 0 : index
    %64 = vector.load %arg9[%c0_17, %c0_18] : memref<8x1xf32, #tpu.memory_space<vmem>>, vector<8x1xf32>
    %65 = vector.broadcast %64 : vector<8x1xf32> to vector<8x256xf32>
    %66 = arith.addf %63, %65 : vector<8x256xf32>
    %c0_19 = arith.constant 0 : index
    %c0_20 = arith.constant 0 : index
    %67 = vector.load %arg10[%c0_19, %c0_20] : memref<8x256xf32, #tpu.memory_space<vmem>>, vector<8x256xf32>
    tpu.vector_store %arg10[%c0_19, %c0_20], %66 {strides = array<i32>} : memref<8x256xf32, #tpu.memory_space<vmem>>, vector<8x256xf32>,
    return
  }
  func.func @transform_0(%arg0: i32) -> (i32, i32) {
    %c0_i32 = arith.constant 0 : i32
    %c0_i32_0 = arith.constant 0 : i32
    return %c0_i32, %arg0 : i32, i32
  }
  func.func @transform_1(%arg0: i32) -> (i32, i32) {
    %c0_i32 = arith.constant 0 : i32
    %c0_i32_0 = arith.constant 0 : i32
    %c0_i32_1 = arith.constant 0 : i32
    return %c0_i32, %c0_i32_0 : i32, i32
  }
  func.func @transform_2(%arg0: i32) -> (i32, i32) {
    %c0_i32 = arith.constant 0 : i32
    %c0_i32_0 = arith.constant 0 : i32
    %c0_i32_1 = arith.constant 0 : i32
    return %c0_i32, %c0_i32_0 : i32, i32
  }
  func.func @transform_3(%arg0: i32) -> (i32, i32) {
    %c0_i32 = arith.constant 0 : i32
    %c0_i32_0 = arith.constant 0 : i32
    %c0_i32_1 = arith.constant 0 : i32
    return %c0_i32, %c0_i32_0 : i32, i32
  }
  func.func @transform_4(%arg0: i32) -> (i32, i32) {
    %c0_i32 = arith.constant 0 : i32
    %c0_i32_0 = arith.constant 0 : i32
    %c0_i32_1 = arith.constant 0 : i32
    return %c0_i32, %c0_i32_0 : i32, i32
  }
  func.func @transform_5(%arg0: i32) -> (i32, i32) {
    %c0_i32 = arith.constant 0 : i32
    %c0_i32_0 = arith.constant 0 : i32
    %c0_i32_1 = arith.constant 0 : i32
    return %c0_i32, %c0_i32_0 : i32, i32
  }
  func.func @transform_6(%arg0: i32) -> (i32, i32) {
    %c0_i32 = arith.constant 0 : i32
    %c0_i32_0 = arith.constant 0 : i32
    %c0_i32_1 = arith.constant 0 : i32
    return %c0_i32, %c0_i32_0 : i32, i32
  }
  func.func @transform_7(%arg0: i32) -> (i32, i32) {
    %c0_i32 = arith.constant 0 : i32
    %c0_i32_0 = arith.constant 0 : i32
    %c0_i32_1 = arith.constant 0 : i32
    return %c0_i32, %c0_i32_0 : i32, i32
  }
  func.func @transform_8(%arg0: i32) -> (i32, i32) {
    %c0_i32 = arith.constant 0 : i32
    %c0_i32_0 = arith.constant 0 : i32
    %c0_i32_1 = arith.constant 0 : i32
    return %c0_i32, %c0_i32_0 : i32, i32
  }
  func.func @transform_9(%arg0: i32) -> (i32, i32) {
    %c0_i32 = arith.constant 0 : i32
    %c0_i32_0 = arith.constant 0 : i32
    return %c0_i32, %arg0 : i32, i32
  }
}

</mosaic_0001>

<llo_original>
// kernel: tpu_custom_call.1
$region0: #{tpu_custom_call.1}
  #allocation0 [shape = 'u32[]', space=smem, size = 0x4, offset = 0x4, fixed_abs, tag = 'smem constant byte address 0x4 - core index']
  #allocation1 [shape = 'u32[144,128]{1,0:T(1,128)}', space=vmem, size = 0x12000, scoped, tag = 'internal scratch']
  %s0 = inlined_call_operand.vmem [shape: f32[4,512], index: 0, kind: input, shape index: {}]
  %s1 = inlined_call_operand.vmem [shape: f32[256,50], index: 1, kind: input, shape index: {}]
  %s2 = inlined_call_operand.vmem [shape: f32[32,4], index: 2, kind: input, shape index: {}]
  %s3 = inlined_call_operand.vmem [shape: f32[32,50], index: 3, kind: input, shape index: {}]
  %s4 = inlined_call_operand.vmem [shape: f32[50,256], index: 4, kind: input, shape index: {}]
  %s5 = inlined_call_operand.vmem [shape: f32[72,36], index: 5, kind: input, shape index: {}]
  %s6 = inlined_call_operand.vmem [shape: f32[72,256], index: 6, kind: input, shape index: {}]
  %s7 = inlined_call_operand.vmem [shape: f32[8,1], index: 7, kind: input, shape index: {}]
  %s8 = inlined_call_operand.vmem [shape: f32[8,1], index: 8, kind: input, shape index: {}]
  %s9 = inlined_call_operand.hbm [shape: f32[8,512], index: 9, kind: output, shape index: {}]
  %s10 = sld [smem:[#allocation0]]
  $region69: #{tpu_custom_call.1} parent=0
    _
  %s12 = ssub.s32 1, %s10
  %s13 = scalar_select 0, %s12, %s10
  $region1: #{tpu_custom_call.1} parent=0
    #allocation2 [shape = 'u8[16384]{0}', space=vmem, size = 0x4000, scoped, tag = 'output window, operand 0']
    #allocation3 [shape = 's32[2]{0}', space=sflag, size = 0x8, scoped, tag = 'scoped memory for tpu_custom_call.1']
    %14 = vsyncpa [#allocation3], 0
    %s15 = scalar_lea.sflag [#allocation3], 1
    %16 = vsyncpa %s15, 0
    loop: start=0, step=1, limit=4
    $region2: #{tpu_custom_call.1} parent=1 // loop_pre_header
      _
    $region3: #{tpu_custom_call.1} parent=1 // loop_header
      %s18 = sphi 0, %s22
      %p19 = scmp.ge.s32.totalorder %s18, 4
      %s28 = sphi 0, %s30
      %s31 = sphi 0, %s28
      %s32 = sphi 0, %s31
      %s48 = sphi 0, %s32
      %s52 = sphi 0, %s52
      %s54 = sphi 0, %s52
      %s55 = sphi 0, %s54
      %s69 = sphi 0, %s55
      %s73 = sphi 0, %s73
      %s75 = sphi 0, %s73
      %s76 = sphi 0, %s75
      %s90 = sphi 0, %s76
      %s94 = sphi 0, %s94
      %s96 = sphi 0, %s94
      %s97 = sphi 0, %s96
      %s111 = sphi 0, %s97
      %s115 = sphi 0, %s115
      %s117 = sphi 0, %s115
      %s118 = sphi 0, %s117
      %s132 = sphi 0, %s118
      %s136 = sphi 0, %s136
      %s138 = sphi 0, %s136
      %s139 = sphi 0, %s138
      %s153 = sphi 0, %s139
      %s157 = sphi 0, %s157
      %s159 = sphi 0, %s157
      %s160 = sphi 0, %s159
      %s174 = sphi 0, %s160
      %s178 = sphi 0, %s178
      %s180 = sphi 0, %s178
      %s181 = sphi 0, %s180
      %s195 = sphi 0, %s181
      %s199 = sphi 0, %s199
      %s201 = sphi 0, %s199
      %s202 = sphi 0, %s201
      %s216 = sphi 0, %s202
      %s222 = sphi 0, %s224
      %s225 = sphi 0, %s222
      %s226 = sphi 0, %s225
      %s242 = sphi 0, %s226
    $region4: #{tpu_custom_call.1} parent=1 // loop_header_branch
      %21 = sbr.rel (%p19) target = $region8
    $region5: #{tpu_custom_call.1} parent=1 // loop_body
      %s23 = ssub.s32 %s18, 1
      %s24 = ssub.s32 %s18, 2
      %s25 = sadd.s32 %s18, 1
      %s26 = ssub.s32 %s18, %s25
      %p27 = scmp.eq.s32.totalorder %s26, 0
      %s29 = sadd.s32 %s28, 1
      %s30 = scalar_select %p27, %s28, %s29
      %p33 = pneg %p27
      %p34 = scmp.eq.s32.totalorder %s18, 1
      %p35 = por %p33, %p34
      %p36 = scmp.ne.s32.totalorder %s28, %s31
      %p37 = scmp.eq.s32.totalorder %s18, 0
      %p38 = por %p36, %p37
      %p39 = scmp.ne.s32.totalorder %s28, %s31
      %p40 = scmp.eq.s32.totalorder %s23, 1
      %p41 = por %p39, %p40
      %p42 = scmp.ne.s32.totalorder %s31, %s32
      %p43 = scmp.eq.s32.totalorder %s23, 0
      %p44 = por %p42, %p43
      %p45 = scmp.ne.s32.totalorder %s31, %s32
      %p46 = scmp.eq.s32.totalorder %s24, 1
      %p47 = por %p45, %p46
      %p49 = scmp.ne.s32.totalorder %s32, %s48
      %p50 = scmp.eq.s32.totalorder %s24, 0
      %p51 = por %p49, %p50
      %s53 = sadd.s32 %s52, 1
      %p56 = scmp.eq.s32.totalorder %s18, 1
      %p57 = scmp.ne.s32.totalorder %s52, %s54
      %p58 = scmp.eq.s32.totalorder %s18, 0
      %p59 = por %p57, %p58
      %p60 = scmp.ne.s32.totalorder %s52, %s54
      %p61 = scmp.eq.s32.totalorder %s23, 1
      %p62 = por %p60, %p61
      %p63 = scmp.ne.s32.totalorder %s54, %s55
      %p64 = scmp.eq.s32.totalorder %s23, 0
      %p65 = por %p63, %p64
      %p66 = scmp.ne.s32.totalorder %s54, %s55
      %p67 = scmp.eq.s32.totalorder %s24, 1
      %p68 = por %p66, %p67
      %p70 = scmp.ne.s32.totalorder %s55, %s69
      %p71 = scmp.eq.s32.totalorder %s24, 0
      %p72 = por %p70, %p71
      %s74 = sadd.s32 %s73, 1
      %p77 = scmp.eq.s32.totalorder %s18, 1
      %p78 = scmp.ne.s32.totalorder %s73, %s75
      %p79 = scmp.eq.s32.totalorder %s18, 0
      %p80 = por %p78, %p79
      %p81 = scmp.ne.s32.totalorder %s73, %s75
      %p82 = scmp.eq.s32.totalorder %s23, 1
      %p83 = por %p81, %p82
      %p84 = scmp.ne.s32.totalorder %s75, %s76
      %p85 = scmp.eq.s32.totalorder %s23, 0
      %p86 = por %p84, %p85
      %p87 = scmp.ne.s32.totalorder %s75, %s76
      %p88 = scmp.eq.s32.totalorder %s24, 1
      %p89 = por %p87, %p88
      %p91 = scmp.ne.s32.totalorder %s76, %s90
      %p92 = scmp.eq.s32.totalorder %s24, 0
      %p93 = por %p91, %p92
      %s95 = sadd.s32 %s94, 1
      %p98 = scmp.eq.s32.totalorder %s18, 1
      %p99 = scmp.ne.s32.totalorder %s94, %s96
      %p100 = scmp.eq.s32.totalorder %s18, 0
      %p101 = por %p99, %p100
      %p102 = scmp.ne.s32.totalorder %s94, %s96
      %p103 = scmp.eq.s32.totalorder %s23, 1
      %p104 = por %p102, %p103
      %p105 = scmp.ne.s32.totalorder %s96, %s97
      %p106 = scmp.eq.s32.totalorder %s23, 0
      %p107 = por %p105, %p106
      %p108 = scmp.ne.s32.totalorder %s96, %s97
      %p109 = scmp.eq.s32.totalorder %s24, 1
      %p110 = por %p108, %p109
      %p112 = scmp.ne.s32.totalorder %s97, %s111
      %p113 = scmp.eq.s32.totalorder %s24, 0
      %p114 = por %p112, %p113
      %s116 = sadd.s32 %s115, 1
      %p119 = scmp.eq.s32.totalorder %s18, 1
      %p120 = scmp.ne.s32.totalorder %s115, %s117
      %p121 = scmp.eq.s32.totalorder %s18, 0
      %p122 = por %p120, %p121
      %p123 = scmp.ne.s32.totalorder %s115, %s117
      %p124 = scmp.eq.s32.totalorder %s23, 1
      %p125 = por %p123, %p124
      %p126 = scmp.ne.s32.totalorder %s117, %s118
      %p127 = scmp.eq.s32.totalorder %s23, 0
      %p128 = por %p126, %p127
      %p129 = scmp.ne.s32.totalorder %s117, %s118
      %p130 = scmp.eq.s32.totalorder %s24, 1
      %p131 = por %p129, %p130
      %p133 = scmp.ne.s32.totalorder %s118, %s132
      %p134 = scmp.eq.s32.totalorder %s24, 0
      %p135 = por %p133, %p134
      %s137 = sadd.s32 %s136, 1
      %p140 = scmp.eq.s32.totalorder %s18, 1
      %p141 = scmp.ne.s32.totalorder %s136, %s138
      %p142 = scmp.eq.s32.totalorder %s18, 0
      %p143 = por %p141, %p142
      %p144 = scmp.ne.s32.totalorder %s136, %s138
      %p145 = scmp.eq.s32.totalorder %s23, 1
      %p146 = por %p144, %p145
      %p147 = scmp.ne.s32.totalorder %s138, %s139
      %p148 = scmp.eq.s32.totalorder %s23, 0
      %p149 = por %p147, %p148
      %p150 = scmp.ne.s32.totalorder %s138, %s139
      %p151 = scmp.eq.s32.totalorder %s24, 1
      %p152 = por %p150, %p151
      %p154 = scmp.ne.s32.totalorder %s139, %s153
      %p155 = scmp.eq.s32.totalorder %s24, 0
      %p156 = por %p154, %p155
      %s158 = sadd.s32 %s157, 1
      %p161 = scmp.eq.s32.totalorder %s18, 1
      %p162 = scmp.ne.s32.totalorder %s157, %s159
      %p163 = scmp.eq.s32.totalorder %s18, 0
      %p164 = por %p162, %p163
      %p165 = scmp.ne.s32.totalorder %s157, %s159
      %p166 = scmp.eq.s32.totalorder %s23, 1
      %p167 = por %p165, %p166
      %p168 = scmp.ne.s32.totalorder %s159, %s160
      %p169 = scmp.eq.s32.totalorder %s23, 0
      %p170 = por %p168, %p169
      %p171 = scmp.ne.s32.totalorder %s159, %s160
      %p172 = scmp.eq.s32.totalorder %s24, 1
      %p173 = por %p171, %p172
      %p175 = scmp.ne.s32.totalorder %s160, %s174
      %p176 = scmp.eq.s32.totalorder %s24, 0
      %p177 = por %p175, %p176
      %s179 = sadd.s32 %s178, 1
      %p182 = scmp.eq.s32.totalorder %s18, 1
      %p183 = scmp.ne.s32.totalorder %s178, %s180
      %p184 = scmp.eq.s32.totalorder %s18, 0
      %p185 = por %p183, %p184
      %p186 = scmp.ne.s32.totalorder %s178, %s180
      %p187 = scmp.eq.s32.totalorder %s23, 1
      %p188 = por %p186, %p187
      %p189 = scmp.ne.s32.totalorder %s180, %s181
      %p190 = scmp.eq.s32.totalorder %s23, 0
      %p191 = por %p189, %p190
      %p192 = scmp.ne.s32.totalorder %s180, %s181
      %p193 = scmp.eq.s32.totalorder %s24, 1
      %p194 = por %p192, %p193
      %p196 = scmp.ne.s32.totalorder %s181, %s195
      %p197 = scmp.eq.s32.totalorder %s24, 0
      %p198 = por %p196, %p197
      %s200 = sadd.s32 %s199, 1
      %p203 = scmp.eq.s32.totalorder %s18, 1
      %p204 = scmp.ne.s32.totalorder %s199, %s201
      %p205 = scmp.eq.s32.totalorder %s18, 0
      %p206 = por %p204, %p205
      %p207 = scmp.ne.s32.totalorder %s199, %s201
      %p208 = scmp.eq.s32.totalorder %s23, 1
      %p209 = por %p207, %p208
      %p210 = scmp.ne.s32.totalorder %s201, %s202
      %p211 = scmp.eq.s32.totalorder %s23, 0
      %p212 = por %p210, %p211
      %p213 = scmp.ne.s32.totalorder %s201, %s202
      %p214 = scmp.eq.s32.totalorder %s24, 1
      %p215 = por %p213, %p214
      %p217 = scmp.ne.s32.totalorder %s202, %s216
      %p218 = scmp.eq.s32.totalorder %s24, 0
      %p219 = por %p217, %p218
      %s220 = ssub.s32 %s18, %s25
      %p221 = scmp.eq.s32.totalorder %s220, 0
      %s223 = sadd.s32 %s222, 1
      %s224 = scalar_select %p221, %s222, %s223
      %p227 = pneg %p221
      %p228 = scmp.eq.s32.totalorder %s18, 1
      %p229 = por %p227, %p228
      %p230 = scmp.ne.s32.totalorder %s222, %s225
      %p231 = scmp.eq.s32.totalorder %s18, 0
      %p232 = por %p230, %p231
      %p233 = scmp.ne.s32.totalorder %s222, %s225
      %p234 = scmp.eq.s32.totalorder %s23, 1
      %p235 = por %p233, %p234
      %p236 = scmp.ne.s32.totalorder %s225, %s226
      %p237 = scmp.eq.s32.totalorder %s23, 0
      %p238 = por %p236, %p237
      %p239 = scmp.ne.s32.totalorder %s225, %s226
      %p240 = scmp.eq.s32.totalorder %s24, 1
      %p241 = por %p239, %p240
      %p243 = scmp.ne.s32.totalorder %s226, %s242
      %p244 = scmp.eq.s32.totalorder %s24, 0
      %p245 = por %p243, %p244
      %p246 = scmp.le.s32.totalorder 1, %s18
      %p247 = scmp.lt.s32.totalorder %s18, 3
      %p248 = pnand %p246, %p247
      %p249 = pneg %p248
      // Predicated region
      $region9: #{tpu_custom_call.1} parent=5 // pred_check
        _
      $region10: #{tpu_custom_call.1} parent=5 // pred_check_branch
        %251 = sbr.rel (%p248) target = $region12
      $region11: #{tpu_custom_call.1} parent=5 // pred_region
        %s252 = ssub.s32 %s18, 1
        // Predicated region
        $region13: #{tpu_custom_call.1} parent=11 // pred_check
          %p253 = pneg %p65
        $region14: #{tpu_custom_call.1} parent=11 // pred_check_branch
          %255 = sbr.rel (%p253) target = $region16
        $region15: #{tpu_custom_call.1} parent=11 // pred_region
          _
        $region16: #{tpu_custom_call.1} parent=11 // pred_fallthru
          _
        // Predicated region
        $region17: #{tpu_custom_call.1} parent=11 // pred_check
          %p256 = pneg %p86
        $region18: #{tpu_custom_call.1} parent=11 // pred_check_branch
          %258 = sbr.rel (%p256) target = $region20
        $region19: #{tpu_custom_call.1} parent=11 // pred_region
          _
        $region20: #{tpu_custom_call.1} parent=11 // pred_fallthru
          _
        // Predicated region
        $region21: #{tpu_custom_call.1} parent=11 // pred_check
          %p259 = pneg %p107
        $region22: #{tpu_custom_call.1} parent=11 // pred_check_branch
          %261 = sbr.rel (%p259) target = $region24
        $region23: #{tpu_custom_call.1} parent=11 // pred_region
          _
        $region24: #{tpu_custom_call.1} parent=11 // pred_fallthru
          _
        // Predicated region
        $region25: #{tpu_custom_call.1} parent=11 // pred_check
          %p262 = pneg %p128
        $region26: #{tpu_custom_call.1} parent=11 // pred_check_branch
          %264 = sbr.rel (%p262) target = $region28
        $region27: #{tpu_custom_call.1} parent=11 // pred_region
          _
        $region28: #{tpu_custom_call.1} parent=11 // pred_fallthru
          _
        // Predicated region
        $region29: #{tpu_custom_call.1} parent=11 // pred_check
          %p265 = pneg %p149
        $region30: #{tpu_custom_call.1} parent=11 // pred_check_branch
          %267 = sbr.rel (%p265) target = $region32
        $region31: #{tpu_custom_call.1} parent=11 // pred_region
          _
        $region32: #{tpu_custom_call.1} parent=11 // pred_fallthru
          _
        // Predicated region
        $region33: #{tpu_custom_call.1} parent=11 // pred_check
          %p268 = pneg %p170
        $region34: #{tpu_custom_call.1} parent=11 // pred_check_branch
          %270 = sbr.rel (%p268) target = $region36
        $region35: #{tpu_custom_call.1} parent=11 // pred_region
          _
        $region36: #{tpu_custom_call.1} parent=11 // pred_fallthru
          _
        // Predicated region
        $region37: #{tpu_custom_call.1} parent=11 // pred_check
          %p271 = pneg %p191
        $region38: #{tpu_custom_call.1} parent=11 // pred_check_branch
          %273 = sbr.rel (%p271) target = $region40
        $region39: #{tpu_custom_call.1} parent=11 // pred_region
          _
        $region40: #{tpu_custom_call.1} parent=11 // pred_fallthru
          _
        // Predicated region
        $region41: #{tpu_custom_call.1} parent=11 // pred_check
          %p274 = pneg %p212
        $region42: #{tpu_custom_call.1} parent=11 // pred_check_branch
          %276 = sbr.rel (%p274) target = $region44
        $region43: #{tpu_custom_call.1} parent=11 // pred_region
          _
        $region44: #{tpu_custom_call.1} parent=11 // pred_fallthru
          _
      $region12: #{tpu_custom_call.1} parent=5 // pred_fallthru
        _
      %p277 = scmp.lt.s32.totalorder %s18, 2
      // Predicated region
      $region45: #{tpu_custom_call.1} parent=5 // pred_check
        %p278 = pneg %p277
      $region46: #{tpu_custom_call.1} parent=5 // pred_check_branch
        %280 = sbr.rel (%p278) target = $region48
      $region47: #{tpu_custom_call.1} parent=5 // pred_region
        // Predicated region
        $region49: #{tpu_custom_call.1} parent=47 // pred_check
          %p281 = pneg %p38
        $region50: #{tpu_custom_call.1} parent=47 // pred_check_branch
          %283 = sbr.rel (%p281) target = $region52
        $region51: #{tpu_custom_call.1} parent=47 // pred_region
          %s284 = smul.u32 2, %s18
          %p285 = scmp.lt.s32.totalorder %s284, 3
          %s286 = scalar_select %p285, %s284, 3
          %s287 = smul.addr %s286, 4
          %s288 = scalar_lea.vmem %s0, %s287
          %s289 = smul.u32 2, %s18
        $region52: #{tpu_custom_call.1} parent=47 // pred_fallthru
          _
      $region48: #{tpu_custom_call.1} parent=5 // pred_fallthru
        _
      %p290 = scmp.le.s32.totalorder 1, %s18
      %p291 = scmp.lt.s32.totalorder %s18, 3
      %p292 = pnand %p290, %p291
      %p293 = pneg %p292
      // Predicated region
      $region53: #{tpu_custom_call.1} parent=5 // pred_check
        _
      $region54: #{tpu_custom_call.1} parent=5 // pred_check_branch
        %295 = sbr.rel (%p292) target = $region56
      $region55: #{tpu_custom_call.1} parent=5 // pred_region
        %s296 = ssub.s32 %s18, 1
        %s297 = smul.u32 2, %s23
        %p298 = scmp.lt.s32.totalorder %s297, 3
        %s299 = scalar_select %p298, %s297, 3
        %s300 = smul.addr %s299, 4
        %s301 = scalar_lea.vmem %s0, %s300
        %p302 = pneg %p44
        %p303 = pneg %p41
        %p304 = pneg %p65
        %p305 = pneg %p62
        %p306 = pneg %p86
        %p307 = pneg %p83
        %p308 = pneg %p107
        %p309 = pneg %p104
        %p310 = pneg %p128
        %p311 = pneg %p125
        %p312 = pneg %p149
        %p313 = pneg %p146
        %p314 = pneg %p170
        %p315 = pneg %p167
        %p316 = pneg %p191
        %p317 = pneg %p188
        %p318 = pneg %p212
        %p319 = pneg %p209
        %p320 = pneg %p238
        %p321 = pneg %p235
        %s322 = sand.u32 %s225, 1
        %s323 = scalar_lea.sflag [#allocation3], %s322
        %s324 = sand.u32 %s225, 1
        %s325 = smul.addr %s324, 16
        %s326 = scalar_lea.vmem [#allocation2], %s325
        %s327 = smul.u32 2, %s23
        %p328 = scmp.lt.s32.totalorder %s327, 3
        %s329 = scalar_select %p328, %s327, 3
        %s330 = smul.addr %s329, 4
        %s331 = scalar_lea.vmem %s0, %s330
        %s332 = smul.u32 2, %s23
        %s333 = smul.u32 2, %s23
        %v334 = vld [vmem:[%s331] sm:$0xff]
        %v335 = vld [vmem:[%s1] sm:$0xff]
        %v336 = vld [vmem:[%s1 + $0x8] sm:$0xff]
        %v337 = vld [vmem:[%s1 + $0x10] sm:$0xff]
        %v338 = vld [vmem:[%s1 + $0x18] sm:$0xff]
        %v339 = vld [vmem:[%s1 + $0x20] sm:$0xff]
        %v340 = vld [vmem:[%s1 + $0x28] sm:$0xff]
        %v341 = vld [vmem:[%s1 + $0x30] sm:$0xff]
        %v342 = vld [vmem:[%s1 + $0x38] sm:$0xff]
        %v343 = vld [vmem:[%s1 + $0x40] sm:$0xff]
        %v344 = vld [vmem:[%s1 + $0x48] sm:$0xff]
        %v345 = vld [vmem:[%s1 + $0x50] sm:$0xff]
        %v346 = vld [vmem:[%s1 + $0x58] sm:$0xff]
        %v347 = vld [vmem:[%s1 + $0x60] sm:$0xff]
        %v348 = vld [vmem:[%s1 + $0x68] sm:$0xff]
        %v349 = vld [vmem:[%s1 + $0x70] sm:$0xff]
        %v350 = vld [vmem:[%s1 + $0x78] sm:$0xff]
        %v351 = vld [vmem:[%s1 + $0x80] sm:$0xff]
        %v352 = vld [vmem:[%s1 + $0x88] sm:$0xff]
        %v353 = vld [vmem:[%s1 + $0x90] sm:$0xff]
        %v354 = vld [vmem:[%s1 + $0x98] sm:$0xff]
        %v355 = vld [vmem:[%s1 + $0xa0] sm:$0xff]
        %v356 = vld [vmem:[%s1 + $0xa8] sm:$0xff]
        %v357 = vld [vmem:[%s1 + $0xb0] sm:$0xff]
        %v358 = vld [vmem:[%s1 + $0xb8] sm:$0xff]
        %v359 = vld [vmem:[%s1 + $0xc0] sm:$0xff]
        %v360 = vld [vmem:[%s1 + $0xc8] sm:$0xff]
        %v361 = vld [vmem:[%s1 + $0xd0] sm:$0xff]
        %v362 = vld [vmem:[%s1 + $0xd8] sm:$0xff]
        %v363 = vld [vmem:[%s1 + $0xe0] sm:$0xff]
        %v364 = vld [vmem:[%s1 + $0xe8] sm:$0xff]
        %v365 = vld [vmem:[%s1 + $0xf0] sm:$0xff]
        %v366 = vld [vmem:[%s1 + $0xf8] sm:$0xff]
        %v368 = vcombine.high %v334, %v334
        %370 = vmatprep.subr.mxu0 0.0
        %v371 = vand.u32 %v335, 4294901760
        %372 = vmatpush1.msra.mxu0 %v371
        %373 = vmatprep.subr.mxu0 0.0
        %v374 = vand.u32 %v336, 4294901760
        %375 = vmatpush1.msra.mxu0 %v374
        %376 = vmatprep.subr.mxu0 0.0
        %v377 = vand.u32 %v337, 4294901760
        %378 = vmatpush1.msra.mxu0 %v377
        %379 = vmatprep.subr.mxu0 0.0
        %v380 = vand.u32 %v338, 4294901760
        %381 = vmatpush1.msra.mxu0 %v380
        %382 = vmatprep.subr.mxu0 0.0
        %v383 = vand.u32 %v339, 4294901760
        %384 = vmatpush1.msra.mxu0 %v383
        %385 = vmatprep.subr.mxu0 0.0
        %v386 = vand.u32 %v340, 4294901760
        %387 = vmatpush1.msra.mxu0 %v386
        %388 = vmatprep.subr.mxu0 0.0
        %v389 = vand.u32 %v341, 4294901760
        %390 = vmatpush1.msra.mxu0 %v389
        %391 = vmatprep.subr.mxu0 0.0
        %v392 = vand.u32 %v342, 4294901760
        %393 = vmatpush1.msra.mxu0 %v392
        %394 = vmatprep.subr.mxu0 0.0
        %v395 = vand.u32 %v343, 4294901760
        %396 = vmatpush1.msra.mxu0 %v395
        %397 = vmatprep.subr.mxu0 0.0
        %v398 = vand.u32 %v344, 4294901760
        %399 = vmatpush1.msra.mxu0 %v398
        %400 = vmatprep.subr.mxu0 0.0
        %v401 = vand.u32 %v345, 4294901760
        %402 = vmatpush1.msra.mxu0 %v401
        %403 = vmatprep.subr.mxu0 0.0
        %v404 = vand.u32 %v346, 4294901760
        %405 = vmatpush1.msra.mxu0 %v404
        %406 = vmatprep.subr.mxu0 0.0
        %v407 = vand.u32 %v347, 4294901760
        %408 = vmatpush1.msra.mxu0 %v407
        %409 = vmatprep.subr.mxu0 0.0
        %v410 = vand.u32 %v348, 4294901760
        %411 = vmatpush1.msra.mxu0 %v410
        %412 = vmatprep.subr.mxu0 0.0
        %v413 = vand.u32 %v349, 4294901760
        %414 = vmatpush1.msra.mxu0 %v413
        %415 = vmatprep.subr.mxu0 0.0
        %v416 = vand.u32 %v350, 4294901760
        %417 = vmatpush1.msra.mxu0 %v416
        %418 = vmatprep.subr.mxu0 0.0
        %v419 = vand.u32 %v351, 4294901760
        %420 = vmatpush1.msra.mxu0 %v419
        %421 = vmatprep.subr.mxu0 0.0
        %v422 = vand.u32 %v352, 4294901760
        %423 = vmatpush1.msra.mxu0 %v422
        %424 = vmatprep.subr.mxu0 0.0
        %v425 = vand.u32 %v353, 4294901760
        %426 = vmatpush1.msra.mxu0 %v425
        %427 = vmatprep.subr.mxu0 0.0
        %v428 = vand.u32 %v354, 4294901760
        %429 = vmatpush1.msra.mxu0 %v428
        %430 = vmatprep.subr.mxu0 0.0
        %v431 = vand.u32 %v355, 4294901760
        %432 = vmatpush1.msra.mxu0 %v431
        %433 = vmatprep.subr.mxu0 0.0
        %v434 = vand.u32 %v356, 4294901760
        %435 = vmatpush1.msra.mxu0 %v434
        %436 = vmatprep.subr.mxu0 0.0
        %v437 = vand.u32 %v357, 4294901760
        %438 = vmatpush1.msra.mxu0 %v437
        %439 = vmatprep.subr.mxu0 0.0
        %v440 = vand.u32 %v358, 4294901760
        %441 = vmatpush1.msra.mxu0 %v440
        %442 = vmatprep.subr.mxu0 0.0
        %v443 = vand.u32 %v359, 4294901760
        %444 = vmatpush1.msra.mxu0 %v443
        %445 = vmatprep.subr.mxu0 0.0
        %v446 = vand.u32 %v360, 4294901760
        %447 = vmatpush1.msra.mxu0 %v446
        %448 = vmatprep.subr.mxu0 0.0
        %v449 = vand.u32 %v361, 4294901760
        %450 = vmatpush1.msra.mxu0 %v449
        %451 = vmatprep.subr.mxu0 0.0
        %v452 = vand.u32 %v362, 4294901760
        %453 = vmatpush1.msra.mxu0 %v452
        %454 = vmatprep.subr.mxu0 0.0
        %v455 = vand.u32 %v363, 4294901760
        %456 = vmatpush1.msra.mxu0 %v455
        %457 = vmatprep.subr.mxu0 0.0
        %v458 = vand.u32 %v364, 4294901760
        %459 = vmatpush1.msra.mxu0 %v458
        %460 = vmatprep.subr.mxu0 0.0
        %v461 = vand.u32 %v365, 4294901760
        %462 = vmatpush1.msra.mxu0 %v461
        %463 = vmatprep.subr.mxu0 0.0
        %v464 = vand.u32 %v366, 4294901760
        %465 = vmatpush1.msra.mxu0 %v464
        %v466 = vand.u32 %v368, 4294901760
        %v467 = vsub.f32 %v368, %v466
        %v468 = vand.u32 %v467, 4294901760
        %v469 = vsub.f32 %v467, %v468
        %v470 = vand.u32 %v469, 4294901760
        %471 = vmatprep.mubr.f32.mxu0 %v470
        %v472 = vand.u32 %v334, 4294901760
        %v473 = vsub.f32 %v334, %v472
        %v474 = vand.u32 %v473, 4294901760
        %v475 = vsub.f32 %v473, %v474
        %v476 = vand.u32 %v475, 4294901760
        %477 = vmatmul.mubr.f32.gmra.mrb[0].mxu0 %v476
        %v478 = vpop.f32.mrb[0].mxu0
        %v479 = vadd.f32 0.0, %v478
        %v480 = vpop.f32.mrb[0].mxu0
        %481 = vdwg.mxu0
        %482 = vmatprep.subr.mxu0 0.0
        %v483 = vand.u32 %v335, 4294901760
        %v484 = vsub.f32 %v335, %v483
        %v485 = vand.u32 %v484, 4294901760
        %v486 = vsub.f32 %v484, %v485
        %v487 = vand.u32 %v486, 4294901760
        %488 = vmatpush1.msra.mxu0 %v487
        %489 = vmatprep.subr.mxu0 0.0
        %v490 = vand.u32 %v336, 4294901760
        %v491 = vsub.f32 %v336, %v490
        %v492 = vand.u32 %v491, 4294901760
        %v493 = vsub.f32 %v491, %v492
        %v494 = vand.u32 %v493, 4294901760
        %495 = vmatpush1.msra.mxu0 %v494
        %496 = vmatprep.subr.mxu0 0.0
        %v497 = vand.u32 %v337, 4294901760
        %v498 = vsub.f32 %v337, %v497
        %v499 = vand.u32 %v498, 4294901760
        %v500 = vsub.f32 %v498, %v499
        %v501 = vand.u32 %v500, 4294901760
        %502 = vmatpush1.msra.mxu0 %v501
        %503 = vmatprep.subr.mxu0 0.0
        %v504 = vand.u32 %v338, 4294901760
        %v505 = vsub.f32 %v338, %v504
        %v506 = vand.u32 %v505, 4294901760
        %v507 = vsub.f32 %v505, %v506
        %v508 = vand.u32 %v507, 4294901760
        %509 = vmatpush1.msra.mxu0 %v508
        %510 = vmatprep.subr.mxu0 0.0
        %v511 = vand.u32 %v339, 4294901760
        %v512 = vsub.f32 %v339, %v511
        %v513 = vand.u32 %v512, 4294901760
        %v514 = vsub.f32 %v512, %v513
        %v515 = vand.u32 %v514, 4294901760
        %516 = vmatpush1.msra.mxu0 %v515
        %517 = vmatprep.subr.mxu0 0.0
        %v518 = vand.u32 %v340, 4294901760
        %v519 = vsub.f32 %v340, %v518
        %v520 = vand.u32 %v519, 4294901760
        %v521 = vsub.f32 %v519, %v520
        %v522 = vand.u32 %v521, 4294901760
        %523 = vmatpush1.msra.mxu0 %v522
        %524 = vmatprep.subr.mxu0 0.0
        %v525 = vand.u32 %v341, 4294901760
        %v526 = vsub.f32 %v341, %v525
        %v527 = vand.u32 %v526, 4294901760
        %v528 = vsub.f32 %v526, %v527
        %v529 = vand.u32 %v528, 4294901760
        %530 = vmatpush1.msra.mxu0 %v529
        %531 = vmatprep.subr.mxu0 0.0
        %v532 = vand.u32 %v342, 4294901760
        %v533 = vsub.f32 %v342, %v532
        %v534 = vand.u32 %v533, 4294901760
        %v535 = vsub.f32 %v533, %v534
        %v536 = vand.u32 %v535, 4294901760
        %537 = vmatpush1.msra.mxu0 %v536
        %538 = vmatprep.subr.mxu0 0.0
        %v539 = vand.u32 %v343, 4294901760
        %v540 = vsub.f32 %v343, %v539
        %v541 = vand.u32 %v540, 4294901760
        %v542 = vsub.f32 %v540, %v541
        %v543 = vand.u32 %v542, 4294901760
        %544 = vmatpush1.msra.mxu0 %v543
        %545 = vmatprep.subr.mxu0 0.0
        %v546 = vand.u32 %v344, 4294901760
        %v547 = vsub.f32 %v344, %v546
        %v548 = vand.u32 %v547, 4294901760
        %v549 = vsub.f32 %v547, %v548
        %v550 = vand.u32 %v549, 4294901760
        %551 = vmatpush1.msra.mxu0 %v550
        %552 = vmatprep.subr.mxu0 0.0
        %v553 = vand.u32 %v345, 4294901760
        %v554 = vsub.f32 %v345, %v553
        %v555 = vand.u32 %v554, 4294901760
        %v556 = vsub.f32 %v554, %v555
        %v557 = vand.u32 %v556, 4294901760
        %558 = vmatpush1.msra.mxu0 %v557
        %559 = vmatprep.subr.mxu0 0.0
        %v560 = vand.u32 %v346, 4294901760
        %v561 = vsub.f32 %v346, %v560
        %v562 = vand.u32 %v561, 4294901760
        %v563 = vsub.f32 %v561, %v562
        %v564 = vand.u32 %v563, 4294901760
        %565 = vmatpush1.msra.mxu0 %v564
        %566 = vmatprep.subr.mxu0 0.0
        %v567 = vand.u32 %v347, 4294901760
        %v568 = vsub.f32 %v347, %v567
        %v569 = vand.u32 %v568, 4294901760
        %v570 = vsub.f32 %v568, %v569
        %v571 = vand.u32 %v570, 4294901760
        %572 = vmatpush1.msra.mxu0 %v571
        %573 = vmatprep.subr.mxu0 0.0
        %v574 = vand.u32 %v348, 4294901760
        %v575 = vsub.f32 %v348, %v574
        %v576 = vand.u32 %v575, 4294901760
        %v577 = vsub.f32 %v575, %v576
        %v578 = vand.u32 %v577, 4294901760
        %579 = vmatpush1.msra.mxu0 %v578
        %580 = vmatprep.subr.mxu0 0.0
        %v581 = vand.u32 %v349, 4294901760
        %v582 = vsub.f32 %v349, %v581
        %v583 = vand.u32 %v582, 4294901760
        %v584 = vsub.f32 %v582, %v583
        %v585 = vand.u32 %v584, 4294901760
        %586 = vmatpush1.msra.mxu0 %v585
        %587 = vmatprep.subr.mxu0 0.0
        %v588 = vand.u32 %v350, 4294901760
        %v589 = vsub.f32 %v350, %v588
        %v590 = vand.u32 %v589, 4294901760
        %v591 = vsub.f32 %v589, %v590
        %v592 = vand.u32 %v591, 4294901760
        %593 = vmatpush1.msra.mxu0 %v592
        %594 = vmatprep.subr.mxu0 0.0
        %v595 = vand.u32 %v351, 4294901760
        %v596 = vsub.f32 %v351, %v595
        %v597 = vand.u32 %v596, 4294901760
        %v598 = vsub.f32 %v596, %v597
        %v599 = vand.u32 %v598, 4294901760
        %600 = vmatpush1.msra.mxu0 %v599
        %601 = vmatprep.subr.mxu0 0.0
        %v602 = vand.u32 %v352, 4294901760
        %v603 = vsub.f32 %v352, %v602
        %v604 = vand.u32 %v603, 4294901760
        %v605 = vsub.f32 %v603, %v604
        %v606 = vand.u32 %v605, 4294901760
        %607 = vmatpush1.msra.mxu0 %v606
        %608 = vmatprep.subr.mxu0 0.0
        %v609 = vand.u32 %v353, 4294901760
        %v610 = vsub.f32 %v353, %v609
        %v611 = vand.u32 %v610, 4294901760
        %v612 = vsub.f32 %v610, %v611
        %v613 = vand.u32 %v612, 4294901760
        %614 = vmatpush1.msra.mxu0 %v613
        %615 = vmatprep.subr.mxu0 0.0
        %v616 = vand.u32 %v354, 4294901760
        %v617 = vsub.f32 %v354, %v616
        %v618 = vand.u32 %v617, 4294901760
        %v619 = vsub.f32 %v617, %v618
        %v620 = vand.u32 %v619, 4294901760
        %621 = vmatpush1.msra.mxu0 %v620
        %622 = vmatprep.subr.mxu0 0.0
        %v623 = vand.u32 %v355, 4294901760
        %v624 = vsub.f32 %v355, %v623
        %v625 = vand.u32 %v624, 4294901760
        %v626 = vsub.f32 %v624, %v625
        %v627 = vand.u32 %v626, 4294901760
        %628 = vmatpush1.msra.mxu0 %v627
        %629 = vmatprep.subr.mxu0 0.0
        %v630 = vand.u32 %v356, 4294901760
        %v631 = vsub.f32 %v356, %v630
        %v632 = vand.u32 %v631, 4294901760
        %v633 = vsub.f32 %v631, %v632
        %v634 = vand.u32 %v633, 4294901760
        %635 = vmatpush1.msra.mxu0 %v634
        %636 = vmatprep.subr.mxu0 0.0
        %v637 = vand.u32 %v357, 4294901760
        %v638 = vsub.f32 %v357, %v637
        %v639 = vand.u32 %v638, 4294901760
        %v640 = vsub.f32 %v638, %v639
        %v641 = vand.u32 %v640, 4294901760
        %642 = vmatpush1.msra.mxu0 %v641
        %643 = vmatprep.subr.mxu0 0.0
        %v644 = vand.u32 %v358, 4294901760
        %v645 = vsub.f32 %v358, %v644
        %v646 = vand.u32 %v645, 4294901760
        %v647 = vsub.f32 %v645, %v646
        %v648 = vand.u32 %v647, 4294901760
        %649 = vmatpush1.msra.mxu0 %v648
        %650 = vmatprep.subr.mxu0 0.0
        %v651 = vand.u32 %v359, 4294901760
        %v652 = vsub.f32 %v359, %v651
        %v653 = vand.u32 %v652, 4294901760
        %v654 = vsub.f32 %v652, %v653
        %v655 = vand.u32 %v654, 4294901760
        %656 = vmatpush1.msra.mxu0 %v655
        %657 = vmatprep.subr.mxu0 0.0
        %v658 = vand.u32 %v360, 4294901760
        %v659 = vsub.f32 %v360, %v658
        %v660 = vand.u32 %v659, 4294901760
        %v661 = vsub.f32 %v659, %v660
        %v662 = vand.u32 %v661, 4294901760
        %663 = vmatpush1.msra.mxu0 %v662
        %664 = vmatprep.subr.mxu0 0.0
        %v665 = vand.u32 %v361, 4294901760
        %v666 = vsub.f32 %v361, %v665
        %v667 = vand.u32 %v666, 4294901760
        %v668 = vsub.f32 %v666, %v667
        %v669 = vand.u32 %v668, 4294901760
        %670 = vmatpush1.msra.mxu0 %v669
        %671 = vmatprep.subr.mxu0 0.0
        %v672 = vand.u32 %v362, 4294901760
        %v673 = vsub.f32 %v362, %v672
        %v674 = vand.u32 %v673, 4294901760
        %v675 = vsub.f32 %v673, %v674
        %v676 = vand.u32 %v675, 4294901760
        %677 = vmatpush1.msra.mxu0 %v676
        %678 = vmatprep.subr.mxu0 0.0
        %v679 = vand.u32 %v363, 4294901760
        %v680 = vsub.f32 %v363, %v679
        %v681 = vand.u32 %v680, 4294901760
        %v682 = vsub.f32 %v680, %v681
        %v683 = vand.u32 %v682, 4294901760
        %684 = vmatpush1.msra.mxu0 %v683
        %685 = vmatprep.subr.mxu0 0.0
        %v686 = vand.u32 %v364, 4294901760
        %v687 = vsub.f32 %v364, %v686
        %v688 = vand.u32 %v687, 4294901760
        %v689 = vsub.f32 %v687, %v688
        %v690 = vand.u32 %v689, 4294901760
        %691 = vmatpush1.msra.mxu0 %v690
        %692 = vmatprep.subr.mxu0 0.0
        %v693 = vand.u32 %v365, 4294901760
        %v694 = vsub.f32 %v365, %v693
        %v695 = vand.u32 %v694, 4294901760
        %v696 = vsub.f32 %v694, %v695
        %v697 = vand.u32 %v696, 4294901760
        %698 = vmatpush1.msra.mxu0 %v697
        %699 = vmatprep.subr.mxu0 0.0
        %v700 = vand.u32 %v366, 4294901760
        %v701 = vsub.f32 %v366, %v700
        %v702 = vand.u32 %v701, 4294901760
        %v703 = vsub.f32 %v701, %v702
        %v704 = vand.u32 %v703, 4294901760
        %705 = vmatpush1.msra.mxu0 %v704
        %v706 = vand.u32 %v368, 4294901760
        %707 = vmatprep.mubr.f32.mxu0 %v706
        %v708 = vand.u32 %v334, 4294901760
        %709 = vmatmul.mubr.f32.gmra.mrb[0].mxu0 %v708
        %v710 = vpop.f32.mrb[0].mxu0
        %v711 = vadd.f32 %v479, %v710
        %v712 = vpop.f32.mrb[0].mxu0
        %713 = vdwg.mxu0
        %714 = vmatprep.subr.mxu0 0.0
        %v715 = vand.u32 %v335, 4294901760
        %v716 = vsub.f32 %v335, %v715
        %717 = vmatpush1.msra.mxu0 %v716
        %718 = vmatprep.subr.mxu0 0.0
        %v719 = vand.u32 %v336, 4294901760
        %v720 = vsub.f32 %v336, %v719
        %721 = vmatpush1.msra.mxu0 %v720
        %722 = vmatprep.subr.mxu0 0.0
        %v723 = vand.u32 %v337, 4294901760
        %v724 = vsub.f32 %v337, %v723
        %725 = vmatpush1.msra.mxu0 %v724
        %726 = vmatprep.subr.mxu0 0.0
        %v727 = vand.u32 %v338, 4294901760
        %v728 = vsub.f32 %v338, %v727
        %729 = vmatpush1.msra.mxu0 %v728
        %730 = vmatprep.subr.mxu0 0.0
        %v731 = vand.u32 %v339, 4294901760
        %v732 = vsub.f32 %v339, %v731
        %733 = vmatpush1.msra.mxu0 %v732
        %734 = vmatprep.subr.mxu0 0.0
        %v735 = vand.u32 %v340, 4294901760
        %v736 = vsub.f32 %v340, %v735
        %737 = vmatpush1.msra.mxu0 %v736
        %738 = vmatprep.subr.mxu0 0.0
        %v739 = vand.u32 %v341, 4294901760
        %v740 = vsub.f32 %v341, %v739
        %741 = vmatpush1.msra.mxu0 %v740
        %742 = vmatprep.subr.mxu0 0.0
        %v743 = vand.u32 %v342, 4294901760
        %v744 = vsub.f32 %v342, %v743
        %745 = vmatpush1.msra.mxu0 %v744
        %746 = vmatprep.subr.mxu0 0.0
        %v747 = vand.u32 %v343, 4294901760
        %v748 = vsub.f32 %v343, %v747
        %749 = vmatpush1.msra.mxu0 %v748
        %750 = vmatprep.subr.mxu0 0.0
        %v751 = vand.u32 %v344, 4294901760
        %v752 = vsub.f32 %v344, %v751
        %753 = vmatpush1.msra.mxu0 %v752
        %754 = vmatprep.subr.mxu0 0.0
        %v755 = vand.u32 %v345, 4294901760
        %v756 = vsub.f32 %v345, %v755
        %757 = vmatpush1.msra.mxu0 %v756
        %758 = vmatprep.subr.mxu0 0.0
        %v759 = vand.u32 %v346, 4294901760
        %v760 = vsub.f32 %v346, %v759
        %761 = vmatpush1.msra.mxu0 %v760
        %762 = vmatprep.subr.mxu0 0.0
        %v763 = vand.u32 %v347, 4294901760
        %v764 = vsub.f32 %v347, %v763
        %765 = vmatpush1.msra.mxu0 %v764
        %766 = vmatprep.subr.mxu0 0.0
        %v767 = vand.u32 %v348, 4294901760
        %v768 = vsub.f32 %v348, %v767
        %769 = vmatpush1.msra.mxu0 %v768
        %770 = vmatprep.subr.mxu0 0.0
        %v771 = vand.u32 %v349, 4294901760
        %v772 = vsub.f32 %v349, %v771
        %773 = vmatpush1.msra.mxu0 %v772
        %774 = vmatprep.subr.mxu0 0.0
        %v775 = vand.u32 %v350, 4294901760
        %v776 = vsub.f32 %v350, %v775
        %777 = vmatpush1.msra.mxu0 %v776
        %778 = vmatprep.subr.mxu0 0.0
        %v779 = vand.u32 %v351, 4294901760
        %v780 = vsub.f32 %v351, %v779
        %781 = vmatpush1.msra.mxu0 %v780
        %782 = vmatprep.subr.mxu0 0.0
        %v783 = vand.u32 %v352, 4294901760
        %v784 = vsub.f32 %v352, %v783
        %785 = vmatpush1.msra.mxu0 %v784
        %786 = vmatprep.subr.mxu0 0.0
        %v787 = vand.u32 %v353, 4294901760
        %v788 = vsub.f32 %v353, %v787
        %789 = vmatpush1.msra.mxu0 %v788
        %790 = vmatprep.subr.mxu0 0.0
        %v791 = vand.u32 %v354, 4294901760
        %v792 = vsub.f32 %v354, %v791
        %793 = vmatpush1.msra.mxu0 %v792
        %794 = vmatprep.subr.mxu0 0.0
        %v795 = vand.u32 %v355, 4294901760
        %v796 = vsub.f32 %v355, %v795
        %797 = vmatpush1.msra.mxu0 %v796
        %798 = vmatprep.subr.mxu0 0.0
        %v799 = vand.u32 %v356, 4294901760
        %v800 = vsub.f32 %v356, %v799
        %801 = vmatpush1.msra.mxu0 %v800
        %802 = vmatprep.subr.mxu0 0.0
        %v803 = vand.u32 %v357, 4294901760
        %v804 = vsub.f32 %v357, %v803
        %805 = vmatpush1.msra.mxu0 %v804
        %806 = vmatprep.subr.mxu0 0.0
        %v807 = vand.u32 %v358, 4294901760
        %v808 = vsub.f32 %v358, %v807
        %809 = vmatpush1.msra.mxu0 %v808
        %810 = vmatprep.subr.mxu0 0.0
        %v811 = vand.u32 %v359, 4294901760
        %v812 = vsub.f32 %v359, %v811
        %813 = vmatpush1.msra.mxu0 %v812
        %814 = vmatprep.subr.mxu0 0.0
        %v815 = vand.u32 %v360, 4294901760
        %v816 = vsub.f32 %v360, %v815
        %817 = vmatpush1.msra.mxu0 %v816
        %818 = vmatprep.subr.mxu0 0.0
        %v819 = vand.u32 %v361, 4294901760
        %v820 = vsub.f32 %v361, %v819
        %821 = vmatpush1.msra.mxu0 %v820
        %822 = vmatprep.subr.mxu0 0.0
        %v823 = vand.u32 %v362, 4294901760
        %v824 = vsub.f32 %v362, %v823
        %825 = vmatpush1.msra.mxu0 %v824
        %826 = vmatprep.subr.mxu0 0.0
        %v827 = vand.u32 %v363, 4294901760
        %v828 = vsub.f32 %v363, %v827
        %829 = vmatpush1.msra.mxu0 %v828
        %830 = vmatprep.subr.mxu0 0.0
        %v831 = vand.u32 %v364, 4294901760
        %v832 = vsub.f32 %v364, %v831
        %833 = vmatpush1.msra.mxu0 %v832
        %834 = vmatprep.subr.mxu0 0.0
        %v835 = vand.u32 %v365, 4294901760
        %v836 = vsub.f32 %v365, %v835
        %837 = vmatpush1.msra.mxu0 %v836
        %838 = vmatprep.subr.mxu0 0.0
        %v839 = vand.u32 %v366, 4294901760
        %v840 = vsub.f32 %v366, %v839
        %841 = vmatpush1.msra.mxu0 %v840
        %v842 = vand.u32 %v368, 4294901760
        %v843 = vsub.f32 %v368, %v842
        %844 = vmatprep.mubr.f32.mxu0 %v843
        %v845 = vand.u32 %v334, 4294901760
        %v846 = vsub.f32 %v334, %v845
        %847 = vmatmul.mubr.f32.gmra.mrb[0].mxu0 %v846
        %v848 = vpop.f32.mrb[0].mxu0
        %v849 = vadd.f32 %v711, %v848
        %v850 = vpop.f32.mrb[0].mxu0
        %851 = vdwg.mxu0
        %852 = vmatprep.subr.mxu0 0.0
        %v853 = vand.u32 %v335, 4294901760
        %854 = vmatpush1.msra.mxu0 %v853
        %855 = vmatprep.subr.mxu0 0.0
        %v856 = vand.u32 %v336, 4294901760
        %857 = vmatpush1.msra.mxu0 %v856
        %858 = vmatprep.subr.mxu0 0.0
        %v859 = vand.u32 %v337, 4294901760
        %860 = vmatpush1.msra.mxu0 %v859
        %861 = vmatprep.subr.mxu0 0.0
        %v862 = vand.u32 %v338, 4294901760
        %863 = vmatpush1.msra.mxu0 %v862
        %864 = vmatprep.subr.mxu0 0.0
        %v865 = vand.u32 %v339, 4294901760
        %866 = vmatpush1.msra.mxu0 %v865
        %867 = vmatprep.subr.mxu0 0.0
        %v868 = vand.u32 %v340, 4294901760
        %869 = vmatpush1.msra.mxu0 %v868
        %870 = vmatprep.subr.mxu0 0.0
        %v871 = vand.u32 %v341, 4294901760
        %872 = vmatpush1.msra.mxu0 %v871
        %873 = vmatprep.subr.mxu0 0.0
        %v874 = vand.u32 %v342, 4294901760
        %875 = vmatpush1.msra.mxu0 %v874
        %876 = vmatprep.subr.mxu0 0.0
        %v877 = vand.u32 %v343, 4294901760
        %878 = vmatpush1.msra.mxu0 %v877
        %879 = vmatprep.subr.mxu0 0.0
        %v880 = vand.u32 %v344, 4294901760
        %881 = vmatpush1.msra.mxu0 %v880
        %882 = vmatprep.subr.mxu0 0.0
        %v883 = vand.u32 %v345, 4294901760
        %884 = vmatpush1.msra.mxu0 %v883
        %885 = vmatprep.subr.mxu0 0.0
        %v886 = vand.u32 %v346, 4294901760
        %887 = vmatpush1.msra.mxu0 %v886
        %888 = vmatprep.subr.mxu0 0.0
        %v889 = vand.u32 %v347, 4294901760
        %890 = vmatpush1.msra.mxu0 %v889
        %891 = vmatprep.subr.mxu0 0.0
        %v892 = vand.u32 %v348, 4294901760
        %893 = vmatpush1.msra.mxu0 %v892
        %894 = vmatprep.subr.mxu0 0.0
        %v895 = vand.u32 %v349, 4294901760
        %896 = vmatpush1.msra.mxu0 %v895
        %897 = vmatprep.subr.mxu0 0.0
        %v898 = vand.u32 %v350, 4294901760
        %899 = vmatpush1.msra.mxu0 %v898
        %900 = vmatprep.subr.mxu0 0.0
        %v901 = vand.u32 %v351, 4294901760
        %902 = vmatpush1.msra.mxu0 %v901
        %903 = vmatprep.subr.mxu0 0.0
        %v904 = vand.u32 %v352, 4294901760
        %905 = vmatpush1.msra.mxu0 %v904
        %906 = vmatprep.subr.mxu0 0.0
        %v907 = vand.u32 %v353, 4294901760
        %908 = vmatpush1.msra.mxu0 %v907
        %909 = vmatprep.subr.mxu0 0.0
        %v910 = vand.u32 %v354, 4294901760
        %911 = vmatpush1.msra.mxu0 %v910
        %912 = vmatprep.subr.mxu0 0.0
        %v913 = vand.u32 %v355, 4294901760
        %914 = vmatpush1.msra.mxu0 %v913
        %915 = vmatprep.subr.mxu0 0.0
        %v916 = vand.u32 %v356, 4294901760
        %917 = vmatpush1.msra.mxu0 %v916
        %918 = vmatprep.subr.mxu0 0.0
        %v919 = vand.u32 %v357, 4294901760
        %920 = vmatpush1.msra.mxu0 %v919
        %921 = vmatprep.subr.mxu0 0.0
        %v922 = vand.u32 %v358, 4294901760
        %923 = vmatpush1.msra.mxu0 %v922
        %924 = vmatprep.subr.mxu0 0.0
        %v925 = vand.u32 %v359, 4294901760
        %926 = vmatpush1.msra.mxu0 %v925
        %927 = vmatprep.subr.mxu0 0.0
        %v928 = vand.u32 %v360, 4294901760
        %929 = vmatpush1.msra.mxu0 %v928
        %930 = vmatprep.subr.mxu0 0.0
        %v931 = vand.u32 %v361, 4294901760
        %932 = vmatpush1.msra.mxu0 %v931
        %933 = vmatprep.subr.mxu0 0.0
        %v934 = vand.u32 %v362, 4294901760
        %935 = vmatpush1.msra.mxu0 %v934
        %936 = vmatprep.subr.mxu0 0.0
        %v937 = vand.u32 %v363, 4294901760
        %938 = vmatpush1.msra.mxu0 %v937
        %939 = vmatprep.subr.mxu0 0.0
        %v940 = vand.u32 %v364, 4294901760
        %941 = vmatpush1.msra.mxu0 %v940
        %942 = vmatprep.subr.mxu0 0.0
        %v943 = vand.u32 %v365, 4294901760
        %944 = vmatpush1.msra.mxu0 %v943
        %945 = vmatprep.subr.mxu0 0.0
        %v946 = vand.u32 %v366, 4294901760
        %947 = vmatpush1.msra.mxu0 %v946
        %v948 = vand.u32 %v368, 4294901760
        %v949 = vsub.f32 %v368, %v948
        %v950 = vand.u32 %v949, 4294901760
        %951 = vmatprep.mubr.f32.mxu0 %v950
        %v952 = vand.u32 %v334, 4294901760
        %v953 = vsub.f32 %v334, %v952
        %v954 = vand.u32 %v953, 4294901760
        %955 = vmatmul.mubr.f32.gmra.mrb[0].mxu0 %v954
        %v956 = vpop.f32.mrb[0].mxu0
        %v957 = vadd.f32 %v849, %v956
        %v958 = vpop.f32.mrb[0].mxu0
        %959 = vdwg.mxu0
        %960 = vmatprep.subr.mxu0 0.0
        %v961 = vand.u32 %v335, 4294901760
        %v962 = vsub.f32 %v335, %v961
        %v963 = vand.u32 %v962, 4294901760
        %964 = vmatpush1.msra.mxu0 %v963
        %965 = vmatprep.subr.mxu0 0.0
        %v966 = vand.u32 %v336, 4294901760
        %v967 = vsub.f32 %v336, %v966
        %v968 = vand.u32 %v967, 4294901760
        %969 = vmatpush1.msra.mxu0 %v968
        %970 = vmatprep.subr.mxu0 0.0
        %v971 = vand.u32 %v337, 4294901760
        %v972 = vsub.f32 %v337, %v971
        %v973 = vand.u32 %v972, 4294901760
        %974 = vmatpush1.msra.mxu0 %v973
        %975 = vmatprep.subr.mxu0 0.0
        %v976 = vand.u32 %v338, 4294901760
        %v977 = vsub.f32 %v338, %v976
        %v978 = vand.u32 %v977, 4294901760
        %979 = vmatpush1.msra.mxu0 %v978
        %980 = vmatprep.subr.mxu0 0.0
        %v981 = vand.u32 %v339, 4294901760
        %v982 = vsub.f32 %v339, %v981
        %v983 = vand.u32 %v982, 4294901760
        %984 = vmatpush1.msra.mxu0 %v983
        %985 = vmatprep.subr.mxu0 0.0
        %v986 = vand.u32 %v340, 4294901760
        %v987 = vsub.f32 %v340, %v986
        %v988 = vand.u32 %v987, 4294901760
        %989 = vmatpush1.msra.mxu0 %v988
        %990 = vmatprep.subr.mxu0 0.0
        %v991 = vand.u32 %v341, 4294901760
        %v992 = vsub.f32 %v341, %v991
        %v993 = vand.u32 %v992, 4294901760
        %994 = vmatpush1.msra.mxu0 %v993
        %995 = vmatprep.subr.mxu0 0.0
        %v996 = vand.u32 %v342, 4294901760
        %v997 = vsub.f32 %v342, %v996
        %v998 = vand.u32 %v997, 4294901760
        %999 = vmatpush1.msra.mxu0 %v998
        %1000 = vmatprep.subr.mxu0 0.0
        %v1001 = vand.u32 %v343, 4294901760
        %v1002 = vsub.f32 %v343, %v1001
        %v1003 = vand.u32 %v1002, 4294901760
        %1004 = vmatpush1.msra.mxu0 %v1003
        %1005 = vmatprep.subr.mxu0 0.0
        %v1006 = vand.u32 %v344, 4294901760
        %v1007 = vsub.f32 %v344, %v1006
        %v1008 = vand.u32 %v1007, 4294901760
        %1009 = vmatpush1.msra.mxu0 %v1008
        %1010 = vmatprep.subr.mxu0 0.0
        %v1011 = vand.u32 %v345, 4294901760
        %v1012 = vsub.f32 %v345, %v1011
        %v1013 = vand.u32 %v1012, 4294901760
        %1014 = vmatpush1.msra.mxu0 %v1013
        %1015 = vmatprep.subr.mxu0 0.0
        %v1016 = vand.u32 %v346, 4294901760
        %v1017 = vsub.f32 %v346, %v1016
        %v1018 = vand.u32 %v1017, 4294901760
        %1019 = vmatpush1.msra.mxu0 %v1018
        %1020 = vmatprep.subr.mxu0 0.0
        %v1021 = vand.u32 %v347, 4294901760
        %v1022 = vsub.f32 %v347, %v1021
        %v1023 = vand.u32 %v1022, 4294901760
        %1024 = vmatpush1.msra.mxu0 %v1023
        %1025 = vmatprep.subr.mxu0 0.0
        %v1026 = vand.u32 %v348, 4294901760
        %v1027 = vsub.f32 %v348, %v1026
        %v1028 = vand.u32 %v1027, 4294901760
        %1029 = vmatpush1.msra.mxu0 %v1028
        %1030 = vmatprep.subr.mxu0 0.0
        %v1031 = vand.u32 %v349, 4294901760
        %v1032 = vsub.f32 %v349, %v1031
        %v1033 = vand.u32 %v1032, 4294901760
        %1034 = vmatpush1.msra.mxu0 %v1033
        %1035 = vmatprep.subr.mxu0 0.0
        %v1036 = vand.u32 %v350, 4294901760
        %v1037 = vsub.f32 %v350, %v1036
        %v1038 = vand.u32 %v1037, 4294901760
        %1039 = vmatpush1.msra.mxu0 %v1038
        %1040 = vmatprep.subr.mxu0 0.0
        %v1041 = vand.u32 %v351, 4294901760
        %v1042 = vsub.f32 %v351, %v1041
        %v1043 = vand.u32 %v1042, 4294901760
        %1044 = vmatpush1.msra.mxu0 %v1043
        %1045 = vmatprep.subr.mxu0 0.0
        %v1046 = vand.u32 %v352, 4294901760
        %v1047 = vsub.f32 %v352, %v1046
        %v1048 = vand.u32 %v1047, 4294901760
        %1049 = vmatpush1.msra.mxu0 %v1048
        %1050 = vmatprep.subr.mxu0 0.0
        %v1051 = vand.u32 %v353, 4294901760
        %v1052 = vsub.f32 %v353, %v1051
        %v1053 = vand.u32 %v1052, 4294901760
        %1054 = vmatpush1.msra.mxu0 %v1053
        %1055 = vmatprep.subr.mxu0 0.0
        %v1056 = vand.u32 %v354, 4294901760
        %v1057 = vsub.f32 %v354, %v1056
        %v1058 = vand.u32 %v1057, 4294901760
        %1059 = vmatpush1.msra.mxu0 %v1058
        %1060 = vmatprep.subr.mxu0 0.0
        %v1061 = vand.u32 %v355, 4294901760
        %v1062 = vsub.f32 %v355, %v1061
        %v1063 = vand.u32 %v1062, 4294901760
        %1064 = vmatpush1.msra.mxu0 %v1063
        %1065 = vmatprep.subr.mxu0 0.0
        %v1066 = vand.u32 %v356, 4294901760
        %v1067 = vsub.f32 %v356, %v1066
        %v1068 = vand.u32 %v1067, 4294901760
        %1069 = vmatpush1.msra.mxu0 %v1068
        %1070 = vmatprep.subr.mxu0 0.0
        %v1071 = vand.u32 %v357, 4294901760
        %v1072 = vsub.f32 %v357, %v1071
        %v1073 = vand.u32 %v1072, 4294901760
        %1074 = vmatpush1.msra.mxu0 %v1073
        %1075 = vmatprep.subr.mxu0 0.0
        %v1076 = vand.u32 %v358, 4294901760
        %v1077 = vsub.f32 %v358, %v1076
        %v1078 = vand.u32 %v1077, 4294901760
        %1079 = vmatpush1.msra.mxu0 %v1078
        %1080 = vmatprep.subr.mxu0 0.0
        %v1081 = vand.u32 %v359, 4294901760
        %v1082 = vsub.f32 %v359, %v1081
        %v1083 = vand.u32 %v1082, 4294901760
        %1084 = vmatpush1.msra.mxu0 %v1083
        %1085 = vmatprep.subr.mxu0 0.0
        %v1086 = vand.u32 %v360, 4294901760
        %v1087 = vsub.f32 %v360, %v1086
        %v1088 = vand.u32 %v1087, 4294901760
        %1089 = vmatpush1.msra.mxu0 %v1088
        %1090 = vmatprep.subr.mxu0 0.0
        %v1091 = vand.u32 %v361, 4294901760
        %v1092 = vsub.f32 %v361, %v1091
        %v1093 = vand.u32 %v1092, 4294901760
        %1094 = vmatpush1.msra.mxu0 %v1093
        %1095 = vmatprep.subr.mxu0 0.0
        %v1096 = vand.u32 %v362, 4294901760
        %v1097 = vsub.f32 %v362, %v1096
        %v1098 = vand.u32 %v1097, 4294901760
        %1099 = vmatpush1.msra.mxu0 %v1098
        %1100 = vmatprep.subr.mxu0 0.0
        %v1101 = vand.u32 %v363, 4294901760
        %v1102 = vsub.f32 %v363, %v1101
        %v1103 = vand.u32 %v1102, 4294901760
        %1104 = vmatpush1.msra.mxu0 %v1103
        %1105 = vmatprep.subr.mxu0 0.0
        %v1106 = vand.u32 %v364, 4294901760
        %v1107 = vsub.f32 %v364, %v1106
        %v1108 = vand.u32 %v1107, 4294901760
        %1109 = vmatpush1.msra.mxu0 %v1108
        %1110 = vmatprep.subr.mxu0 0.0
        %v1111 = vand.u32 %v365, 4294901760
        %v1112 = vsub.f32 %v365, %v1111
        %v1113 = vand.u32 %v1112, 4294901760
        %1114 = vmatpush1.msra.mxu0 %v1113
        %1115 = vmatprep.subr.mxu0 0.0
        %v1116 = vand.u32 %v366, 4294901760
        %v1117 = vsub.f32 %v366, %v1116
        %v1118 = vand.u32 %v1117, 4294901760
        %1119 = vmatpush1.msra.mxu0 %v1118
        %v1120 = vand.u32 %v368, 4294901760
        %1121 = vmatprep.mubr.f32.mxu0 %v1120
        %v1122 = vand.u32 %v334, 4294901760
        %1123 = vmatmul.mubr.f32.gmra.mrb[0].mxu0 %v1122
        %v1124 = vpop.f32.mrb[0].mxu0
        %v1125 = vadd.f32 %v957, %v1124
        %v1126 = vpop.f32.mrb[0].mxu0
        %1127 = vdwg.mxu0
        %1128 = vmatprep.subr.mxu0 0.0
        %v1129 = vand.u32 %v335, 4294901760
        %1130 = vmatpush1.msra.mxu0 %v1129
        %1131 = vmatprep.subr.mxu0 0.0
        %v1132 = vand.u32 %v336, 4294901760
        %1133 = vmatpush1.msra.mxu0 %v1132
        %1134 = vmatprep.subr.mxu0 0.0
        %v1135 = vand.u32 %v337, 4294901760
        %1136 = vmatpush1.msra.mxu0 %v1135
        %1137 = vmatprep.subr.mxu0 0.0
        %v1138 = vand.u32 %v338, 4294901760
        %1139 = vmatpush1.msra.mxu0 %v1138
        %1140 = vmatprep.subr.mxu0 0.0
        %v1141 = vand.u32 %v339, 4294901760
        %1142 = vmatpush1.msra.mxu0 %v1141
        %1143 = vmatprep.subr.mxu0 0.0
        %v1144 = vand.u32 %v340, 4294901760
        %1145 = vmatpush1.msra.mxu0 %v1144
        %1146 = vmatprep.subr.mxu0 0.0
        %v1147 = vand.u32 %v341, 4294901760
        %1148 = vmatpush1.msra.mxu0 %v1147
        %1149 = vmatprep.subr.mxu0 0.0
        %v1150 = vand.u32 %v342, 4294901760
        %1151 = vmatpush1.msra.mxu0 %v1150
        %1152 = vmatprep.subr.mxu0 0.0
        %v1153 = vand.u32 %v343, 4294901760
        %1154 = vmatpush1.msra.mxu0 %v1153
        %1155 = vmatprep.subr.mxu0 0.0
        %v1156 = vand.u32 %v344, 4294901760
        %1157 = vmatpush1.msra.mxu0 %v1156
        %1158 = vmatprep.subr.mxu0 0.0
        %v1159 = vand.u32 %v345, 4294901760
        %1160 = vmatpush1.msra.mxu0 %v1159
        %1161 = vmatprep.subr.mxu0 0.0
        %v1162 = vand.u32 %v346, 4294901760
        %1163 = vmatpush1.msra.mxu0 %v1162
        %1164 = vmatprep.subr.mxu0 0.0
        %v1165 = vand.u32 %v347, 4294901760
        %1166 = vmatpush1.msra.mxu0 %v1165
        %1167 = vmatprep.subr.mxu0 0.0
        %v1168 = vand.u32 %v348, 4294901760
        %1169 = vmatpush1.msra.mxu0 %v1168
        %1170 = vmatprep.subr.mxu0 0.0
        %v1171 = vand.u32 %v349, 4294901760
        %1172 = vmatpush1.msra.mxu0 %v1171
        %1173 = vmatprep.subr.mxu0 0.0
        %v1174 = vand.u32 %v350, 4294901760
        %1175 = vmatpush1.msra.mxu0 %v1174
        %1176 = vmatprep.subr.mxu0 0.0
        %v1177 = vand.u32 %v351, 4294901760
        %1178 = vmatpush1.msra.mxu0 %v1177
        %1179 = vmatprep.subr.mxu0 0.0
        %v1180 = vand.u32 %v352, 4294901760
        %1181 = vmatpush1.msra.mxu0 %v1180
        %1182 = vmatprep.subr.mxu0 0.0
        %v1183 = vand.u32 %v353, 4294901760
        %1184 = vmatpush1.msra.mxu0 %v1183
        %1185 = vmatprep.subr.mxu0 0.0
        %v1186 = vand.u32 %v354, 4294901760
        %1187 = vmatpush1.msra.mxu0 %v1186
        %1188 = vmatprep.subr.mxu0 0.0
        %v1189 = vand.u32 %v355, 4294901760
        %1190 = vmatpush1.msra.mxu0 %v1189
        %1191 = vmatprep.subr.mxu0 0.0
        %v1192 = vand.u32 %v356, 4294901760
        %1193 = vmatpush1.msra.mxu0 %v1192
        %1194 = vmatprep.subr.mxu0 0.0
        %v1195 = vand.u32 %v357, 4294901760
        %1196 = vmatpush1.msra.mxu0 %v1195
        %1197 = vmatprep.subr.mxu0 0.0
        %v1198 = vand.u32 %v358, 4294901760
        %1199 = vmatpush1.msra.mxu0 %v1198
        %1200 = vmatprep.subr.mxu0 0.0
        %v1201 = vand.u32 %v359, 4294901760
        %1202 = vmatpush1.msra.mxu0 %v1201
        %1203 = vmatprep.subr.mxu0 0.0
        %v1204 = vand.u32 %v360, 4294901760
        %1205 = vmatpush1.msra.mxu0 %v1204
        %1206 = vmatprep.subr.mxu0 0.0
        %v1207 = vand.u32 %v361, 4294901760
        %1208 = vmatpush1.msra.mxu0 %v1207
        %1209 = vmatprep.subr.mxu0 0.0
        %v1210 = vand.u32 %v362, 4294901760
        %1211 = vmatpush1.msra.mxu0 %v1210
        %1212 = vmatprep.subr.mxu0 0.0
        %v1213 = vand.u32 %v363, 4294901760
        %1214 = vmatpush1.msra.mxu0 %v1213
        %1215 = vmatprep.subr.mxu0 0.0
        %v1216 = vand.u32 %v364, 4294901760
        %1217 = vmatpush1.msra.mxu0 %v1216
        %1218 = vmatprep.subr.mxu0 0.0
        %v1219 = vand.u32 %v365, 4294901760
        %1220 = vmatpush1.msra.mxu0 %v1219
        %1221 = vmatprep.subr.mxu0 0.0
        %v1222 = vand.u32 %v366, 4294901760
        %1223 = vmatpush1.msra.mxu0 %v1222
        %v1224 = vand.u32 %v368, 4294901760
        %1225 = vmatprep.mubr.f32.mxu0 %v1224
        %v1226 = vand.u32 %v334, 4294901760
        %1227 = vmatmul.mubr.f32.gmra.mrb[0].mxu0 %v1226
        %v1228 = vpop.f32.mrb[0].mxu0
        %v1229 = vadd.f32 %v1125, %v1228
        %v1230 = vpop.f32.mrb[0].mxu0
        %1231 = vdwg.mxu0
        %v1232 = vld [vmem:[%s2] sm:$0xff]
        %v1233 = vld [vmem:[%s2 + $0x8] sm:$0xff]
        %v1234 = vld [vmem:[%s2 + $0x10] sm:$0xff]
        %v1235 = vld [vmem:[%s2 + $0x18] sm:$0xff]
        %1237 = vset.pattern.permute.xlu0 0
        %1238 = vperm.xlu0 %1237, %v1232
        %v1239 = vpop.permute.xlu0 %1238
        %1242 = vset.pattern.permute.xlu0 0
        %1243 = vperm.xlu0 %1242, %v1233
        %v1244 = vpop.permute.xlu0 %1243
        %1247 = vset.pattern.permute.xlu0 0
        %1248 = vperm.xlu0 %1247, %v1234
        %v1249 = vpop.permute.xlu0 %1248
        %1252 = vset.pattern.permute.xlu0 0
        %1253 = vperm.xlu0 %1252, %v1235
        %v1254 = vpop.permute.xlu0 %1253
        %v1256 = vlaneseq
        %v1257 = vshrl.u32 %v1256, 7
        %v1258 = vsub.s32 0, %v1257
        %v1259 = vrot.slane %v1229, %v1258
        %v1260 = vmul.f32 %v1239, %v1259
        %v1261 = vmul.f32 %v1244, %v1259
        %v1262 = vmul.f32 %v1249, %v1259
        %v1263 = vmul.f32 %v1254, %v1259
        %1264 = vset.pattern.permute.xlu0 1
        %1265 = vperm.xlu0 %1264, %v1232
        %v1266 = vpop.permute.xlu0 %1265
        %1268 = vset.pattern.permute.xlu0 1
        %1269 = vperm.xlu0 %1268, %v1233
        %v1270 = vpop.permute.xlu0 %1269
        %1272 = vset.pattern.permute.xlu0 1
        %1273 = vperm.xlu0 %1272, %v1234
        %v1274 = vpop.permute.xlu0 %1273
        %1276 = vset.pattern.permute.xlu0 1
        %1277 = vperm.xlu0 %1276, %v1235
        %v1278 = vpop.permute.xlu0 %1277
        %v1280 = vlaneseq
        %v1281 = vshrl.u32 %v1280, 7
        %v1282 = vsub.s32 1, %v1281
        %v1283 = vrot.slane %v1229, %v1282
        %v1284 = vmul.f32 %v1266, %v1283
        %v1285 = vmul.f32 %v1270, %v1283
        %v1286 = vmul.f32 %v1274, %v1283
        %v1287 = vmul.f32 %v1278, %v1283
        %v1288 = vadd.f32 %v1260, %v1284
        %v1289 = vadd.f32 %v1261, %v1285
        %v1290 = vadd.f32 %v1262, %v1286
        %v1291 = vadd.f32 %v1263, %v1287
        %1292 = vset.pattern.permute.xlu0 2
        %1293 = vperm.xlu0 %1292, %v1232
        %v1294 = vpop.permute.xlu0 %1293
        %1296 = vset.pattern.permute.xlu0 2
        %1297 = vperm.xlu0 %1296, %v1233
        %v1298 = vpop.permute.xlu0 %1297
        %1300 = vset.pattern.permute.xlu0 2
        %1301 = vperm.xlu0 %1300, %v1234
        %v1302 = vpop.permute.xlu0 %1301
        %1304 = vset.pattern.permute.xlu0 2
        %1305 = vperm.xlu0 %1304, %v1235
        %v1306 = vpop.permute.xlu0 %1305
        %v1308 = vlaneseq
        %v1309 = vshrl.u32 %v1308, 7
        %v1310 = vsub.s32 2, %v1309
        %v1311 = vrot.slane %v1229, %v1310
        %v1312 = vmul.f32 %v1294, %v1311
        %v1313 = vmul.f32 %v1298, %v1311
        %v1314 = vmul.f32 %v1302, %v1311
        %v1315 = vmul.f32 %v1306, %v1311
        %v1316 = vadd.f32 %v1288, %v1312
        %v1317 = vadd.f32 %v1289, %v1313
        %v1318 = vadd.f32 %v1290, %v1314
        %v1319 = vadd.f32 %v1291, %v1315
        %1320 = vset.pattern.permute.xlu0 3
        %1321 = vperm.xlu0 %1320, %v1232
        %v1322 = vpop.permute.xlu0 %1321
        %1324 = vset.pattern.permute.xlu0 3
        %1325 = vperm.xlu0 %1324, %v1233
        %v1326 = vpop.permute.xlu0 %1325
        %1328 = vset.pattern.permute.xlu0 3
        %1329 = vperm.xlu0 %1328, %v1234
        %v1330 = vpop.permute.xlu0 %1329
        %1332 = vset.pattern.permute.xlu0 3
        %1333 = vperm.xlu0 %1332, %v1235
        %v1334 = vpop.permute.xlu0 %1333
        %v1336 = vlaneseq
        %v1337 = vshrl.u32 %v1336, 7
        %v1338 = vsub.s32 3, %v1337
        %v1339 = vrot.slane %v1229, %v1338
        %v1340 = vmul.f32 %v1322, %v1339
        %v1341 = vmul.f32 %v1326, %v1339
        %v1342 = vmul.f32 %v1330, %v1339
        %v1343 = vmul.f32 %v1334, %v1339
        %v1344 = vadd.f32 %v1316, %v1340
        %v1345 = vadd.f32 %v1317, %v1341
        %v1346 = vadd.f32 %v1318, %v1342
        %v1347 = vadd.f32 %v1319, %v1343
        %v1348 = vld [vmem:[%s3] sm:$0xff]
        %v1349 = vld [vmem:[%s3 + $0x8] sm:$0xff]
        %v1350 = vld [vmem:[%s3 + $0x10] sm:$0xff]
        %v1351 = vld [vmem:[%s3 + $0x18] sm:$0xff]
        %v1352 = vmul.f32 %v1344, %v1348
        %v1353 = vmul.f32 %v1345, %v1349
        %v1354 = vmul.f32 %v1346, %v1350
        %v1355 = vmul.f32 %v1347, %v1351
        %v1356 = vld [vmem:[%s4] sm:$0xff]
        %v1357 = vld [vmem:[%s4 + $0x8] sm:$0xff]
        %v1358 = vld [vmem:[%s4 + $0x10] sm:$0xff]
        %v1359 = vld [vmem:[%s4 + $0x18] sm:$0xff]
        %v1360 = vld [vmem:[%s4 + $0x20] sm:$0xff]
        %v1361 = vld [vmem:[%s4 + $0x28] sm:$0xff]
        %v1362 = vld [vmem:[%s4 + $0x30] sm:$0xff]
        %v1363 = vld [vmem:[%s4 + $0x38] sm:$0xff]
        %v1364 = vld [vmem:[%s4 + $0x40] sm:$0xff]
        %v1365 = vld [vmem:[%s4 + $0x48] sm:$0xff]
        %v1366 = vld [vmem:[%s4 + $0x50] sm:$0xff]
        %v1367 = vld [vmem:[%s4 + $0x58] sm:$0xff]
        %v1368 = vld [vmem:[%s4 + $0x60] sm:$0x3]
        %v1369 = vld [vmem:[%s4 + $0x68] sm:$0x3]
        %vm1370 = vcmask 408576
        %v1372 = vsel %vm1370, %v1352, 0
        %v1375 = vsel %vm1370, %v1353, 0
        %v1378 = vsel %vm1370, %v1354, 0
        %v1381 = vsel %vm1370, %v1355, 0
        %vm1383 = vcmask 1041408
        %v1385 = vsel %vm1383, %v1368, 0
        %v1388 = vsel %vm1383, %v1369, 0
        %v1390 = vand.u32 %v1357, 4294901760
        %1391 = vmatprep.subr.mxu0 %v1390
        %v1392 = vand.u32 %v1356, 4294901760
        %1393 = vmatpush1.msra.mxu0 %v1392
        %v1394 = vand.u32 %v1359, 4294901760
        %1395 = vmatprep.subr.mxu0 %v1394
        %v1396 = vand.u32 %v1358, 4294901760
        %1397 = vmatpush1.msra.mxu0 %v1396
        %v1398 = vand.u32 %v1361, 4294901760
        %1399 = vmatprep.subr.mxu0 %v1398
        %v1400 = vand.u32 %v1360, 4294901760
        %1401 = vmatpush1.msra.mxu0 %v1400
        %v1402 = vand.u32 %v1363, 4294901760
        %1403 = vmatprep.subr.mxu0 %v1402
        %v1404 = vand.u32 %v1362, 4294901760
        %1405 = vmatpush1.msra.mxu0 %v1404
        %v1406 = vand.u32 %v1365, 4294901760
        %1407 = vmatprep.subr.mxu0 %v1406
        %v1408 = vand.u32 %v1364, 4294901760
        %1409 = vmatpush1.msra.mxu0 %v1408
        %v1410 = vand.u32 %v1367, 4294901760
        %1411 = vmatprep.subr.mxu0 %v1410
        %v1412 = vand.u32 %v1366, 4294901760
        %1413 = vmatpush1.msra.mxu0 %v1412
        %v1414 = vand.u32 %v1388, 4294901760
        %1415 = vmatprep.subr.mxu0 %v1414
        %v1416 = vand.u32 %v1385, 4294901760
        %1417 = vmatpush1.msra.mxu0 %v1416
        %1418 = vmatprep.subr.mxu0 0.0
        %1419 = vmatpush1.msra.mxu0 0.0
        %1420 = vmatprep.subr.mxu0 0.0
        %1421 = vmatpush1.msra.mxu0 0.0
        %1422 = vmatprep.subr.mxu0 0.0
        %1423 = vmatpush1.msra.mxu0 0.0
        %1424 = vmatprep.subr.mxu0 0.0
        %1425 = vmatpush1.msra.mxu0 0.0
        %1426 = vmatprep.subr.mxu0 0.0
        %1427 = vmatpush1.msra.mxu0 0.0
        %1428 = vmatprep.subr.mxu0 0.0
        %1429 = vmatpush1.msra.mxu0 0.0
        %1430 = vmatprep.subr.mxu0 0.0
        %1431 = vmatpush1.msra.mxu0 0.0
        %1432 = vmatprep.subr.mxu0 0.0
        %1433 = vmatpush1.msra.mxu0 0.0
        %1434 = vmatprep.subr.mxu0 0.0
        %1435 = vmatpush1.msra.mxu0 0.0
        %1436 = vmatprep.subr.mxu0 0.0
        %1437 = vmatpush1.msra.mxu0 0.0
        %1438 = vmatprep.subr.mxu0 0.0
        %1439 = vmatpush1.msra.mxu0 0.0
        %1440 = vmatprep.subr.mxu0 0.0
        %1441 = vmatpush1.msra.mxu0 0.0
        %1442 = vmatprep.subr.mxu0 0.0
        %1443 = vmatpush1.msra.mxu0 0.0
        %1444 = vmatprep.subr.mxu0 0.0
        %1445 = vmatpush1.msra.mxu0 0.0
        %1446 = vmatprep.subr.mxu0 0.0
        %1447 = vmatpush1.msra.mxu0 0.0
        %1448 = vmatprep.subr.mxu0 0.0
        %1449 = vmatpush1.msra.mxu0 0.0
        %1450 = vmatprep.subr.mxu0 0.0
        %1451 = vmatpush1.msra.mxu0 0.0
        %1452 = vmatprep.subr.mxu0 0.0
        %1453 = vmatpush1.msra.mxu0 0.0
        %1454 = vmatprep.subr.mxu0 0.0
        %1455 = vmatpush1.msra.mxu0 0.0
        %1456 = vmatprep.subr.mxu0 0.0
        %1457 = vmatpush1.msra.mxu0 0.0
        %1458 = vmatprep.subr.mxu0 0.0
        %1459 = vmatpush1.msra.mxu0 0.0
        %1460 = vmatprep.subr.mxu0 0.0
        %1461 = vmatpush1.msra.mxu0 0.0
        %1462 = vmatprep.subr.mxu0 0.0
        %1463 = vmatpush1.msra.mxu0 0.0
        %1464 = vmatprep.subr.mxu0 0.0
        %1465 = vmatpush1.msra.mxu0 0.0
        %1466 = vmatprep.subr.mxu0 0.0
        %1467 = vmatpush1.msra.mxu0 0.0
        %1468 = vmatprep.mubr.f32.mxu0 0.0
        %v1469 = vand.u32 %v1372, 4294901760
        %v1470 = vsub.f32 %v1372, %v1469
        %v1471 = vand.u32 %v1470, 4294901760
        %v1472 = vsub.f32 %v1470, %v1471
        %v1473 = vand.u32 %v1472, 4294901760
        %1474 = vmatmul.mubr.f32.gmra.mrb[0].mxu0 %v1473
        %v1475 = vpop.f32.mrb[0].mxu0
        %v1476 = vadd.f32 0.0, %v1475
        %v1477 = vpop.f32.mrb[0].mxu0
        %v1478 = vadd.f32 0.0, %v1477
        %1479 = vmatprep.mubr.f32.mxu0 0.0
        %v1480 = vand.u32 %v1375, 4294901760
        %v1481 = vsub.f32 %v1375, %v1480
        %v1482 = vand.u32 %v1481, 4294901760
        %v1483 = vsub.f32 %v1481, %v1482
        %v1484 = vand.u32 %v1483, 4294901760
        %1485 = vmatmul.mubr.f32.gmra.mrb[0].mxu0 %v1484
        %v1486 = vpop.f32.mrb[0].mxu0
        %v1487 = vadd.f32 0.0, %v1486
        %v1488 = vpop.f32.mrb[0].mxu0
        %v1489 = vadd.f32 0.0, %v1488
        %1490 = vmatprep.mubr.f32.mxu0 0.0
        %v1491 = vand.u32 %v1378, 4294901760
        %v1492 = vsub.f32 %v1378, %v1491
        %v1493 = vand.u32 %v1492, 4294901760
        %v1494 = vsub.f32 %v1492, %v1493
        %v1495 = vand.u32 %v1494, 4294901760
        %1496 = vmatmul.mubr.f32.gmra.mrb[0].mxu0 %v1495
        %v1497 = vpop.f32.mrb[0].mxu0
        %v1498 = vadd.f32 0.0, %v1497
        %v1499 = vpop.f32.mrb[0].mxu0
        %v1500 = vadd.f32 0.0, %v1499
        %1501 = vmatprep.mubr.f32.mxu0 0.0
        %v1502 = vand.u32 %v1381, 4294901760
        %v1503 = vsub.f32 %v1381, %v1502
        %v1504 = vand.u32 %v1503, 4294901760
        %v1505 = vsub.f32 %v1503, %v1504
        %v1506 = vand.u32 %v1505, 4294901760
        %1507 = vmatmul.mubr.f32.gmra.mrb[0].mxu0 %v1506
        %v1508 = vpop.f32.mrb[0].mxu0
        %v1509 = vadd.f32 0.0, %v1508
        %v1510 = vpop.f32.mrb[0].mxu0
        %v1511 = vadd.f32 0.0, %v1510
        %1512 = vdwg.mxu0
        %v1513 = vand.u32 %v1357, 4294901760
        %v1514 = vsub.f32 %v1357, %v1513
        %v1515 = vand.u32 %v1514, 4294901760
        %v1516 = vsub.f32 %v1514, %v1515
        %v1517 = vand.u32 %v1516, 4294901760
        %1518 = vmatprep.subr.mxu0 %v1517
        %v1519 = vand.u32 %v1356, 4294901760
        %v1520 = vsub.f32 %v1356, %v1519
        %v1521 = vand.u32 %v1520, 4294901760
        %v1522 = vsub.f32 %v1520, %v1521
        %v1523 = vand.u32 %v1522, 4294901760
        %1524 = vmatpush1.msra.mxu0 %v1523
        %v1525 = vand.u32 %v1359, 4294901760
        %v1526 = vsub.f32 %v1359, %v1525
        %v1527 = vand.u32 %v1526, 4294901760
        %v1528 = vsub.f32 %v1526, %v1527
        %v1529 = vand.u32 %v1528, 4294901760
        %1530 = vmatprep.subr.mxu0 %v1529
        %v1531 = vand.u32 %v1358, 4294901760
        %v1532 = vsub.f32 %v1358, %v1531
        %v1533 = vand.u32 %v1532, 4294901760
        %v1534 = vsub.f32 %v1532, %v1533
        %v1535 = vand.u32 %v1534, 4294901760
        %1536 = vmatpush1.msra.mxu0 %v1535
        %v1537 = vand.u32 %v1361, 4294901760
        %v1538 = vsub.f32 %v1361, %v1537
        %v1539 = vand.u32 %v1538, 4294901760
        %v1540 = vsub.f32 %v1538, %v1539
        %v1541 = vand.u32 %v1540, 4294901760
        %1542 = vmatprep.subr.mxu0 %v1541
        %v1543 = vand.u32 %v1360, 4294901760
        %v1544 = vsub.f32 %v1360, %v1543
        %v1545 = vand.u32 %v1544, 4294901760
        %v1546 = vsub.f32 %v1544, %v1545
        %v1547 = vand.u32 %v1546, 4294901760
        %1548 = vmatpush1.msra.mxu0 %v1547
        %v1549 = vand.u32 %v1363, 4294901760
        %v1550 = vsub.f32 %v1363, %v1549
        %v1551 = vand.u32 %v1550, 4294901760
        %v1552 = vsub.f32 %v1550, %v1551
        %v1553 = vand.u32 %v1552, 4294901760
        %1554 = vmatprep.subr.mxu0 %v1553
        %v1555 = vand.u32 %v1362, 4294901760
        %v1556 = vsub.f32 %v1362, %v1555
        %v1557 = vand.u32 %v1556, 4294901760
        %v1558 = vsub.f32 %v1556, %v1557
        %v1559 = vand.u32 %v1558, 4294901760
        %1560 = vmatpush1.msra.mxu0 %v1559
        %v1561 = vand.u32 %v1365, 4294901760
        %v1562 = vsub.f32 %v1365, %v1561
        %v1563 = vand.u32 %v1562, 4294901760
        %v1564 = vsub.f32 %v1562, %v1563
        %v1565 = vand.u32 %v1564, 4294901760
        %1566 = vmatprep.subr.mxu0 %v1565
        %v1567 = vand.u32 %v1364, 4294901760
        %v1568 = vsub.f32 %v1364, %v1567
        %v1569 = vand.u32 %v1568, 4294901760
        %v1570 = vsub.f32 %v1568, %v1569
        %v1571 = vand.u32 %v1570, 4294901760
        %1572 = vmatpush1.msra.mxu0 %v1571
        %v1573 = vand.u32 %v1367, 4294901760
        %v1574 = vsub.f32 %v1367, %v1573
        %v1575 = vand.u32 %v1574, 4294901760
        %v1576 = vsub.f32 %v1574, %v1575
        %v1577 = vand.u32 %v1576, 4294901760
        %1578 = vmatprep.subr.mxu0 %v1577
        %v1579 = vand.u32 %v1366, 4294901760
        %v1580 = vsub.f32 %v1366, %v1579
        %v1581 = vand.u32 %v1580, 4294901760
        %v1582 = vsub.f32 %v1580, %v1581
        %v1583 = vand.u32 %v1582, 4294901760
        %1584 = vmatpush1.msra.mxu0 %v1583
        %v1585 = vand.u32 %v1388, 4294901760
        %v1586 = vsub.f32 %v1388, %v1585
        %v1587 = vand.u32 %v1586, 4294901760
        %v1588 = vsub.f32 %v1586, %v1587
        %v1589 = vand.u32 %v1588, 4294901760
        %1590 = vmatprep.subr.mxu0 %v1589
        %v1591 = vand.u32 %v1385, 4294901760
        %v1592 = vsub.f32 %v1385, %v1591
        %v1593 = vand.u32 %v1592, 4294901760
        %v1594 = vsub.f32 %v1592, %v1593
        %v1595 = vand.u32 %v1594, 4294901760
        %1596 = vmatpush1.msra.mxu0 %v1595
        %1597 = vmatprep.subr.mxu0 0.0
        %1598 = vmatpush1.msra.mxu0 0.0
        %1599 = vmatprep.subr.mxu0 0.0
        %1600 = vmatpush1.msra.mxu0 0.0
        %1601 = vmatprep.subr.mxu0 0.0
        %1602 = vmatpush1.msra.mxu0 0.0
        %1603 = vmatprep.subr.mxu0 0.0
        %1604 = vmatpush1.msra.mxu0 0.0
        %1605 = vmatprep.subr.mxu0 0.0
        %1606 = vmatpush1.msra.mxu0 0.0
        %1607 = vmatprep.subr.mxu0 0.0
        %1608 = vmatpush1.msra.mxu0 0.0
        %1609 = vmatprep.subr.mxu0 0.0
        %1610 = vmatpush1.msra.mxu0 0.0
        %1611 = vmatprep.subr.mxu0 0.0
        %1612 = vmatpush1.msra.mxu0 0.0
        %1613 = vmatprep.subr.mxu0 0.0
        %1614 = vmatpush1.msra.mxu0 0.0
        %1615 = vmatprep.subr.mxu0 0.0
        %1616 = vmatpush1.msra.mxu0 0.0
        %1617 = vmatprep.subr.mxu0 0.0
        %1618 = vmatpush1.msra.mxu0 0.0
        %1619 = vmatprep.subr.mxu0 0.0
        %1620 = vmatpush1.msra.mxu0 0.0
        %1621 = vmatprep.subr.mxu0 0.0
        %1622 = vmatpush1.msra.mxu0 0.0
        %1623 = vmatprep.subr.mxu0 0.0
        %1624 = vmatpush1.msra.mxu0 0.0
        %1625 = vmatprep.subr.mxu0 0.0
        %1626 = vmatpush1.msra.mxu0 0.0
        %1627 = vmatprep.subr.mxu0 0.0
        %1628 = vmatpush1.msra.mxu0 0.0
        %1629 = vmatprep.subr.mxu0 0.0
        %1630 = vmatpush1.msra.mxu0 0.0
        %1631 = vmatprep.subr.mxu0 0.0
        %1632 = vmatpush1.msra.mxu0 0.0
        %1633 = vmatprep.subr.mxu0 0.0
        %1634 = vmatpush1.msra.mxu0 0.0
        %1635 = vmatprep.subr.mxu0 0.0
        %1636 = vmatpush1.msra.mxu0 0.0
        %1637 = vmatprep.subr.mxu0 0.0
        %1638 = vmatpush1.msra.mxu0 0.0
        %1639 = vmatprep.subr.mxu0 0.0
        %1640 = vmatpush1.msra.mxu0 0.0
        %1641 = vmatprep.subr.mxu0 0.0
        %1642 = vmatpush1.msra.mxu0 0.0
        %1643 = vmatprep.subr.mxu0 0.0
        %1644 = vmatpush1.msra.mxu0 0.0
        %1645 = vmatprep.subr.mxu0 0.0
        %1646 = vmatpush1.msra.mxu0 0.0
        %1647 = vmatprep.mubr.f32.mxu0 0.0
        %v1648 = vand.u32 %v1372, 4294901760
        %1649 = vmatmul.mubr.f32.gmra.mrb[0].mxu0 %v1648
        %v1650 = vpop.f32.mrb[0].mxu0
        %v1651 = vadd.f32 %v1476, %v1650
        %v1652 = vpop.f32.mrb[0].mxu0
        %v1653 = vadd.f32 %v1478, %v1652
        %1654 = vmatprep.mubr.f32.mxu0 0.0
        %v1655 = vand.u32 %v1375, 4294901760
        %1656 = vmatmul.mubr.f32.gmra.mrb[0].mxu0 %v1655
        %v1657 = vpop.f32.mrb[0].mxu0
        %v1658 = vadd.f32 %v1487, %v1657
        %v1659 = vpop.f32.mrb[0].mxu0
        %v1660 = vadd.f32 %v1489, %v1659
        %1661 = vmatprep.mubr.f32.mxu0 0.0
        %v1662 = vand.u32 %v1378, 4294901760
        %1663 = vmatmul.mubr.f32.gmra.mrb[0].mxu0 %v1662
        %v1664 = vpop.f32.mrb[0].mxu0
        %v1665 = vadd.f32 %v1498, %v1664
        %v1666 = vpop.f32.mrb[0].mxu0
        %v1667 = vadd.f32 %v1500, %v1666
        %1668 = vmatprep.mubr.f32.mxu0 0.0
        %v1669 = vand.u32 %v1381, 4294901760
        %1670 = vmatmul.mubr.f32.gmra.mrb[0].mxu0 %v1669
        %v1671 = vpop.f32.mrb[0].mxu0
        %v1672 = vadd.f32 %v1509, %v1671
        %v1673 = vpop.f32.mrb[0].mxu0
        %v1674 = vadd.f32 %v1511, %v1673
        %1675 = vdwg.mxu0
        %v1676 = vand.u32 %v1357, 4294901760
        %v1677 = vsub.f32 %v1357, %v1676
        %1678 = vmatprep.subr.mxu0 %v1677
        %v1679 = vand.u32 %v1356, 4294901760
        %v1680 = vsub.f32 %v1356, %v1679
        %1681 = vmatpush1.msra.mxu0 %v1680
        %v1682 = vand.u32 %v1359, 4294901760
        %v1683 = vsub.f32 %v1359, %v1682
        %1684 = vmatprep.subr.mxu0 %v1683
        %v1685 = vand.u32 %v1358, 4294901760
        %v1686 = vsub.f32 %v1358, %v1685
        %1687 = vmatpush1.msra.mxu0 %v1686
        %v1688 = vand.u32 %v1361, 4294901760
        %v1689 = vsub.f32 %v1361, %v1688
        %1690 = vmatprep.subr.mxu0 %v1689
        %v1691 = vand.u32 %v1360, 4294901760
        %v1692 = vsub.f32 %v1360, %v1691
        %1693 = vmatpush1.msra.mxu0 %v1692
        %v1694 = vand.u32 %v1363, 4294901760
        %v1695 = vsub.f32 %v1363, %v1694
        %1696 = vmatprep.subr.mxu0 %v1695
        %v1697 = vand.u32 %v1362, 4294901760
        %v1698 = vsub.f32 %v1362, %v1697
        %1699 = vmatpush1.msra.mxu0 %v1698
        %v1700 = vand.u32 %v1365, 4294901760
        %v1701 = vsub.f32 %v1365, %v1700
        %1702 = vmatprep.subr.mxu0 %v1701
        %v1703 = vand.u32 %v1364, 4294901760
        %v1704 = vsub.f32 %v1364, %v1703
        %1705 = vmatpush1.msra.mxu0 %v1704
        %v1706 = vand.u32 %v1367, 4294901760
        %v1707 = vsub.f32 %v1367, %v1706
        %1708 = vmatprep.subr.mxu0 %v1707
        %v1709 = vand.u32 %v1366, 4294901760
        %v1710 = vsub.f32 %v1366, %v1709
        %1711 = vmatpush1.msra.mxu0 %v1710
        %v1712 = vand.u32 %v1388, 4294901760
        %v1713 = vsub.f32 %v1388, %v1712
        %1714 = vmatprep.subr.mxu0 %v1713
        %v1715 = vand.u32 %v1385, 4294901760
        %v1716 = vsub.f32 %v1385, %v1715
        %1717 = vmatpush1.msra.mxu0 %v1716
        %1718 = vmatprep.subr.mxu0 0.0
        %1719 = vmatpush1.msra.mxu0 0.0
        %1720 = vmatprep.subr.mxu0 0.0
        %1721 = vmatpush1.msra.mxu0 0.0
        %1722 = vmatprep.subr.mxu0 0.0
        %1723 = vmatpush1.msra.mxu0 0.0
        %1724 = vmatprep.subr.mxu0 0.0
        %1725 = vmatpush1.msra.mxu0 0.0
        %1726 = vmatprep.subr.mxu0 0.0
        %1727 = vmatpush1.msra.mxu0 0.0
        %1728 = vmatprep.subr.mxu0 0.0
        %1729 = vmatpush1.msra.mxu0 0.0
        %1730 = vmatprep.subr.mxu0 0.0
        %1731 = vmatpush1.msra.mxu0 0.0
        %1732 = vmatprep.subr.mxu0 0.0
        %1733 = vmatpush1.msra.mxu0 0.0
        %1734 = vmatprep.subr.mxu0 0.0
        %1735 = vmatpush1.msra.mxu0 0.0
        %1736 = vmatprep.subr.mxu0 0.0
        %1737 = vmatpush1.msra.mxu0 0.0
        %1738 = vmatprep.subr.mxu0 0.0
        %1739 = vmatpush1.msra.mxu0 0.0
        %1740 = vmatprep.subr.mxu0 0.0
        %1741 = vmatpush1.msra.mxu0 0.0
        %1742 = vmatprep.subr.mxu0 0.0
        %1743 = vmatpush1.msra.mxu0 0.0
        %1744 = vmatprep.subr.mxu0 0.0
        %1745 = vmatpush1.msra.mxu0 0.0
        %1746 = vmatprep.subr.mxu0 0.0
        %1747 = vmatpush1.msra.mxu0 0.0
        %1748 = vmatprep.subr.mxu0 0.0
        %1749 = vmatpush1.msra.mxu0 0.0
        %1750 = vmatprep.subr.mxu0 0.0
        %1751 = vmatpush1.msra.mxu0 0.0
        %1752 = vmatprep.subr.mxu0 0.0
        %1753 = vmatpush1.msra.mxu0 0.0
        %1754 = vmatprep.subr.mxu0 0.0
        %1755 = vmatpush1.msra.mxu0 0.0
        %1756 = vmatprep.subr.mxu0 0.0
        %1757 = vmatpush1.msra.mxu0 0.0
        %1758 = vmatprep.subr.mxu0 0.0
        %1759 = vmatpush1.msra.mxu0 0.0
        %1760 = vmatprep.subr.mxu0 0.0
        %1761 = vmatpush1.msra.mxu0 0.0
        %1762 = vmatprep.subr.mxu0 0.0
        %1763 = vmatpush1.msra.mxu0 0.0
        %1764 = vmatprep.subr.mxu0 0.0
        %1765 = vmatpush1.msra.mxu0 0.0
        %1766 = vmatprep.subr.mxu0 0.0
        %1767 = vmatpush1.msra.mxu0 0.0
        %1768 = vmatprep.mubr.f32.mxu0 0.0
        %v1769 = vand.u32 %v1372, 4294901760
        %v1770 = vsub.f32 %v1372, %v1769
        %1771 = vmatmul.mubr.f32.gmra.mrb[0].mxu0 %v1770
        %v1772 = vpop.f32.mrb[0].mxu0
        %v1773 = vadd.f32 %v1651, %v1772
        %v1774 = vpop.f32.mrb[0].mxu0
        %v1775 = vadd.f32 %v1653, %v1774
        %1776 = vmatprep.mubr.f32.mxu0 0.0
        %v1777 = vand.u32 %v1375, 4294901760
        %v1778 = vsub.f32 %v1375, %v1777
        %1779 = vmatmul.mubr.f32.gmra.mrb[0].mxu0 %v1778
        %v1780 = vpop.f32.mrb[0].mxu0
        %v1781 = vadd.f32 %v1658, %v1780
        %v1782 = vpop.f32.mrb[0].mxu0
        %v1783 = vadd.f32 %v1660, %v1782
        %1784 = vmatprep.mubr.f32.mxu0 0.0
        %v1785 = vand.u32 %v1378, 4294901760
        %v1786 = vsub.f32 %v1378, %v1785
        %1787 = vmatmul.mubr.f32.gmra.mrb[0].mxu0 %v1786
        %v1788 = vpop.f32.mrb[0].mxu0
        %v1789 = vadd.f32 %v1665, %v1788
        %v1790 = vpop.f32.mrb[0].mxu0
        %v1791 = vadd.f32 %v1667, %v1790
        %1792 = vmatprep.mubr.f32.mxu0 0.0
        %v1793 = vand.u32 %v1381, 4294901760
        %v1794 = vsub.f32 %v1381, %v1793
        %1795 = vmatmul.mubr.f32.gmra.mrb[0].mxu0 %v1794
        %v1796 = vpop.f32.mrb[0].mxu0
        %v1797 = vadd.f32 %v1672, %v1796
        %v1798 = vpop.f32.mrb[0].mxu0
        %v1799 = vadd.f32 %v1674, %v1798
        %1800 = vdwg.mxu0
        %v1801 = vand.u32 %v1357, 4294901760
        %1802 = vmatprep.subr.mxu0 %v1801
        %v1803 = vand.u32 %v1356, 4294901760
        %1804 = vmatpush1.msra.mxu0 %v1803
        %v1805 = vand.u32 %v1359, 4294901760
        %1806 = vmatprep.subr.mxu0 %v1805
        %v1807 = vand.u32 %v1358, 4294901760
        %1808 = vmatpush1.msra.mxu0 %v1807
        %v1809 = vand.u32 %v1361, 4294901760
        %1810 = vmatprep.subr.mxu0 %v1809
        %v1811 = vand.u32 %v1360, 4294901760
        %1812 = vmatpush1.msra.mxu0 %v1811
        %v1813 = vand.u32 %v1363, 4294901760
        %1814 = vmatprep.subr.mxu0 %v1813
        %v1815 = vand.u32 %v1362, 4294901760
        %1816 = vmatpush1.msra.mxu0 %v1815
        %v1817 = vand.u32 %v1365, 4294901760
        %1818 = vmatprep.subr.mxu0 %v1817
        %v1819 = vand.u32 %v1364, 4294901760
        %1820 = vmatpush1.msra.mxu0 %v1819
        %v1821 = vand.u32 %v1367, 4294901760
        %1822 = vmatprep.subr.mxu0 %v1821
        %v1823 = vand.u32 %v1366, 4294901760
        %1824 = vmatpush1.msra.mxu0 %v1823
        %v1825 = vand.u32 %v1388, 4294901760
        %1826 = vmatprep.subr.mxu0 %v1825
        %v1827 = vand.u32 %v1385, 4294901760
        %1828 = vmatpush1.msra.mxu0 %v1827
        %1829 = vmatprep.subr.mxu0 0.0
        %1830 = vmatpush1.msra.mxu0 0.0
        %1831 = vmatprep.subr.mxu0 0.0
        %1832 = vmatpush1.msra.mxu0 0.0
        %1833 = vmatprep.subr.mxu0 0.0
        %1834 = vmatpush1.msra.mxu0 0.0
        %1835 = vmatprep.subr.mxu0 0.0
        %1836 = vmatpush1.msra.mxu0 0.0
        %1837 = vmatprep.subr.mxu0 0.0
        %1838 = vmatpush1.msra.mxu0 0.0
        %1839 = vmatprep.subr.mxu0 0.0
        %1840 = vmatpush1.msra.mxu0 0.0
        %1841 = vmatprep.subr.mxu0 0.0
        %1842 = vmatpush1.msra.mxu0 0.0
        %1843 = vmatprep.subr.mxu0 0.0
        %1844 = vmatpush1.msra.mxu0 0.0
        %1845 = vmatprep.subr.mxu0 0.0
        %1846 = vmatpush1.msra.mxu0 0.0
        %1847 = vmatprep.subr.mxu0 0.0
        %1848 = vmatpush1.msra.mxu0 0.0
        %1849 = vmatprep.subr.mxu0 0.0
        %1850 = vmatpush1.msra.mxu0 0.0
        %1851 = vmatprep.subr.mxu0 0.0
        %1852 = vmatpush1.msra.mxu0 0.0
        %1853 = vmatprep.subr.mxu0 0.0
        %1854 = vmatpush1.msra.mxu0 0.0
        %1855 = vmatprep.subr.mxu0 0.0
        %1856 = vmatpush1.msra.mxu0 0.0
        %1857 = vmatprep.subr.mxu0 0.0
        %1858 = vmatpush1.msra.mxu0 0.0
        %1859 = vmatprep.subr.mxu0 0.0
        %1860 = vmatpush1.msra.mxu0 0.0
        %1861 = vmatprep.subr.mxu0 0.0
        %1862 = vmatpush1.msra.mxu0 0.0
        %1863 = vmatprep.subr.mxu0 0.0
        %1864 = vmatpush1.msra.mxu0 0.0
        %1865 = vmatprep.subr.mxu0 0.0
        %1866 = vmatpush1.msra.mxu0 0.0
        %1867 = vmatprep.subr.mxu0 0.0
        %1868 = vmatpush1.msra.mxu0 0.0
        %1869 = vmatprep.subr.mxu0 0.0
        %1870 = vmatpush1.msra.mxu0 0.0
        %1871 = vmatprep.subr.mxu0 0.0
        %1872 = vmatpush1.msra.mxu0 0.0
        %1873 = vmatprep.subr.mxu0 0.0
        %1874 = vmatpush1.msra.mxu0 0.0
        %1875 = vmatprep.subr.mxu0 0.0
        %1876 = vmatpush1.msra.mxu0 0.0
        %1877 = vmatprep.subr.mxu0 0.0
        %1878 = vmatpush1.msra.mxu0 0.0
        %1879 = vmatprep.mubr.f32.mxu0 0.0
        %v1880 = vand.u32 %v1372, 4294901760
        %v1881 = vsub.f32 %v1372, %v1880
        %v1882 = vand.u32 %v1881, 4294901760
        %1883 = vmatmul.mubr.f32.gmra.mrb[0].mxu0 %v1882
        %v1884 = vpop.f32.mrb[0].mxu0
        %v1885 = vadd.f32 %v1773, %v1884
        %v1886 = vpop.f32.mrb[0].mxu0
        %v1887 = vadd.f32 %v1775, %v1886
        %1888 = vmatprep.mubr.f32.mxu0 0.0
        %v1889 = vand.u32 %v1375, 4294901760
        %v1890 = vsub.f32 %v1375, %v1889
        %v1891 = vand.u32 %v1890, 4294901760
        %1892 = vmatmul.mubr.f32.gmra.mrb[0].mxu0 %v1891
        %v1893 = vpop.f32.mrb[0].mxu0
        %v1894 = vadd.f32 %v1781, %v1893
        %v1895 = vpop.f32.mrb[0].mxu0
        %v1896 = vadd.f32 %v1783, %v1895
        %1897 = vmatprep.mubr.f32.mxu0 0.0
        %v1898 = vand.u32 %v1378, 4294901760
        %v1899 = vsub.f32 %v1378, %v1898
        %v1900 = vand.u32 %v1899, 4294901760
        %1901 = vmatmul.mubr.f32.gmra.mrb[0].mxu0 %v1900
        %v1902 = vpop.f32.mrb[0].mxu0
        %v1903 = vadd.f32 %v1789, %v1902
        %v1904 = vpop.f32.mrb[0].mxu0
        %v1905 = vadd.f32 %v1791, %v1904
        %1906 = vmatprep.mubr.f32.mxu0 0.0
        %v1907 = vand.u32 %v1381, 4294901760
        %v1908 = vsub.f32 %v1381, %v1907
        %v1909 = vand.u32 %v1908, 4294901760
        %1910 = vmatmul.mubr.f32.gmra.mrb[0].mxu0 %v1909
        %v1911 = vpop.f32.mrb[0].mxu0
        %v1912 = vadd.f32 %v1797, %v1911
        %v1913 = vpop.f32.mrb[0].mxu0
        %v1914 = vadd.f32 %v1799, %v1913
        %1915 = vdwg.mxu0
        %v1916 = vand.u32 %v1357, 4294901760
        %v1917 = vsub.f32 %v1357, %v1916
        %v1918 = vand.u32 %v1917, 4294901760
        %1919 = vmatprep.subr.mxu0 %v1918
        %v1920 = vand.u32 %v1356, 4294901760
        %v1921 = vsub.f32 %v1356, %v1920
        %v1922 = vand.u32 %v1921, 4294901760
        %1923 = vmatpush1.msra.mxu0 %v1922
        %v1924 = vand.u32 %v1359, 4294901760
        %v1925 = vsub.f32 %v1359, %v1924
        %v1926 = vand.u32 %v1925, 4294901760
        %1927 = vmatprep.subr.mxu0 %v1926
        %v1928 = vand.u32 %v1358, 4294901760
        %v1929 = vsub.f32 %v1358, %v1928
        %v1930 = vand.u32 %v1929, 4294901760
        %1931 = vmatpush1.msra.mxu0 %v1930
        %v1932 = vand.u32 %v1361, 4294901760
        %v1933 = vsub.f32 %v1361, %v1932
        %v1934 = vand.u32 %v1933, 4294901760
        %1935 = vmatprep.subr.mxu0 %v1934
        %v1936 = vand.u32 %v1360, 4294901760
        %v1937 = vsub.f32 %v1360, %v1936
        %v1938 = vand.u32 %v1937, 4294901760
        %1939 = vmatpush1.msra.mxu0 %v1938
        %v1940 = vand.u32 %v1363, 4294901760
        %v1941 = vsub.f32 %v1363, %v1940
        %v1942 = vand.u32 %v1941, 4294901760
        %1943 = vmatprep.subr.mxu0 %v1942
        %v1944 = vand.u32 %v1362, 4294901760
        %v1945 = vsub.f32 %v1362, %v1944
        %v1946 = vand.u32 %v1945, 4294901760
        %1947 = vmatpush1.msra.mxu0 %v1946
        %v1948 = vand.u32 %v1365, 4294901760
        %v1949 = vsub.f32 %v1365, %v1948
        %v1950 = vand.u32 %v1949, 4294901760
        %1951 = vmatprep.subr.mxu0 %v1950
        %v1952 = vand.u32 %v1364, 4294901760
        %v1953 = vsub.f32 %v1364, %v1952
        %v1954 = vand.u32 %v1953, 4294901760
        %1955 = vmatpush1.msra.mxu0 %v1954
        %v1956 = vand.u32 %v1367, 4294901760
        %v1957 = vsub.f32 %v1367, %v1956
        %v1958 = vand.u32 %v1957, 4294901760
        %1959 = vmatprep.subr.mxu0 %v1958
        %v1960 = vand.u32 %v1366, 4294901760
        %v1961 = vsub.f32 %v1366, %v1960
        %v1962 = vand.u32 %v1961, 4294901760
        %1963 = vmatpush1.msra.mxu0 %v1962
        %v1964 = vand.u32 %v1388, 4294901760
        %v1965 = vsub.f32 %v1388, %v1964
        %v1966 = vand.u32 %v1965, 4294901760
        %1967 = vmatprep.subr.mxu0 %v1966
        %v1968 = vand.u32 %v1385, 4294901760
        %v1969 = vsub.f32 %v1385, %v1968
        %v1970 = vand.u32 %v1969, 4294901760
        %1971 = vmatpush1.msra.mxu0 %v1970
        %1972 = vmatprep.subr.mxu0 0.0
        %1973 = vmatpush1.msra.mxu0 0.0
        %1974 = vmatprep.subr.mxu0 0.0
        %1975 = vmatpush1.msra.mxu0 0.0
        %1976 = vmatprep.subr.mxu0 0.0
        %1977 = vmatpush1.msra.mxu0 0.0
        %1978 = vmatprep.subr.mxu0 0.0
        %1979 = vmatpush1.msra.mxu0 0.0
        %1980 = vmatprep.subr.mxu0 0.0
        %1981 = vmatpush1.msra.mxu0 0.0
        %1982 = vmatprep.subr.mxu0 0.0
        %1983 = vmatpush1.msra.mxu0 0.0
        %1984 = vmatprep.subr.mxu0 0.0
        %1985 = vmatpush1.msra.mxu0 0.0
        %1986 = vmatprep.subr.mxu0 0.0
        %1987 = vmatpush1.msra.mxu0 0.0
        %1988 = vmatprep.subr.mxu0 0.0
        %1989 = vmatpush1.msra.mxu0 0.0
        %1990 = vmatprep.subr.mxu0 0.0
        %1991 = vmatpush1.msra.mxu0 0.0
        %1992 = vmatprep.subr.mxu0 0.0
        %1993 = vmatpush1.msra.mxu0 0.0
        %1994 = vmatprep.subr.mxu0 0.0
        %1995 = vmatpush1.msra.mxu0 0.0
        %1996 = vmatprep.subr.mxu0 0.0
        %1997 = vmatpush1.msra.mxu0 0.0
        %1998 = vmatprep.subr.mxu0 0.0
        %1999 = vmatpush1.msra.mxu0 0.0
        %2000 = vmatprep.subr.mxu0 0.0
        %2001 = vmatpush1.msra.mxu0 0.0
        %2002 = vmatprep.subr.mxu0 0.0
        %2003 = vmatpush1.msra.mxu0 0.0
        %2004 = vmatprep.subr.mxu0 0.0
        %2005 = vmatpush1.msra.mxu0 0.0
        %2006 = vmatprep.subr.mxu0 0.0
        %2007 = vmatpush1.msra.mxu0 0.0
        %2008 = vmatprep.subr.mxu0 0.0
        %2009 = vmatpush1.msra.mxu0 0.0
        %2010 = vmatprep.subr.mxu0 0.0
        %2011 = vmatpush1.msra.mxu0 0.0
        %2012 = vmatprep.subr.mxu0 0.0
        %2013 = vmatpush1.msra.mxu0 0.0
        %2014 = vmatprep.subr.mxu0 0.0
        %2015 = vmatpush1.msra.mxu0 0.0
        %2016 = vmatprep.subr.mxu0 0.0
        %2017 = vmatpush1.msra.mxu0 0.0
        %2018 = vmatprep.subr.mxu0 0.0
        %2019 = vmatpush1.msra.mxu0 0.0
        %2020 = vmatprep.subr.mxu0 0.0
        %2021 = vmatpush1.msra.mxu0 0.0
        %2022 = vmatprep.mubr.f32.mxu0 0.0
        %v2023 = vand.u32 %v1372, 4294901760
        %2024 = vmatmul.mubr.f32.gmra.mrb[0].mxu0 %v2023
        %v2025 = vpop.f32.mrb[0].mxu0
        %v2026 = vadd.f32 %v1885, %v2025
        %v2027 = vpop.f32.mrb[0].mxu0
        %v2028 = vadd.f32 %v1887, %v2027
        %2029 = vmatprep.mubr.f32.mxu0 0.0
        %v2030 = vand.u32 %v1375, 4294901760
        %2031 = vmatmul.mubr.f32.gmra.mrb[0].mxu0 %v2030
        %v2032 = vpop.f32.mrb[0].mxu0
        %v2033 = vadd.f32 %v1894, %v2032
        %v2034 = vpop.f32.mrb[0].mxu0
        %v2035 = vadd.f32 %v1896, %v2034
        %2036 = vmatprep.mubr.f32.mxu0 0.0
        %v2037 = vand.u32 %v1378, 4294901760
        %2038 = vmatmul.mubr.f32.gmra.mrb[0].mxu0 %v2037
        %v2039 = vpop.f32.mrb[0].mxu0
        %v2040 = vadd.f32 %v1903, %v2039
        %v2041 = vpop.f32.mrb[0].mxu0
        %v2042 = vadd.f32 %v1905, %v2041
        %2043 = vmatprep.mubr.f32.mxu0 0.0
        %v2044 = vand.u32 %v1381, 4294901760
        %2045 = vmatmul.mubr.f32.gmra.mrb[0].mxu0 %v2044
        %v2046 = vpop.f32.mrb[0].mxu0
        %v2047 = vadd.f32 %v1912, %v2046
        %v2048 = vpop.f32.mrb[0].mxu0
        %v2049 = vadd.f32 %v1914, %v2048
        %2050 = vdwg.mxu0
        %v2051 = vand.u32 %v1357, 4294901760
        %2052 = vmatprep.subr.mxu0 %v2051
        %v2053 = vand.u32 %v1356, 4294901760
        %2054 = vmatpush1.msra.mxu0 %v2053
        %v2055 = vand.u32 %v1359, 4294901760
        %2056 = vmatprep.subr.mxu0 %v2055
        %v2057 = vand.u32 %v1358, 4294901760
        %2058 = vmatpush1.msra.mxu0 %v2057
        %v2059 = vand.u32 %v1361, 4294901760
        %2060 = vmatprep.subr.mxu0 %v2059
        %v2061 = vand.u32 %v1360, 4294901760
        %2062 = vmatpush1.msra.mxu0 %v2061
        %v2063 = vand.u32 %v1363, 4294901760
        %2064 = vmatprep.subr.mxu0 %v2063
        %v2065 = vand.u32 %v1362, 4294901760
        %2066 = vmatpush1.msra.mxu0 %v2065
        %v2067 = vand.u32 %v1365, 4294901760
        %2068 = vmatprep.subr.mxu0 %v2067
        %v2069 = vand.u32 %v1364, 4294901760
        %2070 = vmatpush1.msra.mxu0 %v2069
        %v2071 = vand.u32 %v1367, 4294901760
        %2072 = vmatprep.subr.mxu0 %v2071
        %v2073 = vand.u32 %v1366, 4294901760
        %2074 = vmatpush1.msra.mxu0 %v2073
        %v2075 = vand.u32 %v1388, 4294901760
        %2076 = vmatprep.subr.mxu0 %v2075
        %v2077 = vand.u32 %v1385, 4294901760
        %2078 = vmatpush1.msra.mxu0 %v2077
        %2079 = vmatprep.subr.mxu0 0.0
        %2080 = vmatpush1.msra.mxu0 0.0
        %2081 = vmatprep.subr.mxu0 0.0
        %2082 = vmatpush1.msra.mxu0 0.0
        %2083 = vmatprep.subr.mxu0 0.0
        %2084 = vmatpush1.msra.mxu0 0.0
        %2085 = vmatprep.subr.mxu0 0.0
        %2086 = vmatpush1.msra.mxu0 0.0
        %2087 = vmatprep.subr.mxu0 0.0
        %2088 = vmatpush1.msra.mxu0 0.0
        %2089 = vmatprep.subr.mxu0 0.0
        %2090 = vmatpush1.msra.mxu0 0.0
        %2091 = vmatprep.subr.mxu0 0.0
        %2092 = vmatpush1.msra.mxu0 0.0
        %2093 = vmatprep.subr.mxu0 0.0
        %2094 = vmatpush1.msra.mxu0 0.0
        %2095 = vmatprep.subr.mxu0 0.0
        %2096 = vmatpush1.msra.mxu0 0.0
        %2097 = vmatprep.subr.mxu0 0.0
        %2098 = vmatpush1.msra.mxu0 0.0
        %2099 = vmatprep.subr.mxu0 0.0
        %2100 = vmatpush1.msra.mxu0 0.0
        %2101 = vmatprep.subr.mxu0 0.0
        %2102 = vmatpush1.msra.mxu0 0.0
        %2103 = vmatprep.subr.mxu0 0.0
        %2104 = vmatpush1.msra.mxu0 0.0
        %2105 = vmatprep.subr.mxu0 0.0
        %2106 = vmatpush1.msra.mxu0 0.0
        %2107 = vmatprep.subr.mxu0 0.0
        %2108 = vmatpush1.msra.mxu0 0.0
        %2109 = vmatprep.subr.mxu0 0.0
        %2110 = vmatpush1.msra.mxu0 0.0
        %2111 = vmatprep.subr.mxu0 0.0
        %2112 = vmatpush1.msra.mxu0 0.0
        %2113 = vmatprep.subr.mxu0 0.0
        %2114 = vmatpush1.msra.mxu0 0.0
        %2115 = vmatprep.subr.mxu0 0.0
        %2116 = vmatpush1.msra.mxu0 0.0
        %2117 = vmatprep.subr.mxu0 0.0
        %2118 = vmatpush1.msra.mxu0 0.0
        %2119 = vmatprep.subr.mxu0 0.0
        %2120 = vmatpush1.msra.mxu0 0.0
        %2121 = vmatprep.subr.mxu0 0.0
        %2122 = vmatpush1.msra.mxu0 0.0
        %2123 = vmatprep.subr.mxu0 0.0
        %2124 = vmatpush1.msra.mxu0 0.0
        %2125 = vmatprep.subr.mxu0 0.0
        %2126 = vmatpush1.msra.mxu0 0.0
        %2127 = vmatprep.subr.mxu0 0.0
        %2128 = vmatpush1.msra.mxu0 0.0
        %2129 = vmatprep.mubr.f32.mxu0 0.0
        %v2130 = vand.u32 %v1372, 4294901760
        %2131 = vmatmul.mubr.f32.gmra.mrb[0].mxu0 %v2130
        %v2132 = vpop.f32.mrb[0].mxu0
        %v2133 = vadd.f32 %v2026, %v2132
        %v2134 = vpop.f32.mrb[0].mxu0
        %v2135 = vadd.f32 %v2028, %v2134
        %2136 = vmatprep.mubr.f32.mxu0 0.0
        %v2137 = vand.u32 %v1375, 4294901760
        %2138 = vmatmul.mubr.f32.gmra.mrb[0].mxu0 %v2137
        %v2139 = vpop.f32.mrb[0].mxu0
        %v2140 = vadd.f32 %v2033, %v2139
        %v2141 = vpop.f32.mrb[0].mxu0
        %v2142 = vadd.f32 %v2035, %v2141
        %2143 = vmatprep.mubr.f32.mxu0 0.0
        %v2144 = vand.u32 %v1378, 4294901760
        %2145 = vmatmul.mubr.f32.gmra.mrb[0].mxu0 %v2144
        %v2146 = vpop.f32.mrb[0].mxu0
        %v2147 = vadd.f32 %v2040, %v2146
        %v2148 = vpop.f32.mrb[0].mxu0
        %v2149 = vadd.f32 %v2042, %v2148
        %2150 = vmatprep.mubr.f32.mxu0 0.0
        %v2151 = vand.u32 %v1381, 4294901760
        %2152 = vmatmul.mubr.f32.gmra.mrb[0].mxu0 %v2151
        %v2153 = vpop.f32.mrb[0].mxu0
        %v2154 = vadd.f32 %v2047, %v2153
        %v2155 = vpop.f32.mrb[0].mxu0
        %v2156 = vadd.f32 %v2049, %v2155
        %2157 = vdwg.mxu0
        %v2158 = vld [vmem:[%s5] sm:$0xff]
        %v2159 = vld [vmem:[%s5 + $0x8] sm:$0xff]
        %v2160 = vld [vmem:[%s5 + $0x10] sm:$0xff]
        %v2161 = vld [vmem:[%s5 + $0x18] sm:$0xff]
        %v2162 = vld [vmem:[%s5 + $0x20] sm:$0xff]
        %v2163 = vld [vmem:[%s5 + $0x28] sm:$0xff]
        %v2164 = vld [vmem:[%s5 + $0x30] sm:$0xff]
        %v2165 = vld [vmem:[%s5 + $0x38] sm:$0xff]
        %v2166 = vld [vmem:[%s5 + $0x40] sm:$0xff]
        %vm2167 = vcmask 293888
        %v2169 = vsel %vm2167, %v2158, 0
        %v2172 = vsel %vm2167, %v2159, 0
        %v2175 = vsel %vm2167, %v2160, 0
        %v2178 = vsel %vm2167, %v2161, 0
        %v2181 = vsel %vm2167, %v2162, 0
        %v2184 = vsel %vm2167, %v2163, 0
        %v2187 = vsel %vm2167, %v2164, 0
        %v2190 = vsel %vm2167, %v2165, 0
        %v2193 = vsel %vm2167, %v2166, 0
        %vm2195 = vcmask 1043456
        %v2196 = vsel %vm2195, %v334, 0
        %v2198 = vsel %vm2195, %v368, 0
        %v2200 = vand.u32 %v2135, 4294901760
        %2201 = vmatprep.subr.mxu0 %v2200
        %v2202 = vand.u32 %v2133, 4294901760
        %2203 = vmatpush1.msra.mxu0 %v2202
        %v2204 = vand.u32 %v2142, 4294901760
        %2205 = vmatprep.subr.mxu0 %v2204
        %v2206 = vand.u32 %v2140, 4294901760
        %2207 = vmatpush1.msra.mxu0 %v2206
        %v2208 = vand.u32 %v2149, 4294901760
        %2209 = vmatprep.subr.mxu0 %v2208
        %v2210 = vand.u32 %v2147, 4294901760
        %2211 = vmatpush1.msra.mxu0 %v2210
        %v2212 = vand.u32 %v2156, 4294901760
        %2213 = vmatprep.subr.mxu0 %v2212
        %v2214 = vand.u32 %v2154, 4294901760
        %2215 = vmatpush1.msra.mxu0 %v2214
        %v2216 = vand.u32 %v2198, 4294901760
        %2217 = vmatprep.subr.mxu0 %v2216
        %v2218 = vand.u32 %v2196, 4294901760
        %2219 = vmatpush1.msra.mxu0 %v2218
        %2220 = vmatprep.subr.mxu0 0.0
        %2221 = vmatpush1.msra.mxu0 0.0
        %2222 = vmatprep.subr.mxu0 0.0
        %2223 = vmatpush1.msra.mxu0 0.0
        %2224 = vmatprep.subr.mxu0 0.0
        %2225 = vmatpush1.msra.mxu0 0.0
        %2226 = vmatprep.subr.mxu0 0.0
        %2227 = vmatpush1.msra.mxu0 0.0
        %2228 = vmatprep.subr.mxu0 0.0
        %2229 = vmatpush1.msra.mxu0 0.0
        %2230 = vmatprep.subr.mxu0 0.0
        %2231 = vmatpush1.msra.mxu0 0.0
        %2232 = vmatprep.subr.mxu0 0.0
        %2233 = vmatpush1.msra.mxu0 0.0
        %2234 = vmatprep.subr.mxu0 0.0
        %2235 = vmatpush1.msra.mxu0 0.0
        %2236 = vmatprep.subr.mxu0 0.0
        %2237 = vmatpush1.msra.mxu0 0.0
        %2238 = vmatprep.subr.mxu0 0.0
        %2239 = vmatpush1.msra.mxu0 0.0
        %2240 = vmatprep.subr.mxu0 0.0
        %2241 = vmatpush1.msra.mxu0 0.0
        %2242 = vmatprep.subr.mxu0 0.0
        %2243 = vmatpush1.msra.mxu0 0.0
        %2244 = vmatprep.subr.mxu0 0.0
        %2245 = vmatpush1.msra.mxu0 0.0
        %2246 = vmatprep.subr.mxu0 0.0
        %2247 = vmatpush1.msra.mxu0 0.0
        %2248 = vmatprep.subr.mxu0 0.0
        %2249 = vmatpush1.msra.mxu0 0.0
        %2250 = vmatprep.subr.mxu0 0.0
        %2251 = vmatpush1.msra.mxu0 0.0
        %2252 = vmatprep.subr.mxu0 0.0
        %2253 = vmatpush1.msra.mxu0 0.0
        %2254 = vmatprep.subr.mxu0 0.0
        %2255 = vmatpush1.msra.mxu0 0.0
        %2256 = vmatprep.subr.mxu0 0.0
        %2257 = vmatpush1.msra.mxu0 0.0
        %2258 = vmatprep.subr.mxu0 0.0
        %2259 = vmatpush1.msra.mxu0 0.0
        %2260 = vmatprep.subr.mxu0 0.0
        %2261 = vmatpush1.msra.mxu0 0.0
        %2262 = vmatprep.subr.mxu0 0.0
        %2263 = vmatpush1.msra.mxu0 0.0
        %2264 = vmatprep.subr.mxu0 0.0
        %2265 = vmatpush1.msra.mxu0 0.0
        %2266 = vmatprep.subr.mxu0 0.0
        %2267 = vmatpush1.msra.mxu0 0.0
        %2268 = vmatprep.subr.mxu0 0.0
        %2269 = vmatpush1.msra.mxu0 0.0
        %2270 = vmatprep.subr.mxu0 0.0
        %2271 = vmatpush1.msra.mxu0 0.0
        %2272 = vmatprep.subr.mxu0 0.0
        %2273 = vmatpush1.msra.mxu0 0.0
        %2274 = vmatprep.mubr.f32.mxu0 0.0
        %v2275 = vand.u32 %v2169, 4294901760
        %v2276 = vsub.f32 %v2169, %v2275
        %v2277 = vand.u32 %v2276, 4294901760
        %v2278 = vsub.f32 %v2276, %v2277
        %v2279 = vand.u32 %v2278, 4294901760
        %2280 = vmatmul.mubr.f32.gmra.mrb[0].mxu0 %v2279
        %v2281 = vpop.f32.mrb[0].mxu0
        %v2282 = vadd.f32 0.0, %v2281
        %v2283 = vpop.f32.mrb[0].mxu0
        %v2284 = vadd.f32 0.0, %v2283
        %2285 = vmatprep.mubr.f32.mxu0 0.0
        %v2286 = vand.u32 %v2172, 4294901760
        %v2287 = vsub.f32 %v2172, %v2286
        %v2288 = vand.u32 %v2287, 4294901760
        %v2289 = vsub.f32 %v2287, %v2288
        %v2290 = vand.u32 %v2289, 4294901760
        %2291 = vmatmul.mubr.f32.gmra.mrb[0].mxu0 %v2290
        %v2292 = vpop.f32.mrb[0].mxu0
        %v2293 = vadd.f32 0.0, %v2292
        %v2294 = vpop.f32.mrb[0].mxu0
        %v2295 = vadd.f32 0.0, %v2294
        %2296 = vmatprep.mubr.f32.mxu0 0.0
        %v2297 = vand.u32 %v2175, 4294901760
        %v2298 = vsub.f32 %v2175, %v2297
        %v2299 = vand.u32 %v2298, 4294901760
        %v2300 = vsub.f32 %v2298, %v2299
        %v2301 = vand.u32 %v2300, 4294901760
        %2302 = vmatmul.mubr.f32.gmra.mrb[0].mxu0 %v2301
        %v2303 = vpop.f32.mrb[0].mxu0
        %v2304 = vadd.f32 0.0, %v2303
        %v2305 = vpop.f32.mrb[0].mxu0
        %v2306 = vadd.f32 0.0, %v2305
        %2307 = vmatprep.mubr.f32.mxu0 0.0
        %v2308 = vand.u32 %v2178, 4294901760
        %v2309 = vsub.f32 %v2178, %v2308
        %v2310 = vand.u32 %v2309, 4294901760
        %v2311 = vsub.f32 %v2309, %v2310
        %v2312 = vand.u32 %v2311, 4294901760
        %2313 = vmatmul.mubr.f32.gmra.mrb[0].mxu0 %v2312
        %v2314 = vpop.f32.mrb[0].mxu0
        %v2315 = vadd.f32 0.0, %v2314
        %v2316 = vpop.f32.mrb[0].mxu0
        %v2317 = vadd.f32 0.0, %v2316
        %2318 = vmatprep.mubr.f32.mxu0 0.0
        %v2319 = vand.u32 %v2181, 4294901760
        %v2320 = vsub.f32 %v2181, %v2319
        %v2321 = vand.u32 %v2320, 4294901760
        %v2322 = vsub.f32 %v2320, %v2321
        %v2323 = vand.u32 %v2322, 4294901760
        %2324 = vmatmul.mubr.f32.gmra.mrb[0].mxu0 %v2323
        %v2325 = vpop.f32.mrb[0].mxu0
        %v2326 = vadd.f32 0.0, %v2325
        %v2327 = vpop.f32.mrb[0].mxu0
        %v2328 = vadd.f32 0.0, %v2327
        %2329 = vmatprep.mubr.f32.mxu0 0.0
        %v2330 = vand.u32 %v2184, 4294901760
        %v2331 = vsub.f32 %v2184, %v2330
        %v2332 = vand.u32 %v2331, 4294901760
        %v2333 = vsub.f32 %v2331, %v2332
        %v2334 = vand.u32 %v2333, 4294901760
        %2335 = vmatmul.mubr.f32.gmra.mrb[0].mxu0 %v2334
        %v2336 = vpop.f32.mrb[0].mxu0
        %v2337 = vadd.f32 0.0, %v2336
        %v2338 = vpop.f32.mrb[0].mxu0
        %v2339 = vadd.f32 0.0, %v2338
        %2340 = vmatprep.mubr.f32.mxu0 0.0
        %v2341 = vand.u32 %v2187, 4294901760
        %v2342 = vsub.f32 %v2187, %v2341
        %v2343 = vand.u32 %v2342, 4294901760
        %v2344 = vsub.f32 %v2342, %v2343
        %v2345 = vand.u32 %v2344, 4294901760
        %2346 = vmatmul.mubr.f32.gmra.mrb[0].mxu0 %v2345
        %v2347 = vpop.f32.mrb[0].mxu0
        %v2348 = vadd.f32 0.0, %v2347
        %v2349 = vpop.f32.mrb[0].mxu0
        %v2350 = vadd.f32 0.0, %v2349
        %2351 = vmatprep.mubr.f32.mxu0 0.0
        %v2352 = vand.u32 %v2190, 4294901760
        %v2353 = vsub.f32 %v2190, %v2352
        %v2354 = vand.u32 %v2353, 4294901760
        %v2355 = vsub.f32 %v2353, %v2354
        %v2356 = vand.u32 %v2355, 4294901760
        %2357 = vmatmul.mubr.f32.gmra.mrb[0].mxu0 %v2356
        %v2358 = vpop.f32.mrb[0].mxu0
        %v2359 = vadd.f32 0.0, %v2358
        %v2360 = vpop.f32.mrb[0].mxu0
        %v2361 = vadd.f32 0.0, %v2360
        %2362 = vmatprep.mubr.f32.mxu0 0.0
        %v2363 = vand.u32 %v2193, 4294901760
        %v2364 = vsub.f32 %v2193, %v2363
        %v2365 = vand.u32 %v2364, 4294901760
        %v2366 = vsub.f32 %v2364, %v2365
        %v2367 = vand.u32 %v2366, 4294901760
        %2368 = vmatmul.mubr.f32.gmra.mrb[0].mxu0 %v2367
        %v2369 = vpop.f32.mrb[0].mxu0
        %v2370 = vadd.f32 0.0, %v2369
        %v2371 = vpop.f32.mrb[0].mxu0
        %v2372 = vadd.f32 0.0, %v2371
        %2373 = vdwg.mxu0
        %v2374 = vand.u32 %v2135, 4294901760
        %v2375 = vsub.f32 %v2135, %v2374
        %v2376 = vand.u32 %v2375, 4294901760
        %v2377 = vsub.f32 %v2375, %v2376
        %v2378 = vand.u32 %v2377, 4294901760
        %2379 = vmatprep.subr.mxu0 %v2378
        %v2380 = vand.u32 %v2133, 4294901760
        %v2381 = vsub.f32 %v2133, %v2380
        %v2382 = vand.u32 %v2381, 4294901760
        %v2383 = vsub.f32 %v2381, %v2382
        %v2384 = vand.u32 %v2383, 4294901760
        %2385 = vmatpush1.msra.mxu0 %v2384
        %v2386 = vand.u32 %v2142, 4294901760
        %v2387 = vsub.f32 %v2142, %v2386
        %v2388 = vand.u32 %v2387, 4294901760
        %v2389 = vsub.f32 %v2387, %v2388
        %v2390 = vand.u32 %v2389, 4294901760
        %2391 = vmatprep.subr.mxu0 %v2390
        %v2392 = vand.u32 %v2140, 4294901760
        %v2393 = vsub.f32 %v2140, %v2392
        %v2394 = vand.u32 %v2393, 4294901760
        %v2395 = vsub.f32 %v2393, %v2394
        %v2396 = vand.u32 %v2395, 4294901760
        %2397 = vmatpush1.msra.mxu0 %v2396
        %v2398 = vand.u32 %v2149, 4294901760
        %v2399 = vsub.f32 %v2149, %v2398
        %v2400 = vand.u32 %v2399, 4294901760
        %v2401 = vsub.f32 %v2399, %v2400
        %v2402 = vand.u32 %v2401, 4294901760
        %2403 = vmatprep.subr.mxu0 %v2402
        %v2404 = vand.u32 %v2147, 4294901760
        %v2405 = vsub.f32 %v2147, %v2404
        %v2406 = vand.u32 %v2405, 4294901760
        %v2407 = vsub.f32 %v2405, %v2406
        %v2408 = vand.u32 %v2407, 4294901760
        %2409 = vmatpush1.msra.mxu0 %v2408
        %v2410 = vand.u32 %v2156, 4294901760
        %v2411 = vsub.f32 %v2156, %v2410
        %v2412 = vand.u32 %v2411, 4294901760
        %v2413 = vsub.f32 %v2411, %v2412
        %v2414 = vand.u32 %v2413, 4294901760
        %2415 = vmatprep.subr.mxu0 %v2414
        %v2416 = vand.u32 %v2154, 4294901760
        %v2417 = vsub.f32 %v2154, %v2416
        %v2418 = vand.u32 %v2417, 4294901760
        %v2419 = vsub.f32 %v2417, %v2418
        %v2420 = vand.u32 %v2419, 4294901760
        %2421 = vmatpush1.msra.mxu0 %v2420
        %v2422 = vand.u32 %v2198, 4294901760
        %v2423 = vsub.f32 %v2198, %v2422
        %v2424 = vand.u32 %v2423, 4294901760
        %v2425 = vsub.f32 %v2423, %v2424
        %v2426 = vand.u32 %v2425, 4294901760
        %2427 = vmatprep.subr.mxu0 %v2426
        %v2428 = vand.u32 %v2196, 4294901760
        %v2429 = vsub.f32 %v2196, %v2428
        %v2430 = vand.u32 %v2429, 4294901760
        %v2431 = vsub.f32 %v2429, %v2430
        %v2432 = vand.u32 %v2431, 4294901760
        %2433 = vmatpush1.msra.mxu0 %v2432
        %2434 = vmatprep.subr.mxu0 0.0
        %2435 = vmatpush1.msra.mxu0 0.0
        %2436 = vmatprep.subr.mxu0 0.0
        %2437 = vmatpush1.msra.mxu0 0.0
        %2438 = vmatprep.subr.mxu0 0.0
        %2439 = vmatpush1.msra.mxu0 0.0
        %2440 = vmatprep.subr.mxu0 0.0
        %2441 = vmatpush1.msra.mxu0 0.0
        %2442 = vmatprep.subr.mxu0 0.0
        %2443 = vmatpush1.msra.mxu0 0.0
        %2444 = vmatprep.subr.mxu0 0.0
        %2445 = vmatpush1.msra.mxu0 0.0
        %2446 = vmatprep.subr.mxu0 0.0
        %2447 = vmatpush1.msra.mxu0 0.0
        %2448 = vmatprep.subr.mxu0 0.0
        %2449 = vmatpush1.msra.mxu0 0.0
        %2450 = vmatprep.subr.mxu0 0.0
        %2451 = vmatpush1.msra.mxu0 0.0
        %2452 = vmatprep.subr.mxu0 0.0
        %2453 = vmatpush1.msra.mxu0 0.0
        %2454 = vmatprep.subr.mxu0 0.0
        %2455 = vmatpush1.msra.mxu0 0.0
        %2456 = vmatprep.subr.mxu0 0.0
        %2457 = vmatpush1.msra.mxu0 0.0
        %2458 = vmatprep.subr.mxu0 0.0
        %2459 = vmatpush1.msra.mxu0 0.0
        %2460 = vmatprep.subr.mxu0 0.0
        %2461 = vmatpush1.msra.mxu0 0.0
        %2462 = vmatprep.subr.mxu0 0.0
        %2463 = vmatpush1.msra.mxu0 0.0
        %2464 = vmatprep.subr.mxu0 0.0
        %2465 = vmatpush1.msra.mxu0 0.0
        %2466 = vmatprep.subr.mxu0 0.0
        %2467 = vmatpush1.msra.mxu0 0.0
        %2468 = vmatprep.subr.mxu0 0.0
        %2469 = vmatpush1.msra.mxu0 0.0
        %2470 = vmatprep.subr.mxu0 0.0
        %2471 = vmatpush1.msra.mxu0 0.0
        %2472 = vmatprep.subr.mxu0 0.0
        %2473 = vmatpush1.msra.mxu0 0.0
        %2474 = vmatprep.subr.mxu0 0.0
        %2475 = vmatpush1.msra.mxu0 0.0
        %2476 = vmatprep.subr.mxu0 0.0
        %2477 = vmatpush1.msra.mxu0 0.0
        %2478 = vmatprep.subr.mxu0 0.0
        %2479 = vmatpush1.msra.mxu0 0.0
        %2480 = vmatprep.subr.mxu0 0.0
        %2481 = vmatpush1.msra.mxu0 0.0
        %2482 = vmatprep.subr.mxu0 0.0
        %2483 = vmatpush1.msra.mxu0 0.0
        %2484 = vmatprep.subr.mxu0 0.0
        %2485 = vmatpush1.msra.mxu0 0.0
        %2486 = vmatprep.subr.mxu0 0.0
        %2487 = vmatpush1.msra.mxu0 0.0
        %2488 = vmatprep.mubr.f32.mxu0 0.0
        %v2489 = vand.u32 %v2169, 4294901760
        %2490 = vmatmul.mubr.f32.gmra.mrb[0].mxu0 %v2489
        %v2491 = vpop.f32.mrb[0].mxu0
        %v2492 = vadd.f32 %v2282, %v2491
        %v2493 = vpop.f32.mrb[0].mxu0
        %v2494 = vadd.f32 %v2284, %v2493
        %2495 = vmatprep.mubr.f32.mxu0 0.0
        %v2496 = vand.u32 %v2172, 4294901760
        %2497 = vmatmul.mubr.f32.gmra.mrb[0].mxu0 %v2496
        %v2498 = vpop.f32.mrb[0].mxu0
        %v2499 = vadd.f32 %v2293, %v2498
        %v2500 = vpop.f32.mrb[0].mxu0
        %v2501 = vadd.f32 %v2295, %v2500
        %2502 = vmatprep.mubr.f32.mxu0 0.0
        %v2503 = vand.u32 %v2175, 4294901760
        %2504 = vmatmul.mubr.f32.gmra.mrb[0].mxu0 %v2503
        %v2505 = vpop.f32.mrb[0].mxu0
        %v2506 = vadd.f32 %v2304, %v2505
        %v2507 = vpop.f32.mrb[0].mxu0
        %v2508 = vadd.f32 %v2306, %v2507
        %2509 = vmatprep.mubr.f32.mxu0 0.0
        %v2510 = vand.u32 %v2178, 4294901760
        %2511 = vmatmul.mubr.f32.gmra.mrb[0].mxu0 %v2510
        %v2512 = vpop.f32.mrb[0].mxu0
        %v2513 = vadd.f32 %v2315, %v2512
        %v2514 = vpop.f32.mrb[0].mxu0
        %v2515 = vadd.f32 %v2317, %v2514
        %2516 = vmatprep.mubr.f32.mxu0 0.0
        %v2517 = vand.u32 %v2181, 4294901760
        %2518 = vmatmul.mubr.f32.gmra.mrb[0].mxu0 %v2517
        %v2519 = vpop.f32.mrb[0].mxu0
        %v2520 = vadd.f32 %v2326, %v2519
        %v2521 = vpop.f32.mrb[0].mxu0
        %v2522 = vadd.f32 %v2328, %v2521
        %2523 = vmatprep.mubr.f32.mxu0 0.0
        %v2524 = vand.u32 %v2184, 4294901760
        %2525 = vmatmul.mubr.f32.gmra.mrb[0].mxu0 %v2524
        %v2526 = vpop.f32.mrb[0].mxu0
        %v2527 = vadd.f32 %v2337, %v2526
        %v2528 = vpop.f32.mrb[0].mxu0
        %v2529 = vadd.f32 %v2339, %v2528
        %2530 = vmatprep.mubr.f32.mxu0 0.0
        %v2531 = vand.u32 %v2187, 4294901760
        %2532 = vmatmul.mubr.f32.gmra.mrb[0].mxu0 %v2531
        %v2533 = vpop.f32.mrb[0].mxu0
        %v2534 = vadd.f32 %v2348, %v2533
        %v2535 = vpop.f32.mrb[0].mxu0
        %v2536 = vadd.f32 %v2350, %v2535
        %2537 = vmatprep.mubr.f32.mxu0 0.0
        %v2538 = vand.u32 %v2190, 4294901760
        %2539 = vmatmul.mubr.f32.gmra.mrb[0].mxu0 %v2538
        %v2540 = vpop.f32.mrb[0].mxu0
        %v2541 = vadd.f32 %v2359, %v2540
        %v2542 = vpop.f32.mrb[0].mxu0
        %v2543 = vadd.f32 %v2361, %v2542
        %2544 = vmatprep.mubr.f32.mxu0 0.0
        %v2545 = vand.u32 %v2193, 4294901760
        %2546 = vmatmul.mubr.f32.gmra.mrb[0].mxu0 %v2545
        %v2547 = vpop.f32.mrb[0].mxu0
        %v2548 = vadd.f32 %v2370, %v2547
        %v2549 = vpop.f32.mrb[0].mxu0
        %v2550 = vadd.f32 %v2372, %v2549
        %2551 = vdwg.mxu0
        %v2552 = vand.u32 %v2135, 4294901760
        %v2553 = vsub.f32 %v2135, %v2552
        %2554 = vmatprep.subr.mxu0 %v2553
        %v2555 = vand.u32 %v2133, 4294901760
        %v2556 = vsub.f32 %v2133, %v2555
        %2557 = vmatpush1.msra.mxu0 %v2556
        %v2558 = vand.u32 %v2142, 4294901760
        %v2559 = vsub.f32 %v2142, %v2558
        %2560 = vmatprep.subr.mxu0 %v2559
        %v2561 = vand.u32 %v2140, 4294901760
        %v2562 = vsub.f32 %v2140, %v2561
        %2563 = vmatpush1.msra.mxu0 %v2562
        %v2564 = vand.u32 %v2149, 4294901760
        %v2565 = vsub.f32 %v2149, %v2564
        %2566 = vmatprep.subr.mxu0 %v2565
        %v2567 = vand.u32 %v2147, 4294901760
        %v2568 = vsub.f32 %v2147, %v2567
        %2569 = vmatpush1.msra.mxu0 %v2568
        %v2570 = vand.u32 %v2156, 4294901760
        %v2571 = vsub.f32 %v2156, %v2570
        %2572 = vmatprep.subr.mxu0 %v2571
        %v2573 = vand.u32 %v2154, 4294901760
        %v2574 = vsub.f32 %v2154, %v2573
        %2575 = vmatpush1.msra.mxu0 %v2574
        %v2576 = vand.u32 %v2198, 4294901760
        %v2577 = vsub.f32 %v2198, %v2576
        %2578 = vmatprep.subr.mxu0 %v2577
        %v2579 = vand.u32 %v2196, 4294901760
        %v2580 = vsub.f32 %v2196, %v2579
        %2581 = vmatpush1.msra.mxu0 %v2580
        %2582 = vmatprep.subr.mxu0 0.0
        %2583 = vmatpush1.msra.mxu0 0.0
        %2584 = vmatprep.subr.mxu0 0.0
        %2585 = vmatpush1.msra.mxu0 0.0
        %2586 = vmatprep.subr.mxu0 0.0
        %2587 = vmatpush1.msra.mxu0 0.0
        %2588 = vmatprep.subr.mxu0 0.0
        %2589 = vmatpush1.msra.mxu0 0.0
        %2590 = vmatprep.subr.mxu0 0.0
        %2591 = vmatpush1.msra.mxu0 0.0
        %2592 = vmatprep.subr.mxu0 0.0
        %2593 = vmatpush1.msra.mxu0 0.0
        %2594 = vmatprep.subr.mxu0 0.0
        %2595 = vmatpush1.msra.mxu0 0.0
        %2596 = vmatprep.subr.mxu0 0.0
        %2597 = vmatpush1.msra.mxu0 0.0
        %2598 = vmatprep.subr.mxu0 0.0
        %2599 = vmatpush1.msra.mxu0 0.0
        %2600 = vmatprep.subr.mxu0 0.0
        %2601 = vmatpush1.msra.mxu0 0.0
        %2602 = vmatprep.subr.mxu0 0.0
        %2603 = vmatpush1.msra.mxu0 0.0
        %2604 = vmatprep.subr.mxu0 0.0
        %2605 = vmatpush1.msra.mxu0 0.0
        %2606 = vmatprep.subr.mxu0 0.0
        %2607 = vmatpush1.msra.mxu0 0.0
        %2608 = vmatprep.subr.mxu0 0.0
        %2609 = vmatpush1.msra.mxu0 0.0
        %2610 = vmatprep.subr.mxu0 0.0
        %2611 = vmatpush1.msra.mxu0 0.0
        %2612 = vmatprep.subr.mxu0 0.0
        %2613 = vmatpush1.msra.mxu0 0.0
        %2614 = vmatprep.subr.mxu0 0.0
        %2615 = vmatpush1.msra.mxu0 0.0
        %2616 = vmatprep.subr.mxu0 0.0
        %2617 = vmatpush1.msra.mxu0 0.0
        %2618 = vmatprep.subr.mxu0 0.0
        %2619 = vmatpush1.msra.mxu0 0.0
        %2620 = vmatprep.subr.mxu0 0.0
        %2621 = vmatpush1.msra.mxu0 0.0
        %2622 = vmatprep.subr.mxu0 0.0
        %2623 = vmatpush1.msra.mxu0 0.0
        %2624 = vmatprep.subr.mxu0 0.0
        %2625 = vmatpush1.msra.mxu0 0.0
        %2626 = vmatprep.subr.mxu0 0.0
        %2627 = vmatpush1.msra.mxu0 0.0
        %2628 = vmatprep.subr.mxu0 0.0
        %2629 = vmatpush1.msra.mxu0 0.0
        %2630 = vmatprep.subr.mxu0 0.0
        %2631 = vmatpush1.msra.mxu0 0.0
        %2632 = vmatprep.subr.mxu0 0.0
        %2633 = vmatpush1.msra.mxu0 0.0
        %2634 = vmatprep.subr.mxu0 0.0
        %2635 = vmatpush1.msra.mxu0 0.0
        %2636 = vmatprep.mubr.f32.mxu0 0.0
        %v2637 = vand.u32 %v2169, 4294901760
        %v2638 = vsub.f32 %v2169, %v2637
        %2639 = vmatmul.mubr.f32.gmra.mrb[0].mxu0 %v2638
        %v2640 = vpop.f32.mrb[0].mxu0
        %v2641 = vadd.f32 %v2492, %v2640
        %v2642 = vpop.f32.mrb[0].mxu0
        %v2643 = vadd.f32 %v2494, %v2642
        %2644 = vmatprep.mubr.f32.mxu0 0.0
        %v2645 = vand.u32 %v2172, 4294901760
        %v2646 = vsub.f32 %v2172, %v2645
        %2647 = vmatmul.mubr.f32.gmra.mrb[0].mxu0 %v2646
        %v2648 = vpop.f32.mrb[0].mxu0
        %v2649 = vadd.f32 %v2499, %v2648
        %v2650 = vpop.f32.mrb[0].mxu0
        %v2651 = vadd.f32 %v2501, %v2650
        %2652 = vmatprep.mubr.f32.mxu0 0.0
        %v2653 = vand.u32 %v2175, 4294901760
        %v2654 = vsub.f32 %v2175, %v2653
        %2655 = vmatmul.mubr.f32.gmra.mrb[0].mxu0 %v2654
        %v2656 = vpop.f32.mrb[0].mxu0
        %v2657 = vadd.f32 %v2506, %v2656
        %v2658 = vpop.f32.mrb[0].mxu0
        %v2659 = vadd.f32 %v2508, %v2658
        %2660 = vmatprep.mubr.f32.mxu0 0.0
        %v2661 = vand.u32 %v2178, 4294901760
        %v2662 = vsub.f32 %v2178, %v2661
        %2663 = vmatmul.mubr.f32.gmra.mrb[0].mxu0 %v2662
        %v2664 = vpop.f32.mrb[0].mxu0
        %v2665 = vadd.f32 %v2513, %v2664
        %v2666 = vpop.f32.mrb[0].mxu0
        %v2667 = vadd.f32 %v2515, %v2666
        %2668 = vmatprep.mubr.f32.mxu0 0.0
        %v2669 = vand.u32 %v2181, 4294901760
        %v2670 = vsub.f32 %v2181, %v2669
        %2671 = vmatmul.mubr.f32.gmra.mrb[0].mxu0 %v2670
        %v2672 = vpop.f32.mrb[0].mxu0
        %v2673 = vadd.f32 %v2520, %v2672
        %v2674 = vpop.f32.mrb[0].mxu0
        %v2675 = vadd.f32 %v2522, %v2674
        %2676 = vmatprep.mubr.f32.mxu0 0.0
        %v2677 = vand.u32 %v2184, 4294901760
        %v2678 = vsub.f32 %v2184, %v2677
        %2679 = vmatmul.mubr.f32.gmra.mrb[0].mxu0 %v2678
        %v2680 = vpop.f32.mrb[0].mxu0
        %v2681 = vadd.f32 %v2527, %v2680
        %v2682 = vpop.f32.mrb[0].mxu0
        %v2683 = vadd.f32 %v2529, %v2682
        %2684 = vmatprep.mubr.f32.mxu0 0.0
        %v2685 = vand.u32 %v2187, 4294901760
        %v2686 = vsub.f32 %v2187, %v2685
        %2687 = vmatmul.mubr.f32.gmra.mrb[0].mxu0 %v2686
        %v2688 = vpop.f32.mrb[0].mxu0
        %v2689 = vadd.f32 %v2534, %v2688
        %v2690 = vpop.f32.mrb[0].mxu0
        %v2691 = vadd.f32 %v2536, %v2690
        %2692 = vmatprep.mubr.f32.mxu0 0.0
        %v2693 = vand.u32 %v2190, 4294901760
        %v2694 = vsub.f32 %v2190, %v2693
        %2695 = vmatmul.mubr.f32.gmra.mrb[0].mxu0 %v2694
        %v2696 = vpop.f32.mrb[0].mxu0
        %v2697 = vadd.f32 %v2541, %v2696
        %v2698 = vpop.f32.mrb[0].mxu0
        %v2699 = vadd.f32 %v2543, %v2698
        %2700 = vmatprep.mubr.f32.mxu0 0.0
        %v2701 = vand.u32 %v2193, 4294901760
        %v2702 = vsub.f32 %v2193, %v2701
        %2703 = vmatmul.mubr.f32.gmra.mrb[0].mxu0 %v2702
        %v2704 = vpop.f32.mrb[0].mxu0
        %v2705 = vadd.f32 %v2548, %v2704
        %v2706 = vpop.f32.mrb[0].mxu0
        %v2707 = vadd.f32 %v2550, %v2706
        %2708 = vdwg.mxu0
        %v2709 = vand.u32 %v2135, 4294901760
        %2710 = vmatprep.subr.mxu0 %v2709
        %v2711 = vand.u32 %v2133, 4294901760
        %2712 = vmatpush1.msra.mxu0 %v2711
        %v2713 = vand.u32 %v2142, 4294901760
        %2714 = vmatprep.subr.mxu0 %v2713
        %v2715 = vand.u32 %v2140, 4294901760
        %2716 = vmatpush1.msra.mxu0 %v2715
        %v2717 = vand.u32 %v2149, 4294901760
        %2718 = vmatprep.subr.mxu0 %v2717
        %v2719 = vand.u32 %v2147, 4294901760
        %2720 = vmatpush1.msra.mxu0 %v2719
        %v2721 = vand.u32 %v2156, 4294901760
        %2722 = vmatprep.subr.mxu0 %v2721
        %v2723 = vand.u32 %v2154, 4294901760
        %2724 = vmatpush1.msra.mxu0 %v2723
        %v2725 = vand.u32 %v2198, 4294901760
        %2726 = vmatprep.subr.mxu0 %v2725
        %v2727 = vand.u32 %v2196, 4294901760
        %2728 = vmatpush1.msra.mxu0 %v2727
        %2729 = vmatprep.subr.mxu0 0.0
        %2730 = vmatpush1.msra.mxu0 0.0
        %2731 = vmatprep.subr.mxu0 0.0
        %2732 = vmatpush1.msra.mxu0 0.0
        %2733 = vmatprep.subr.mxu0 0.0
        %2734 = vmatpush1.msra.mxu0 0.0
        %2735 = vmatprep.subr.mxu0 0.0
        %2736 = vmatpush1.msra.mxu0 0.0
        %2737 = vmatprep.subr.mxu0 0.0
        %2738 = vmatpush1.msra.mxu0 0.0
        %2739 = vmatprep.subr.mxu0 0.0
        %2740 = vmatpush1.msra.mxu0 0.0
        %2741 = vmatprep.subr.mxu0 0.0
        %2742 = vmatpush1.msra.mxu0 0.0
        %2743 = vmatprep.subr.mxu0 0.0
        %2744 = vmatpush1.msra.mxu0 0.0
        %2745 = vmatprep.subr.mxu0 0.0
        %2746 = vmatpush1.msra.mxu0 0.0
        %2747 = vmatprep.subr.mxu0 0.0
        %2748 = vmatpush1.msra.mxu0 0.0
        %2749 = vmatprep.subr.mxu0 0.0
        %2750 = vmatpush1.msra.mxu0 0.0
        %2751 = vmatprep.subr.mxu0 0.0
        %2752 = vmatpush1.msra.mxu0 0.0
        %2753 = vmatprep.subr.mxu0 0.0
        %2754 = vmatpush1.msra.mxu0 0.0
        %2755 = vmatprep.subr.mxu0 0.0
        %2756 = vmatpush1.msra.mxu0 0.0
        %2757 = vmatprep.subr.mxu0 0.0
        %2758 = vmatpush1.msra.mxu0 0.0
        %2759 = vmatprep.subr.mxu0 0.0
        %2760 = vmatpush1.msra.mxu0 0.0
        %2761 = vmatprep.subr.mxu0 0.0
        %2762 = vmatpush1.msra.mxu0 0.0
        %2763 = vmatprep.subr.mxu0 0.0
        %2764 = vmatpush1.msra.mxu0 0.0
        %2765 = vmatprep.subr.mxu0 0.0
        %2766 = vmatpush1.msra.mxu0 0.0
        %2767 = vmatprep.subr.mxu0 0.0
        %2768 = vmatpush1.msra.mxu0 0.0
        %2769 = vmatprep.subr.mxu0 0.0
        %2770 = vmatpush1.msra.mxu0 0.0
        %2771 = vmatprep.subr.mxu0 0.0
        %2772 = vmatpush1.msra.mxu0 0.0
        %2773 = vmatprep.subr.mxu0 0.0
        %2774 = vmatpush1.msra.mxu0 0.0
        %2775 = vmatprep.subr.mxu0 0.0
        %2776 = vmatpush1.msra.mxu0 0.0
        %2777 = vmatprep.subr.mxu0 0.0
        %2778 = vmatpush1.msra.mxu0 0.0
        %2779 = vmatprep.subr.mxu0 0.0
        %2780 = vmatpush1.msra.mxu0 0.0
        %2781 = vmatprep.subr.mxu0 0.0
        %2782 = vmatpush1.msra.mxu0 0.0
        %2783 = vmatprep.mubr.f32.mxu0 0.0
        %v2784 = vand.u32 %v2169, 4294901760
        %v2785 = vsub.f32 %v2169, %v2784
        %v2786 = vand.u32 %v2785, 4294901760
        %2787 = vmatmul.mubr.f32.gmra.mrb[0].mxu0 %v2786
        %v2788 = vpop.f32.mrb[0].mxu0
        %v2789 = vadd.f32 %v2641, %v2788
        %v2790 = vpop.f32.mrb[0].mxu0
        %v2791 = vadd.f32 %v2643, %v2790
        %2792 = vmatprep.mubr.f32.mxu0 0.0
        %v2793 = vand.u32 %v2172, 4294901760
        %v2794 = vsub.f32 %v2172, %v2793
        %v2795 = vand.u32 %v2794, 4294901760
        %2796 = vmatmul.mubr.f32.gmra.mrb[0].mxu0 %v2795
        %v2797 = vpop.f32.mrb[0].mxu0
        %v2798 = vadd.f32 %v2649, %v2797
        %v2799 = vpop.f32.mrb[0].mxu0
        %v2800 = vadd.f32 %v2651, %v2799
        %2801 = vmatprep.mubr.f32.mxu0 0.0
        %v2802 = vand.u32 %v2175, 4294901760
        %v2803 = vsub.f32 %v2175, %v2802
        %v2804 = vand.u32 %v2803, 4294901760
        %2805 = vmatmul.mubr.f32.gmra.mrb[0].mxu0 %v2804
        %v2806 = vpop.f32.mrb[0].mxu0
        %v2807 = vadd.f32 %v2657, %v2806
        %v2808 = vpop.f32.mrb[0].mxu0
        %v2809 = vadd.f32 %v2659, %v2808
        %2810 = vmatprep.mubr.f32.mxu0 0.0
        %v2811 = vand.u32 %v2178, 4294901760
        %v2812 = vsub.f32 %v2178, %v2811
        %v2813 = vand.u32 %v2812, 4294901760
        %2814 = vmatmul.mubr.f32.gmra.mrb[0].mxu0 %v2813
        %v2815 = vpop.f32.mrb[0].mxu0
        %v2816 = vadd.f32 %v2665, %v2815
        %v2817 = vpop.f32.mrb[0].mxu0
        %v2818 = vadd.f32 %v2667, %v2817
        %2819 = vmatprep.mubr.f32.mxu0 0.0
        %v2820 = vand.u32 %v2181, 4294901760
        %v2821 = vsub.f32 %v2181, %v2820
        %v2822 = vand.u32 %v2821, 4294901760
        %2823 = vmatmul.mubr.f32.gmra.mrb[0].mxu0 %v2822
        %v2824 = vpop.f32.mrb[0].mxu0
        %v2825 = vadd.f32 %v2673, %v2824
        %v2826 = vpop.f32.mrb[0].mxu0
        %v2827 = vadd.f32 %v2675, %v2826
        %2828 = vmatprep.mubr.f32.mxu0 0.0
        %v2829 = vand.u32 %v2184, 4294901760
        %v2830 = vsub.f32 %v2184, %v2829
        %v2831 = vand.u32 %v2830, 4294901760
        %2832 = vmatmul.mubr.f32.gmra.mrb[0].mxu0 %v2831
        %v2833 = vpop.f32.mrb[0].mxu0
        %v2834 = vadd.f32 %v2681, %v2833
        %v2835 = vpop.f32.mrb[0].mxu0
        %v2836 = vadd.f32 %v2683, %v2835
        %2837 = vmatprep.mubr.f32.mxu0 0.0
        %v2838 = vand.u32 %v2187, 4294901760
        %v2839 = vsub.f32 %v2187, %v2838
        %v2840 = vand.u32 %v2839, 4294901760
        %2841 = vmatmul.mubr.f32.gmra.mrb[0].mxu0 %v2840
        %v2842 = vpop.f32.mrb[0].mxu0
        %v2843 = vadd.f32 %v2689, %v2842
        %v2844 = vpop.f32.mrb[0].mxu0
        %v2845 = vadd.f32 %v2691, %v2844
        %2846 = vmatprep.mubr.f32.mxu0 0.0
        %v2847 = vand.u32 %v2190, 4294901760
        %v2848 = vsub.f32 %v2190, %v2847
        %v2849 = vand.u32 %v2848, 4294901760
        %2850 = vmatmul.mubr.f32.gmra.mrb[0].mxu0 %v2849
        %v2851 = vpop.f32.mrb[0].mxu0
        %v2852 = vadd.f32 %v2697, %v2851
        %v2853 = vpop.f32.mrb[0].mxu0
        %v2854 = vadd.f32 %v2699, %v2853
        %2855 = vmatprep.mubr.f32.mxu0 0.0
        %v2856 = vand.u32 %v2193, 4294901760
        %v2857 = vsub.f32 %v2193, %v2856
        %v2858 = vand.u32 %v2857, 4294901760
        %2859 = vmatmul.mubr.f32.gmra.mrb[0].mxu0 %v2858
        %v2860 = vpop.f32.mrb[0].mxu0
        %v2861 = vadd.f32 %v2705, %v2860
        %v2862 = vpop.f32.mrb[0].mxu0
        %v2863 = vadd.f32 %v2707, %v2862
        %2864 = vdwg.mxu0
        %v2865 = vand.u32 %v2135, 4294901760
        %v2866 = vsub.f32 %v2135, %v2865
        %v2867 = vand.u32 %v2866, 4294901760
        %2868 = vmatprep.subr.mxu0 %v2867
        %v2869 = vand.u32 %v2133, 4294901760
        %v2870 = vsub.f32 %v2133, %v2869
        %v2871 = vand.u32 %v2870, 4294901760
        %2872 = vmatpush1.msra.mxu0 %v2871
        %v2873 = vand.u32 %v2142, 4294901760
        %v2874 = vsub.f32 %v2142, %v2873
        %v2875 = vand.u32 %v2874, 4294901760
        %2876 = vmatprep.subr.mxu0 %v2875
        %v2877 = vand.u32 %v2140, 4294901760
        %v2878 = vsub.f32 %v2140, %v2877
        %v2879 = vand.u32 %v2878, 4294901760
        %2880 = vmatpush1.msra.mxu0 %v2879
        %v2881 = vand.u32 %v2149, 4294901760
        %v2882 = vsub.f32 %v2149, %v2881
        %v2883 = vand.u32 %v2882, 4294901760
        %2884 = vmatprep.subr.mxu0 %v2883
        %v2885 = vand.u32 %v2147, 4294901760
        %v2886 = vsub.f32 %v2147, %v2885
        %v2887 = vand.u32 %v2886, 4294901760
        %2888 = vmatpush1.msra.mxu0 %v2887
        %v2889 = vand.u32 %v2156, 4294901760
        %v2890 = vsub.f32 %v2156, %v2889
        %v2891 = vand.u32 %v2890, 4294901760
        %2892 = vmatprep.subr.mxu0 %v2891
        %v2893 = vand.u32 %v2154, 4294901760
        %v2894 = vsub.f32 %v2154, %v2893
        %v2895 = vand.u32 %v2894, 4294901760
        %2896 = vmatpush1.msra.mxu0 %v2895
        %v2897 = vand.u32 %v2198, 4294901760
        %v2898 = vsub.f32 %v2198, %v2897
        %v2899 = vand.u32 %v2898, 4294901760
        %2900 = vmatprep.subr.mxu0 %v2899
        %v2901 = vand.u32 %v2196, 4294901760
        %v2902 = vsub.f32 %v2196, %v2901
        %v2903 = vand.u32 %v2902, 4294901760
        %2904 = vmatpush1.msra.mxu0 %v2903
        %2905 = vmatprep.subr.mxu0 0.0
        %2906 = vmatpush1.msra.mxu0 0.0
        %2907 = vmatprep.subr.mxu0 0.0
        %2908 = vmatpush1.msra.mxu0 0.0
        %2909 = vmatprep.subr.mxu0 0.0
        %2910 = vmatpush1.msra.mxu0 0.0
        %2911 = vmatprep.subr.mxu0 0.0
        %2912 = vmatpush1.msra.mxu0 0.0
        %2913 = vmatprep.subr.mxu0 0.0
        %2914 = vmatpush1.msra.mxu0 0.0
        %2915 = vmatprep.subr.mxu0 0.0
        %2916 = vmatpush1.msra.mxu0 0.0
        %2917 = vmatprep.subr.mxu0 0.0
        %2918 = vmatpush1.msra.mxu0 0.0
        %2919 = vmatprep.subr.mxu0 0.0
        %2920 = vmatpush1.msra.mxu0 0.0
        %2921 = vmatprep.subr.mxu0 0.0
        %2922 = vmatpush1.msra.mxu0 0.0
        %2923 = vmatprep.subr.mxu0 0.0
        %2924 = vmatpush1.msra.mxu0 0.0
        %2925 = vmatprep.subr.mxu0 0.0
        %2926 = vmatpush1.msra.mxu0 0.0
        %2927 = vmatprep.subr.mxu0 0.0
        %2928 = vmatpush1.msra.mxu0 0.0
        %2929 = vmatprep.subr.mxu0 0.0
        %2930 = vmatpush1.msra.mxu0 0.0
        %2931 = vmatprep.subr.mxu0 0.0
        %2932 = vmatpush1.msra.mxu0 0.0
        %2933 = vmatprep.subr.mxu0 0.0
        %2934 = vmatpush1.msra.mxu0 0.0
        %2935 = vmatprep.subr.mxu0 0.0
        %2936 = vmatpush1.msra.mxu0 0.0
        %2937 = vmatprep.subr.mxu0 0.0
        %2938 = vmatpush1.msra.mxu0 0.0
        %2939 = vmatprep.subr.mxu0 0.0
        %2940 = vmatpush1.msra.mxu0 0.0
        %2941 = vmatprep.subr.mxu0 0.0
        %2942 = vmatpush1.msra.mxu0 0.0
        %2943 = vmatprep.subr.mxu0 0.0
        %2944 = vmatpush1.msra.mxu0 0.0
        %2945 = vmatprep.subr.mxu0 0.0
        %2946 = vmatpush1.msra.mxu0 0.0
        %2947 = vmatprep.subr.mxu0 0.0
        %2948 = vmatpush1.msra.mxu0 0.0
        %2949 = vmatprep.subr.mxu0 0.0
        %2950 = vmatpush1.msra.mxu0 0.0
        %2951 = vmatprep.subr.mxu0 0.0
        %2952 = vmatpush1.msra.mxu0 0.0
        %2953 = vmatprep.subr.mxu0 0.0
        %2954 = vmatpush1.msra.mxu0 0.0
        %2955 = vmatprep.subr.mxu0 0.0
        %2956 = vmatpush1.msra.mxu0 0.0
        %2957 = vmatprep.subr.mxu0 0.0
        %2958 = vmatpush1.msra.mxu0 0.0
        %2959 = vmatprep.mubr.f32.mxu0 0.0
        %v2960 = vand.u32 %v2169, 4294901760
        %2961 = vmatmul.mubr.f32.gmra.mrb[0].mxu0 %v2960
        %v2962 = vpop.f32.mrb[0].mxu0
        %v2963 = vadd.f32 %v2789, %v2962
        %v2964 = vpop.f32.mrb[0].mxu0
        %v2965 = vadd.f32 %v2791, %v2964
        %2966 = vmatprep.mubr.f32.mxu0 0.0
        %v2967 = vand.u32 %v2172, 4294901760
        %2968 = vmatmul.mubr.f32.gmra.mrb[0].mxu0 %v2967
        %v2969 = vpop.f32.mrb[0].mxu0
        %v2970 = vadd.f32 %v2798, %v2969
        %v2971 = vpop.f32.mrb[0].mxu0
        %v2972 = vadd.f32 %v2800, %v2971
        %2973 = vmatprep.mubr.f32.mxu0 0.0
        %v2974 = vand.u32 %v2175, 4294901760
        %2975 = vmatmul.mubr.f32.gmra.mrb[0].mxu0 %v2974
        %v2976 = vpop.f32.mrb[0].mxu0
        %v2977 = vadd.f32 %v2807, %v2976
        %v2978 = vpop.f32.mrb[0].mxu0
        %v2979 = vadd.f32 %v2809, %v2978
        %2980 = vmatprep.mubr.f32.mxu0 0.0
        %v2981 = vand.u32 %v2178, 4294901760
        %2982 = vmatmul.mubr.f32.gmra.mrb[0].mxu0 %v2981
        %v2983 = vpop.f32.mrb[0].mxu0
        %v2984 = vadd.f32 %v2816, %v2983
        %v2985 = vpop.f32.mrb[0].mxu0
        %v2986 = vadd.f32 %v2818, %v2985
        %2987 = vmatprep.mubr.f32.mxu0 0.0
        %v2988 = vand.u32 %v2181, 4294901760
        %2989 = vmatmul.mubr.f32.gmra.mrb[0].mxu0 %v2988
        %v2990 = vpop.f32.mrb[0].mxu0
        %v2991 = vadd.f32 %v2825, %v2990
        %v2992 = vpop.f32.mrb[0].mxu0
        %v2993 = vadd.f32 %v2827, %v2992
        %2994 = vmatprep.mubr.f32.mxu0 0.0
        %v2995 = vand.u32 %v2184, 4294901760
        %2996 = vmatmul.mubr.f32.gmra.mrb[0].mxu0 %v2995
        %v2997 = vpop.f32.mrb[0].mxu0
        %v2998 = vadd.f32 %v2834, %v2997
        %v2999 = vpop.f32.mrb[0].mxu0
        %v3000 = vadd.f32 %v2836, %v2999
        %3001 = vmatprep.mubr.f32.mxu0 0.0
        %v3002 = vand.u32 %v2187, 4294901760
        %3003 = vmatmul.mubr.f32.gmra.mrb[0].mxu0 %v3002
        %v3004 = vpop.f32.mrb[0].mxu0
        %v3005 = vadd.f32 %v2843, %v3004
        %v3006 = vpop.f32.mrb[0].mxu0
        %v3007 = vadd.f32 %v2845, %v3006
        %3008 = vmatprep.mubr.f32.mxu0 0.0
        %v3009 = vand.u32 %v2190, 4294901760
        %3010 = vmatmul.mubr.f32.gmra.mrb[0].mxu0 %v3009
        %v3011 = vpop.f32.mrb[0].mxu0
        %v3012 = vadd.f32 %v2852, %v3011
        %v3013 = vpop.f32.mrb[0].mxu0
        %v3014 = vadd.f32 %v2854, %v3013
        %3015 = vmatprep.mubr.f32.mxu0 0.0
        %v3016 = vand.u32 %v2193, 4294901760
        %3017 = vmatmul.mubr.f32.gmra.mrb[0].mxu0 %v3016
        %v3018 = vpop.f32.mrb[0].mxu0
        %v3019 = vadd.f32 %v2861, %v3018
        %v3020 = vpop.f32.mrb[0].mxu0
        %v3021 = vadd.f32 %v2863, %v3020
        %3022 = vdwg.mxu0
        %v3023 = vand.u32 %v2135, 4294901760
        %3024 = vmatprep.subr.mxu0 %v3023
        %v3025 = vand.u32 %v2133, 4294901760
        %3026 = vmatpush1.msra.mxu0 %v3025
        %v3027 = vand.u32 %v2142, 4294901760
        %3028 = vmatprep.subr.mxu0 %v3027
        %v3029 = vand.u32 %v2140, 4294901760
        %3030 = vmatpush1.msra.mxu0 %v3029
        %v3031 = vand.u32 %v2149, 4294901760
        %3032 = vmatprep.subr.mxu0 %v3031
        %v3033 = vand.u32 %v2147, 4294901760
        %3034 = vmatpush1.msra.mxu0 %v3033
        %v3035 = vand.u32 %v2156, 4294901760
        %3036 = vmatprep.subr.mxu0 %v3035
        %v3037 = vand.u32 %v2154, 4294901760
        %3038 = vmatpush1.msra.mxu0 %v3037
        %v3039 = vand.u32 %v2198, 4294901760
        %3040 = vmatprep.subr.mxu0 %v3039
        %v3041 = vand.u32 %v2196, 4294901760
        %3042 = vmatpush1.msra.mxu0 %v3041
        %3043 = vmatprep.subr.mxu0 0.0
        %3044 = vmatpush1.msra.mxu0 0.0
        %3045 = vmatprep.subr.mxu0 0.0
        %3046 = vmatpush1.msra.mxu0 0.0
        %3047 = vmatprep.subr.mxu0 0.0
        %3048 = vmatpush1.msra.mxu0 0.0
        %3049 = vmatprep.subr.mxu0 0.0
        %3050 = vmatpush1.msra.mxu0 0.0
        %3051 = vmatprep.subr.mxu0 0.0
        %3052 = vmatpush1.msra.mxu0 0.0
        %3053 = vmatprep.subr.mxu0 0.0
        %3054 = vmatpush1.msra.mxu0 0.0
        %3055 = vmatprep.subr.mxu0 0.0
        %3056 = vmatpush1.msra.mxu0 0.0
        %3057 = vmatprep.subr.mxu0 0.0
        %3058 = vmatpush1.msra.mxu0 0.0
        %3059 = vmatprep.subr.mxu0 0.0
        %3060 = vmatpush1.msra.mxu0 0.0
        %3061 = vmatprep.subr.mxu0 0.0
        %3062 = vmatpush1.msra.mxu0 0.0
        %3063 = vmatprep.subr.mxu0 0.0
        %3064 = vmatpush1.msra.mxu0 0.0
        %3065 = vmatprep.subr.mxu0 0.0
        %3066 = vmatpush1.msra.mxu0 0.0
        %3067 = vmatprep.subr.mxu0 0.0
        %3068 = vmatpush1.msra.mxu0 0.0
        %3069 = vmatprep.subr.mxu0 0.0
        %3070 = vmatpush1.msra.mxu0 0.0
        %3071 = vmatprep.subr.mxu0 0.0
        %3072 = vmatpush1.msra.mxu0 0.0
        %3073 = vmatprep.subr.mxu0 0.0
        %3074 = vmatpush1.msra.mxu0 0.0
        %3075 = vmatprep.subr.mxu0 0.0
        %3076 = vmatpush1.msra.mxu0 0.0
        %3077 = vmatprep.subr.mxu0 0.0
        %3078 = vmatpush1.msra.mxu0 0.0
        %3079 = vmatprep.subr.mxu0 0.0
        %3080 = vmatpush1.msra.mxu0 0.0
        %3081 = vmatprep.subr.mxu0 0.0
        %3082 = vmatpush1.msra.mxu0 0.0
        %3083 = vmatprep.subr.mxu0 0.0
        %3084 = vmatpush1.msra.mxu0 0.0
        %3085 = vmatprep.subr.mxu0 0.0
        %3086 = vmatpush1.msra.mxu0 0.0
        %3087 = vmatprep.subr.mxu0 0.0
        %3088 = vmatpush1.msra.mxu0 0.0
        %3089 = vmatprep.subr.mxu0 0.0
        %3090 = vmatpush1.msra.mxu0 0.0
        %3091 = vmatprep.subr.mxu0 0.0
        %3092 = vmatpush1.msra.mxu0 0.0
        %3093 = vmatprep.subr.mxu0 0.0
        %3094 = vmatpush1.msra.mxu0 0.0
        %3095 = vmatprep.subr.mxu0 0.0
        %3096 = vmatpush1.msra.mxu0 0.0
        %3097 = vmatprep.mubr.f32.mxu0 0.0
        %v3098 = vand.u32 %v2169, 4294901760
        %3099 = vmatmul.mubr.f32.gmra.mrb[0].mxu0 %v3098
        %v3100 = vpop.f32.mrb[0].mxu0
        %v3101 = vadd.f32 %v2963, %v3100
        %v3102 = vpop.f32.mrb[0].mxu0
        %v3103 = vadd.f32 %v2965, %v3102
        %3104 = vmatprep.mubr.f32.mxu0 0.0
        %v3105 = vand.u32 %v2172, 4294901760
        %3106 = vmatmul.mubr.f32.gmra.mrb[0].mxu0 %v3105
        %v3107 = vpop.f32.mrb[0].mxu0
        %v3108 = vadd.f32 %v2970, %v3107
        %v3109 = vpop.f32.mrb[0].mxu0
        %v3110 = vadd.f32 %v2972, %v3109
        %3111 = vmatprep.mubr.f32.mxu0 0.0
        %v3112 = vand.u32 %v2175, 4294901760
        %3113 = vmatmul.mubr.f32.gmra.mrb[0].mxu0 %v3112
        %v3114 = vpop.f32.mrb[0].mxu0
        %v3115 = vadd.f32 %v2977, %v3114
        %v3116 = vpop.f32.mrb[0].mxu0
        %v3117 = vadd.f32 %v2979, %v3116
        %3118 = vmatprep.mubr.f32.mxu0 0.0
        %v3119 = vand.u32 %v2178, 4294901760
        %3120 = vmatmul.mubr.f32.gmra.mrb[0].mxu0 %v3119
        %v3121 = vpop.f32.mrb[0].mxu0
        %v3122 = vadd.f32 %v2984, %v3121
        %v3123 = vpop.f32.mrb[0].mxu0
        %v3124 = vadd.f32 %v2986, %v3123
        %3125 = vmatprep.mubr.f32.mxu0 0.0
        %v3126 = vand.u32 %v2181, 4294901760
        %3127 = vmatmul.mubr.f32.gmra.mrb[0].mxu0 %v3126
        %v3128 = vpop.f32.mrb[0].mxu0
        %v3129 = vadd.f32 %v2991, %v3128
        %v3130 = vpop.f32.mrb[0].mxu0
        %v3131 = vadd.f32 %v2993, %v3130
        %3132 = vmatprep.mubr.f32.mxu0 0.0
        %v3133 = vand.u32 %v2184, 4294901760
        %3134 = vmatmul.mubr.f32.gmra.mrb[0].mxu0 %v3133
        %v3135 = vpop.f32.mrb[0].mxu0
        %v3136 = vadd.f32 %v2998, %v3135
        %v3137 = vpop.f32.mrb[0].mxu0
        %v3138 = vadd.f32 %v3000, %v3137
        %3139 = vmatprep.mubr.f32.mxu0 0.0
        %v3140 = vand.u32 %v2187, 4294901760
        %3141 = vmatmul.mubr.f32.gmra.mrb[0].mxu0 %v3140
        %v3142 = vpop.f32.mrb[0].mxu0
        %v3143 = vadd.f32 %v3005, %v3142
        %v3144 = vpop.f32.mrb[0].mxu0
        %v3145 = vadd.f32 %v3007, %v3144
        %3146 = vmatprep.mubr.f32.mxu0 0.0
        %v3147 = vand.u32 %v2190, 4294901760
        %3148 = vmatmul.mubr.f32.gmra.mrb[0].mxu0 %v3147
        %v3149 = vpop.f32.mrb[0].mxu0
        %v3150 = vadd.f32 %v3012, %v3149
        %v3151 = vpop.f32.mrb[0].mxu0
        %v3152 = vadd.f32 %v3014, %v3151
        %3153 = vmatprep.mubr.f32.mxu0 0.0
        %v3154 = vand.u32 %v2193, 4294901760
        %3155 = vmatmul.mubr.f32.gmra.mrb[0].mxu0 %v3154
        %v3156 = vpop.f32.mrb[0].mxu0
        %v3157 = vadd.f32 %v3019, %v3156
        %v3158 = vpop.f32.mrb[0].mxu0
        %v3159 = vadd.f32 %v3021, %v3158
        %3160 = vdwg.mxu0
        %v3161 = vld [vmem:[%s6] sm:$0xff]
        %v3162 = vld [vmem:[%s6 + $0x8] sm:$0xff]
        %v3163 = vld [vmem:[%s6 + $0x10] sm:$0xff]
        %v3164 = vld [vmem:[%s6 + $0x18] sm:$0xff]
        %v3165 = vld [vmem:[%s6 + $0x20] sm:$0xff]
        %v3166 = vld [vmem:[%s6 + $0x28] sm:$0xff]
        %v3167 = vld [vmem:[%s6 + $0x30] sm:$0xff]
        %v3168 = vld [vmem:[%s6 + $0x38] sm:$0xff]
        %v3169 = vld [vmem:[%s6 + $0x40] sm:$0xff]
        %v3170 = vld [vmem:[%s6 + $0x48] sm:$0xff]
        %v3171 = vld [vmem:[%s6 + $0x50] sm:$0xff]
        %v3172 = vld [vmem:[%s6 + $0x58] sm:$0xff]
        %v3173 = vld [vmem:[%s6 + $0x60] sm:$0xff]
        %v3174 = vld [vmem:[%s6 + $0x68] sm:$0xff]
        %v3175 = vld [vmem:[%s6 + $0x70] sm:$0xff]
        %v3176 = vld [vmem:[%s6 + $0x78] sm:$0xff]
        %v3177 = vld [vmem:[%s6 + $0x80] sm:$0xff]
        %v3178 = vld [vmem:[%s6 + $0x88] sm:$0xff]
        %v3179 = vmul.f32 %v3101, %v3161
        %v3180 = vmul.f32 %v3103, %v3162
        %v3181 = vmul.f32 %v3108, %v3163
        %v3182 = vmul.f32 %v3110, %v3164
        %v3183 = vmul.f32 %v3115, %v3165
        %v3184 = vmul.f32 %v3117, %v3166
        %v3185 = vmul.f32 %v3122, %v3167
        %v3186 = vmul.f32 %v3124, %v3168
        %v3187 = vmul.f32 %v3129, %v3169
        %v3188 = vmul.f32 %v3131, %v3170
        %v3189 = vmul.f32 %v3136, %v3171
        %v3190 = vmul.f32 %v3138, %v3172
        %v3191 = vmul.f32 %v3143, %v3173
        %v3192 = vmul.f32 %v3145, %v3174
        %v3193 = vmul.f32 %v3150, %v3175
        %v3194 = vmul.f32 %v3152, %v3176
        %v3195 = vmul.f32 %v3157, %v3177
        %v3196 = vmul.f32 %v3159, %v3178
        %3197 = vrot.lane.b32.xlu0 %v3179, 17
        %v3198 = vpop.permute.xlu0 %3197
        %3199 = vrot.lane.b32.xlu0 %v3180, 17
        %v3200 = vpop.permute.xlu0 %3199
        %v3201 = vlaneseq
        %v3202 = vand.u32 %v3201, 127
        %vm3203 = vcmp.lt.s32.totalorder %v3202, 17
        %v3204 = vsel %vm3203, %v3198, %v3200
        %v3205 = vsel %vm3203, %v3200, %v3198
        %v3206 = vadd.f32 %v3187, %v3205
        %v3207 = vadd.f32 %v3188, %v3204
        %3208 = vrot.lane.b32.xlu0 %v3181, 16
        %v3209 = vpop.permute.xlu0 %3208
        %3210 = vrot.lane.b32.xlu0 %v3182, 16
        %v3211 = vpop.permute.xlu0 %3210
        %vm3212 = vcmp.lt.s32.totalorder %v3202, 16
        %v3213 = vsel %vm3212, %v3209, %v3211
        %v3214 = vsel %vm3212, %v3211, %v3209
        %v3215 = vadd.f32 %v3206, %v3214
        %v3216 = vadd.f32 %v3207, %v3213
        %3217 = vrot.lane.b32.xlu0 %v3183, 15
        %v3218 = vpop.permute.xlu0 %3217
        %3219 = vrot.lane.b32.xlu0 %v3184, 15
        %v3220 = vpop.permute.xlu0 %3219
        %vm3221 = vcmp.lt.s32.totalorder %v3202, 15
        %v3222 = vsel %vm3221, %v3218, %v3220
        %v3223 = vsel %vm3221, %v3220, %v3218
        %v3224 = vadd.f32 %v3215, %v3223
        %v3225 = vadd.f32 %v3216, %v3222
        %3226 = vrot.lane.b32.xlu0 %v3185, 1
        %v3227 = vpop.permute.xlu0 %3226
        %3228 = vrot.lane.b32.xlu0 %v3186, 1
        %v3229 = vpop.permute.xlu0 %3228
        %vm3230 = vcmp.lt.s32.totalorder %v3202, 1
        %v3231 = vsel %vm3230, %v3227, %v3229
        %v3232 = vsel %vm3230, %v3229, %v3227
        %v3233 = vadd.f32 %v3224, %v3232
        %v3234 = vadd.f32 %v3225, %v3231
        %3235 = vrot.lane.b32.xlu0 %v3189, 127
        %v3236 = vpop.permute.xlu0 %3235
        %3237 = vrot.lane.b32.xlu0 %v3190, 127
        %v3238 = vpop.permute.xlu0 %3237
        %vm3239 = vcmp.lt.s32.totalorder %v3202, 127
        %v3240 = vsel %vm3239, %v3236, %v3238
        %v3241 = vsel %vm3239, %v3238, %v3236
        %v3242 = vadd.f32 %v3233, %v3240
        %v3243 = vadd.f32 %v3234, %v3241
        %3244 = vrot.lane.b32.xlu0 %v3191, 113
        %v3245 = vpop.permute.xlu0 %3244
        %3246 = vrot.lane.b32.xlu0 %v3192, 113
        %v3247 = vpop.permute.xlu0 %3246
        %vm3248 = vcmp.lt.s32.totalorder %v3202, 113
        %v3249 = vsel %vm3248, %v3245, %v3247
        %v3250 = vsel %vm3248, %v3247, %v3245
        %v3251 = vadd.f32 %v3242, %v3249
        %v3252 = vadd.f32 %v3243, %v3250
        %3253 = vrot.lane.b32.xlu0 %v3193, 112
        %v3254 = vpop.permute.xlu0 %3253
        %3255 = vrot.lane.b32.xlu0 %v3194, 112
        %v3256 = vpop.permute.xlu0 %3255
        %vm3257 = vcmp.lt.s32.totalorder %v3202, 112
        %v3258 = vsel %vm3257, %v3254, %v3256
        %v3259 = vsel %vm3257, %v3256, %v3254
        %v3260 = vadd.f32 %v3251, %v3258
        %v3261 = vadd.f32 %v3252, %v3259
        %3262 = vrot.lane.b32.xlu0 %v3195, 111
        %v3263 = vpop.permute.xlu0 %3262
        %3264 = vrot.lane.b32.xlu0 %v3196, 111
        %v3265 = vpop.permute.xlu0 %3264
        %vm3266 = vcmp.lt.s32.totalorder %v3202, 111
        %v3267 = vsel %vm3266, %v3263, %v3265
        %v3268 = vsel %vm3266, %v3265, %v3263
        %v3269 = vadd.f32 %v3260, %v3267
        %v3270 = vadd.f32 %v3261, %v3268
        %v3271 = vld [vmem:[%s7] sm:$0xff]
        %3273 = vset.pattern.permute.xlu0 0
        %3274 = vperm.xlu0 %3273, %v3271
        %v3275 = vpop.permute.xlu0 %3274
        %v3277 = vmul.f32 %v3269, %v3275
        %v3278 = vmul.f32 %v3270, %v3275
        %v3279 = vld [vmem:[%s8] sm:$0xff]
        %3281 = vset.pattern.permute.xlu0 0
        %3282 = vperm.xlu0 %3281, %v3279
        %v3283 = vpop.permute.xlu0 %3282
        %v3285 = vadd.f32 %v3277, %v3283
        %v3286 = vadd.f32 %v3278, %v3283
        %3287 = vst [vmem:[%s326] sm:$0xff] %v3285
        %3288 = vst [vmem:[%s326 + $0x8] sm:$0xff] %v3286
        %s3289 = sand.u32 %s225, 1
        %s3290 = scalar_lea.sflag [#allocation3], %s3289
        %s3291 = sand.u32 %s225, 1
        %s3292 = smul.addr %s3291, 16
        %s3293 = scalar_lea.vmem [#allocation2], %s3292
        // Predicated region
        $region57: #{tpu_custom_call.1} parent=55 // pred_check
          %p3294 = pneg %p235
        $region58: #{tpu_custom_call.1} parent=55 // pred_check_branch
          %3296 = sbr.rel (%p3294) target = $region60
        $region59: #{tpu_custom_call.1} parent=55 // pred_region
          %s3297 = smul.u32 2, %s23
          %s3299 = ssub.s32 256, 256
          %3300 = vsyncadd %s3290, %s3299
          %s3301 = smul.addr %s3297, 128
          %s3302 = scalar_lea.hbm %s9, %s3301
          %s3304 = sshll.u32 %s3293, 4
          %s3305 = int_to_ptr.vmem [resolvable:$true] %s3304
          %3307 = dma.vmem_to_hbm [thread:$0]  %s3305, 256, %s3302, %s3290
        $region60: #{tpu_custom_call.1} parent=55 // pred_fallthru
          _
      $region56: #{tpu_custom_call.1} parent=5 // pred_fallthru
        _
      %p3308 = scmp.le.s32.totalorder 2, %s18
      // Predicated region
      $region61: #{tpu_custom_call.1} parent=5 // pred_check
        %p3309 = pneg %p3308
      $region62: #{tpu_custom_call.1} parent=5 // pred_check_branch
        %3311 = sbr.rel (%p3309) target = $region64
      $region63: #{tpu_custom_call.1} parent=5 // pred_region
        %s3312 = ssub.s32 %s18, 2
        // Predicated region
        $region65: #{tpu_custom_call.1} parent=63 // pred_check
          %p3313 = pneg %p241
        $region66: #{tpu_custom_call.1} parent=63 // pred_check_branch
          %3315 = sbr.rel (%p3313) target = $region68
        $region67: #{tpu_custom_call.1} parent=63 // pred_region
          %s3316 = sand.u32 %s226, 1
          %s3317 = scalar_lea.sflag [#allocation3], %s3316
          %s3318 = sand.u32 %s226, 1
          %s3319 = smul.addr %s3318, 16
          %s3320 = scalar_lea.vmem [#allocation2], %s3319
          %3321 = dma.done %s3317, 256
        $region68: #{tpu_custom_call.1} parent=63 // pred_fallthru
          _
      $region64: #{tpu_custom_call.1} parent=5 // pred_fallthru
        _
    $region6: #{tpu_custom_call.1} parent=1 // loop_footer
      %s22 = sadd.s32 1, %s18
    $region7: #{tpu_custom_call.1} parent=1 // loop_footer_branch
      %17 = sbr.rel target = $region3
    $region8: #{tpu_custom_call.1} parent=1 // loop_exit
      _
    %3322 = vsyncpa [#allocation3], 1
    %s3323 = scalar_lea.sflag [#allocation3], 1
    %3324 = vsyncpa %s3323, 1

// kernel: tpu_custom_call.1
$region0: #{tpu_custom_call.1}
  #allocation0 [shape = 'u32[]', space=smem, size = 0x4, offset = 0x4, fixed_abs, tag = 'smem constant byte address 0x4 - core index']
  #allocation1 [shape = 'u32[144,128]{1,0:T(1,128)}', space=vmem, size = 0x12000, scoped, tag = 'internal scratch']
  %s0 = inlined_call_operand.vmem [shape: f32[4,512], index: 0, kind: input, shape index: {}]
  %s1 = inlined_call_operand.vmem [shape: f32[256,50], index: 1, kind: input, shape index: {}]
  %s2 = inlined_call_operand.vmem [shape: f32[32,4], index: 2, kind: input, shape index: {}]
  %s3 = inlined_call_operand.vmem [shape: f32[32,50], index: 3, kind: input, shape index: {}]
  %s4 = inlined_call_operand.vmem [shape: f32[50,256], index: 4, kind: input, shape index: {}]
  %s5 = inlined_call_operand.vmem [shape: f32[72,36], index: 5, kind: input, shape index: {}]
  %s6 = inlined_call_operand.vmem [shape: f32[72,256], index: 6, kind: input, shape index: {}]
  %s7 = inlined_call_operand.vmem [shape: f32[8,1], index: 7, kind: input, shape index: {}]
  %s8 = inlined_call_operand.vmem [shape: f32[8,1], index: 8, kind: input, shape index: {}]
  %s9 = inlined_call_operand.hbm [shape: f32[8,512], index: 9, kind: output, shape index: {}]
  %s10 = sld [smem:[#allocation0]]
  $region69: #{tpu_custom_call.1} parent=0
    _
  %s12 = ssub.s32 1, %s10
  %s13 = scalar_select 0, %s12, %s10
  $region1: #{tpu_custom_call.1} parent=0
    #allocation2 [shape = 'u8[16384]{0}', space=vmem, size = 0x4000, scoped, tag = 'output window, operand 0']
    #allocation3 [shape = 's32[2]{0}', space=sflag, size = 0x8, scoped, tag = 'scoped memory for tpu_custom_call.1']
    %14 = vsyncpa [#allocation3], 0
    %s15 = scalar_lea.sflag [#allocation3], 1
    %16 = vsyncpa %s15, 0
    loop: start=0, step=1, limit=4
    $region2: #{tpu_custom_call.1} parent=1 // loop_pre_header
      _
    $region3: #{tpu_custom_call.1} parent=1 // loop_header
      %s18 = sphi 0, %s22
      %p19 = scmp.ge.s32.totalorder %s18, 4
      %s28 = sphi 0, %s30
      %s31 = sphi 0, %s28
      %s32 = sphi 0, %s31
      %s48 = sphi 0, %s32
      %s52 = sphi 0, %s52
      %s54 = sphi 0, %s52
      %s55 = sphi 0, %s54
      %s69 = sphi 0, %s55
      %s73 = sphi 0, %s73
      %s75 = sphi 0, %s73
      %s76 = sphi 0, %s75
      %s90 = sphi 0, %s76
      %s94 = sphi 0, %s94
      %s96 = sphi 0, %s94
      %s97 = sphi 0, %s96
      %s111 = sphi 0, %s97
      %s115 = sphi 0, %s115
      %s117 = sphi 0, %s115
      %s118 = sphi 0, %s117
      %s132 = sphi 0, %s118
      %s136 = sphi 0, %s136
      %s138 = sphi 0, %s136
      %s139 = sphi 0, %s138
      %s153 = sphi 0, %s139
      %s157 = sphi 0, %s157
      %s159 = sphi 0, %s157
      %s160 = sphi 0, %s159
      %s174 = sphi 0, %s160
      %s178 = sphi 0, %s178
      %s180 = sphi 0, %s178
      %s181 = sphi 0, %s180
      %s195 = sphi 0, %s181
      %s199 = sphi 0, %s199
      %s201 = sphi 0, %s199
      %s202 = sphi 0, %s201
      %s216 = sphi 0, %s202
      %s222 = sphi 0, %s224
      %s225 = sphi 0, %s222
      %s226 = sphi 0, %s225
      %s242 = sphi 0, %s226
    $region4: #{tpu_custom_call.1} parent=1 // loop_header_branch
      %21 = sbr.rel (%p19) target = $region8
    $region5: #{tpu_custom_call.1} parent=1 // loop_body
      %s23 = ssub.s32 %s18, 1
      %s24 = ssub.s32 %s18, 2
      %s25 = sadd.s32 %s18, 1
      %s26 = ssub.s32 %s18, %s25
      %p27 = scmp.eq.s32.totalorder %s26, 0
      %s29 = sadd.s32 %s28, 1
      %s30 = scalar_select %p27, %s28, %s29
      %p33 = pneg %p27
      %p34 = scmp.eq.s32.totalorder %s18, 1
      %p35 = por %p33, %p34
      %p36 = scmp.ne.s32.totalorder %s28, %s31
      %p37 = scmp.eq.s32.totalorder %s18, 0
      %p38 = por %p36, %p37
      %p39 = scmp.ne.s32.totalorder %s28, %s31
      %p40 = scmp.eq.s32.totalorder %s23, 1
      %p41 = por %p39, %p40
      %p42 = scmp.ne.s32.totalorder %s31, %s32
      %p43 = scmp.eq.s32.totalorder %s23, 0
      %p44 = por %p42, %p43
      %p45 = scmp.ne.s32.totalorder %s31, %s32
      %p46 = scmp.eq.s32.totalorder %s24, 1
      %p47 = por %p45, %p46
      %p49 = scmp.ne.s32.totalorder %s32, %s48
      %p50 = scmp.eq.s32.totalorder %s24, 0
      %p51 = por %p49, %p50
      %s53 = sadd.s32 %s52, 1
      %p56 = scmp.eq.s32.totalorder %s18, 1
      %p57 = scmp.ne.s32.totalorder %s52, %s54
      %p58 = scmp.eq.s32.totalorder %s18, 0
      %p59 = por %p57, %p58
      %p60 = scmp.ne.s32.totalorder %s52, %s54
      %p61 = scmp.eq.s32.totalorder %s23, 1
      %p62 = por %p60, %p61
      %p63 = scmp.ne.s32.totalorder %s54, %s55
      %p64 = scmp.eq.s32.totalorder %s23, 0
      %p65 = por %p63, %p64
      %p66 = scmp.ne.s32.totalorder %s54, %s55
      %p67 = scmp.eq.s32.totalorder %s24, 1
      %p68 = por %p66, %p67
      %p70 = scmp.ne.s32.totalorder %s55, %s69
      %p71 = scmp.eq.s32.totalorder %s24, 0
      %p72 = por %p70, %p71
      %s74 = sadd.s32 %s73, 1
      %p77 = scmp.eq.s32.totalorder %s18, 1
      %p78 = scmp.ne.s32.totalorder %s73, %s75
      %p79 = scmp.eq.s32.totalorder %s18, 0
      %p80 = por %p78, %p79
      %p81 = scmp.ne.s32.totalorder %s73, %s75
      %p82 = scmp.eq.s32.totalorder %s23, 1
      %p83 = por %p81, %p82
      %p84 = scmp.ne.s32.totalorder %s75, %s76
      %p85 = scmp.eq.s32.totalorder %s23, 0
      %p86 = por %p84, %p85
      %p87 = scmp.ne.s32.totalorder %s75, %s76
      %p88 = scmp.eq.s32.totalorder %s24, 1
      %p89 = por %p87, %p88
      %p91 = scmp.ne.s32.totalorder %s76, %s90
      %p92 = scmp.eq.s32.totalorder %s24, 0
      %p93 = por %p91, %p92
      %s95 = sadd.s32 %s94, 1
      %p98 = scmp.eq.s32.totalorder %s18, 1
      %p99 = scmp.ne.s32.totalorder %s94, %s96
      %p100 = scmp.eq.s32.totalorder %s18, 0
      %p101 = por %p99, %p100
      %p102 = scmp.ne.s32.totalorder %s94, %s96
      %p103 = scmp.eq.s32.totalorder %s23, 1
      %p104 = por %p102, %p103
      %p105 = scmp.ne.s32.totalorder %s96, %s97
      %p106 = scmp.eq.s32.totalorder %s23, 0
      %p107 = por %p105, %p106
      %p108 = scmp.ne.s32.totalorder %s96, %s97
      %p109 = scmp.eq.s32.totalorder %s24, 1
      %p110 = por %p108, %p109
      %p112 = scmp.ne.s32.totalorder %s97, %s111
      %p113 = scmp.eq.s32.totalorder %s24, 0
      %p114 = por %p112, %p113
      %s116 = sadd.s32 %s115, 1
      %p119 = scmp.eq.s32.totalorder %s18, 1
      %p120 = scmp.ne.s32.totalorder %s115, %s117
      %p121 = scmp.eq.s32.totalorder %s18, 0
      %p122 = por %p120, %p121
      %p123 = scmp.ne.s32.totalorder %s115, %s117
      %p124 = scmp.eq.s32.totalorder %s23, 1
      %p125 = por %p123, %p124
      %p126 = scmp.ne.s32.totalorder %s117, %s118
      %p127 = scmp.eq.s32.totalorder %s23, 0
      %p128 = por %p126, %p127
      %p129 = scmp.ne.s32.totalorder %s117, %s118
      %p130 = scmp.eq.s32.totalorder %s24, 1
      %p131 = por %p129, %p130
      %p133 = scmp.ne.s32.totalorder %s118, %s132
      %p134 = scmp.eq.s32.totalorder %s24, 0
      %p135 = por %p133, %p134
      %s137 = sadd.s32 %s136, 1
      %p140 = scmp.eq.s32.totalorder %s18, 1
      %p141 = scmp.ne.s32.totalorder %s136, %s138
      %p142 = scmp.eq.s32.totalorder %s18, 0
      %p143 = por %p141, %p142
      %p144 = scmp.ne.s32.totalorder %s136, %s138
      %p145 = scmp.eq.s32.totalorder %s23, 1
      %p146 = por %p144, %p145
      %p147 = scmp.ne.s32.totalorder %s138, %s139
      %p148 = scmp.eq.s32.totalorder %s23, 0
      %p149 = por %p147, %p148
      %p150 = scmp.ne.s32.totalorder %s138, %s139
      %p151 = scmp.eq.s32.totalorder %s24, 1
      %p152 = por %p150, %p151
      %p154 = scmp.ne.s32.totalorder %s139, %s153
      %p155 = scmp.eq.s32.totalorder %s24, 0
      %p156 = por %p154, %p155
      %s158 = sadd.s32 %s157, 1
      %p161 = scmp.eq.s32.totalorder %s18, 1
      %p162 = scmp.ne.s32.totalorder %s157, %s159
      %p163 = scmp.eq.s32.totalorder %s18, 0
      %p164 = por %p162, %p163
      %p165 = scmp.ne.s32.totalorder %s157, %s159
      %p166 = scmp.eq.s32.totalorder %s23, 1
      %p167 = por %p165, %p166
      %p168 = scmp.ne.s32.totalorder %s159, %s160
      %p169 = scmp.eq.s32.totalorder %s23, 0
      %p170 = por %p168, %p169
      %p171 = scmp.ne.s32.totalorder %s159, %s160
      %p172 = scmp.eq.s32.totalorder %s24, 1
      %p173 = por %p171, %p172
      %p175 = scmp.ne.s32.totalorder %s160, %s174
      %p176 = scmp.eq.s32.totalorder %s24, 0
      %p177 = por %p175, %p176
      %s179 = sadd.s32 %s178, 1
      %p182 = scmp.eq.s32.totalorder %s18, 1
      %p183 = scmp.ne.s32.totalorder %s178, %s180
      %p184 = scmp.eq.s32.totalorder %s18, 0
      %p185 = por %p183, %p184
      %p186 = scmp.ne.s32.totalorder %s178, %s180
      %p187 = scmp.eq.s32.totalorder %s23, 1
      %p188 = por %p186, %p187
      %p189 = scmp.ne.s32.totalorder %s180, %s181
      %p190 = scmp.eq.s32.totalorder %s23, 0
      %p191 = por %p189, %p190
      %p192 = scmp.ne.s32.totalorder %s180, %s181
      %p193 = scmp.eq.s32.totalorder %s24, 1
      %p194 = por %p192, %p193
      %p196 = scmp.ne.s32.totalorder %s181, %s195
      %p197 = scmp.eq.s32.totalorder %s24, 0
      %p198 = por %p196, %p197
      %s200 = sadd.s32 %s199, 1
      %p203 = scmp.eq.s32.totalorder %s18, 1
      %p204 = scmp.ne.s32.totalorder %s199, %s201
      %p205 = scmp.eq.s32.totalorder %s18, 0
      %p206 = por %p204, %p205
      %p207 = scmp.ne.s32.totalorder %s199, %s201
      %p208 = scmp.eq.s32.totalorder %s23, 1
      %p209 = por %p207, %p208
      %p210 = scmp.ne.s32.totalorder %s201, %s202
      %p211 = scmp.eq.s32.totalorder %s23, 0
      %p212 = por %p210, %p211
      %p213 = scmp.ne.s32.totalorder %s201, %s202
      %p214 = scmp.eq.s32.totalorder %s24, 1
      %p215 = por %p213, %p214
      %p217 = scmp.ne.s32.totalorder %s202, %s216
      %p218 = scmp.eq.s32.totalorder %s24, 0
      %p219 = por %p217, %p218
      %s220 = ssub.s32 %s18, %s25
      %p221 = scmp.eq.s32.totalorder %s220, 0
      %s223 = sadd.s32 %s222, 1
      %s224 = scalar_select %p221, %s222, %s223
      %p227 = pneg %p221
      %p228 = scmp.eq.s32.totalorder %s18, 1
      %p229 = por %p227, %p228
      %p230 = scmp.ne.s32.totalorder %s222, %s225
      %p231 = scmp.eq.s32.totalorder %s18, 0
      %p232 = por %p230, %p231
      %p233 = scmp.ne.s32.totalorder %s222, %s225
      %p234 = scmp.eq.s32.totalorder %s23, 1
      %p235 = por %p233, %p234
      %p236 = scmp.ne.s32.totalorder %s225, %s226
      %p237 = scmp.eq.s32.totalorder %s23, 0
      %p238 = por %p236, %p237
      %p239 = scmp.ne.s32.totalorder %s225, %s226
      %p240 = scmp.eq.s32.totalorder %s24, 1
      %p241 = por %p239, %p240
      %p243 = scmp.ne.s32.totalorder %s226, %s242
      %p244 = scmp.eq.s32.totalorder %s24, 0
      %p245 = por %p243, %p244
      %p246 = scmp.le.s32.totalorder 1, %s18
      %p247 = scmp.lt.s32.totalorder %s18, 3
      %p248 = pnand %p246, %p247
      %p249 = pneg %p248
      // Predicated region
      $region9: #{tpu_custom_call.1} parent=5 // pred_check
        _
      $region10: #{tpu_custom_call.1} parent=5 // pred_check_branch
        %251 = sbr.rel (%p248) target = $region12
      $region11: #{tpu_custom_call.1} parent=5 // pred_region
        %s252 = ssub.s32 %s18, 1
        // Predicated region
        $region13: #{tpu_custom_call.1} parent=11 // pred_check
          %p253 = pneg %p65
        $region14: #{tpu_custom_call.1} parent=11 // pred_check_branch
          %255 = sbr.rel (%p253) target = $region16
        $region15: #{tpu_custom_call.1} parent=11 // pred_region
          _
        $region16: #{tpu_custom_call.1} parent=11 // pred_fallthru
          _
        // Predicated region
        $region17: #{tpu_custom_call.1} parent=11 // pred_check
          %p256 = pneg %p86
        $region18: #{tpu_custom_call.1} parent=11 // pred_check_branch
          %258 = sbr.rel (%p256) target = $region20
        $region19: #{tpu_custom_call.1} parent=11 // pred_region
          _
        $region20: #{tpu_custom_call.1} parent=11 // pred_fallthru
          _
        // Predicated region
        $region21: #{tpu_custom_call.1} parent=11 // pred_check
          %p259 = pneg %p107
        $region22: #{tpu_custom_call.1} parent=11 // pred_check_branch
          %261 = sbr.rel (%p259) target = $region24
        $region23: #{tpu_custom_call.1} parent=11 // pred_region
          _
        $region24: #{tpu_custom_call.1} parent=11 // pred_fallthru
          _
        // Predicated region
        $region25: #{tpu_custom_call.1} parent=11 // pred_check
          %p262 = pneg %p128
        $region26: #{tpu_custom_call.1} parent=11 // pred_check_branch
          %264 = sbr.rel (%p262) target = $region28
        $region27: #{tpu_custom_call.1} parent=11 // pred_region
          _
        $region28: #{tpu_custom_call.1} parent=11 // pred_fallthru
          _
        // Predicated region
        $region29: #{tpu_custom_call.1} parent=11 // pred_check
          %p265 = pneg %p149
        $region30: #{tpu_custom_call.1} parent=11 // pred_check_branch
          %267 = sbr.rel (%p265) target = $region32
        $region31: #{tpu_custom_call.1} parent=11 // pred_region
          _
        $region32: #{tpu_custom_call.1} parent=11 // pred_fallthru
          _
        // Predicated region
        $region33: #{tpu_custom_call.1} parent=11 // pred_check
          %p268 = pneg %p170
        $region34: #{tpu_custom_call.1} parent=11 // pred_check_branch
          %270 = sbr.rel (%p268) target = $region36
        $region35: #{tpu_custom_call.1} parent=11 // pred_region
          _
        $region36: #{tpu_custom_call.1} parent=11 // pred_fallthru
          _
        // Predicated region
        $region37: #{tpu_custom_call.1} parent=11 // pred_check
          %p271 = pneg %p191
        $region38: #{tpu_custom_call.1} parent=11 // pred_check_branch
          %273 = sbr.rel (%p271) target = $region40
        $region39: #{tpu_custom_call.1} parent=11 // pred_region
          _
        $region40: #{tpu_custom_call.1} parent=11 // pred_fallthru
          _
        // Predicated region
        $region41: #{tpu_custom_call.1} parent=11 // pred_check
          %p274 = pneg %p212
        $region42: #{tpu_custom_call.1} parent=11 // pred_check_branch
          %276 = sbr.rel (%p274) target = $region44
        $region43: #{tpu_custom_call.1} parent=11 // pred_region
          _
        $region44: #{tpu_custom_call.1} parent=11 // pred_fallthru
          _
      $region12: #{tpu_custom_call.1} parent=5 // pred_fallthru
        _
      %p277 = scmp.lt.s32.totalorder %s18, 2
      // Predicated region
      $region45: #{tpu_custom_call.1} parent=5 // pred_check
        %p278 = pneg %p277
      $region46: #{tpu_custom_call.1} parent=5 // pred_check_branch
        %280 = sbr.rel (%p278) target = $region48
      $region47: #{tpu_custom_call.1} parent=5 // pred_region
        // Predicated region
        $region49: #{tpu_custom_call.1} parent=47 // pred_check
          %p281 = pneg %p38
        $region50: #{tpu_custom_call.1} parent=47 // pred_check_branch
          %283 = sbr.rel (%p281) target = $region52
        $region51: #{tpu_custom_call.1} parent=47 // pred_region
          %s284 = smul.u32 2, %s18
          %p285 = scmp.lt.s32.totalorder %s284, 3
          %s286 = scalar_select %p285, %s284, 3
          %s287 = smul.addr %s286, 4
          %s288 = scalar_lea.vmem %s0, %s287
          %s289 = smul.u32 2, %s18
        $region52: #{tpu_custom_call.1} parent=47 // pred_fallthru
          _
      $region48: #{tpu_custom_call.1} parent=5 // pred_fallthru
        _
      %p290 = scmp.le.s32.totalorder 1, %s18
      %p291 = scmp.lt.s32.totalorder %s18, 3
      %p292 = pnand %p290, %p291
      %p293 = pneg %p292
      // Predicated region
      $region53: #{tpu_custom_call.1} parent=5 // pred_check
        _
      $region54: #{tpu_custom_call.1} parent=5 // pred_check_branch
        %295 = sbr.rel (%p292) target = $region56
      $region55: #{tpu_custom_call.1} parent=5 // pred_region
        %s296 = ssub.s32 %s18, 1
        %s297 = smul.u32 2, %s23
        %p298 = scmp.lt.s32.totalorder %s297, 3
        %s299 = scalar_select %p298, %s297, 3
        %s300 = smul.addr %s299, 4
        %s301 = scalar_lea.vmem %s0, %s300
        %p302 = pneg %p44
        %p303 = pneg %p41
        %p304 = pneg %p65
        %p305 = pneg %p62
        %p306 = pneg %p86
        %p307 = pneg %p83
        %p308 = pneg %p107
        %p309 = pneg %p104
        %p310 = pneg %p128
        %p311 = pneg %p125
        %p312 = pneg %p149
        %p313 = pneg %p146
        %p314 = pneg %p170
        %p315 = pneg %p167
        %p316 = pneg %p191
        %p317 = pneg %p188
        %p318 = pneg %p212
        %p319 = pneg %p209
        %p320 = pneg %p238
        %p321 = pneg %p235
        %s322 = sand.u32 %s225, 1
        %s323 = scalar_lea.sflag [#allocation3], %s322
        %s324 = sand.u32 %s225, 1
        %s325 = smul.addr %s324, 16
        %s326 = scalar_lea.vmem [#allocation2], %s325
        %s327 = smul.u32 2, %s23
        %p328 = scmp.lt.s32.totalorder %s327, 3
        %s329 = scalar_select %p328, %s327, 3
        %s330 = smul.addr %s329, 4
        %s331 = scalar_lea.vmem %s0, %s330
        %s332 = smul.u32 2, %s23
        %s333 = smul.u32 2, %s23
        %v334 = vld [vmem:[%s331] sm:$0xff]
        %v335 = vld [vmem:[%s1] sm:$0xff]
        %v336 = vld [vmem:[%s1 + $0x8] sm:$0xff]
        %v337 = vld [vmem:[%s1 + $0x10] sm:$0xff]
        %v338 = vld [vmem:[%s1 + $0x18] sm:$0xff]
        %v339 = vld [vmem:[%s1 + $0x20] sm:$0xff]
        %v340 = vld [vmem:[%s1 + $0x28] sm:$0xff]
        %v341 = vld [vmem:[%s1 + $0x30] sm:$0xff]
        %v342 = vld [vmem:[%s1 + $0x38] sm:$0xff]
        %v343 = vld [vmem:[%s1 + $0x40] sm:$0xff]
        %v344 = vld [vmem:[%s1 + $0x48] sm:$0xff]
        %v345 = vld [vmem:[%s1 + $0x50] sm:$0xff]
        %v346 = vld [vmem:[%s1 + $0x58] sm:$0xff]
        %v347 = vld [vmem:[%s1 + $0x60] sm:$0xff]
        %v348 = vld [vmem:[%s1 + $0x68] sm:$0xff]
        %v349 = vld [vmem:[%s1 + $0x70] sm:$0xff]
        %v350 = vld [vmem:[%s1 + $0x78] sm:$0xff]
        %v351 = vld [vmem:[%s1 + $0x80] sm:$0xff]
        %v352 = vld [vmem:[%s1 + $0x88] sm:$0xff]
        %v353 = vld [vmem:[%s1 + $0x90] sm:$0xff]
        %v354 = vld [vmem:[%s1 + $0x98] sm:$0xff]
        %v355 = vld [vmem:[%s1 + $0xa0] sm:$0xff]
        %v356 = vld [vmem:[%s1 + $0xa8] sm:$0xff]
        %v357 = vld [vmem:[%s1 + $0xb0] sm:$0xff]
        %v358 = vld [vmem:[%s1 + $0xb8] sm:$0xff]
        %v359 = vld [vmem:[%s1 + $0xc0] sm:$0xff]
        %v360 = vld [vmem:[%s1 + $0xc8] sm:$0xff]
        %v361 = vld [vmem:[%s1 + $0xd0] sm:$0xff]
        %v362 = vld [vmem:[%s1 + $0xd8] sm:$0xff]
        %v363 = vld [vmem:[%s1 + $0xe0] sm:$0xff]
        %v364 = vld [vmem:[%s1 + $0xe8] sm:$0xff]
        %v365 = vld [vmem:[%s1 + $0xf0] sm:$0xff]
        %v366 = vld [vmem:[%s1 + $0xf8] sm:$0xff]
        %v368 = vcombine.high %v334, %v334
        %370 = vmatprep.subr.mxu0 0.0
        %v371 = vand.u32 %v335, 4294901760
        %372 = vmatpush1.msra.mxu0 %v371
        %373 = vmatprep.subr.mxu0 0.0
        %v374 = vand.u32 %v336, 4294901760
        %375 = vmatpush1.msra.mxu0 %v374
        %376 = vmatprep.subr.mxu0 0.0
        %v377 = vand.u32 %v337, 4294901760
        %378 = vmatpush1.msra.mxu0 %v377
        %379 = vmatprep.subr.mxu0 0.0
        %v380 = vand.u32 %v338, 4294901760
        %381 = vmatpush1.msra.mxu0 %v380
        %382 = vmatprep.subr.mxu0 0.0
        %v383 = vand.u32 %v339, 4294901760
        %384 = vmatpush1.msra.mxu0 %v383
        %385 = vmatprep.subr.mxu0 0.0
        %v386 = vand.u32 %v340, 4294901760
        %387 = vmatpush1.msra.mxu0 %v386
        %388 = vmatprep.subr.mxu0 0.0
        %v389 = vand.u32 %v341, 4294901760
        %390 = vmatpush1.msra.mxu0 %v389
        %391 = vmatprep.subr.mxu0 0.0
        %v392 = vand.u32 %v342, 4294901760
        %393 = vmatpush1.msra.mxu0 %v392
        %394 = vmatprep.subr.mxu0 0.0
        %v395 = vand.u32 %v343, 4294901760
        %396 = vmatpush1.msra.mxu0 %v395
        %397 = vmatprep.subr.mxu0 0.0
        %v398 = vand.u32 %v344, 4294901760
        %399 = vmatpush1.msra.mxu0 %v398
        %400 = vmatprep.subr.mxu0 0.0
        %v401 = vand.u32 %v345, 4294901760
        %402 = vmatpush1.msra.mxu0 %v401
        %403 = vmatprep.subr.mxu0 0.0
        %v404 = vand.u32 %v346, 4294901760
        %405 = vmatpush1.msra.mxu0 %v404
        %406 = vmatprep.subr.mxu0 0.0
        %v407 = vand.u32 %v347, 4294901760
        %408 = vmatpush1.msra.mxu0 %v407
        %409 = vmatprep.subr.mxu0 0.0
        %v410 = vand.u32 %v348, 4294901760
        %411 = vmatpush1.msra.mxu0 %v410
        %412 = vmatprep.subr.mxu0 0.0
        %v413 = vand.u32 %v349, 4294901760
        %414 = vmatpush1.msra.mxu0 %v413
        %415 = vmatprep.subr.mxu0 0.0
        %v416 = vand.u32 %v350, 4294901760
        %417 = vmatpush1.msra.mxu0 %v416
        %418 = vmatprep.subr.mxu0 0.0
        %v419 = vand.u32 %v351, 4294901760
        %420 = vmatpush1.msra.mxu0 %v419
        %421 = vmatprep.subr.mxu0 0.0
        %v422 = vand.u32 %v352, 4294901760
        %423 = vmatpush1.msra.mxu0 %v422
        %424 = vmatprep.subr.mxu0 0.0
        %v425 = vand.u32 %v353, 4294901760
        %426 = vmatpush1.msra.mxu0 %v425
        %427 = vmatprep.subr.mxu0 0.0
        %v428 = vand.u32 %v354, 4294901760
        %429 = vmatpush1.msra.mxu0 %v428
        %430 = vmatprep.subr.mxu0 0.0
        %v431 = vand.u32 %v355, 4294901760
        %432 = vmatpush1.msra.mxu0 %v431
        %433 = vmatprep.subr.mxu0 0.0
        %v434 = vand.u32 %v356, 4294901760
        %435 = vmatpush1.msra.mxu0 %v434
        %436 = vmatprep.subr.mxu0 0.0
        %v437 = vand.u32 %v357, 4294901760
        %438 = vmatpush1.msra.mxu0 %v437
        %439 = vmatprep.subr.mxu0 0.0
        %v440 = vand.u32 %v358, 4294901760
        %441 = vmatpush1.msra.mxu0 %v440
        %442 = vmatprep.subr.mxu0 0.0
        %v443 = vand.u32 %v359, 4294901760
        %444 = vmatpush1.msra.mxu0 %v443
        %445 = vmatprep.subr.mxu0 0.0
        %v446 = vand.u32 %v360, 4294901760
        %447 = vmatpush1.msra.mxu0 %v446
        %448 = vmatprep.subr.mxu0 0.0
        %v449 = vand.u32 %v361, 4294901760
        %450 = vmatpush1.msra.mxu0 %v449
        %451 = vmatprep.subr.mxu0 0.0
        %v452 = vand.u32 %v362, 4294901760
        %453 = vmatpush1.msra.mxu0 %v452
        %454 = vmatprep.subr.mxu0 0.0
        %v455 = vand.u32 %v363, 4294901760
        %456 = vmatpush1.msra.mxu0 %v455
        %457 = vmatprep.subr.mxu0 0.0
        %v458 = vand.u32 %v364, 4294901760
        %459 = vmatpush1.msra.mxu0 %v458
        %460 = vmatprep.subr.mxu0 0.0
        %v461 = vand.u32 %v365, 4294901760
        %462 = vmatpush1.msra.mxu0 %v461
        %463 = vmatprep.subr.mxu0 0.0
        %v464 = vand.u32 %v366, 4294901760
        %465 = vmatpush1.msra.mxu0 %v464
        %v466 = vand.u32 %v368, 4294901760
        %v467 = vsub.f32 %v368, %v466
        %v468 = vand.u32 %v467, 4294901760
        %v469 = vsub.f32 %v467, %v468
        %v470 = vand.u32 %v469, 4294901760
        %471 = vmatprep.mubr.f32.mxu0 %v470
        %v472 = vand.u32 %v334, 4294901760
        %v473 = vsub.f32 %v334, %v472
        %v474 = vand.u32 %v473, 4294901760
        %v475 = vsub.f32 %v473, %v474
        %v476 = vand.u32 %v475, 4294901760
        %477 = vmatmul.mubr.f32.gmra.mrb[0].mxu0 %v476
        %v478 = vpop.f32.mrb[0].mxu0
        %v479 = vadd.f32 0.0, %v478
        %v480 = vpop.f32.mrb[0].mxu0
        %481 = vdwg.mxu0
        %482 = vmatprep.subr.mxu0 0.0
        %v483 = vand.u32 %v335, 4294901760
        %v484 = vsub.f32 %v335, %v483
        %v485 = vand.u32 %v484, 4294901760
        %v486 = vsub.f32 %v484, %v485
        %v487 = vand.u32 %v486, 4294901760
        %488 = vmatpush1.msra.mxu0 %v487
        %489 = vmatprep.subr.mxu0 0.0
        %v490 = vand.u32 %v336, 4294901760
        %v491 = vsub.f32 %v336, %v490
        %v492 = vand.u32 %v491, 4294901760
        %v493 = vsub.f32 %v491, %v492
        %v494 = vand.u32 %v493, 4294901760
        %495 = vmatpush1.msra.mxu0 %v494
        %496 = vmatprep.subr.mxu0 0.0
        %v497 = vand.u32 %v337, 4294901760
        %v498 = vsub.f32 %v337, %v497
        %v499 = vand.u32 %v498, 4294901760
        %v500 = vsub.f32 %v498, %v499
        %v501 = vand.u32 %v500, 4294901760
        %502 = vmatpush1.msra.mxu0 %v501
        %503 = vmatprep.subr.mxu0 0.0
        %v504 = vand.u32 %v338, 4294901760
        %v505 = vsub.f32 %v338, %v504
        %v506 = vand.u32 %v505, 4294901760
        %v507 = vsub.f32 %v505, %v506
        %v508 = vand.u32 %v507, 4294901760
        %509 = vmatpush1.msra.mxu0 %v508
        %510 = vmatprep.subr.mxu0 0.0
        %v511 = vand.u32 %v339, 4294901760
        %v512 = vsub.f32 %v339, %v511
        %v513 = vand.u32 %v512, 4294901760
        %v514 = vsub.f32 %v512, %v513
        %v515 = vand.u32 %v514, 4294901760
        %516 = vmatpush1.msra.mxu0 %v515
        %517 = vmatprep.subr.mxu0 0.0
        %v518 = vand.u32 %v340, 4294901760
        %v519 = vsub.f32 %v340, %v518
        %v520 = vand.u32 %v519, 4294901760
        %v521 = vsub.f32 %v519, %v520
        %v522 = vand.u32 %v521, 4294901760
        %523 = vmatpush1.msra.mxu0 %v522
        %524 = vmatprep.subr.mxu0 0.0
        %v525 = vand.u32 %v341, 4294901760
        %v526 = vsub.f32 %v341, %v525
        %v527 = vand.u32 %v526, 4294901760
        %v528 = vsub.f32 %v526, %v527
        %v529 = vand.u32 %v528, 4294901760
        %530 = vmatpush1.msra.mxu0 %v529
        %531 = vmatprep.subr.mxu0 0.0
        %v532 = vand.u32 %v342, 4294901760
        %v533 = vsub.f32 %v342, %v532
        %v534 = vand.u32 %v533, 4294901760
        %v535 = vsub.f32 %v533, %v534
        %v536 = vand.u32 %v535, 4294901760
        %537 = vmatpush1.msra.mxu0 %v536
        %538 = vmatprep.subr.mxu0 0.0
        %v539 = vand.u32 %v343, 4294901760
        %v540 = vsub.f32 %v343, %v539
        %v541 = vand.u32 %v540, 4294901760
        %v542 = vsub.f32 %v540, %v541
        %v543 = vand.u32 %v542, 4294901760
        %544 = vmatpush1.msra.mxu0 %v543
        %545 = vmatprep.subr.mxu0 0.0
        %v546 = vand.u32 %v344, 4294901760
        %v547 = vsub.f32 %v344, %v546
        %v548 = vand.u32 %v547, 4294901760
        %v549 = vsub.f32 %v547, %v548
        %v550 = vand.u32 %v549, 4294901760
        %551 = vmatpush1.msra.mxu0 %v550
        %552 = vmatprep.subr.mxu0 0.0
        %v553 = vand.u32 %v345, 4294901760
        %v554 = vsub.f32 %v345, %v553
        %v555 = vand.u32 %v554, 4294901760
        %v556 = vsub.f32 %v554, %v555
        %v557 = vand.u32 %v556, 4294901760
        %558 = vmatpush1.msra.mxu0 %v557
        %559 = vmatprep.subr.mxu0 0.0
        %v560 = vand.u32 %v346, 4294901760
        %v561 = vsub.f32 %v346, %v560
        %v562 = vand.u32 %v561, 4294901760
        %v563 = vsub.f32 %v561, %v562
        %v564 = vand.u32 %v563, 4294901760
        %565 = vmatpush1.msra.mxu0 %v564
        %566 = vmatprep.subr.mxu0 0.0
        %v567 = vand.u32 %v347, 4294901760
        %v568 = vsub.f32 %v347, %v567
        %v569 = vand.u32 %v568, 4294901760
        %v570 = vsub.f32 %v568, %v569
        %v571 = vand.u32 %v570, 4294901760
        %572 = vmatpush1.msra.mxu0 %v571
        %573 = vmatprep.subr.mxu0 0.0
        %v574 = vand.u32 %v348, 4294901760
        %v575 = vsub.f32 %v348, %v574
        %v576 = vand.u32 %v575, 4294901760
        %v577 = vsub.f32 %v575, %v576
        %v578 = vand.u32 %v577, 4294901760
        %579 = vmatpush1.msra.mxu0 %v578
        %580 = vmatprep.subr.mxu0 0.0
        %v581 = vand.u32 %v349, 4294901760
        %v582 = vsub.f32 %v349, %v581
        %v583 = vand.u32 %v582, 4294901760
        %v584 = vsub.f32 %v582, %v583
        %v585 = vand.u32 %v584, 4294901760
        %586 = vmatpush1.msra.mxu0 %v585
        %587 = vmatprep.subr.mxu0 0.0
        %v588 = vand.u32 %v350, 4294901760
        %v589 = vsub.f32 %v350, %v588
        %v590 = vand.u32 %v589, 4294901760
        %v591 = vsub.f32 %v589, %v590
        %v592 = vand.u32 %v591, 4294901760
        %593 = vmatpush1.msra.mxu0 %v592
        %594 = vmatprep.subr.mxu0 0.0
        %v595 = vand.u32 %v351, 4294901760
        %v596 = vsub.f32 %v351, %v595
        %v597 = vand.u32 %v596, 4294901760
        %v598 = vsub.f32 %v596, %v597
        %v599 = vand.u32 %v598, 4294901760
        %600 = vmatpush1.msra.mxu0 %v599
        %601 = vmatprep.subr.mxu0 0.0
        %v602 = vand.u32 %v352, 4294901760
        %v603 = vsub.f32 %v352, %v602
        %v604 = vand.u32 %v603, 4294901760
        %v605 = vsub.f32 %v603, %v604
        %v606 = vand.u32 %v605, 4294901760
        %607 = vmatpush1.msra.mxu0 %v606
        %608 = vmatprep.subr.mxu0 0.0
        %v609 = vand.u32 %v353, 4294901760
        %v610 = vsub.f32 %v353, %v609
        %v611 = vand.u32 %v610, 4294901760
        %v612 = vsub.f32 %v610, %v611
        %v613 = vand.u32 %v612, 4294901760
        %614 = vmatpush1.msra.mxu0 %v613
        %615 = vmatprep.subr.mxu0 0.0
        %v616 = vand.u32 %v354, 4294901760
        %v617 = vsub.f32 %v354, %v616
        %v618 = vand.u32 %v617, 4294901760
        %v619 = vsub.f32 %v617, %v618
        %v620 = vand.u32 %v619, 4294901760
        %621 = vmatpush1.msra.mxu0 %v620
        %622 = vmatprep.subr.mxu0 0.0
        %v623 = vand.u32 %v355, 4294901760
        %v624 = vsub.f32 %v355, %v623
        %v625 = vand.u32 %v624, 4294901760
        %v626 = vsub.f32 %v624, %v625
        %v627 = vand.u32 %v626, 4294901760
        %628 = vmatpush1.msra.mxu0 %v627
        %629 = vmatprep.subr.mxu0 0.0
        %v630 = vand.u32 %v356, 4294901760
        %v631 = vsub.f32 %v356, %v630
        %v632 = vand.u32 %v631, 4294901760
        %v633 = vsub.f32 %v631, %v632
        %v634 = vand.u32 %v633, 4294901760
        %635 = vmatpush1.msra.mxu0 %v634
        %636 = vmatprep.subr.mxu0 0.0
        %v637 = vand.u32 %v357, 4294901760
        %v638 = vsub.f32 %v357, %v637
        %v639 = vand.u32 %v638, 4294901760
        %v640 = vsub.f32 %v638, %v639
        %v641 = vand.u32 %v640, 4294901760
        %642 = vmatpush1.msra.mxu0 %v641
        %643 = vmatprep.subr.mxu0 0.0
        %v644 = vand.u32 %v358, 4294901760
        %v645 = vsub.f32 %v358, %v644
        %v646 = vand.u32 %v645, 4294901760
        %v647 = vsub.f32 %v645, %v646
        %v648 = vand.u32 %v647, 4294901760
        %649 = vmatpush1.msra.mxu0 %v648
        %650 = vmatprep.subr.mxu0 0.0
        %v651 = vand.u32 %v359, 4294901760
        %v652 = vsub.f32 %v359, %v651
        %v653 = vand.u32 %v652, 4294901760
        %v654 = vsub.f32 %v652, %v653
        %v655 = vand.u32 %v654, 4294901760
        %656 = vmatpush1.msra.mxu0 %v655
        %657 = vmatprep.subr.mxu0 0.0
        %v658 = vand.u32 %v360, 4294901760
        %v659 = vsub.f32 %v360, %v658
        %v660 = vand.u32 %v659, 4294901760
        %v661 = vsub.f32 %v659, %v660
        %v662 = vand.u32 %v661, 4294901760
        %663 = vmatpush1.msra.mxu0 %v662
        %664 = vmatprep.subr.mxu0 0.0
        %v665 = vand.u32 %v361, 4294901760
        %v666 = vsub.f32 %v361, %v665
        %v667 = vand.u32 %v666, 4294901760
        %v668 = vsub.f32 %v666, %v667
        %v669 = vand.u32 %v668, 4294901760
        %670 = vmatpush1.msra.mxu0 %v669
        %671 = vmatprep.subr.mxu0 0.0
        %v672 = vand.u32 %v362, 4294901760
        %v673 = vsub.f32 %v362, %v672
        %v674 = vand.u32 %v673, 4294901760
        %v675 = vsub.f32 %v673, %v674
        %v676 = vand.u32 %v675, 4294901760
        %677 = vmatpush1.msra.mxu0 %v676
        %678 = vmatprep.subr.mxu0 0.0
        %v679 = vand.u32 %v363, 4294901760
        %v680 = vsub.f32 %v363, %v679
        %v681 = vand.u32 %v680, 4294901760
        %v682 = vsub.f32 %v680, %v681
        %v683 = vand.u32 %v682, 4294901760
        %684 = vmatpush1.msra.mxu0 %v683
        %685 = vmatprep.subr.mxu0 0.0
        %v686 = vand.u32 %v364, 4294901760
        %v687 = vsub.f32 %v364, %v686
        %v688 = vand.u32 %v687, 4294901760
        %v689 = vsub.f32 %v687, %v688
        %v690 = vand.u32 %v689, 4294901760
        %691 = vmatpush1.msra.mxu0 %v690
        %692 = vmatprep.subr.mxu0 0.0
        %v693 = vand.u32 %v365, 4294901760
        %v694 = vsub.f32 %v365, %v693
        %v695 = vand.u32 %v694, 4294901760
        %v696 = vsub.f32 %v694, %v695
        %v697 = vand.u32 %v696, 4294901760
        %698 = vmatpush1.msra.mxu0 %v697
        %699 = vmatprep.subr.mxu0 0.0
        %v700 = vand.u32 %v366, 4294901760
        %v701 = vsub.f32 %v366, %v700
        %v702 = vand.u32 %v701, 4294901760
        %v703 = vsub.f32 %v701, %v702
        %v704 = vand.u32 %v703, 4294901760
        %705 = vmatpush1.msra.mxu0 %v704
        %v706 = vand.u32 %v368, 4294901760
        %707 = vmatprep.mubr.f32.mxu0 %v706
        %v708 = vand.u32 %v334, 4294901760
        %709 = vmatmul.mubr.f32.gmra.mrb[0].mxu0 %v708
        %v710 = vpop.f32.mrb[0].mxu0
        %v711 = vadd.f32 %v479, %v710
        %v712 = vpop.f32.mrb[0].mxu0
        %713 = vdwg.mxu0
        %714 = vmatprep.subr.mxu0 0.0
        %v715 = vand.u32 %v335, 4294901760
        %v716 = vsub.f32 %v335, %v715
        %717 = vmatpush1.msra.mxu0 %v716
        %718 = vmatprep.subr.mxu0 0.0
        %v719 = vand.u32 %v336, 4294901760
        %v720 = vsub.f32 %v336, %v719
        %721 = vmatpush1.msra.mxu0 %v720
        %722 = vmatprep.subr.mxu0 0.0
        %v723 = vand.u32 %v337, 4294901760
        %v724 = vsub.f32 %v337, %v723
        %725 = vmatpush1.msra.mxu0 %v724
        %726 = vmatprep.subr.mxu0 0.0
        %v727 = vand.u32 %v338, 4294901760
        %v728 = vsub.f32 %v338, %v727
        %729 = vmatpush1.msra.mxu0 %v728
        %730 = vmatprep.subr.mxu0 0.0
        %v731 = vand.u32 %v339, 4294901760
        %v732 = vsub.f32 %v339, %v731
        %733 = vmatpush1.msra.mxu0 %v732
        %734 = vmatprep.subr.mxu0 0.0
        %v735 = vand.u32 %v340, 4294901760
        %v736 = vsub.f32 %v340, %v735
        %737 = vmatpush1.msra.mxu0 %v736
        %738 = vmatprep.subr.mxu0 0.0
        %v739 = vand.u32 %v341, 4294901760
        %v740 = vsub.f32 %v341, %v739
        %741 = vmatpush1.msra.mxu0 %v740
        %742 = vmatprep.subr.mxu0 0.0
        %v743 = vand.u32 %v342, 4294901760
        %v744 = vsub.f32 %v342, %v743
        %745 = vmatpush1.msra.mxu0 %v744
        %746 = vmatprep.subr.mxu0 0.0
        %v747 = vand.u32 %v343, 4294901760
        %v748 = vsub.f32 %v343, %v747
        %749 = vmatpush1.msra.mxu0 %v748
        %750 = vmatprep.subr.mxu0 0.0
        %v751 = vand.u32 %v344, 4294901760
        %v752 = vsub.f32 %v344, %v751
        %753 = vmatpush1.msra.mxu0 %v752
        %754 = vmatprep.subr.mxu0 0.0
        %v755 = vand.u32 %v345, 4294901760
        %v756 = vsub.f32 %v345, %v755
        %757 = vmatpush1.msra.mxu0 %v756
        %758 = vmatprep.subr.mxu0 0.0
        %v759 = vand.u32 %v346, 4294901760
        %v760 = vsub.f32 %v346, %v759
        %761 = vmatpush1.msra.mxu0 %v760
        %762 = vmatprep.subr.mxu0 0.0
        %v763 = vand.u32 %v347, 4294901760
        %v764 = vsub.f32 %v347, %v763
        %765 = vmatpush1.msra.mxu0 %v764
        %766 = vmatprep.subr.mxu0 0.0
        %v767 = vand.u32 %v348, 4294901760
        %v768 = vsub.f32 %v348, %v767
        %769 = vmatpush1.msra.mxu0 %v768
        %770 = vmatprep.subr.mxu0 0.0
        %v771 = vand.u32 %v349, 4294901760
        %v772 = vsub.f32 %v349, %v771
        %773 = vmatpush1.msra.mxu0 %v772
        %774 = vmatprep.subr.mxu0 0.0
        %v775 = vand.u32 %v350, 4294901760
        %v776 = vsub.f32 %v350, %v775
        %777 = vmatpush1.msra.mxu0 %v776
        %778 = vmatprep.subr.mxu0 0.0
        %v779 = vand.u32 %v351, 4294901760
        %v780 = vsub.f32 %v351, %v779
        %781 = vmatpush1.msra.mxu0 %v780
        %782 = vmatprep.subr.mxu0 0.0
        %v783 = vand.u32 %v352, 4294901760
        %v784 = vsub.f32 %v352, %v783
        %785 = vmatpush1.msra.mxu0 %v784
        %786 = vmatprep.subr.mxu0 0.0
        %v787 = vand.u32 %v353, 4294901760
        %v788 = vsub.f32 %v353, %v787
        %789 = vmatpush1.msra.mxu0 %v788
        %790 = vmatprep.subr.mxu0 0.0
        %v791 = vand.u32 %v354, 4294901760
        %v792 = vsub.f32 %v354, %v791
        %793 = vmatpush1.msra.mxu0 %v792
        %794 = vmatprep.subr.mxu0 0.0
        %v795 = vand.u32 %v355, 4294901760
        %v796 = vsub.f32 %v355, %v795
        %797 = vmatpush1.msra.mxu0 %v796
        %798 = vmatprep.subr.mxu0 0.0
        %v799 = vand.u32 %v356, 4294901760
        %v800 = vsub.f32 %v356, %v799
        %801 = vmatpush1.msra.mxu0 %v800
        %802 = vmatprep.subr.mxu0 0.0
        %v803 = vand.u32 %v357, 4294901760
        %v804 = vsub.f32 %v357, %v803
        %805 = vmatpush1.msra.mxu0 %v804
        %806 = vmatprep.subr.mxu0 0.0
        %v807 = vand.u32 %v358, 4294901760
        %v808 = vsub.f32 %v358, %v807
        %809 = vmatpush1.msra.mxu0 %v808
        %810 = vmatprep.subr.mxu0 0.0
        %v811 = vand.u32 %v359, 4294901760
        %v812 = vsub.f32 %v359, %v811
        %813 = vmatpush1.msra.mxu0 %v812
        %814 = vmatprep.subr.mxu0 0.0
        %v815 = vand.u32 %v360, 4294901760
        %v816 = vsub.f32 %v360, %v815
        %817 = vmatpush1.msra.mxu0 %v816
        %818 = vmatprep.subr.mxu0 0.0
        %v819 = vand.u32 %v361, 4294901760
        %v820 = vsub.f32 %v361, %v819
        %821 = vmatpush1.msra.mxu0 %v820
        %822 = vmatprep.subr.mxu0 0.0
        %v823 = vand.u32 %v362, 4294901760
        %v824 = vsub.f32 %v362, %v823
        %825 = vmatpush1.msra.mxu0 %v824
        %826 = vmatprep.subr.mxu0 0.0
        %v827 = vand.u32 %v363, 4294901760
        %v828 = vsub.f32 %v363, %v827
        %829 = vmatpush1.msra.mxu0 %v828
        %830 = vmatprep.subr.mxu0 0.0
        %v831 = vand.u32 %v364, 4294901760
        %v832 = vsub.f32 %v364, %v831
        %833 = vmatpush1.msra.mxu0 %v832
        %834 = vmatprep.subr.mxu0 0.0
        %v835 = vand.u32 %v365, 4294901760
        %v836 = vsub.f32 %v365, %v835
        %837 = vmatpush1.msra.mxu0 %v836
        %838 = vmatprep.subr.mxu0 0.0
        %v839 = vand.u32 %v366, 4294901760
        %v840 = vsub.f32 %v366, %v839
        %841 = vmatpush1.msra.mxu0 %v840
        %v842 = vand.u32 %v368, 4294901760
        %v843 = vsub.f32 %v368, %v842
        %844 = vmatprep.mubr.f32.mxu0 %v843
        %v845 = vand.u32 %v334, 4294901760
        %v846 = vsub.f32 %v334, %v845
        %847 = vmatmul.mubr.f32.gmra.mrb[0].mxu0 %v846
        %v848 = vpop.f32.mrb[0].mxu0
        %v849 = vadd.f32 %v711, %v848
        %v850 = vpop.f32.mrb[0].mxu0
        %851 = vdwg.mxu0
        %852 = vmatprep.subr.mxu0 0.0
        %v853 = vand.u32 %v335, 4294901760
        %854 = vmatpush1.msra.mxu0 %v853
        %855 = vmatprep.subr.mxu0 0.0
        %v856 = vand.u32 %v336, 4294901760
        %857 = vmatpush1.msra.mxu0 %v856
        %858 = vmatprep.subr.mxu0 0.0
        %v859 = vand.u32 %v337, 4294901760
        %860 = vmatpush1.msra.mxu0 %v859
        %861 = vmatprep.subr.mxu0 0.0
        %v862 = vand.u32 %v338, 4294901760
        %863 = vmatpush1.msra.mxu0 %v862
        %864 = vmatprep.subr.mxu0 0.0
        %v865 = vand.u32 %v339, 4294901760
        %866 = vmatpush1.msra.mxu0 %v865
        %867 = vmatprep.subr.mxu0 0.0
        %v868 = vand.u32 %v340, 4294901760
        %869 = vmatpush1.msra.mxu0 %v868
        %870 = vmatprep.subr.mxu0 0.0
        %v871 = vand.u32 %v341, 4294901760
        %872 = vmatpush1.msra.mxu0 %v871
        %873 = vmatprep.subr.mxu0 0.0
        %v874 = vand.u32 %v342, 4294901760
        %875 = vmatpush1.msra.mxu0 %v874
        %876 = vmatprep.subr.mxu0 0.0
        %v877 = vand.u32 %v343, 4294901760
        %878 = vmatpush1.msra.mxu0 %v877
        %879 = vmatprep.subr.mxu0 0.0
        %v880 = vand.u32 %v344, 4294901760
        %881 = vmatpush1.msra.mxu0 %v880
        %882 = vmatprep.subr.mxu0 0.0
        %v883 = vand.u32 %v345, 4294901760
        %884 = vmatpush1.msra.mxu0 %v883
        %885 = vmatprep.subr.mxu0 0.0
        %v886 = vand.u32 %v346, 4294901760
        %887 = vmatpush1.msra.mxu0 %v886
        %888 = vmatprep.subr.mxu0 0.0
        %v889 = vand.u32 %v347, 4294901760
        %890 = vmatpush1.msra.mxu0 %v889
        %891 = vmatprep.subr.mxu0 0.0
        %v892 = vand.u32 %v348, 4294901760
        %893 = vmatpush1.msra.mxu0 %v892
        %894 = vmatprep.subr.mxu0 0.0
        %v895 = vand.u32 %v349, 4294901760
        %896 = vmatpush1.msra.mxu0 %v895
        %897 = vmatprep.subr.mxu0 0.0
        %v898 = vand.u32 %v350, 4294901760
        %899 = vmatpush1.msra.mxu0 %v898
        %900 = vmatprep.subr.mxu0 0.0
        %v901 = vand.u32 %v351, 4294901760
        %902 = vmatpush1.msra.mxu0 %v901
        %903 = vmatprep.subr.mxu0 0.0
        %v904 = vand.u32 %v352, 4294901760
        %905 = vmatpush1.msra.mxu0 %v904
        %906 = vmatprep.subr.mxu0 0.0
        %v907 = vand.u32 %v353, 4294901760
        %908 = vmatpush1.msra.mxu0 %v907
        %909 = vmatprep.subr.mxu0 0.0
        %v910 = vand.u32 %v354, 4294901760
        %911 = vmatpush1.msra.mxu0 %v910
        %912 = vmatprep.subr.mxu0 0.0
        %v913 = vand.u32 %v355, 4294901760
        %914 = vmatpush1.msra.mxu0 %v913
        %915 = vmatprep.subr.mxu0 0.0
        %v916 = vand.u32 %v356, 4294901760
        %917 = vmatpush1.msra.mxu0 %v916
        %918 = vmatprep.subr.mxu0 0.0
        %v919 = vand.u32 %v357, 4294901760
        %920 = vmatpush1.msra.mxu0 %v919
        %921 = vmatprep.subr.mxu0 0.0
        %v922 = vand.u32 %v358, 4294901760
        %923 = vmatpush1.msra.mxu0 %v922
        %924 = vmatprep.subr.mxu0 0.0
        %v925 = vand.u32 %v359, 4294901760
        %926 = vmatpush1.msra.mxu0 %v925
        %927 = vmatprep.subr.mxu0 0.0
        %v928 = vand.u32 %v360, 4294901760
        %929 = vmatpush1.msra.mxu0 %v928
        %930 = vmatprep.subr.mxu0 0.0
        %v931 = vand.u32 %v361, 4294901760
        %932 = vmatpush1.msra.mxu0 %v931
        %933 = vmatprep.subr.mxu0 0.0
        %v934 = vand.u32 %v362, 4294901760
        %935 = vmatpush1.msra.mxu0 %v934
        %936 = vmatprep.subr.mxu0 0.0
        %v937 = vand.u32 %v363, 4294901760
        %938 = vmatpush1.msra.mxu0 %v937
        %939 = vmatprep.subr.mxu0 0.0
        %v940 = vand.u32 %v364, 4294901760
        %941 = vmatpush1.msra.mxu0 %v940
        %942 = vmatprep.subr.mxu0 0.0
        %v943 = vand.u32 %v365, 4294901760
        %944 = vmatpush1.msra.mxu0 %v943
        %945 = vmatprep.subr.mxu0 0.0
        %v946 = vand.u32 %v366, 4294901760
        %947 = vmatpush1.msra.mxu0 %v946
        %v948 = vand.u32 %v368, 4294901760
        %v949 = vsub.f32 %v368, %v948
        %v950 = vand.u32 %v949, 4294901760
        %951 = vmatprep.mubr.f32.mxu0 %v950
        %v952 = vand.u32 %v334, 4294901760
        %v953 = vsub.f32 %v334, %v952
        %v954 = vand.u32 %v953, 4294901760
        %955 = vmatmul.mubr.f32.gmra.mrb[0].mxu0 %v954
        %v956 = vpop.f32.mrb[0].mxu0
        %v957 = vadd.f32 %v849, %v956
        %v958 = vpop.f32.mrb[0].mxu0
        %959 = vdwg.mxu0
        %960 = vmatprep.subr.mxu0 0.0
        %v961 = vand.u32 %v335, 4294901760
        %v962 = vsub.f32 %v335, %v961
        %v963 = vand.u32 %v962, 4294901760
        %964 = vmatpush1.msra.mxu0 %v963
        %965 = vmatprep.subr.mxu0 0.0
        %v966 = vand.u32 %v336, 4294901760
        %v967 = vsub.f32 %v336, %v966
        %v968 = vand.u32 %v967, 4294901760
        %969 = vmatpush1.msra.mxu0 %v968
        %970 = vmatprep.subr.mxu0 0.0
        %v971 = vand.u32 %v337, 4294901760
        %v972 = vsub.f32 %v337, %v971
        %v973 = vand.u32 %v972, 4294901760
        %974 = vmatpush1.msra.mxu0 %v973
        %975 = vmatprep.subr.mxu0 0.0
        %v976 = vand.u32 %v338, 4294901760
        %v977 = vsub.f32 %v338, %v976
        %v978 = vand.u32 %v977, 4294901760
        %979 = vmatpush1.msra.mxu0 %v978
        %980 = vmatprep.subr.mxu0 0.0
        %v981 = vand.u32 %v339, 4294901760
        %v982 = vsub.f32 %v339, %v981
        %v983 = vand.u32 %v982, 4294901760
        %984 = vmatpush1.msra.mxu0 %v983
        %985 = vmatprep.subr.mxu0 0.0
        %v986 = vand.u32 %v340, 4294901760
        %v987 = vsub.f32 %v340, %v986
        %v988 = vand.u32 %v987, 4294901760
        %989 = vmatpush1.msra.mxu0 %v988
        %990 = vmatprep.subr.mxu0 0.0
        %v991 = vand.u32 %v341, 4294901760
        %v992 = vsub.f32 %v341, %v991
        %v993 = vand.u32 %v992, 4294901760
        %994 = vmatpush1.msra.mxu0 %v993
        %995 = vmatprep.subr.mxu0 0.0
        %v996 = vand.u32 %v342, 4294901760
        %v997 = vsub.f32 %v342, %v996
        %v998 = vand.u32 %v997, 4294901760
        %999 = vmatpush1.msra.mxu0 %v998
        %1000 = vmatprep.subr.mxu0 0.0
        %v1001 = vand.u32 %v343, 4294901760
        %v1002 = vsub.f32 %v343, %v1001
        %v1003 = vand.u32 %v1002, 4294901760
        %1004 = vmatpush1.msra.mxu0 %v1003
        %1005 = vmatprep.subr.mxu0 0.0
        %v1006 = vand.u32 %v344, 4294901760
        %v1007 = vsub.f32 %v344, %v1006
        %v1008 = vand.u32 %v1007, 4294901760
        %1009 = vmatpush1.msra.mxu0 %v1008
        %1010 = vmatprep.subr.mxu0 0.0
        %v1011 = vand.u32 %v345, 4294901760
        %v1012 = vsub.f32 %v345, %v1011
        %v1013 = vand.u32 %v1012, 4294901760
        %1014 = vmatpush1.msra.mxu0 %v1013
        %1015 = vmatprep.subr.mxu0 0.0
        %v1016 = vand.u32 %v346, 4294901760
        %v1017 = vsub.f32 %v346, %v1016
        %v1018 = vand.u32 %v1017, 4294901760
        %1019 = vmatpush1.msra.mxu0 %v1018
        %1020 = vmatprep.subr.mxu0 0.0
        %v1021 = vand.u32 %v347, 4294901760
        %v1022 = vsub.f32 %v347, %v1021
        %v1023 = vand.u32 %v1022, 4294901760
        %1024 = vmatpush1.msra.mxu0 %v1023
        %1025 = vmatprep.subr.mxu0 0.0
        %v1026 = vand.u32 %v348, 4294901760
        %v1027 = vsub.f32 %v348, %v1026
        %v1028 = vand.u32 %v1027, 4294901760
        %1029 = vmatpush1.msra.mxu0 %v1028
        %1030 = vmatprep.subr.mxu0 0.0
        %v1031 = vand.u32 %v349, 4294901760
        %v1032 = vsub.f32 %v349, %v1031
        %v1033 = vand.u32 %v1032, 4294901760
        %1034 = vmatpush1.msra.mxu0 %v1033
        %1035 = vmatprep.subr.mxu0 0.0
        %v1036 = vand.u32 %v350, 4294901760
        %v1037 = vsub.f32 %v350, %v1036
        %v1038 = vand.u32 %v1037, 4294901760
        %1039 = vmatpush1.msra.mxu0 %v1038
        %1040 = vmatprep.subr.mxu0 0.0
        %v1041 = vand.u32 %v351, 4294901760
        %v1042 = vsub.f32 %v351, %v1041
        %v1043 = vand.u32 %v1042, 4294901760
        %1044 = vmatpush1.msra.mxu0 %v1043
        %1045 = vmatprep.subr.mxu0 0.0
        %v1046 = vand.u32 %v352, 4294901760
        %v1047 = vsub.f32 %v352, %v1046
        %v1048 = vand.u32 %v1047, 4294901760
        %1049 = vmatpush1.msra.mxu0 %v1048
        %1050 = vmatprep.subr.mxu0 0.0
        %v1051 = vand.u32 %v353, 4294901760
        %v1052 = vsub.f32 %v353, %v1051
        %v1053 = vand.u32 %v1052, 4294901760
        %1054 = vmatpush1.msra.mxu0 %v1053
        %1055 = vmatprep.subr.mxu0 0.0
        %v1056 = vand.u32 %v354, 4294901760
        %v1057 = vsub.f32 %v354, %v1056
        %v1058 = vand.u32 %v1057, 4294901760
        %1059 = vmatpush1.msra.mxu0 %v1058
        %1060 = vmatprep.subr.mxu0 0.0
        %v1061 = vand.u32 %v355, 4294901760
        %v1062 = vsub.f32 %v355, %v1061
        %v1063 = vand.u32 %v1062, 4294901760
        %1064 = vmatpush1.msra.mxu0 %v1063
        %1065 = vmatprep.subr.mxu0 0.0
        %v1066 = vand.u32 %v356, 4294901760
        %v1067 = vsub.f32 %v356, %v1066
        %v1068 = vand.u32 %v1067, 4294901760
        %1069 = vmatpush1.msra.mxu0 %v1068
        %1070 = vmatprep.subr.mxu0 0.0
        %v1071 = vand.u32 %v357, 4294901760
        %v1072 = vsub.f32 %v357, %v1071
        %v1073 = vand.u32 %v1072, 4294901760
        %1074 = vmatpush1.msra.mxu0 %v1073
        %1075 = vmatprep.subr.mxu0 0.0
        %v1076 = vand.u32 %v358, 4294901760
        %v1077 = vsub.f32 %v358, %v1076
        %v1078 = vand.u32 %v1077, 4294901760
        %1079 = vmatpush1.msra.mxu0 %v1078
        %1080 = vmatprep.subr.mxu0 0.0
        %v1081 = vand.u32 %v359, 4294901760
        %v1082 = vsub.f32 %v359, %v1081
        %v1083 = vand.u32 %v1082, 4294901760
        %1084 = vmatpush1.msra.mxu0 %v1083
        %1085 = vmatprep.subr.mxu0 0.0
        %v1086 = vand.u32 %v360, 4294901760
        %v1087 = vsub.f32 %v360, %v1086
        %v1088 = vand.u32 %v1087, 4294901760
        %1089 = vmatpush1.msra.mxu0 %v1088
        %1090 = vmatprep.subr.mxu0 0.0
        %v1091 = vand.u32 %v361, 4294901760
        %v1092 = vsub.f32 %v361, %v1091
        %v1093 = vand.u32 %v1092, 4294901760
        %1094 = vmatpush1.msra.mxu0 %v1093
        %1095 = vmatprep.subr.mxu0 0.0
        %v1096 = vand.u32 %v362, 4294901760
        %v1097 = vsub.f32 %v362, %v1096
        %v1098 = vand.u32 %v1097, 4294901760
        %1099 = vmatpush1.msra.mxu0 %v1098
        %1100 = vmatprep.subr.mxu0 0.0
        %v1101 = vand.u32 %v363, 4294901760
        %v1102 = vsub.f32 %v363, %v1101
        %v1103 = vand.u32 %v1102, 4294901760
        %1104 = vmatpush1.msra.mxu0 %v1103
        %1105 = vmatprep.subr.mxu0 0.0
        %v1106 = vand.u32 %v364, 4294901760
        %v1107 = vsub.f32 %v364, %v1106
        %v1108 = vand.u32 %v1107, 4294901760
        %1109 = vmatpush1.msra.mxu0 %v1108
        %1110 = vmatprep.subr.mxu0 0.0
        %v1111 = vand.u32 %v365, 4294901760
        %v1112 = vsub.f32 %v365, %v1111
        %v1113 = vand.u32 %v1112, 4294901760
        %1114 = vmatpush1.msra.mxu0 %v1113
        %1115 = vmatprep.subr.mxu0 0.0
        %v1116 = vand.u32 %v366, 4294901760
        %v1117 = vsub.f32 %v366, %v1116
        %v1118 = vand.u32 %v1117, 4294901760
        %1119 = vmatpush1.msra.mxu0 %v1118
        %v1120 = vand.u32 %v368, 4294901760
        %1121 = vmatprep.mubr.f32.mxu0 %v1120
        %v1122 = vand.u32 %v334, 4294901760
        %1123 = vmatmul.mubr.f32.gmra.mrb[0].mxu0 %v1122
        %v1124 = vpop.f32.mrb[0].mxu0
        %v1125 = vadd.f32 %v957, %v1124
        %v1126 = vpop.f32.mrb[0].mxu0
        %1127 = vdwg.mxu0
        %1128 = vmatprep.subr.mxu0 0.0
        %v1129 = vand.u32 %v335, 4294901760
        %1130 = vmatpush1.msra.mxu0 %v1129
        %1131 = vmatprep.subr.mxu0 0.0
        %v1132 = vand.u32 %v336, 4294901760
        %1133 = vmatpush1.msra.mxu0 %v1132
        %1134 = vmatprep.subr.mxu0 0.0
        %v1135 = vand.u32 %v337, 4294901760
        %1136 = vmatpush1.msra.mxu0 %v1135
        %1137 = vmatprep.subr.mxu0 0.0
        %v1138 = vand.u32 %v338, 4294901760
        %1139 = vmatpush1.msra.mxu0 %v1138
        %1140 = vmatprep.subr.mxu0 0.0
        %v1141 = vand.u32 %v339, 4294901760
        %1142 = vmatpush1.msra.mxu0 %v1141
        %1143 = vmatprep.subr.mxu0 0.0
        %v1144 = vand.u32 %v340, 4294901760
        %1145 = vmatpush1.msra.mxu0 %v1144
        %1146 = vmatprep.subr.mxu0 0.0
        %v1147 = vand.u32 %v341, 4294901760
        %1148 = vmatpush1.msra.mxu0 %v1147
        %1149 = vmatprep.subr.mxu0 0.0
        %v1150 = vand.u32 %v342, 4294901760
        %1151 = vmatpush1.msra.mxu0 %v1150
        %1152 = vmatprep.subr.mxu0 0.0
        %v1153 = vand.u32 %v343, 4294901760
        %1154 = vmatpush1.msra.mxu0 %v1153
        %1155 = vmatprep.subr.mxu0 0.0
        %v1156 = vand.u32 %v344, 4294901760
        %1157 = vmatpush1.msra.mxu0 %v1156
        %1158 = vmatprep.subr.mxu0 0.0
        %v1159 = vand.u32 %v345, 4294901760
        %1160 = vmatpush1.msra.mxu0 %v1159
        %1161 = vmatprep.subr.mxu0 0.0
        %v1162 = vand.u32 %v346, 4294901760
        %1163 = vmatpush1.msra.mxu0 %v1162
        %1164 = vmatprep.subr.mxu0 0.0
        %v1165 = vand.u32 %v347, 4294901760
        %1166 = vmatpush1.msra.mxu0 %v1165
        %1167 = vmatprep.subr.mxu0 0.0
        %v1168 = vand.u32 %v348, 4294901760
        %1169 = vmatpush1.msra.mxu0 %v1168
        %1170 = vmatprep.subr.mxu0 0.0
        %v1171 = vand.u32 %v349, 4294901760
        %1172 = vmatpush1.msra.mxu0 %v1171
        %1173 = vmatprep.subr.mxu0 0.0
        %v1174 = vand.u32 %v350, 4294901760
        %1175 = vmatpush1.msra.mxu0 %v1174
        %1176 = vmatprep.subr.mxu0 0.0
        %v1177 = vand.u32 %v351, 4294901760
        %1178 = vmatpush1.msra.mxu0 %v1177
        %1179 = vmatprep.subr.mxu0 0.0
        %v1180 = vand.u32 %v352, 4294901760
        %1181 = vmatpush1.msra.mxu0 %v1180
        %1182 = vmatprep.subr.mxu0 0.0
        %v1183 = vand.u32 %v353, 4294901760
        %1184 = vmatpush1.msra.mxu0 %v1183
        %1185 = vmatprep.subr.mxu0 0.0
        %v1186 = vand.u32 %v354, 4294901760
        %1187 = vmatpush1.msra.mxu0 %v1186
        %1188 = vmatprep.subr.mxu0 0.0
        %v1189 = vand.u32 %v355, 4294901760
        %1190 = vmatpush1.msra.mxu0 %v1189
        %1191 = vmatprep.subr.mxu0 0.0
        %v1192 = vand.u32 %v356, 4294901760
        %1193 = vmatpush1.msra.mxu0 %v1192
        %1194 = vmatprep.subr.mxu0 0.0
        %v1195 = vand.u32 %v357, 4294901760
        %1196 = vmatpush1.msra.mxu0 %v1195
        %1197 = vmatprep.subr.mxu0 0.0
        %v1198 = vand.u32 %v358, 4294901760
        %1199 = vmatpush1.msra.mxu0 %v1198
        %1200 = vmatprep.subr.mxu0 0.0
        %v1201 = vand.u32 %v359, 4294901760
        %1202 = vmatpush1.msra.mxu0 %v1201
        %1203 = vmatprep.subr.mxu0 0.0
        %v1204 = vand.u32 %v360, 4294901760
        %1205 = vmatpush1.msra.mxu0 %v1204
        %1206 = vmatprep.subr.mxu0 0.0
        %v1207 = vand.u32 %v361, 4294901760
        %1208 = vmatpush1.msra.mxu0 %v1207
        %1209 = vmatprep.subr.mxu0 0.0
        %v1210 = vand.u32 %v362, 4294901760
        %1211 = vmatpush1.msra.mxu0 %v1210
        %1212 = vmatprep.subr.mxu0 0.0
        %v1213 = vand.u32 %v363, 4294901760
        %1214 = vmatpush1.msra.mxu0 %v1213
        %1215 = vmatprep.subr.mxu0 0.0
        %v1216 = vand.u32 %v364, 4294901760
        %1217 = vmatpush1.msra.mxu0 %v1216
        %1218 = vmatprep.subr.mxu0 0.0
        %v1219 = vand.u32 %v365, 4294901760
        %1220 = vmatpush1.msra.mxu0 %v1219
        %1221 = vmatprep.subr.mxu0 0.0
        %v1222 = vand.u32 %v366, 4294901760
        %1223 = vmatpush1.msra.mxu0 %v1222
        %v1224 = vand.u32 %v368, 4294901760
        %1225 = vmatprep.mubr.f32.mxu0 %v1224
        %v1226 = vand.u32 %v334, 4294901760
        %1227 = vmatmul.mubr.f32.gmra.mrb[0].mxu0 %v1226
        %v1228 = vpop.f32.mrb[0].mxu0
        %v1229 = vadd.f32 %v1125, %v1228
        %v1230 = vpop.f32.mrb[0].mxu0
        %1231 = vdwg.mxu0
        %v1232 = vld [vmem:[%s2] sm:$0xff]
        %v1233 = vld [vmem:[%s2 + $0x8] sm:$0xff]
        %v1234 = vld [vmem:[%s2 + $0x10] sm:$0xff]
        %v1235 = vld [vmem:[%s2 + $0x18] sm:$0xff]
        %1237 = vset.pattern.permute.xlu0 0
        %1238 = vperm.xlu0 %1237, %v1232
        %v1239 = vpop.permute.xlu0 %1238
        %1242 = vset.pattern.permute.xlu0 0
        %1243 = vperm.xlu0 %1242, %v1233
        %v1244 = vpop.permute.xlu0 %1243
        %1247 = vset.pattern.permute.xlu0 0
        %1248 = vperm.xlu0 %1247, %v1234
        %v1249 = vpop.permute.xlu0 %1248
        %1252 = vset.pattern.permute.xlu0 0
        %1253 = vperm.xlu0 %1252, %v1235
        %v1254 = vpop.permute.xlu0 %1253
        %v1256 = vlaneseq
        %v1257 = vshrl.u32 %v1256, 7
        %v1258 = vsub.s32 0, %v1257
        %v1259 = vrot.slane %v1229, %v1258
        %v1260 = vmul.f32 %v1239, %v1259
        %v1261 = vmul.f32 %v1244, %v1259
        %v1262 = vmul.f32 %v1249, %v1259
        %v1263 = vmul.f32 %v1254, %v1259
        %1264 = vset.pattern.permute.xlu0 1
        %1265 = vperm.xlu0 %1264, %v1232
        %v1266 = vpop.permute.xlu0 %1265
        %1268 = vset.pattern.permute.xlu0 1
        %1269 = vperm.xlu0 %1268, %v1233
        %v1270 = vpop.permute.xlu0 %1269
        %1272 = vset.pattern.permute.xlu0 1
        %1273 = vperm.xlu0 %1272, %v1234
        %v1274 = vpop.permute.xlu0 %1273
        %1276 = vset.pattern.permute.xlu0 1
        %1277 = vperm.xlu0 %1276, %v1235
        %v1278 = vpop.permute.xlu0 %1277
        %v1280 = vlaneseq
        %v1281 = vshrl.u32 %v1280, 7
        %v1282 = vsub.s32 1, %v1281
        %v1283 = vrot.slane %v1229, %v1282
        %v1284 = vmul.f32 %v1266, %v1283
        %v1285 = vmul.f32 %v1270, %v1283
        %v1286 = vmul.f32 %v1274, %v1283
        %v1287 = vmul.f32 %v1278, %v1283
        %v1288 = vadd.f32 %v1260, %v1284
        %v1289 = vadd.f32 %v1261, %v1285
        %v1290 = vadd.f32 %v1262, %v1286
        %v1291 = vadd.f32 %v1263, %v1287
        %1292 = vset.pattern.permute.xlu0 2
        %1293 = vperm.xlu0 %1292, %v1232
        %v1294 = vpop.permute.xlu0 %1293
        %1296 = vset.pattern.permute.xlu0 2
        %1297 = vperm.xlu0 %1296, %v1233
        %v1298 = vpop.permute.xlu0 %1297
        %1300 = vset.pattern.permute.xlu0 2
        %1301 = vperm.xlu0 %1300, %v1234
        %v1302 = vpop.permute.xlu0 %1301
        %1304 = vset.pattern.permute.xlu0 2
        %1305 = vperm.xlu0 %1304, %v1235
        %v1306 = vpop.permute.xlu0 %1305
        %v1308 = vlaneseq
        %v1309 = vshrl.u32 %v1308, 7
        %v1310 = vsub.s32 2, %v1309
        %v1311 = vrot.slane %v1229, %v1310
        %v1312 = vmul.f32 %v1294, %v1311
        %v1313 = vmul.f32 %v1298, %v1311
        %v1314 = vmul.f32 %v1302, %v1311
        %v1315 = vmul.f32 %v1306, %v1311
        %v1316 = vadd.f32 %v1288, %v1312
        %v1317 = vadd.f32 %v1289, %v1313
        %v1318 = vadd.f32 %v1290, %v1314
        %v1319 = vadd.f32 %v1291, %v1315
        %1320 = vset.pattern.permute.xlu0 3
        %1321 = vperm.xlu0 %1320, %v1232
        %v1322 = vpop.permute.xlu0 %1321
        %1324 = vset.pattern.permute.xlu0 3
        %1325 = vperm.xlu0 %1324, %v1233
        %v1326 = vpop.permute.xlu0 %1325
        %1328 = vset.pattern.permute.xlu0 3
        %1329 = vperm.xlu0 %1328, %v1234
        %v1330 = vpop.permute.xlu0 %1329
        %1332 = vset.pattern.permute.xlu0 3
        %1333 = vperm.xlu0 %1332, %v1235
        %v1334 = vpop.permute.xlu0 %1333
        %v1336 = vlaneseq
        %v1337 = vshrl.u32 %v1336, 7
        %v1338 = vsub.s32 3, %v1337
        %v1339 = vrot.slane %v1229, %v1338
        %v1340 = vmul.f32 %v1322, %v1339
        %v1341 = vmul.f32 %v1326, %v1339
        %v1342 = vmul.f32 %v1330, %v1339
        %v1343 = vmul.f32 %v1334, %v1339
        %v1344 = vadd.f32 %v1316, %v1340
        %v1345 = vadd.f32 %v1317, %v1341
        %v1346 = vadd.f32 %v1318, %v1342
        %v1347 = vadd.f32 %v1319, %v1343
        %v1348 = vld [vmem:[%s3] sm:$0xff]
        %v1349 = vld [vmem:[%s3 + $0x8] sm:$0xff]
        %v1350 = vld [vmem:[%s3 + $0x10] sm:$0xff]
        %v1351 = vld [vmem:[%s3 + $0x18] sm:$0xff]
        %v1352 = vmul.f32 %v1344, %v1348
        %v1353 = vmul.f32 %v1345, %v1349
        %v1354 = vmul.f32 %v1346, %v1350
        %v1355 = vmul.f32 %v1347, %v1351
        %v1356 = vld [vmem:[%s4] sm:$0xff]
        %v1357 = vld [vmem:[%s4 + $0x8] sm:$0xff]
        %v1358 = vld [vmem:[%s4 + $0x10] sm:$0xff]
        %v1359 = vld [vmem:[%s4 + $0x18] sm:$0xff]
        %v1360 = vld [vmem:[%s4 + $0x20] sm:$0xff]
        %v1361 = vld [vmem:[%s4 + $0x28] sm:$0xff]
        %v1362 = vld [vmem:[%s4 + $0x30] sm:$0xff]
        %v1363 = vld [vmem:[%s4 + $0x38] sm:$0xff]
        %v1364 = vld [vmem:[%s4 + $0x40] sm:$0xff]
        %v1365 = vld [vmem:[%s4 + $0x48] sm:$0xff]
        %v1366 = vld [vmem:[%s4 + $0x50] sm:$0xff]
        %v1367 = vld [vmem:[%s4 + $0x58] sm:$0xff]
        %v1368 = vld [vmem:[%s4 + $0x60] sm:$0x3]
        %v1369 = vld [vmem:[%s4 + $0x68] sm:$0x3]
        %vm1370 = vcmask 408576
        %v1372 = vsel %vm1370, %v1352, 0
        %v1375 = vsel %vm1370, %v1353, 0
        %v1378 = vsel %vm1370, %v1354, 0
        %v1381 = vsel %vm1370, %v1355, 0
        %vm1383 = vcmask 1041408
        %v1385 = vsel %vm1383, %v1368, 0
        %v1388 = vsel %vm1383, %v1369, 0
        %v1390 = vand.u32 %v1357, 4294901760
        %1391 = vmatprep.subr.mxu0 %v1390
        %v1392 = vand.u32 %v1356, 4294901760
        %1393 = vmatpush1.msra.mxu0 %v1392
        %v1394 = vand.u32 %v1359, 4294901760
        %1395 = vmatprep.subr.mxu0 %v1394
        %v1396 = vand.u32 %v1358, 4294901760
        %1397 = vmatpush1.msra.mxu0 %v1396
        %v1398 = vand.u32 %v1361, 4294901760
        %1399 = vmatprep.subr.mxu0 %v1398
        %v1400 = vand.u32 %v1360, 4294901760
        %1401 = vmatpush1.msra.mxu0 %v1400
        %v1402 = vand.u32 %v1363, 4294901760
        %1403 = vmatprep.subr.mxu0 %v1402
        %v1404 = vand.u32 %v1362, 4294901760
        %1405 = vmatpush1.msra.mxu0 %v1404
        %v1406 = vand.u32 %v1365, 4294901760
        %1407 = vmatprep.subr.mxu0 %v1406
        %v1408 = vand.u32 %v1364, 4294901760
        %1409 = vmatpush1.msra.mxu0 %v1408
        %v1410 = vand.u32 %v1367, 4294901760
        %1411 = vmatprep.subr.mxu0 %v1410
        %v1412 = vand.u32 %v1366, 4294901760
        %1413 = vmatpush1.msra.mxu0 %v1412
        %v1414 = vand.u32 %v1388, 4294901760
        %1415 = vmatprep.subr.mxu0 %v1414
        %v1416 = vand.u32 %v1385, 4294901760
        %1417 = vmatpush1.msra.mxu0 %v1416
        %1418 = vmatprep.subr.mxu0 0.0
        %1419 = vmatpush1.msra.mxu0 0.0
        %1420 = vmatprep.subr.mxu0 0.0
        %1421 = vmatpush1.msra.mxu0 0.0
        %1422 = vmatprep.subr.mxu0 0.0
        %1423 = vmatpush1.msra.mxu0 0.0
        %1424 = vmatprep.subr.mxu0 0.0
        %1425 = vmatpush1.msra.mxu0 0.0
        %1426 = vmatprep.subr.mxu0 0.0
        %1427 = vmatpush1.msra.mxu0 0.0
        %1428 = vmatprep.subr.mxu0 0.0
        %1429 = vmatpush1.msra.mxu0 0.0
        %1430 = vmatprep.subr.mxu0 0.0
        %1431 = vmatpush1.msra.mxu0 0.0
        %1432 = vmatprep.subr.mxu0 0.0
        %1433 = vmatpush1.msra.mxu0 0.0
        %1434 = vmatprep.subr.mxu0 0.0
        %1435 = vmatpush1.msra.mxu0 0.0
        %1436 = vmatprep.subr.mxu0 0.0
        %1437 = vmatpush1.msra.mxu0 0.0
        %1438 = vmatprep.subr.mxu0 0.0
        %1439 = vmatpush1.msra.mxu0 0.0
        %1440 = vmatprep.subr.mxu0 0.0
        %1441 = vmatpush1.msra.mxu0 0.0
        %1442 = vmatprep.subr.mxu0 0.0
        %1443 = vmatpush1.msra.mxu0 0.0
        %1444 = vmatprep.subr.mxu0 0.0
        %1445 = vmatpush1.msra.mxu0 0.0
        %1446 = vmatprep.subr.mxu0 0.0
        %1447 = vmatpush1.msra.mxu0 0.0
        %1448 = vmatprep.subr.mxu0 0.0
        %1449 = vmatpush1.msra.mxu0 0.0
        %1450 = vmatprep.subr.mxu0 0.0
        %1451 = vmatpush1.msra.mxu0 0.0
        %1452 = vmatprep.subr.mxu0 0.0
        %1453 = vmatpush1.msra.mxu0 0.0
        %1454 = vmatprep.subr.mxu0 0.0
        %1455 = vmatpush1.msra.mxu0 0.0
        %1456 = vmatprep.subr.mxu0 0.0
        %1457 = vmatpush1.msra.mxu0 0.0
        %1458 = vmatprep.subr.mxu0 0.0
        %1459 = vmatpush1.msra.mxu0 0.0
        %1460 = vmatprep.subr.mxu0 0.0
        %1461 = vmatpush1.msra.mxu0 0.0
        %1462 = vmatprep.subr.mxu0 0.0
        %1463 = vmatpush1.msra.mxu0 0.0
        %1464 = vmatprep.subr.mxu0 0.0
        %1465 = vmatpush1.msra.mxu0 0.0
        %1466 = vmatprep.subr.mxu0 0.0
        %1467 = vmatpush1.msra.mxu0 0.0
        %1468 = vmatprep.mubr.f32.mxu0 0.0
        %v1469 = vand.u32 %v1372, 4294901760
        %v1470 = vsub.f32 %v1372, %v1469
        %v1471 = vand.u32 %v1470, 4294901760
        %v1472 = vsub.f32 %v1470, %v1471
        %v1473 = vand.u32 %v1472, 4294901760
        %1474 = vmatmul.mubr.f32.gmra.mrb[0].mxu0 %v1473
        %v1475 = vpop.f32.mrb[0].mxu0
        %v1476 = vadd.f32 0.0, %v1475
        %v1477 = vpop.f32.mrb[0].mxu0
        %v1478 = vadd.f32 0.0, %v1477
        %1479 = vmatprep.mubr.f32.mxu0 0.0
        %v1480 = vand.u32 %v1375, 4294901760
        %v1481 = vsub.f32 %v1375, %v1480
        %v1482 = vand.u32 %v1481, 4294901760
        %v1483 = vsub.f32 %v1481, %v1482
        %v1484 = vand.u32 %v1483, 4294901760
        %1485 = vmatmul.mubr.f32.gmra.mrb[0].mxu0 %v1484
        %v1486 = vpop.f32.mrb[0].mxu0
        %v1487 = vadd.f32 0.0, %v1486
        %v1488 = vpop.f32.mrb[0].mxu0
        %v1489 = vadd.f32 0.0, %v1488
        %1490 = vmatprep.mubr.f32.mxu0 0.0
        %v1491 = vand.u32 %v1378, 4294901760
        %v1492 = vsub.f32 %v1378, %v1491
        %v1493 = vand.u32 %v1492, 4294901760
        %v1494 = vsub.f32 %v1492, %v1493
        %v1495 = vand.u32 %v1494, 4294901760
        %1496 = vmatmul.mubr.f32.gmra.mrb[0].mxu0 %v1495
        %v1497 = vpop.f32.mrb[0].mxu0
        %v1498 = vadd.f32 0.0, %v1497
        %v1499 = vpop.f32.mrb[0].mxu0
        %v1500 = vadd.f32 0.0, %v1499
        %1501 = vmatprep.mubr.f32.mxu0 0.0
        %v1502 = vand.u32 %v1381, 4294901760
        %v1503 = vsub.f32 %v1381, %v1502
        %v1504 = vand.u32 %v1503, 4294901760
        %v1505 = vsub.f32 %v1503, %v1504
        %v1506 = vand.u32 %v1505, 4294901760
        %1507 = vmatmul.mubr.f32.gmra.mrb[0].mxu0 %v1506
        %v1508 = vpop.f32.mrb[0].mxu0
        %v1509 = vadd.f32 0.0, %v1508
        %v1510 = vpop.f32.mrb[0].mxu0
        %v1511 = vadd.f32 0.0, %v1510
        %1512 = vdwg.mxu0
        %v1513 = vand.u32 %v1357, 4294901760
        %v1514 = vsub.f32 %v1357, %v1513
        %v1515 = vand.u32 %v1514, 4294901760
        %v1516 = vsub.f32 %v1514, %v1515
        %v1517 = vand.u32 %v1516, 4294901760
        %1518 = vmatprep.subr.mxu0 %v1517
        %v1519 = vand.u32 %v1356, 4294901760
        %v1520 = vsub.f32 %v1356, %v1519
        %v1521 = vand.u32 %v1520, 4294901760
        %v1522 = vsub.f32 %v1520, %v1521
        %v1523 = vand.u32 %v1522, 4294901760
        %1524 = vmatpush1.msra.mxu0 %v1523
        %v1525 = vand.u32 %v1359, 4294901760
        %v1526 = vsub.f32 %v1359, %v1525
        %v1527 = vand.u32 %v1526, 4294901760
        %v1528 = vsub.f32 %v1526, %v1527
        %v1529 = vand.u32 %v1528, 4294901760
        %1530 = vmatprep.subr.mxu0 %v1529
        %v1531 = vand.u32 %v1358, 4294901760
        %v1532 = vsub.f32 %v1358, %v1531
        %v1533 = vand.u32 %v1532, 4294901760
        %v1534 = vsub.f32 %v1532, %v1533
        %v1535 = vand.u32 %v1534, 4294901760
        %1536 = vmatpush1.msra.mxu0 %v1535
        %v1537 = vand.u32 %v1361, 4294901760
        %v1538 = vsub.f32 %v1361, %v1537
        %v1539 = vand.u32 %v1538, 4294901760
        %v1540 = vsub.f32 %v1538, %v1539
        %v1541 = vand.u32 %v1540, 4294901760
        %1542 = vmatprep.subr.mxu0 %v1541
        %v1543 = vand.u32 %v1360, 4294901760
        %v1544 = vsub.f32 %v1360, %v1543
        %v1545 = vand.u32 %v1544, 4294901760
        %v1546 = vsub.f32 %v1544, %v1545
        %v1547 = vand.u32 %v1546, 4294901760
        %1548 = vmatpush1.msra.mxu0 %v1547
        %v1549 = vand.u32 %v1363, 4294901760
        %v1550 = vsub.f32 %v1363, %v1549
        %v1551 = vand.u32 %v1550, 4294901760
        %v1552 = vsub.f32 %v1550, %v1551
        %v1553 = vand.u32 %v1552, 4294901760
        %1554 = vmatprep.subr.mxu0 %v1553
        %v1555 = vand.u32 %v1362, 4294901760
        %v1556 = vsub.f32 %v1362, %v1555
        %v1557 = vand.u32 %v1556, 4294901760
        %v1558 = vsub.f32 %v1556, %v1557
        %v1559 = vand.u32 %v1558, 4294901760
        %1560 = vmatpush1.msra.mxu0 %v1559
        %v1561 = vand.u32 %v1365, 4294901760
        %v1562 = vsub.f32 %v1365, %v1561
        %v1563 = vand.u32 %v1562, 4294901760
        %v1564 = vsub.f32 %v1562, %v1563
        %v1565 = vand.u32 %v1564, 4294901760
        %1566 = vmatprep.subr.mxu0 %v1565
        %v1567 = vand.u32 %v1364, 4294901760
        %v1568 = vsub.f32 %v1364, %v1567
        %v1569 = vand.u32 %v1568, 4294901760
        %v1570 = vsub.f32 %v1568, %v1569
        %v1571 = vand.u32 %v1570, 4294901760
        %1572 = vmatpush1.msra.mxu0 %v1571
        %v1573 = vand.u32 %v1367, 4294901760
        %v1574 = vsub.f32 %v1367, %v1573
        %v1575 = vand.u32 %v1574, 4294901760
        %v1576 = vsub.f32 %v1574, %v1575
        %v1577 = vand.u32 %v1576, 4294901760
        %1578 = vmatprep.subr.mxu0 %v1577
        %v1579 = vand.u32 %v1366, 4294901760
        %v1580 = vsub.f32 %v1366, %v1579
        %v1581 = vand.u32 %v1580, 4294901760
        %v1582 = vsub.f32 %v1580, %v1581
        %v1583 = vand.u32 %v1582, 4294901760
        %1584 = vmatpush1.msra.mxu0 %v1583
        %v1585 = vand.u32 %v1388, 4294901760
        %v1586 = vsub.f32 %v1388, %v1585
        %v1587 = vand.u32 %v1586, 4294901760
        %v1588 = vsub.f32 %v1586, %v1587
        %v1589 = vand.u32 %v1588, 4294901760
        %1590 = vmatprep.subr.mxu0 %v1589
        %v1591 = vand.u32 %v1385, 4294901760
        %v1592 = vsub.f32 %v1385, %v1591
        %v1593 = vand.u32 %v1592, 4294901760
        %v1594 = vsub.f32 %v1592, %v1593
        %v1595 = vand.u32 %v1594, 4294901760
        %1596 = vmatpush1.msra.mxu0 %v1595
        %1597 = vmatprep.subr.mxu0 0.0
        %1598 = vmatpush1.msra.mxu0 0.0
        %1599 = vmatprep.subr.mxu0 0.0
        %1600 = vmatpush1.msra.mxu0 0.0
        %1601 = vmatprep.subr.mxu0 0.0
        %1602 = vmatpush1.msra.mxu0 0.0
        %1603 = vmatprep.subr.mxu0 0.0
        %1604 = vmatpush1.msra.mxu0 0.0
        %1605 = vmatprep.subr.mxu0 0.0
        %1606 = vmatpush1.msra.mxu0 0.0
        %1607 = vmatprep.subr.mxu0 0.0
        %1608 = vmatpush1.msra.mxu0 0.0
        %1609 = vmatprep.subr.mxu0 0.0
        %1610 = vmatpush1.msra.mxu0 0.0
        %1611 = vmatprep.subr.mxu0 0.0
        %1612 = vmatpush1.msra.mxu0 0.0
        %1613 = vmatprep.subr.mxu0 0.0
        %1614 = vmatpush1.msra.mxu0 0.0
        %1615 = vmatprep.subr.mxu0 0.0
        %1616 = vmatpush1.msra.mxu0 0.0
        %1617 = vmatprep.subr.mxu0 0.0
        %1618 = vmatpush1.msra.mxu0 0.0
        %1619 = vmatprep.subr.mxu0 0.0
        %1620 = vmatpush1.msra.mxu0 0.0
        %1621 = vmatprep.subr.mxu0 0.0
        %1622 = vmatpush1.msra.mxu0 0.0
        %1623 = vmatprep.subr.mxu0 0.0
        %1624 = vmatpush1.msra.mxu0 0.0
        %1625 = vmatprep.subr.mxu0 0.0
        %1626 = vmatpush1.msra.mxu0 0.0
        %1627 = vmatprep.subr.mxu0 0.0
        %1628 = vmatpush1.msra.mxu0 0.0
        %1629 = vmatprep.subr.mxu0 0.0
        %1630 = vmatpush1.msra.mxu0 0.0
        %1631 = vmatprep.subr.mxu0 0.0
        %1632 = vmatpush1.msra.mxu0 0.0
        %1633 = vmatprep.subr.mxu0 0.0
        %1634 = vmatpush1.msra.mxu0 0.0
        %1635 = vmatprep.subr.mxu0 0.0
        %1636 = vmatpush1.msra.mxu0 0.0
        %1637 = vmatprep.subr.mxu0 0.0
        %1638 = vmatpush1.msra.mxu0 0.0
        %1639 = vmatprep.subr.mxu0 0.0
        %1640 = vmatpush1.msra.mxu0 0.0
        %1641 = vmatprep.subr.mxu0 0.0
        %1642 = vmatpush1.msra.mxu0 0.0
        %1643 = vmatprep.subr.mxu0 0.0
        %1644 = vmatpush1.msra.mxu0 0.0
        %1645 = vmatprep.subr.mxu0 0.0
        %1646 = vmatpush1.msra.mxu0 0.0
        %1647 = vmatprep.mubr.f32.mxu0 0.0
        %v1648 = vand.u32 %v1372, 4294901760
        %1649 = vmatmul.mubr.f32.gmra.mrb[0].mxu0 %v1648
        %v1650 = vpop.f32.mrb[0].mxu0
        %v1651 = vadd.f32 %v1476, %v1650
        %v1652 = vpop.f32.mrb[0].mxu0
        %v1653 = vadd.f32 %v1478, %v1652
        %1654 = vmatprep.mubr.f32.mxu0 0.0
        %v1655 = vand.u32 %v1375, 4294901760
        %1656 = vmatmul.mubr.f32.gmra.mrb[0].mxu0 %v1655
        %v1657 = vpop.f32.mrb[0].mxu0
        %v1658 = vadd.f32 %v1487, %v1657
        %v1659 = vpop.f32.mrb[0].mxu0
        %v1660 = vadd.f32 %v1489, %v1659
        %1661 = vmatprep.mubr.f32.mxu0 0.0
        %v1662 = vand.u32 %v1378, 4294901760
        %1663 = vmatmul.mubr.f32.gmra.mrb[0].mxu0 %v1662
        %v1664 = vpop.f32.mrb[0].mxu0
        %v1665 = vadd.f32 %v1498, %v1664
        %v1666 = vpop.f32.mrb[0].mxu0
        %v1667 = vadd.f32 %v1500, %v1666
        %1668 = vmatprep.mubr.f32.mxu0 0.0
        %v1669 = vand.u32 %v1381, 4294901760
        %1670 = vmatmul.mubr.f32.gmra.mrb[0].mxu0 %v1669
        %v1671 = vpop.f32.mrb[0].mxu0
        %v1672 = vadd.f32 %v1509, %v1671
        %v1673 = vpop.f32.mrb[0].mxu0
        %v1674 = vadd.f32 %v1511, %v1673
        %1675 = vdwg.mxu0
        %v1676 = vand.u32 %v1357, 4294901760
        %v1677 = vsub.f32 %v1357, %v1676
        %1678 = vmatprep.subr.mxu0 %v1677
        %v1679 = vand.u32 %v1356, 4294901760
        %v1680 = vsub.f32 %v1356, %v1679
        %1681 = vmatpush1.msra.mxu0 %v1680
        %v1682 = vand.u32 %v1359, 4294901760
        %v1683 = vsub.f32 %v1359, %v1682
        %1684 = vmatprep.subr.mxu0 %v1683
        %v1685 = vand.u32 %v1358, 4294901760
        %v1686 = vsub.f32 %v1358, %v1685
        %1687 = vmatpush1.msra.mxu0 %v1686
        %v1688 = vand.u32 %v1361, 4294901760
        %v1689 = vsub.f32 %v1361, %v1688
        %1690 = vmatprep.subr.mxu0 %v1689
        %v1691 = vand.u32 %v1360, 4294901760
        %v1692 = vsub.f32 %v1360, %v1691
        %1693 = vmatpush1.msra.mxu0 %v1692
        %v1694 = vand.u32 %v1363, 4294901760
        %v1695 = vsub.f32 %v1363, %v1694
        %1696 = vmatprep.subr.mxu0 %v1695
        %v1697 = vand.u32 %v1362, 4294901760
        %v1698 = vsub.f32 %v1362, %v1697
        %1699 = vmatpush1.msra.mxu0 %v1698
        %v1700 = vand.u32 %v1365, 4294901760
        %v1701 = vsub.f32 %v1365, %v1700
        %1702 = vmatprep.subr.mxu0 %v1701
        %v1703 = vand.u32 %v1364, 4294901760
        %v1704 = vsub.f32 %v1364, %v1703
        %1705 = vmatpush1.msra.mxu0 %v1704
        %v1706 = vand.u32 %v1367, 4294901760
        %v1707 = vsub.f32 %v1367, %v1706
        %1708 = vmatprep.subr.mxu0 %v1707
        %v1709 = vand.u32 %v1366, 4294901760
        %v1710 = vsub.f32 %v1366, %v1709
        %1711 = vmatpush1.msra.mxu0 %v1710
        %v1712 = vand.u32 %v1388, 4294901760
        %v1713 = vsub.f32 %v1388, %v1712
        %1714 = vmatprep.subr.mxu0 %v1713
        %v1715 = vand.u32 %v1385, 4294901760
        %v1716 = vsub.f32 %v1385, %v1715
        %1717 = vmatpush1.msra.mxu0 %v1716
        %1718 = vmatprep.subr.mxu0 0.0
        %1719 = vmatpush1.msra.mxu0 0.0
        %1720 = vmatprep.subr.mxu0 0.0
        %1721 = vmatpush1.msra.mxu0 0.0
        %1722 = vmatprep.subr.mxu0 0.0
        %1723 = vmatpush1.msra.mxu0 0.0
        %1724 = vmatprep.subr.mxu0 0.0
        %1725 = vmatpush1.msra.mxu0 0.0
        %1726 = vmatprep.subr.mxu0 0.0
        %1727 = vmatpush1.msra.mxu0 0.0
        %1728 = vmatprep.subr.mxu0 0.0
        %1729 = vmatpush1.msra.mxu0 0.0
        %1730 = vmatprep.subr.mxu0 0.0
        %1731 = vmatpush1.msra.mxu0 0.0
        %1732 = vmatprep.subr.mxu0 0.0
        %1733 = vmatpush1.msra.mxu0 0.0
        %1734 = vmatprep.subr.mxu0 0.0
        %1735 = vmatpush1.msra.mxu0 0.0
        %1736 = vmatprep.subr.mxu0 0.0
        %1737 = vmatpush1.msra.mxu0 0.0
        %1738 = vmatprep.subr.mxu0 0.0
        %1739 = vmatpush1.msra.mxu0 0.0
        %1740 = vmatprep.subr.mxu0 0.0
        %1741 = vmatpush1.msra.mxu0 0.0
        %1742 = vmatprep.subr.mxu0 0.0
        %1743 = vmatpush1.msra.mxu0 0.0
        %1744 = vmatprep.subr.mxu0 0.0
        %1745 = vmatpush1.msra.mxu0 0.0
        %1746 = vmatprep.subr.mxu0 0.0
        %1747 = vmatpush1.msra.mxu0 0.0
        %1748 = vmatprep.subr.mxu0 0.0
        %1749 = vmatpush1.msra.mxu0 0.0
        %1750 = vmatprep.subr.mxu0 0.0
        %1751 = vmatpush1.msra.mxu0 0.0
        %1752 = vmatprep.subr.mxu0 0.0
        %1753 = vmatpush1.msra.mxu0 0.0
        %1754 = vmatprep.subr.mxu0 0.0
        %1755 = vmatpush1.msra.mxu0 0.0
        %1756 = vmatprep.subr.mxu0 0.0
        %1757 = vmatpush1.msra.mxu0 0.0
        %1758 = vmatprep.subr.mxu0 0.0
        %1759 = vmatpush1.msra.mxu0 0.0
        %1760 = vmatprep.subr.mxu0 0.0
        %1761 = vmatpush1.msra.mxu0 0.0
        %1762 = vmatprep.subr.mxu0 0.0
        %1763 = vmatpush1.msra.mxu0 0.0
        %1764 = vmatprep.subr.mxu0 0.0
        %1765 = vmatpush1.msra.mxu0 0.0
        %1766 = vmatprep.subr.mxu0 0.0
        %1767 = vmatpush1.msra.mxu0 0.0
        %1768 = vmatprep.mubr.f32.mxu0 0.0
        %v1769 = vand.u32 %v1372, 4294901760
        %v1770 = vsub.f32 %v1372, %v1769
        %1771 = vmatmul.mubr.f32.gmra.mrb[0].mxu0 %v1770
        %v1772 = vpop.f32.mrb[0].mxu0
        %v1773 = vadd.f32 %v1651, %v1772
        %v1774 = vpop.f32.mrb[0].mxu0
        %v1775 = vadd.f32 %v1653, %v1774
        %1776 = vmatprep.mubr.f32.mxu0 0.0
        %v1777 = vand.u32 %v1375, 4294901760
        %v1778 = vsub.f32 %v1375, %v1777
        %1779 = vmatmul.mubr.f32.gmra.mrb[0].mxu0 %v1778
        %v1780 = vpop.f32.mrb[0].mxu0
        %v1781 = vadd.f32 %v1658, %v1780
        %v1782 = vpop.f32.mrb[0].mxu0
        %v1783 = vadd.f32 %v1660, %v1782
        %1784 = vmatprep.mubr.f32.mxu0 0.0
        %v1785 = vand.u32 %v1378, 4294901760
        %v1786 = vsub.f32 %v1378, %v1785
        %1787 = vmatmul.mubr.f32.gmra.mrb[0].mxu0 %v1786
        %v1788 = vpop.f32.mrb[0].mxu0
        %v1789 = vadd.f32 %v1665, %v1788
        %v1790 = vpop.f32.mrb[0].mxu0
        %v1791 = vadd.f32 %v1667, %v1790
        %1792 = vmatprep.mubr.f32.mxu0 0.0
        %v1793 = vand.u32 %v1381, 4294901760
        %v1794 = vsub.f32 %v1381, %v1793
        %1795 = vmatmul.mubr.f32.gmra.mrb[0].mxu0 %v1794
        %v1796 = vpop.f32.mrb[0].mxu0
        %v1797 = vadd.f32 %v1672, %v1796
        %v1798 = vpop.f32.mrb[0].mxu0
        %v1799 = vadd.f32 %v1674, %v1798
        %1800 = vdwg.mxu0
        %v1801 = vand.u32 %v1357, 4294901760
        %1802 = vmatprep.subr.mxu0 %v1801
        %v1803 = vand.u32 %v1356, 4294901760
        %1804 = vmatpush1.msra.mxu0 %v1803
        %v1805 = vand.u32 %v1359, 4294901760
        %1806 = vmatprep.subr.mxu0 %v1805
        %v1807 = vand.u32 %v1358, 4294901760
        %1808 = vmatpush1.msra.mxu0 %v1807
        %v1809 = vand.u32 %v1361, 4294901760
        %1810 = vmatprep.subr.mxu0 %v1809
        %v1811 = vand.u32 %v1360, 4294901760
        %1812 = vmatpush1.msra.mxu0 %v1811
        %v1813 = vand.u32 %v1363, 4294901760
        %1814 = vmatprep.subr.mxu0 %v1813
        %v1815 = vand.u32 %v1362, 4294901760
        %1816 = vmatpush1.msra.mxu0 %v1815
        %v1817 = vand.u32 %v1365, 4294901760
        %1818 = vmatprep.subr.mxu0 %v1817
        %v1819 = vand.u32 %v1364, 4294901760
        %1820 = vmatpush1.msra.mxu0 %v1819
        %v1821 = vand.u32 %v1367, 4294901760
        %1822 = vmatprep.subr.mxu0 %v1821
        %v1823 = vand.u32 %v1366, 4294901760
        %1824 = vmatpush1.msra.mxu0 %v1823
        %v1825 = vand.u32 %v1388, 4294901760
        %1826 = vmatprep.subr.mxu0 %v1825
        %v1827 = vand.u32 %v1385, 4294901760
        %1828 = vmatpush1.msra.mxu0 %v1827
        %1829 = vmatprep.subr.mxu0 0.0
        %1830 = vmatpush1.msra.mxu0 0.0
        %1831 = vmatprep.subr.mxu0 0.0
        %1832 = vmatpush1.msra.mxu0 0.0
        %1833 = vmatprep.subr.mxu0 0.0
        %1834 = vmatpush1.msra.mxu0 0.0
        %1835 = vmatprep.subr.mxu0 0.0
        %1836 = vmatpush1.msra.mxu0 0.0
        %1837 = vmatprep.subr.mxu0 0.0
        %1838 = vmatpush1.msra.mxu0 0.0
        %1839 = vmatprep.subr.mxu0 0.0
        %1840 = vmatpush1.msra.mxu0 0.0
        %1841 = vmatprep.subr.mxu0 0.0
        %1842 = vmatpush1.msra.mxu0 0.0
        %1843 = vmatprep.subr.mxu0 0.0
        %1844 = vmatpush1.msra.mxu0 0.0
        %1845 = vmatprep.subr.mxu0 0.0
        %1846 = vmatpush1.msra.mxu0 0.0
        %1847 = vmatprep.subr.mxu0 0.0
        %1848 = vmatpush1.msra.mxu0 0.0
        %1849 = vmatprep.subr.mxu0 0.0
        %1850 = vmatpush1.msra.mxu0 0.0
        %1851 = vmatprep.subr.mxu0 0.0
        %1852 = vmatpush1.msra.mxu0 0.0
        %1853 = vmatprep.subr.mxu0 0.0
        %1854 = vmatpush1.msra.mxu0 0.0
        %1855 = vmatprep.subr.mxu0 0.0
        %1856 = vmatpush1.msra.mxu0 0.0
        %1857 = vmatprep.subr.mxu0 0.0
        %1858 = vmatpush1.msra.mxu0 0.0
        %1859 = vmatprep.subr.mxu0 0.0
        %1860 = vmatpush1.msra.mxu0 0.0
        %1861 = vmatprep.subr.mxu0 0.0
        %1862 = vmatpush1.msra.mxu0 0.0
        %1863 = vmatprep.subr.mxu0 0.0
        %1864 = vmatpush1.msra.mxu0 0.0
        %1865 = vmatprep.subr.mxu0 0.0
        %1866 = vmatpush1.msra.mxu0 0.0
        %1867 = vmatprep.subr.mxu0 0.0
        %1868 = vmatpush1.msra.mxu0 0.0
        %1869 = vmatprep.subr.mxu0 0.0
        %1870 = vmatpush1.msra.mxu0 0.0
        %1871 = vmatprep.subr.mxu0 0.0
        %1872 = vmatpush1.msra.mxu0 0.0
        %1873 = vmatprep.subr.mxu0 0.0
        %1874 = vmatpush1.msra.mxu0 0.0
        %1875 = vmatprep.subr.mxu0 0.0
        %1876 = vmatpush1.msra.mxu0 0.0
        %1877 = vmatprep.subr.mxu0 0.0
        %1878 = vmatpush1.msra.mxu0 0.0
        %1879 = vmatprep.mubr.f32.mxu0 0.0
        %v1880 = vand.u32 %v1372, 4294901760
        %v1881 = vsub.f32 %v1372, %v1880
        %v1882 = vand.u32 %v1881, 4294901760
        %1883 = vmatmul.mubr.f32.gmra.mrb[0].mxu0 %v1882
        %v1884 = vpop.f32.mrb[0].mxu0
        %v1885 = vadd.f32 %v1773, %v1884
        %v1886 = vpop.f32.mrb[0].mxu0
        %v1887 = vadd.f32 %v1775, %v1886
        %1888 = vmatprep.mubr.f32.mxu0 0.0
        %v1889 = vand.u32 %v1375, 4294901760
        %v1890 = vsub.f32 %v1375, %v1889
        %v1891 = vand.u32 %v1890, 4294901760
        %1892 = vmatmul.mubr.f32.gmra.mrb[0].mxu0 %v1891
        %v1893 = vpop.f32.mrb[0].mxu0
        %v1894 = vadd.f32 %v1781, %v1893
        %v1895 = vpop.f32.mrb[0].mxu0
        %v1896 = vadd.f32 %v1783, %v1895
        %1897 = vmatprep.mubr.f32.mxu0 0.0
        %v1898 = vand.u32 %v1378, 4294901760
        %v1899 = vsub.f32 %v1378, %v1898
        %v1900 = vand.u32 %v1899, 4294901760
        %1901 = vmatmul.mubr.f32.gmra.mrb[0].mxu0 %v1900
        %v1902 = vpop.f32.mrb[0].mxu0
        %v1903 = vadd.f32 %v1789, %v1902
        %v1904 = vpop.f32.mrb[0].mxu0
        %v1905 = vadd.f32 %v1791, %v1904
        %1906 = vmatprep.mubr.f32.mxu0 0.0
        %v1907 = vand.u32 %v1381, 4294901760
        %v1908 = vsub.f32 %v1381, %v1907
        %v1909 = vand.u32 %v1908, 4294901760
        %1910 = vmatmul.mubr.f32.gmra.mrb[0].mxu0 %v1909
        %v1911 = vpop.f32.mrb[0].mxu0
        %v1912 = vadd.f32 %v1797, %v1911
        %v1913 = vpop.f32.mrb[0].mxu0
        %v1914 = vadd.f32 %v1799, %v1913
        %1915 = vdwg.mxu0
        %v1916 = vand.u32 %v1357, 4294901760
        %v1917 = vsub.f32 %v1357, %v1916
        %v1918 = vand.u32 %v1917, 4294901760
        %1919 = vmatprep.subr.mxu0 %v1918
        %v1920 = vand.u32 %v1356, 4294901760
        %v1921 = vsub.f32 %v1356, %v1920
        %v1922 = vand.u32 %v1921, 4294901760
        %1923 = vmatpush1.msra.mxu0 %v1922
        %v1924 = vand.u32 %v1359, 4294901760
        %v1925 = vsub.f32 %v1359, %v1924
        %v1926 = vand.u32 %v1925, 4294901760
        %1927 = vmatprep.subr.mxu0 %v1926
        %v1928 = vand.u32 %v1358, 4294901760
        %v1929 = vsub.f32 %v1358, %v1928
        %v1930 = vand.u32 %v1929, 4294901760
        %1931 = vmatpush1.msra.mxu0 %v1930
        %v1932 = vand.u32 %v1361, 4294901760
        %v1933 = vsub.f32 %v1361, %v1932
        %v1934 = vand.u32 %v1933, 4294901760
        %1935 = vmatprep.subr.mxu0 %v1934
        %v1936 = vand.u32 %v1360, 4294901760
        %v1937 = vsub.f32 %v1360, %v1936
        %v1938 = vand.u32 %v1937, 4294901760
        %1939 = vmatpush1.msra.mxu0 %v1938
        %v1940 = vand.u32 %v1363, 4294901760
        %v1941 = vsub.f32 %v1363, %v1940
        %v1942 = vand.u32 %v1941, 4294901760
        %1943 = vmatprep.subr.mxu0 %v1942
        %v1944 = vand.u32 %v1362, 4294901760
        %v1945 = vsub.f32 %v1362, %v1944
        %v1946 = vand.u32 %v1945, 4294901760
        %1947 = vmatpush1.msra.mxu0 %v1946
        %v1948 = vand.u32 %v1365, 4294901760
        %v1949 = vsub.f32 %v1365, %v1948
        %v1950 = vand.u32 %v1949, 4294901760
        %1951 = vmatprep.subr.mxu0 %v1950
        %v1952 = vand.u32 %v1364, 4294901760
        %v1953 = vsub.f32 %v1364, %v1952
        %v1954 = vand.u32 %v1953, 4294901760
        %1955 = vmatpush1.msra.mxu0 %v1954
        %v1956 = vand.u32 %v1367, 4294901760
        %v1957 = vsub.f32 %v1367, %v1956
        %v1958 = vand.u32 %v1957, 4294901760
        %1959 = vmatprep.subr.mxu0 %v1958
        %v1960 = vand.u32 %v1366, 4294901760
        %v1961 = vsub.f32 %v1366, %v1960
        %v1962 = vand.u32 %v1961, 4294901760
        %1963 = vmatpush1.msra.mxu0 %v1962
        %v1964 = vand.u32 %v1388, 4294901760
        %v1965 = vsub.f32 %v1388, %v1964
        %v1966 = vand.u32 %v1965, 4294901760
        %1967 = vmatprep.subr.mxu0 %v1966
        %v1968 = vand.u32 %v1385, 4294901760
        %v1969 = vsub.f32 %v1385, %v1968
        %v1970 = vand.u32 %v1969, 4294901760
        %1971 = vmatpush1.msra.mxu0 %v1970
        %1972 = vmatprep.subr.mxu0 0.0
        %1973 = vmatpush1.msra.mxu0 0.0
        %1974 = vmatprep.subr.mxu0 0.0
        %1975 = vmatpush1.msra.mxu0 0.0
        %1976 = vmatprep.subr.mxu0 0.0
        %1977 = vmatpush1.msra.mxu0 0.0
        %1978 = vmatprep.subr.mxu0 0.0
        %1979 = vmatpush1.msra.mxu0 0.0
        %1980 = vmatprep.subr.mxu0 0.0
        %1981 = vmatpush1.msra.mxu0 0.0
        %1982 = vmatprep.subr.mxu0 0.0
        %1983 = vmatpush1.msra.mxu0 0.0
        %1984 = vmatprep.subr.mxu0 0.0
        %1985 = vmatpush1.msra.mxu0 0.0
        %1986 = vmatprep.subr.mxu0 0.0
        %1987 = vmatpush1.msra.mxu0 0.0
        %1988 = vmatprep.subr.mxu0 0.0
        %1989 = vmatpush1.msra.mxu0 0.0
        %1990 = vmatprep.subr.mxu0 0.0
        %1991 = vmatpush1.msra.mxu0 0.0
        %1992 = vmatprep.subr.mxu0 0.0
        %1993 = vmatpush1.msra.mxu0 0.0
        %1994 = vmatprep.subr.mxu0 0.0
        %1995 = vmatpush1.msra.mxu0 0.0
        %1996 = vmatprep.subr.mxu0 0.0
        %1997 = vmatpush1.msra.mxu0 0.0
        %1998 = vmatprep.subr.mxu0 0.0
        %1999 = vmatpush1.msra.mxu0 0.0
        %2000 = vmatprep.subr.mxu0 0.0
        %2001 = vmatpush1.msra.mxu0 0.0
        %2002 = vmatprep.subr.mxu0 0.0
        %2003 = vmatpush1.msra.mxu0 0.0
        %2004 = vmatprep.subr.mxu0 0.0
        %2005 = vmatpush1.msra.mxu0 0.0
        %2006 = vmatprep.subr.mxu0 0.0
        %2007 = vmatpush1.msra.mxu0 0.0
        %2008 = vmatprep.subr.mxu0 0.0
        %2009 = vmatpush1.msra.mxu0 0.0
        %2010 = vmatprep.subr.mxu0 0.0
        %2011 = vmatpush1.msra.mxu0 0.0
        %2012 = vmatprep.subr.mxu0 0.0
        %2013 = vmatpush1.msra.mxu0 0.0
        %2014 = vmatprep.subr.mxu0 0.0
        %2015 = vmatpush1.msra.mxu0 0.0
        %2016 = vmatprep.subr.mxu0 0.0
        %2017 = vmatpush1.msra.mxu0 0.0
        %2018 = vmatprep.subr.mxu0 0.0
        %2019 = vmatpush1.msra.mxu0 0.0
        %2020 = vmatprep.subr.mxu0 0.0
        %2021 = vmatpush1.msra.mxu0 0.0
        %2022 = vmatprep.mubr.f32.mxu0 0.0
        %v2023 = vand.u32 %v1372, 4294901760
        %2024 = vmatmul.mubr.f32.gmra.mrb[0].mxu0 %v2023
        %v2025 = vpop.f32.mrb[0].mxu0
        %v2026 = vadd.f32 %v1885, %v2025
        %v2027 = vpop.f32.mrb[0].mxu0
        %v2028 = vadd.f32 %v1887, %v2027
        %2029 = vmatprep.mubr.f32.mxu0 0.0
        %v2030 = vand.u32 %v1375, 4294901760
        %2031 = vmatmul.mubr.f32.gmra.mrb[0].mxu0 %v2030
        %v2032 = vpop.f32.mrb[0].mxu0
        %v2033 = vadd.f32 %v1894, %v2032
        %v2034 = vpop.f32.mrb[0].mxu0
        %v2035 = vadd.f32 %v1896, %v2034
        %2036 = vmatprep.mubr.f32.mxu0 0.0
        %v2037 = vand.u32 %v1378, 4294901760
        %2038 = vmatmul.mubr.f32.gmra.mrb[0].mxu0 %v2037
        %v2039 = vpop.f32.mrb[0].mxu0
        %v2040 = vadd.f32 %v1903, %v2039
        %v2041 = vpop.f32.mrb[0].mxu0
        %v2042 = vadd.f32 %v1905, %v2041
        %2043 = vmatprep.mubr.f32.mxu0 0.0
        %v2044 = vand.u32 %v1381, 4294901760
        %2045 = vmatmul.mubr.f32.gmra.mrb[0].mxu0 %v2044
        %v2046 = vpop.f32.mrb[0].mxu0
        %v2047 = vadd.f32 %v1912, %v2046
        %v2048 = vpop.f32.mrb[0].mxu0
        %v2049 = vadd.f32 %v1914, %v2048
        %2050 = vdwg.mxu0
        %v2051 = vand.u32 %v1357, 4294901760
        %2052 = vmatprep.subr.mxu0 %v2051
        %v2053 = vand.u32 %v1356, 4294901760
        %2054 = vmatpush1.msra.mxu0 %v2053
        %v2055 = vand.u32 %v1359, 4294901760
        %2056 = vmatprep.subr.mxu0 %v2055
        %v2057 = vand.u32 %v1358, 4294901760
        %2058 = vmatpush1.msra.mxu0 %v2057
        %v2059 = vand.u32 %v1361, 4294901760
        %2060 = vmatprep.subr.mxu0 %v2059
        %v2061 = vand.u32 %v1360, 4294901760
        %2062 = vmatpush1.msra.mxu0 %v2061
        %v2063 = vand.u32 %v1363, 4294901760
        %2064 = vmatprep.subr.mxu0 %v2063
        %v2065 = vand.u32 %v1362, 4294901760
        %2066 = vmatpush1.msra.mxu0 %v2065
        %v2067 = vand.u32 %v1365, 4294901760
        %2068 = vmatprep.subr.mxu0 %v2067
        %v2069 = vand.u32 %v1364, 4294901760
        %2070 = vmatpush1.msra.mxu0 %v2069
        %v2071 = vand.u32 %v1367, 4294901760
        %2072 = vmatprep.subr.mxu0 %v2071
        %v2073 = vand.u32 %v1366, 4294901760
        %2074 = vmatpush1.msra.mxu0 %v2073
        %v2075 = vand.u32 %v1388, 4294901760
        %2076 = vmatprep.subr.mxu0 %v2075
        %v2077 = vand.u32 %v1385, 4294901760
        %2078 = vmatpush1.msra.mxu0 %v2077
        %2079 = vmatprep.subr.mxu0 0.0
        %2080 = vmatpush1.msra.mxu0 0.0
        %2081 = vmatprep.subr.mxu0 0.0
        %2082 = vmatpush1.msra.mxu0 0.0
        %2083 = vmatprep.subr.mxu0 0.0
        %2084 = vmatpush1.msra.mxu0 0.0
        %2085 = vmatprep.subr.mxu0 0.0
        %2086 = vmatpush1.msra.mxu0 0.0
        %2087 = vmatprep.subr.mxu0 0.0
        %2088 = vmatpush1.msra.mxu0 0.0
        %2089 = vmatprep.subr.mxu0 0.0
        %2090 = vmatpush1.msra.mxu0 0.0
        %2091 = vmatprep.subr.mxu0 0.0
        %2092 = vmatpush1.msra.mxu0 0.0
        %2093 = vmatprep.subr.mxu0 0.0
        %2094 = vmatpush1.msra.mxu0 0.0
        %2095 = vmatprep.subr.mxu0 0.0
        %2096 = vmatpush1.msra.mxu0 0.0
        %2097 = vmatprep.subr.mxu0 0.0
        %2098 = vmatpush1.msra.mxu0 0.0
        %2099 = vmatprep.subr.mxu0 0.0
        %2100 = vmatpush1.msra.mxu0 0.0
        %2101 = vmatprep.subr.mxu0 0.0
        %2102 = vmatpush1.msra.mxu0 0.0
        %2103 = vmatprep.subr.mxu0 0.0
        %2104 = vmatpush1.msra.mxu0 0.0
        %2105 = vmatprep.subr.mxu0 0.0
        %2106 = vmatpush1.msra.mxu0 0.0
        %2107 = vmatprep.subr.mxu0 0.0
        %2108 = vmatpush1.msra.mxu0 0.0
        %2109 = vmatprep.subr.mxu0 0.0
        %2110 = vmatpush1.msra.mxu0 0.0
        %2111 = vmatprep.subr.mxu0 0.0
        %2112 = vmatpush1.msra.mxu0 0.0
        %2113 = vmatprep.subr.mxu0 0.0
        %2114 = vmatpush1.msra.mxu0 0.0
        %2115 = vmatprep.subr.mxu0 0.0
        %2116 = vmatpush1.msra.mxu0 0.0
        %2117 = vmatprep.subr.mxu0 0.0
        %2118 = vmatpush1.msra.mxu0 0.0
        %2119 = vmatprep.subr.mxu0 0.0
        %2120 = vmatpush1.msra.mxu0 0.0
        %2121 = vmatprep.subr.mxu0 0.0
        %2122 = vmatpush1.msra.mxu0 0.0
        %2123 = vmatprep.subr.mxu0 0.0
        %2124 = vmatpush1.msra.mxu0 0.0
        %2125 = vmatprep.subr.mxu0 0.0
        %2126 = vmatpush1.msra.mxu0 0.0
        %2127 = vmatprep.subr.mxu0 0.0
        %2128 = vmatpush1.msra.mxu0 0.0
        %2129 = vmatprep.mubr.f32.mxu0 0.0
        %v2130 = vand.u32 %v1372, 4294901760
        %2131 = vmatmul.mubr.f32.gmra.mrb[0].mxu0 %v2130
        %v2132 = vpop.f32.mrb[0].mxu0
        %v2133 = vadd.f32 %v2026, %v2132
        %v2134 = vpop.f32.mrb[0].mxu0
        %v2135 = vadd.f32 %v2028, %v2134
        %2136 = vmatprep.mubr.f32.mxu0 0.0
        %v2137 = vand.u32 %v1375, 4294901760
        %2138 = vmatmul.mubr.f32.gmra.mrb[0].mxu0 %v2137
        %v2139 = vpop.f32.mrb[0].mxu0
        %v2140 = vadd.f32 %v2033, %v2139
        %v2141 = vpop.f32.mrb[0].mxu0
        %v2142 = vadd.f32 %v2035, %v2141
        %2143 = vmatprep.mubr.f32.mxu0 0.0
        %v2144 = vand.u32 %v1378, 4294901760
        %2145 = vmatmul.mubr.f32.gmra.mrb[0].mxu0 %v2144
        %v2146 = vpop.f32.mrb[0].mxu0
        %v2147 = vadd.f32 %v2040, %v2146
        %v2148 = vpop.f32.mrb[0].mxu0
        %v2149 = vadd.f32 %v2042, %v2148
        %2150 = vmatprep.mubr.f32.mxu0 0.0
        %v2151 = vand.u32 %v1381, 4294901760
        %2152 = vmatmul.mubr.f32.gmra.mrb[0].mxu0 %v2151
        %v2153 = vpop.f32.mrb[0].mxu0
        %v2154 = vadd.f32 %v2047, %v2153
        %v2155 = vpop.f32.mrb[0].mxu0
        %v2156 = vadd.f32 %v2049, %v2155
        %2157 = vdwg.mxu0
        %v2158 = vld [vmem:[%s5] sm:$0xff]
        %v2159 = vld [vmem:[%s5 + $0x8] sm:$0xff]
        %v2160 = vld [vmem:[%s5 + $0x10] sm:$0xff]
        %v2161 = vld [vmem:[%s5 + $0x18] sm:$0xff]
        %v2162 = vld [vmem:[%s5 + $0x20] sm:$0xff]
        %v2163 = vld [vmem:[%s5 + $0x28] sm:$0xff]
        %v2164 = vld [vmem:[%s5 + $0x30] sm:$0xff]
        %v2165 = vld [vmem:[%s5 + $0x38] sm:$0xff]
        %v2166 = vld [vmem:[%s5 + $0x40] sm:$0xff]
        %vm2167 = vcmask 293888
        %v2169 = vsel %vm2167, %v2158, 0
        %v2172 = vsel %vm2167, %v2159, 0
        %v2175 = vsel %vm2167, %v2160, 0
        %v2178 = vsel %vm2167, %v2161, 0
        %v2181 = vsel %vm2167, %v2162, 0
        %v2184 = vsel %vm2167, %v2163, 0
        %v2187 = vsel %vm2167, %v2164, 0
        %v2190 = vsel %vm2167, %v2165, 0
        %v2193 = vsel %vm2167, %v2166, 0
        %vm2195 = vcmask 1043456
        %v2196 = vsel %vm2195, %v334, 0
        %v2198 = vsel %vm2195, %v368, 0
        %v2200 = vand.u32 %v2135, 4294901760
        %2201 = vmatprep.subr.mxu0 %v2200
        %v2202 = vand.u32 %v2133, 4294901760
        %2203 = vmatpush1.msra.mxu0 %v2202
        %v2204 = vand.u32 %v2142, 4294901760
        %2205 = vmatprep.subr.mxu0 %v2204
        %v2206 = vand.u32 %v2140, 4294901760
        %2207 = vmatpush1.msra.mxu0 %v2206
        %v2208 = vand.u32 %v2149, 4294901760
        %2209 = vmatprep.subr.mxu0 %v2208
        %v2210 = vand.u32 %v2147, 4294901760
        %2211 = vmatpush1.msra.mxu0 %v2210
        %v2212 = vand.u32 %v2156, 4294901760
        %2213 = vmatprep.subr.mxu0 %v2212
        %v2214 = vand.u32 %v2154, 4294901760
        %2215 = vmatpush1.msra.mxu0 %v2214
        %v2216 = vand.u32 %v2198, 4294901760
        %2217 = vmatprep.subr.mxu0 %v2216
        %v2218 = vand.u32 %v2196, 4294901760
        %2219 = vmatpush1.msra.mxu0 %v2218
        %2220 = vmatprep.subr.mxu0 0.0
        %2221 = vmatpush1.msra.mxu0 0.0
        %2222 = vmatprep.subr.mxu0 0.0
        %2223 = vmatpush1.msra.mxu0 0.0
        %2224 = vmatprep.subr.mxu0 0.0
        %2225 = vmatpush1.msra.mxu0 0.0
        %2226 = vmatprep.subr.mxu0 0.0
        %2227 = vmatpush1.msra.mxu0 0.0
        %2228 = vmatprep.subr.mxu0 0.0
        %2229 = vmatpush1.msra.mxu0 0.0
        %2230 = vmatprep.subr.mxu0 0.0
        %2231 = vmatpush1.msra.mxu0 0.0
        %2232 = vmatprep.subr.mxu0 0.0
        %2233 = vmatpush1.msra.mxu0 0.0
        %2234 = vmatprep.subr.mxu0 0.0
        %2235 = vmatpush1.msra.mxu0 0.0
        %2236 = vmatprep.subr.mxu0 0.0
        %2237 = vmatpush1.msra.mxu0 0.0
        %2238 = vmatprep.subr.mxu0 0.0
        %2239 = vmatpush1.msra.mxu0 0.0
        %2240 = vmatprep.subr.mxu0 0.0
        %2241 = vmatpush1.msra.mxu0 0.0
        %2242 = vmatprep.subr.mxu0 0.0
        %2243 = vmatpush1.msra.mxu0 0.0
        %2244 = vmatprep.subr.mxu0 0.0
        %2245 = vmatpush1.msra.mxu0 0.0
        %2246 = vmatprep.subr.mxu0 0.0
        %2247 = vmatpush1.msra.mxu0 0.0
        %2248 = vmatprep.subr.mxu0 0.0
        %2249 = vmatpush1.msra.mxu0 0.0
        %2250 = vmatprep.subr.mxu0 0.0
        %2251 = vmatpush1.msra.mxu0 0.0
        %2252 = vmatprep.subr.mxu0 0.0
        %2253 = vmatpush1.msra.mxu0 0.0
        %2254 = vmatprep.subr.mxu0 0.0
        %2255 = vmatpush1.msra.mxu0 0.0
        %2256 = vmatprep.subr.mxu0 0.0
        %2257 = vmatpush1.msra.mxu0 0.0
        %2258 = vmatprep.subr.mxu0 0.0
        %2259 = vmatpush1.msra.mxu0 0.0
        %2260 = vmatprep.subr.mxu0 0.0
        %2261 = vmatpush1.msra.mxu0 0.0
        %2262 = vmatprep.subr.mxu0 0.0
        %2263 = vmatpush1.msra.mxu0 0.0
        %2264 = vmatprep.subr.mxu0 0.0
        %2265 = vmatpush1.msra.mxu0 0.0
        %2266 = vmatprep.subr.mxu0 0.0
        %2267 = vmatpush1.msra.mxu0 0.0
        %2268 = vmatprep.subr.mxu0 0.0
        %2269 = vmatpush1.msra.mxu0 0.0
        %2270 = vmatprep.subr.mxu0 0.0
        %2271 = vmatpush1.msra.mxu0 0.0
        %2272 = vmatprep.subr.mxu0 0.0
        %2273 = vmatpush1.msra.mxu0 0.0
        %2274 = vmatprep.mubr.f32.mxu0 0.0
        %v2275 = vand.u32 %v2169, 4294901760
        %v2276 = vsub.f32 %v2169, %v2275
        %v2277 = vand.u32 %v2276, 4294901760
        %v2278 = vsub.f32 %v2276, %v2277
        %v2279 = vand.u32 %v2278, 4294901760
        %2280 = vmatmul.mubr.f32.gmra.mrb[0].mxu0 %v2279
        %v2281 = vpop.f32.mrb[0].mxu0
        %v2282 = vadd.f32 0.0, %v2281
        %v2283 = vpop.f32.mrb[0].mxu0
        %v2284 = vadd.f32 0.0, %v2283
        %2285 = vmatprep.mubr.f32.mxu0 0.0
        %v2286 = vand.u32 %v2172, 4294901760
        %v2287 = vsub.f32 %v2172, %v2286
        %v2288 = vand.u32 %v2287, 4294901760
        %v2289 = vsub.f32 %v2287, %v2288
        %v2290 = vand.u32 %v2289, 4294901760
        %2291 = vmatmul.mubr.f32.gmra.mrb[0].mxu0 %v2290
        %v2292 = vpop.f32.mrb[0].mxu0
        %v2293 = vadd.f32 0.0, %v2292
        %v2294 = vpop.f32.mrb[0].mxu0
        %v2295 = vadd.f32 0.0, %v2294
        %2296 = vmatprep.mubr.f32.mxu0 0.0
        %v2297 = vand.u32 %v2175, 4294901760
        %v2298 = vsub.f32 %v2175, %v2297
        %v2299 = vand.u32 %v2298, 4294901760
        %v2300 = vsub.f32 %v2298, %v2299
        %v2301 = vand.u32 %v2300, 4294901760
        %2302 = vmatmul.mubr.f32.gmra.mrb[0].mxu0 %v2301
        %v2303 = vpop.f32.mrb[0].mxu0
        %v2304 = vadd.f32 0.0, %v2303
        %v2305 = vpop.f32.mrb[0].mxu0
        %v2306 = vadd.f32 0.0, %v2305
        %2307 = vmatprep.mubr.f32.mxu0 0.0
        %v2308 = vand.u32 %v2178, 4294901760
        %v2309 = vsub.f32 %v2178, %v2308
        %v2310 = vand.u32 %v2309, 4294901760
        %v2311 = vsub.f32 %v2309, %v2310
        %v2312 = vand.u32 %v2311, 4294901760
        %2313 = vmatmul.mubr.f32.gmra.mrb[0].mxu0 %v2312
        %v2314 = vpop.f32.mrb[0].mxu0
        %v2315 = vadd.f32 0.0, %v2314
        %v2316 = vpop.f32.mrb[0].mxu0
        %v2317 = vadd.f32 0.0, %v2316
        %2318 = vmatprep.mubr.f32.mxu0 0.0
        %v2319 = vand.u32 %v2181, 4294901760
        %v2320 = vsub.f32 %v2181, %v2319
        %v2321 = vand.u32 %v2320, 4294901760
        %v2322 = vsub.f32 %v2320, %v2321
        %v2323 = vand.u32 %v2322, 4294901760
        %2324 = vmatmul.mubr.f32.gmra.mrb[0].mxu0 %v2323
        %v2325 = vpop.f32.mrb[0].mxu0
        %v2326 = vadd.f32 0.0, %v2325
        %v2327 = vpop.f32.mrb[0].mxu0
        %v2328 = vadd.f32 0.0, %v2327
        %2329 = vmatprep.mubr.f32.mxu0 0.0
        %v2330 = vand.u32 %v2184, 4294901760
        %v2331 = vsub.f32 %v2184, %v2330
        %v2332 = vand.u32 %v2331, 4294901760
        %v2333 = vsub.f32 %v2331, %v2332
        %v2334 = vand.u32 %v2333, 4294901760
        %2335 = vmatmul.mubr.f32.gmra.mrb[0].mxu0 %v2334
        %v2336 = vpop.f32.mrb[0].mxu0
        %v2337 = vadd.f32 0.0, %v2336
        %v2338 = vpop.f32.mrb[0].mxu0
        %v2339 = vadd.f32 0.0, %v2338
        %2340 = vmatprep.mubr.f32.mxu0 0.0
        %v2341 = vand.u32 %v2187, 4294901760
        %v2342 = vsub.f32 %v2187, %v2341
        %v2343 = vand.u32 %v2342, 4294901760
        %v2344 = vsub.f32 %v2342, %v2343
        %v2345 = vand.u32 %v2344, 4294901760
        %2346 = vmatmul.mubr.f32.gmra.mrb[0].mxu0 %v2345
        %v2347 = vpop.f32.mrb[0].mxu0
        %v2348 = vadd.f32 0.0, %v2347
        %v2349 = vpop.f32.mrb[0].mxu0
        %v2350 = vadd.f32 0.0, %v2349
        %2351 = vmatprep.mubr.f32.mxu0 0.0
        %v2352 = vand.u32 %v2190, 4294901760
        %v2353 = vsub.f32 %v2190, %v2352
        %v2354 = vand.u32 %v2353, 4294901760
        %v2355 = vsub.f32 %v2353, %v2354
        %v2356 = vand.u32 %v2355, 4294901760
        %2357 = vmatmul.mubr.f32.gmra.mrb[0].mxu0 %v2356
        %v2358 = vpop.f32.mrb[0].mxu0
        %v2359 = vadd.f32 0.0, %v2358
        %v2360 = vpop.f32.mrb[0].mxu0
        %v2361 = vadd.f32 0.0, %v2360
        %2362 = vmatprep.mubr.f32.mxu0 0.0
        %v2363 = vand.u32 %v2193, 4294901760
        %v2364 = vsub.f32 %v2193, %v2363
        %v2365 = vand.u32 %v2364, 4294901760
        %v2366 = vsub.f32 %v2364, %v2365
        %v2367 = vand.u32 %v2366, 4294901760
        %2368 = vmatmul.mubr.f32.gmra.mrb[0].mxu0 %v2367
        %v2369 = vpop.f32.mrb[0].mxu0
        %v2370 = vadd.f32 0.0, %v2369
        %v2371 = vpop.f32.mrb[0].mxu0
        %v2372 = vadd.f32 0.0, %v2371
        %2373 = vdwg.mxu0
        %v2374 = vand.u32 %v2135, 4294901760
        %v2375 = vsub.f32 %v2135, %v2374
        %v2376 = vand.u32 %v2375, 4294901760
        %v2377 = vsub.f32 %v2375, %v2376
        %v2378 = vand.u32 %v2377, 4294901760
        %2379 = vmatprep.subr.mxu0 %v2378
        %v2380 = vand.u32 %v2133, 4294901760
        %v2381 = vsub.f32 %v2133, %v2380
        %v2382 = vand.u32 %v2381, 4294901760
        %v2383 = vsub.f32 %v2381, %v2382
        %v2384 = vand.u32 %v2383, 4294901760
        %2385 = vmatpush1.msra.mxu0 %v2384
        %v2386 = vand.u32 %v2142, 4294901760
        %v2387 = vsub.f32 %v2142, %v2386
        %v2388 = vand.u32 %v2387, 4294901760
        %v2389 = vsub.f32 %v2387, %v2388
        %v2390 = vand.u32 %v2389, 4294901760
        %2391 = vmatprep.subr.mxu0 %v2390
        %v2392 = vand.u32 %v2140, 4294901760
        %v2393 = vsub.f32 %v2140, %v2392
        %v2394 = vand.u32 %v2393, 4294901760
        %v2395 = vsub.f32 %v2393, %v2394
        %v2396 = vand.u32 %v2395, 4294901760
        %2397 = vmatpush1.msra.mxu0 %v2396
        %v2398 = vand.u32 %v2149, 4294901760
        %v2399 = vsub.f32 %v2149, %v2398
        %v2400 = vand.u32 %v2399, 4294901760
        %v2401 = vsub.f32 %v2399, %v2400
        %v2402 = vand.u32 %v2401, 4294901760
        %2403 = vmatprep.subr.mxu0 %v2402
        %v2404 = vand.u32 %v2147, 4294901760
        %v2405 = vsub.f32 %v2147, %v2404
        %v2406 = vand.u32 %v2405, 4294901760
        %v2407 = vsub.f32 %v2405, %v2406
        %v2408 = vand.u32 %v2407, 4294901760
        %2409 = vmatpush1.msra.mxu0 %v2408
        %v2410 = vand.u32 %v2156, 4294901760
        %v2411 = vsub.f32 %v2156, %v2410
        %v2412 = vand.u32 %v2411, 4294901760
        %v2413 = vsub.f32 %v2411, %v2412
        %v2414 = vand.u32 %v2413, 4294901760
        %2415 = vmatprep.subr.mxu0 %v2414
        %v2416 = vand.u32 %v2154, 4294901760
        %v2417 = vsub.f32 %v2154, %v2416
        %v2418 = vand.u32 %v2417, 4294901760
        %v2419 = vsub.f32 %v2417, %v2418
        %v2420 = vand.u32 %v2419, 4294901760
        %2421 = vmatpush1.msra.mxu0 %v2420
        %v2422 = vand.u32 %v2198, 4294901760
        %v2423 = vsub.f32 %v2198, %v2422
        %v2424 = vand.u32 %v2423, 4294901760
        %v2425 = vsub.f32 %v2423, %v2424
        %v2426 = vand.u32 %v2425, 4294901760
        %2427 = vmatprep.subr.mxu0 %v2426
        %v2428 = vand.u32 %v2196, 4294901760
        %v2429 = vsub.f32 %v2196, %v2428
        %v2430 = vand.u32 %v2429, 4294901760
        %v2431 = vsub.f32 %v2429, %v2430
        %v2432 = vand.u32 %v2431, 4294901760
        %2433 = vmatpush1.msra.mxu0 %v2432
        %2434 = vmatprep.subr.mxu0 0.0
        %2435 = vmatpush1.msra.mxu0 0.0
        %2436 = vmatprep.subr.mxu0 0.0
        %2437 = vmatpush1.msra.mxu0 0.0
        %2438 = vmatprep.subr.mxu0 0.0
        %2439 = vmatpush1.msra.mxu0 0.0
        %2440 = vmatprep.subr.mxu0 0.0
        %2441 = vmatpush1.msra.mxu0 0.0
        %2442 = vmatprep.subr.mxu0 0.0
        %2443 = vmatpush1.msra.mxu0 0.0
        %2444 = vmatprep.subr.mxu0 0.0
        %2445 = vmatpush1.msra.mxu0 0.0
        %2446 = vmatprep.subr.mxu0 0.0
        %2447 = vmatpush1.msra.mxu0 0.0
        %2448 = vmatprep.subr.mxu0 0.0
        %2449 = vmatpush1.msra.mxu0 0.0
        %2450 = vmatprep.subr.mxu0 0.0
        %2451 = vmatpush1.msra.mxu0 0.0
        %2452 = vmatprep.subr.mxu0 0.0
        %2453 = vmatpush1.msra.mxu0 0.0
        %2454 = vmatprep.subr.mxu0 0.0
        %2455 = vmatpush1.msra.mxu0 0.0
        %2456 = vmatprep.subr.mxu0 0.0
        %2457 = vmatpush1.msra.mxu0 0.0
        %2458 = vmatprep.subr.mxu0 0.0
        %2459 = vmatpush1.msra.mxu0 0.0
        %2460 = vmatprep.subr.mxu0 0.0
        %2461 = vmatpush1.msra.mxu0 0.0
        %2462 = vmatprep.subr.mxu0 0.0
        %2463 = vmatpush1.msra.mxu0 0.0
        %2464 = vmatprep.subr.mxu0 0.0
        %2465 = vmatpush1.msra.mxu0 0.0
        %2466 = vmatprep.subr.mxu0 0.0
        %2467 = vmatpush1.msra.mxu0 0.0
        %2468 = vmatprep.subr.mxu0 0.0
        %2469 = vmatpush1.msra.mxu0 0.0
        %2470 = vmatprep.subr.mxu0 0.0
        %2471 = vmatpush1.msra.mxu0 0.0
        %2472 = vmatprep.subr.mxu0 0.0
        %2473 = vmatpush1.msra.mxu0 0.0
        %2474 = vmatprep.subr.mxu0 0.0
        %2475 = vmatpush1.msra.mxu0 0.0
        %2476 = vmatprep.subr.mxu0 0.0
        %2477 = vmatpush1.msra.mxu0 0.0
        %2478 = vmatprep.subr.mxu0 0.0
        %2479 = vmatpush1.msra.mxu0 0.0
        %2480 = vmatprep.subr.mxu0 0.0
        %2481 = vmatpush1.msra.mxu0 0.0
        %2482 = vmatprep.subr.mxu0 0.0
        %2483 = vmatpush1.msra.mxu0 0.0
        %2484 = vmatprep.subr.mxu0 0.0
        %2485 = vmatpush1.msra.mxu0 0.0
        %2486 = vmatprep.subr.mxu0 0.0
        %2487 = vmatpush1.msra.mxu0 0.0
        %2488 = vmatprep.mubr.f32.mxu0 0.0
        %v2489 = vand.u32 %v2169, 4294901760
        %2490 = vmatmul.mubr.f32.gmra.mrb[0].mxu0 %v2489
        %v2491 = vpop.f32.mrb[0].mxu0
        %v2492 = vadd.f32 %v2282, %v2491
        %v2493 = vpop.f32.mrb[0].mxu0
        %v2494 = vadd.f32 %v2284, %v2493
        %2495 = vmatprep.mubr.f32.mxu0 0.0
        %v2496 = vand.u32 %v2172, 4294901760
        %2497 = vmatmul.mubr.f32.gmra.mrb[0].mxu0 %v2496
        %v2498 = vpop.f32.mrb[0].mxu0
        %v2499 = vadd.f32 %v2293, %v2498
        %v2500 = vpop.f32.mrb[0].mxu0
        %v2501 = vadd.f32 %v2295, %v2500
        %2502 = vmatprep.mubr.f32.mxu0 0.0
        %v2503 = vand.u32 %v2175, 4294901760
        %2504 = vmatmul.mubr.f32.gmra.mrb[0].mxu0 %v2503
        %v2505 = vpop.f32.mrb[0].mxu0
        %v2506 = vadd.f32 %v2304, %v2505
        %v2507 = vpop.f32.mrb[0].mxu0
        %v2508 = vadd.f32 %v2306, %v2507
        %2509 = vmatprep.mubr.f32.mxu0 0.0
        %v2510 = vand.u32 %v2178, 4294901760
        %2511 = vmatmul.mubr.f32.gmra.mrb[0].mxu0 %v2510
        %v2512 = vpop.f32.mrb[0].mxu0
        %v2513 = vadd.f32 %v2315, %v2512
        %v2514 = vpop.f32.mrb[0].mxu0
        %v2515 = vadd.f32 %v2317, %v2514
        %2516 = vmatprep.mubr.f32.mxu0 0.0
        %v2517 = vand.u32 %v2181, 4294901760
        %2518 = vmatmul.mubr.f32.gmra.mrb[0].mxu0 %v2517
        %v2519 = vpop.f32.mrb[0].mxu0
        %v2520 = vadd.f32 %v2326, %v2519
        %v2521 = vpop.f32.mrb[0].mxu0
        %v2522 = vadd.f32 %v2328, %v2521
        %2523 = vmatprep.mubr.f32.mxu0 0.0
        %v2524 = vand.u32 %v2184, 4294901760
        %2525 = vmatmul.mubr.f32.gmra.mrb[0].mxu0 %v2524
        %v2526 = vpop.f32.mrb[0].mxu0
        %v2527 = vadd.f32 %v2337, %v2526
        %v2528 = vpop.f32.mrb[0].mxu0
        %v2529 = vadd.f32 %v2339, %v2528
        %2530 = vmatprep.mubr.f32.mxu0 0.0
        %v2531 = vand.u32 %v2187, 4294901760
        %2532 = vmatmul.mubr.f32.gmra.mrb[0].mxu0 %v2531
        %v2533 = vpop.f32.mrb[0].mxu0
        %v2534 = vadd.f32 %v2348, %v2533
        %v2535 = vpop.f32.mrb[0].mxu0
        %v2536 = vadd.f32 %v2350, %v2535
        %2537 = vmatprep.mubr.f32.mxu0 0.0
        %v2538 = vand.u32 %v2190, 4294901760
        %2539 = vmatmul.mubr.f32.gmra.mrb[0].mxu0 %v2538
        %v2540 = vpop.f32.mrb[0].mxu0
        %v2541 = vadd.f32 %v2359, %v2540
        %v2542 = vpop.f32.mrb[0].mxu0
        %v2543 = vadd.f32 %v2361, %v2542
        %2544 = vmatprep.mubr.f32.mxu0 0.0
        %v2545 = vand.u32 %v2193, 4294901760
        %2546 = vmatmul.mubr.f32.gmra.mrb[0].mxu0 %v2545
        %v2547 = vpop.f32.mrb[0].mxu0
        %v2548 = vadd.f32 %v2370, %v2547
        %v2549 = vpop.f32.mrb[0].mxu0
        %v2550 = vadd.f32 %v2372, %v2549
        %2551 = vdwg.mxu0
        %v2552 = vand.u32 %v2135, 4294901760
        %v2553 = vsub.f32 %v2135, %v2552
        %2554 = vmatprep.subr.mxu0 %v2553
        %v2555 = vand.u32 %v2133, 4294901760
        %v2556 = vsub.f32 %v2133, %v2555
        %2557 = vmatpush1.msra.mxu0 %v2556
        %v2558 = vand.u32 %v2142, 4294901760
        %v2559 = vsub.f32 %v2142, %v2558
        %2560 = vmatprep.subr.mxu0 %v2559
        %v2561 = vand.u32 %v2140, 4294901760
        %v2562 = vsub.f32 %v2140, %v2561
        %2563 = vmatpush1.msra.mxu0 %v2562
        %v2564 = vand.u32 %v2149, 4294901760
        %v2565 = vsub.f32 %v2149, %v2564
        %2566 = vmatprep.subr.mxu0 %v2565
        %v2567 = vand.u32 %v2147, 4294901760
        %v2568 = vsub.f32 %v2147, %v2567
        %2569 = vmatpush1.msra.mxu0 %v2568
        %v2570 = vand.u32 %v2156, 4294901760
        %v2571 = vsub.f32 %v2156, %v2570
        %2572 = vmatprep.subr.mxu0 %v2571
        %v2573 = vand.u32 %v2154, 4294901760
        %v2574 = vsub.f32 %v2154, %v2573
        %2575 = vmatpush1.msra.mxu0 %v2574
        %v2576 = vand.u32 %v2198, 4294901760
        %v2577 = vsub.f32 %v2198, %v2576
        %2578 = vmatprep.subr.mxu0 %v2577
        %v2579 = vand.u32 %v2196, 4294901760
        %v2580 = vsub.f32 %v2196, %v2579
        %2581 = vmatpush1.msra.mxu0 %v2580
        %2582 = vmatprep.subr.mxu0 0.0
        %2583 = vmatpush1.msra.mxu0 0.0
        %2584 = vmatprep.subr.mxu0 0.0
        %2585 = vmatpush1.msra.mxu0 0.0
        %2586 = vmatprep.subr.mxu0 0.0
        %2587 = vmatpush1.msra.mxu0 0.0
        %2588 = vmatprep.subr.mxu0 0.0
        %2589 = vmatpush1.msra.mxu0 0.0
        %2590 = vmatprep.subr.mxu0 0.0
        %2591 = vmatpush1.msra.mxu0 0.0
        %2592 = vmatprep.subr.mxu0 0.0
        %2593 = vmatpush1.msra.mxu0 0.0
        %2594 = vmatprep.subr.mxu0 0.0
        %2595 = vmatpush1.msra.mxu0 0.0
        %2596 = vmatprep.subr.mxu0 0.0
        %2597 = vmatpush1.msra.mxu0 0.0
        %2598 = vmatprep.subr.mxu0 0.0
        %2599 = vmatpush1.msra.mxu0 0.0
        %2600 = vmatprep.subr.mxu0 0.0
        %2601 = vmatpush1.msra.mxu0 0.0
        %2602 = vmatprep.subr.mxu0 0.0
        %2603 = vmatpush1.msra.mxu0 0.0
        %2604 = vmatprep.subr.mxu0 0.0
        %2605 = vmatpush1.msra.mxu0 0.0
        %2606 = vmatprep.subr.mxu0 0.0
        %2607 = vmatpush1.msra.mxu0 0.0
        %2608 = vmatprep.subr.mxu0 0.0
        %2609 = vmatpush1.msra.mxu0 0.0
        %2610 = vmatprep.subr.mxu0 0.0
        %2611 = vmatpush1.msra.mxu0 0.0
        %2612 = vmatprep.subr.mxu0 0.0
        %2613 = vmatpush1.msra.mxu0 0.0
        %2614 = vmatprep.subr.mxu0 0.0
        %2615 = vmatpush1.msra.mxu0 0.0
        %2616 = vmatprep.subr.mxu0 0.0
        %2617 = vmatpush1.msra.mxu0 0.0
        %2618 = vmatprep.subr.mxu0 0.0
        %2619 = vmatpush1.msra.mxu0 0.0
        %2620 = vmatprep.subr.mxu0 0.0
        %2621 = vmatpush1.msra.mxu0 0.0
        %2622 = vmatprep.subr.mxu0 0.0
        %2623 = vmatpush1.msra.mxu0 0.0
        %2624 = vmatprep.subr.mxu0 0.0
        %2625 = vmatpush1.msra.mxu0 0.0
        %2626 = vmatprep.subr.mxu0 0.0
        %2627 = vmatpush1.msra.mxu0 0.0
        %2628 = vmatprep.subr.mxu0 0.0
        %2629 = vmatpush1.msra.mxu0 0.0
        %2630 = vmatprep.subr.mxu0 0.0
        %2631 = vmatpush1.msra.mxu0 0.0
        %2632 = vmatprep.subr.mxu0 0.0
        %2633 = vmatpush1.msra.mxu0 0.0
        %2634 = vmatprep.subr.mxu0 0.0
        %2635 = vmatpush1.msra.mxu0 0.0
        %2636 = vmatprep.mubr.f32.mxu0 0.0
        %v2637 = vand.u32 %v2169, 4294901760
        %v2638 = vsub.f32 %v2169, %v2637
        %2639 = vmatmul.mubr.f32.gmra.mrb[0].mxu0 %v2638
        %v2640 = vpop.f32.mrb[0].mxu0
        %v2641 = vadd.f32 %v2492, %v2640
        %v2642 = vpop.f32.mrb[0].mxu0
        %v2643 = vadd.f32 %v2494, %v2642
        %2644 = vmatprep.mubr.f32.mxu0 0.0
        %v2645 = vand.u32 %v2172, 4294901760
        %v2646 = vsub.f32 %v2172, %v2645
        %2647 = vmatmul.mubr.f32.gmra.mrb[0].mxu0 %v2646
        %v2648 = vpop.f32.mrb[0].mxu0
        %v2649 = vadd.f32 %v2499, %v2648
        %v2650 = vpop.f32.mrb[0].mxu0
        %v2651 = vadd.f32 %v2501, %v2650
        %2652 = vmatprep.mubr.f32.mxu0 0.0
        %v2653 = vand.u32 %v2175, 4294901760
        %v2654 = vsub.f32 %v2175, %v2653
        %2655 = vmatmul.mubr.f32.gmra.mrb[0].mxu0 %v2654
        %v2656 = vpop.f32.mrb[0].mxu0
        %v2657 = vadd.f32 %v2506, %v2656
        %v2658 = vpop.f32.mrb[0].mxu0
        %v2659 = vadd.f32 %v2508, %v2658
        %2660 = vmatprep.mubr.f32.mxu0 0.0
        %v2661 = vand.u32 %v2178, 4294901760
        %v2662 = vsub.f32 %v2178, %v2661
        %2663 = vmatmul.mubr.f32.gmra.mrb[0].mxu0 %v2662
        %v2664 = vpop.f32.mrb[0].mxu0
        %v2665 = vadd.f32 %v2513, %v2664
        %v2666 = vpop.f32.mrb[0].mxu0
        %v2667 = vadd.f32 %v2515, %v2666
        %2668 = vmatprep.mubr.f32.mxu0 0.0
        %v2669 = vand.u32 %v2181, 4294901760
        %v2670 = vsub.f32 %v2181, %v2669
        %2671 = vmatmul.mubr.f32.gmra.mrb[0].mxu0 %v2670
        %v2672 = vpop.f32.mrb[0].mxu0
        %v2673 = vadd.f32 %v2520, %v2672
        %v2674 = vpop.f32.mrb[0].mxu0
        %v2675 = vadd.f32 %v2522, %v2674
        %2676 = vmatprep.mubr.f32.mxu0 0.0
        %v2677 = vand.u32 %v2184, 4294901760
        %v2678 = vsub.f32 %v2184, %v2677
        %2679 = vmatmul.mubr.f32.gmra.mrb[0].mxu0 %v2678
        %v2680 = vpop.f32.mrb[0].mxu0
        %v2681 = vadd.f32 %v2527, %v2680
        %v2682 = vpop.f32.mrb[0].mxu0
        %v2683 = vadd.f32 %v2529, %v2682
        %2684 = vmatprep.mubr.f32.mxu0 0.0
        %v2685 = vand.u32 %v2187, 4294901760
        %v2686 = vsub.f32 %v2187, %v2685
        %2687 = vmatmul.mubr.f32.gmra.mrb[0].mxu0 %v2686
        %v2688 = vpop.f32.mrb[0].mxu0
        %v2689 = vadd.f32 %v2534, %v2688
        %v2690 = vpop.f32.mrb[0].mxu0
        %v2691 = vadd.f32 %v2536, %v2690
        %2692 = vmatprep.mubr.f32.mxu0 0.0
        %v2693 = vand.u32 %v2190, 4294901760
        %v2694 = vsub.f32 %v2190, %v2693
        %2695 = vmatmul.mubr.f32.gmra.mrb[0].mxu0 %v2694
        %v2696 = vpop.f32.mrb[0].mxu0
        %v2697 = vadd.f32 %v2541, %v2696
        %v2698 = vpop.f32.mrb[0].mxu0
        %v2699 = vadd.f32 %v2543, %v2698
        %2700 = vmatprep.mubr.f32.mxu0 0.0
        %v2701 = vand.u32 %v2193, 4294901760
        %v2702 = vsub.f32 %v2193, %v2701
        %2703 = vmatmul.mubr.f32.gmra.mrb[0].mxu0 %v2702
        %v2704 = vpop.f32.mrb[0].mxu0
        %v2705 = vadd.f32 %v2548, %v2704
        %v2706 = vpop.f32.mrb[0].mxu0
        %v2707 = vadd.f32 %v2550, %v2706
        %2708 = vdwg.mxu0
        %v2709 = vand.u32 %v2135, 4294901760
        %2710 = vmatprep.subr.mxu0 %v2709
        %v2711 = vand.u32 %v2133, 4294901760
        %2712 = vmatpush1.msra.mxu0 %v2711
        %v2713 = vand.u32 %v2142, 4294901760
        %2714 = vmatprep.subr.mxu0 %v2713
        %v2715 = vand.u32 %v2140, 4294901760
        %2716 = vmatpush1.msra.mxu0 %v2715
        %v2717 = vand.u32 %v2149, 4294901760
        %2718 = vmatprep.subr.mxu0 %v2717
        %v2719 = vand.u32 %v2147, 4294901760
        %2720 = vmatpush1.msra.mxu0 %v2719
        %v2721 = vand.u32 %v2156, 4294901760
        %2722 = vmatprep.subr.mxu0 %v2721
        %v2723 = vand.u32 %v2154, 4294901760
        %2724 = vmatpush1.msra.mxu0 %v2723
        %v2725 = vand.u32 %v2198, 4294901760
        %2726 = vmatprep.subr.mxu0 %v2725
        %v2727 = vand.u32 %v2196, 4294901760
        %2728 = vmatpush1.msra.mxu0 %v2727
        %2729 = vmatprep.subr.mxu0 0.0
        %2730 = vmatpush1.msra.mxu0 0.0
        %2731 = vmatprep.subr.mxu0 0.0
        %2732 = vmatpush1.msra.mxu0 0.0
        %2733 = vmatprep.subr.mxu0 0.0
        %2734 = vmatpush1.msra.mxu0 0.0
        %2735 = vmatprep.subr.mxu0 0.0
        %2736 = vmatpush1.msra.mxu0 0.0
        %2737 = vmatprep.subr.mxu0 0.0
        %2738 = vmatpush1.msra.mxu0 0.0
        %2739 = vmatprep.subr.mxu0 0.0
        %2740 = vmatpush1.msra.mxu0 0.0
        %2741 = vmatprep.subr.mxu0 0.0
        %2742 = vmatpush1.msra.mxu0 0.0
        %2743 = vmatprep.subr.mxu0 0.0
        %2744 = vmatpush1.msra.mxu0 0.0
        %2745 = vmatprep.subr.mxu0 0.0
        %2746 = vmatpush1.msra.mxu0 0.0
        %2747 = vmatprep.subr.mxu0 0.0
        %2748 = vmatpush1.msra.mxu0 0.0
        %2749 = vmatprep.subr.mxu0 0.0
        %2750 = vmatpush1.msra.mxu0 0.0
        %2751 = vmatprep.subr.mxu0 0.0
        %2752 = vmatpush1.msra.mxu0 0.0
        %2753 = vmatprep.subr.mxu0 0.0
        %2754 = vmatpush1.msra.mxu0 0.0
        %2755 = vmatprep.subr.mxu0 0.0
        %2756 = vmatpush1.msra.mxu0 0.0
        %2757 = vmatprep.subr.mxu0 0.0
        %2758 = vmatpush1.msra.mxu0 0.0
        %2759 = vmatprep.subr.mxu0 0.0
        %2760 = vmatpush1.msra.mxu0 0.0
        %2761 = vmatprep.subr.mxu0 0.0
        %2762 = vmatpush1.msra.mxu0 0.0
        %2763 = vmatprep.subr.mxu0 0.0
        %2764 = vmatpush1.msra.mxu0 0.0
        %2765 = vmatprep.subr.mxu0 0.0
        %2766 = vmatpush1.msra.mxu0 0.0
        %2767 = vmatprep.subr.mxu0 0.0
        %2768 = vmatpush1.msra.mxu0 0.0
        %2769 = vmatprep.subr.mxu0 0.0
        %2770 = vmatpush1.msra.mxu0 0.0
        %2771 = vmatprep.subr.mxu0 0.0
        %2772 = vmatpush1.msra.mxu0 0.0
        %2773 = vmatprep.subr.mxu0 0.0
        %2774 = vmatpush1.msra.mxu0 0.0
        %2775 = vmatprep.subr.mxu0 0.0
        %2776 = vmatpush1.msra.mxu0 0.0
        %2777 = vmatprep.subr.mxu0 0.0
        %2778 = vmatpush1.msra.mxu0 0.0
        %2779 = vmatprep.subr.mxu0 0.0
        %2780 = vmatpush1.msra.mxu0 0.0
        %2781 = vmatprep.subr.mxu0 0.0
        %2782 = vmatpush1.msra.mxu0 0.0
        %2783 = vmatprep.mubr.f32.mxu0 0.0
        %v2784 = vand.u32 %v2169, 4294901760
        %v2785 = vsub.f32 %v2169, %v2784
        %v2786 = vand.u32 %v2785, 4294901760
        %2787 = vmatmul.mubr.f32.gmra.mrb[0].mxu0 %v2786
        %v2788 = vpop.f32.mrb[0].mxu0
        %v2789 = vadd.f32 %v2641, %v2788
        %v2790 = vpop.f32.mrb[0].mxu0
        %v2791 = vadd.f32 %v2643, %v2790
        %2792 = vmatprep.mubr.f32.mxu0 0.0
        %v2793 = vand.u32 %v2172, 4294901760
        %v2794 = vsub.f32 %v2172, %v2793
        %v2795 = vand.u32 %v2794, 4294901760
        %2796 = vmatmul.mubr.f32.gmra.mrb[0].mxu0 %v2795
        %v2797 = vpop.f32.mrb[0].mxu0
        %v2798 = vadd.f32 %v2649, %v2797
        %v2799 = vpop.f32.mrb[0].mxu0
        %v2800 = vadd.f32 %v2651, %v2799
        %2801 = vmatprep.mubr.f32.mxu0 0.0
        %v2802 = vand.u32 %v2175, 4294901760
        %v2803 = vsub.f32 %v2175, %v2802
        %v2804 = vand.u32 %v2803, 4294901760
        %2805 = vmatmul.mubr.f32.gmra.mrb[0].mxu0 %v2804
        %v2806 = vpop.f32.mrb[0].mxu0
        %v2807 = vadd.f32 %v2657, %v2806
        %v2808 = vpop.f32.mrb[0].mxu0
        %v2809 = vadd.f32 %v2659, %v2808
        %2810 = vmatprep.mubr.f32.mxu0 0.0
        %v2811 = vand.u32 %v2178, 4294901760
        %v2812 = vsub.f32 %v2178, %v2811
        %v2813 = vand.u32 %v2812, 4294901760
        %2814 = vmatmul.mubr.f32.gmra.mrb[0].mxu0 %v2813
        %v2815 = vpop.f32.mrb[0].mxu0
        %v2816 = vadd.f32 %v2665, %v2815
        %v2817 = vpop.f32.mrb[0].mxu0
        %v2818 = vadd.f32 %v2667, %v2817
        %2819 = vmatprep.mubr.f32.mxu0 0.0
        %v2820 = vand.u32 %v2181, 4294901760
        %v2821 = vsub.f32 %v2181, %v2820
        %v2822 = vand.u32 %v2821, 4294901760
        %2823 = vmatmul.mubr.f32.gmra.mrb[0].mxu0 %v2822
        %v2824 = vpop.f32.mrb[0].mxu0
        %v2825 = vadd.f32 %v2673, %v2824
        %v2826 = vpop.f32.mrb[0].mxu0
        %v2827 = vadd.f32 %v2675, %v2826
        %2828 = vmatprep.mubr.f32.mxu0 0.0
        %v2829 = vand.u32 %v2184, 4294901760
        %v2830 = vsub.f32 %v2184, %v2829
        %v2831 = vand.u32 %v2830, 4294901760
        %2832 = vmatmul.mubr.f32.gmra.mrb[0].mxu0 %v2831
        %v2833 = vpop.f32.mrb[0].mxu0
        %v2834 = vadd.f32 %v2681, %v2833
        %v2835 = vpop.f32.mrb[0].mxu0
        %v2836 = vadd.f32 %v2683, %v2835
        %2837 = vmatprep.mubr.f32.mxu0 0.0
        %v2838 = vand.u32 %v2187, 4294901760
        %v2839 = vsub.f32 %v2187, %v2838
        %v2840 = vand.u32 %v2839, 4294901760
        %2841 = vmatmul.mubr.f32.gmra.mrb[0].mxu0 %v2840
        %v2842 = vpop.f32.mrb[0].mxu0
        %v2843 = vadd.f32 %v2689, %v2842
        %v2844 = vpop.f32.mrb[0].mxu0
        %v2845 = vadd.f32 %v2691, %v2844
        %2846 = vmatprep.mubr.f32.mxu0 0.0
        %v2847 = vand.u32 %v2190, 4294901760
        %v2848 = vsub.f32 %v2190, %v2847
        %v2849 = vand.u32 %v2848, 4294901760
        %2850 = vmatmul.mubr.f32.gmra.mrb[0].mxu0 %v2849
        %v2851 = vpop.f32.mrb[0].mxu0
        %v2852 = vadd.f32 %v2697, %v2851
        %v2853 = vpop.f32.mrb[0].mxu0
        %v2854 = vadd.f32 %v2699, %v2853
        %2855 = vmatprep.mubr.f32.mxu0 0.0
        %v2856 = vand.u32 %v2193, 4294901760
        %v2857 = vsub.f32 %v2193, %v2856
        %v2858 = vand.u32 %v2857, 4294901760
        %2859 = vmatmul.mubr.f32.gmra.mrb[0].mxu0 %v2858
        %v2860 = vpop.f32.mrb[0].mxu0
        %v2861 = vadd.f32 %v2705, %v2860
        %v2862 = vpop.f32.mrb[0].mxu0
        %v2863 = vadd.f32 %v2707, %v2862
        %2864 = vdwg.mxu0
        %v2865 = vand.u32 %v2135, 4294901760
        %v2866 = vsub.f32 %v2135, %v2865
        %v2867 = vand.u32 %v2866, 4294901760
        %2868 = vmatprep.subr.mxu0 %v2867
        %v2869 = vand.u32 %v2133, 4294901760
        %v2870 = vsub.f32 %v2133, %v2869
        %v2871 = vand.u32 %v2870, 4294901760
        %2872 = vmatpush1.msra.mxu0 %v2871
        %v2873 = vand.u32 %v2142, 4294901760
        %v2874 = vsub.f32 %v2142, %v2873
        %v2875 = vand.u32 %v2874, 4294901760
        %2876 = vmatprep.subr.mxu0 %v2875
        %v2877 = vand.u32 %v2140, 4294901760
        %v2878 = vsub.f32 %v2140, %v2877
        %v2879 = vand.u32 %v2878, 4294901760
        %2880 = vmatpush1.msra.mxu0 %v2879
        %v2881 = vand.u32 %v2149, 4294901760
        %v2882 = vsub.f32 %v2149, %v2881
        %v2883 = vand.u32 %v2882, 4294901760
        %2884 = vmatprep.subr.mxu0 %v2883
        %v2885 = vand.u32 %v2147, 4294901760
        %v2886 = vsub.f32 %v2147, %v2885
        %v2887 = vand.u32 %v2886, 4294901760
        %2888 = vmatpush1.msra.mxu0 %v2887
        %v2889 = vand.u32 %v2156, 4294901760
        %v2890 = vsub.f32 %v2156, %v2889
        %v2891 = vand.u32 %v2890, 4294901760
        %2892 = vmatprep.subr.mxu0 %v2891
        %v2893 = vand.u32 %v2154, 4294901760
        %v2894 = vsub.f32 %v2154, %v2893
        %v2895 = vand.u32 %v2894, 4294901760
        %2896 = vmatpush1.msra.mxu0 %v2895
        %v2897 = vand.u32 %v2198, 4294901760
        %v2898 = vsub.f32 %v2198, %v2897
        %v2899 = vand.u32 %v2898, 4294901760
        %2900 = vmatprep.subr.mxu0 %v2899
        %v2901 = vand.u32 %v2196, 4294901760
        %v2902 = vsub.f32 %v2196, %v2901
        %v2903 = vand.u32 %v2902, 4294901760
        %2904 = vmatpush1.msra.mxu0 %v2903
        %2905 = vmatprep.subr.mxu0 0.0
        %2906 = vmatpush1.msra.mxu0 0.0
        %2907 = vmatprep.subr.mxu0 0.0
        %2908 = vmatpush1.msra.mxu0 0.0
        %2909 = vmatprep.subr.mxu0 0.0
        %2910 = vmatpush1.msra.mxu0 0.0
        %2911 = vmatprep.subr.mxu0 0.0
        %2912 = vmatpush1.msra.mxu0 0.0
        %2913 = vmatprep.subr.mxu0 0.0
        %2914 = vmatpush1.msra.mxu0 0.0
        %2915 = vmatprep.subr.mxu0 0.0
        %2916 = vmatpush1.msra.mxu0 0.0
        %2917 = vmatprep.subr.mxu0 0.0
        %2918 = vmatpush1.msra.mxu0 0.0
        %2919 = vmatprep.subr.mxu0 0.0
        %2920 = vmatpush1.msra.mxu0 0.0
        %2921 = vmatprep.subr.mxu0 0.0
        %2922 = vmatpush1.msra.mxu0 0.0
        %2923 = vmatprep.subr.mxu0 0.0
        %2924 = vmatpush1.msra.mxu0 0.0
        %2925 = vmatprep.subr.mxu0 0.0
        %2926 = vmatpush1.msra.mxu0 0.0
        %2927 = vmatprep.subr.mxu0 0.0
        %2928 = vmatpush1.msra.mxu0 0.0
        %2929 = vmatprep.subr.mxu0 0.0
        %2930 = vmatpush1.msra.mxu0 0.0
        %2931 = vmatprep.subr.mxu0 0.0
        %2932 = vmatpush1.msra.mxu0 0.0
        %2933 = vmatprep.subr.mxu0 0.0
        %2934 = vmatpush1.msra.mxu0 0.0
        %2935 = vmatprep.subr.mxu0 0.0
        %2936 = vmatpush1.msra.mxu0 0.0
        %2937 = vmatprep.subr.mxu0 0.0
        %2938 = vmatpush1.msra.mxu0 0.0
        %2939 = vmatprep.subr.mxu0 0.0
        %2940 = vmatpush1.msra.mxu0 0.0
        %2941 = vmatprep.subr.mxu0 0.0
        %2942 = vmatpush1.msra.mxu0 0.0
        %2943 = vmatprep.subr.mxu0 0.0
        %2944 = vmatpush1.msra.mxu0 0.0
        %2945 = vmatprep.subr.mxu0 0.0
        %2946 = vmatpush1.msra.mxu0 0.0
        %2947 = vmatprep.subr.mxu0 0.0
        %2948 = vmatpush1.msra.mxu0 0.0
        %2949 = vmatprep.subr.mxu0 0.0
        %2950 = vmatpush1.msra.mxu0 0.0
        %2951 = vmatprep.subr.mxu0 0.0
        %2952 = vmatpush1.msra.mxu0 0.0
        %2953 = vmatprep.subr.mxu0 0.0
        %2954 = vmatpush1.msra.mxu0 0.0
        %2955 = vmatprep.subr.mxu0 0.0
        %2956 = vmatpush1.msra.mxu0 0.0
        %2957 = vmatprep.subr.mxu0 0.0
        %2958 = vmatpush1.msra.mxu0 0.0
        %2959 = vmatprep.mubr.f32.mxu0 0.0
        %v2960 = vand.u32 %v2169, 4294901760
        %2961 = vmatmul.mubr.f32.gmra.mrb[0].mxu0 %v2960
        %v2962 = vpop.f32.mrb[0].mxu0
        %v2963 = vadd.f32 %v2789, %v2962
        %v2964 = vpop.f32.mrb[0].mxu0
        %v2965 = vadd.f32 %v2791, %v2964
        %2966 = vmatprep.mubr.f32.mxu0 0.0
        %v2967 = vand.u32 %v2172, 4294901760
        %2968 = vmatmul.mubr.f32.gmra.mrb[0].mxu0 %v2967
        %v2969 = vpop.f32.mrb[0].mxu0
        %v2970 = vadd.f32 %v2798, %v2969
        %v2971 = vpop.f32.mrb[0].mxu0
        %v2972 = vadd.f32 %v2800, %v2971
        %2973 = vmatprep.mubr.f32.mxu0 0.0
        %v2974 = vand.u32 %v2175, 4294901760
        %2975 = vmatmul.mubr.f32.gmra.mrb[0].mxu0 %v2974
        %v2976 = vpop.f32.mrb[0].mxu0
        %v2977 = vadd.f32 %v2807, %v2976
        %v2978 = vpop.f32.mrb[0].mxu0
        %v2979 = vadd.f32 %v2809, %v2978
        %2980 = vmatprep.mubr.f32.mxu0 0.0
        %v2981 = vand.u32 %v2178, 4294901760
        %2982 = vmatmul.mubr.f32.gmra.mrb[0].mxu0 %v2981
        %v2983 = vpop.f32.mrb[0].mxu0
        %v2984 = vadd.f32 %v2816, %v2983
        %v2985 = vpop.f32.mrb[0].mxu0
        %v2986 = vadd.f32 %v2818, %v2985
        %2987 = vmatprep.mubr.f32.mxu0 0.0
        %v2988 = vand.u32 %v2181, 4294901760
        %2989 = vmatmul.mubr.f32.gmra.mrb[0].mxu0 %v2988
        %v2990 = vpop.f32.mrb[0].mxu0
        %v2991 = vadd.f32 %v2825, %v2990
        %v2992 = vpop.f32.mrb[0].mxu0
        %v2993 = vadd.f32 %v2827, %v2992
        %2994 = vmatprep.mubr.f32.mxu0 0.0
        %v2995 = vand.u32 %v2184, 4294901760
        %2996 = vmatmul.mubr.f32.gmra.mrb[0].mxu0 %v2995
        %v2997 = vpop.f32.mrb[0].mxu0
        %v2998 = vadd.f32 %v2834, %v2997
        %v2999 = vpop.f32.mrb[0].mxu0
        %v3000 = vadd.f32 %v2836, %v2999
        %3001 = vmatprep.mubr.f32.mxu0 0.0
        %v3002 = vand.u32 %v2187, 4294901760
        %3003 = vmatmul.mubr.f32.gmra.mrb[0].mxu0 %v3002
        %v3004 = vpop.f32.mrb[0].mxu0
        %v3005 = vadd.f32 %v2843, %v3004
        %v3006 = vpop.f32.mrb[0].mxu0
        %v3007 = vadd.f32 %v2845, %v3006
        %3008 = vmatprep.mubr.f32.mxu0 0.0
        %v3009 = vand.u32 %v2190, 4294901760
        %3010 = vmatmul.mubr.f32.gmra.mrb[0].mxu0 %v3009
        %v3011 = vpop.f32.mrb[0].mxu0
        %v3012 = vadd.f32 %v2852, %v3011
        %v3013 = vpop.f32.mrb[0].mxu0
        %v3014 = vadd.f32 %v2854, %v3013
        %3015 = vmatprep.mubr.f32.mxu0 0.0
        %v3016 = vand.u32 %v2193, 4294901760
        %3017 = vmatmul.mubr.f32.gmra.mrb[0].mxu0 %v3016
        %v3018 = vpop.f32.mrb[0].mxu0
        %v3019 = vadd.f32 %v2861, %v3018
        %v3020 = vpop.f32.mrb[0].mxu0
        %v3021 = vadd.f32 %v2863, %v3020
        %3022 = vdwg.mxu0
        %v3023 = vand.u32 %v2135, 4294901760
        %3024 = vmatprep.subr.mxu0 %v3023
        %v3025 = vand.u32 %v2133, 4294901760
        %3026 = vmatpush1.msra.mxu0 %v3025
        %v3027 = vand.u32 %v2142, 4294901760
        %3028 = vmatprep.subr.mxu0 %v3027
        %v3029 = vand.u32 %v2140, 4294901760
        %3030 = vmatpush1.msra.mxu0 %v3029
        %v3031 = vand.u32 %v2149, 4294901760
        %3032 = vmatprep.subr.mxu0 %v3031
        %v3033 = vand.u32 %v2147, 4294901760
        %3034 = vmatpush1.msra.mxu0 %v3033
        %v3035 = vand.u32 %v2156, 4294901760
        %3036 = vmatprep.subr.mxu0 %v3035
        %v3037 = vand.u32 %v2154, 4294901760
        %3038 = vmatpush1.msra.mxu0 %v3037
        %v3039 = vand.u32 %v2198, 4294901760
        %3040 = vmatprep.subr.mxu0 %v3039
        %v3041 = vand.u32 %v2196, 4294901760
        %3042 = vmatpush1.msra.mxu0 %v3041
        %3043 = vmatprep.subr.mxu0 0.0
        %3044 = vmatpush1.msra.mxu0 0.0
        %3045 = vmatprep.subr.mxu0 0.0
        %3046 = vmatpush1.msra.mxu0 0.0
        %3047 = vmatprep.subr.mxu0 0.0
        %3048 = vmatpush1.msra.mxu0 0.0
        %3049 = vmatprep.subr.mxu0 0.0
        %3050 = vmatpush1.msra.mxu0 0.0
        %3051 = vmatprep.subr.mxu0 0.0
        %3052 = vmatpush1.msra.mxu0 0.0
        %3053 = vmatprep.subr.mxu0 0.0
        %3054 = vmatpush1.msra.mxu0 0.0
        %3055 = vmatprep.subr.mxu0 0.0
        %3056 = vmatpush1.msra.mxu0 0.0
        %3057 = vmatprep.subr.mxu0 0.0
        %3058 = vmatpush1.msra.mxu0 0.0
        %3059 = vmatprep.subr.mxu0 0.0
        %3060 = vmatpush1.msra.mxu0 0.0
        %3061 = vmatprep.subr.mxu0 0.0
        %3062 = vmatpush1.msra.mxu0 0.0
        %3063 = vmatprep.subr.mxu0 0.0
        %3064 = vmatpush1.msra.mxu0 0.0
        %3065 = vmatprep.subr.mxu0 0.0
        %3066 = vmatpush1.msra.mxu0 0.0
        %3067 = vmatprep.subr.mxu0 0.0
        %3068 = vmatpush1.msra.mxu0 0.0
        %3069 = vmatprep.subr.mxu0 0.0
        %3070 = vmatpush1.msra.mxu0 0.0
        %3071 = vmatprep.subr.mxu0 0.0
        %3072 = vmatpush1.msra.mxu0 0.0
        %3073 = vmatprep.subr.mxu0 0.0
        %3074 = vmatpush1.msra.mxu0 0.0
        %3075 = vmatprep.subr.mxu0 0.0
        %3076 = vmatpush1.msra.mxu0 0.0
        %3077 = vmatprep.subr.mxu0 0.0
        %3078 = vmatpush1.msra.mxu0 0.0
        %3079 = vmatprep.subr.mxu0 0.0
        %3080 = vmatpush1.msra.mxu0 0.0
        %3081 = vmatprep.subr.mxu0 0.0
        %3082 = vmatpush1.msra.mxu0 0.0
        %3083 = vmatprep.subr.mxu0 0.0
        %3084 = vmatpush1.msra.mxu0 0.0
        %3085 = vmatprep.subr.mxu0 0.0
        %3086 = vmatpush1.msra.mxu0 0.0
        %3087 = vmatprep.subr.mxu0 0.0
        %3088 = vmatpush1.msra.mxu0 0.0
        %3089 = vmatprep.subr.mxu0 0.0
        %3090 = vmatpush1.msra.mxu0 0.0
        %3091 = vmatprep.subr.mxu0 0.0
        %3092 = vmatpush1.msra.mxu0 0.0
        %3093 = vmatprep.subr.mxu0 0.0
        %3094 = vmatpush1.msra.mxu0 0.0
        %3095 = vmatprep.subr.mxu0 0.0
        %3096 = vmatpush1.msra.mxu0 0.0
        %3097 = vmatprep.mubr.f32.mxu0 0.0
        %v3098 = vand.u32 %v2169, 4294901760
        %3099 = vmatmul.mubr.f32.gmra.mrb[0].mxu0 %v3098
        %v3100 = vpop.f32.mrb[0].mxu0
        %v3101 = vadd.f32 %v2963, %v3100
        %v3102 = vpop.f32.mrb[0].mxu0
        %v3103 = vadd.f32 %v2965, %v3102
        %3104 = vmatprep.mubr.f32.mxu0 0.0
        %v3105 = vand.u32 %v2172, 4294901760
        %3106 = vmatmul.mubr.f32.gmra.mrb[0].mxu0 %v3105
        %v3107 = vpop.f32.mrb[0].mxu0
        %v3108 = vadd.f32 %v2970, %v3107
        %v3109 = vpop.f32.mrb[0].mxu0
        %v3110 = vadd.f32 %v2972, %v3109
        %3111 = vmatprep.mubr.f32.mxu0 0.0
        %v3112 = vand.u32 %v2175, 4294901760
        %3113 = vmatmul.mubr.f32.gmra.mrb[0].mxu0 %v3112
        %v3114 = vpop.f32.mrb[0].mxu0
        %v3115 = vadd.f32 %v2977, %v3114
        %v3116 = vpop.f32.mrb[0].mxu0
        %v3117 = vadd.f32 %v2979, %v3116
        %3118 = vmatprep.mubr.f32.mxu0 0.0
        %v3119 = vand.u32 %v2178, 4294901760
        %3120 = vmatmul.mubr.f32.gmra.mrb[0].mxu0 %v3119
        %v3121 = vpop.f32.mrb[0].mxu0
        %v3122 = vadd.f32 %v2984, %v3121
        %v3123 = vpop.f32.mrb[0].mxu0
        %v3124 = vadd.f32 %v2986, %v3123
        %3125 = vmatprep.mubr.f32.mxu0 0.0
        %v3126 = vand.u32 %v2181, 4294901760
        %3127 = vmatmul.mubr.f32.gmra.mrb[0].mxu0 %v3126
        %v3128 = vpop.f32.mrb[0].mxu0
        %v3129 = vadd.f32 %v2991, %v3128
        %v3130 = vpop.f32.mrb[0].mxu0
        %v3131 = vadd.f32 %v2993, %v3130
        %3132 = vmatprep.mubr.f32.mxu0 0.0
        %v3133 = vand.u32 %v2184, 4294901760
        %3134 = vmatmul.mubr.f32.gmra.mrb[0].mxu0 %v3133
        %v3135 = vpop.f32.mrb[0].mxu0
        %v3136 = vadd.f32 %v2998, %v3135
        %v3137 = vpop.f32.mrb[0].mxu0
        %v3138 = vadd.f32 %v3000, %v3137
        %3139 = vmatprep.mubr.f32.mxu0 0.0
        %v3140 = vand.u32 %v2187, 4294901760
        %3141 = vmatmul.mubr.f32.gmra.mrb[0].mxu0 %v3140
        %v3142 = vpop.f32.mrb[0].mxu0
        %v3143 = vadd.f32 %v3005, %v3142
        %v3144 = vpop.f32.mrb[0].mxu0
        %v3145 = vadd.f32 %v3007, %v3144
        %3146 = vmatprep.mubr.f32.mxu0 0.0
        %v3147 = vand.u32 %v2190, 4294901760
        %3148 = vmatmul.mubr.f32.gmra.mrb[0].mxu0 %v3147
        %v3149 = vpop.f32.mrb[0].mxu0
        %v3150 = vadd.f32 %v3012, %v3149
        %v3151 = vpop.f32.mrb[0].mxu0
        %v3152 = vadd.f32 %v3014, %v3151
        %3153 = vmatprep.mubr.f32.mxu0 0.0
        %v3154 = vand.u32 %v2193, 4294901760
        %3155 = vmatmul.mubr.f32.gmra.mrb[0].mxu0 %v3154
        %v3156 = vpop.f32.mrb[0].mxu0
        %v3157 = vadd.f32 %v3019, %v3156
        %v3158 = vpop.f32.mrb[0].mxu0
        %v3159 = vadd.f32 %v3021, %v3158
        %3160 = vdwg.mxu0
        %v3161 = vld [vmem:[%s6] sm:$0xff]
        %v3162 = vld [vmem:[%s6 + $0x8] sm:$0xff]
        %v3163 = vld [vmem:[%s6 + $0x10] sm:$0xff]
        %v3164 = vld [vmem:[%s6 + $0x18] sm:$0xff]
        %v3165 = vld [vmem:[%s6 + $0x20] sm:$0xff]
        %v3166 = vld [vmem:[%s6 + $0x28] sm:$0xff]
        %v3167 = vld [vmem:[%s6 + $0x30] sm:$0xff]
        %v3168 = vld [vmem:[%s6 + $0x38] sm:$0xff]
        %v3169 = vld [vmem:[%s6 + $0x40] sm:$0xff]
        %v3170 = vld [vmem:[%s6 + $0x48] sm:$0xff]
        %v3171 = vld [vmem:[%s6 + $0x50] sm:$0xff]
        %v3172 = vld [vmem:[%s6 + $0x58] sm:$0xff]
        %v3173 = vld [vmem:[%s6 + $0x60] sm:$0xff]
        %v3174 = vld [vmem:[%s6 + $0x68] sm:$0xff]
        %v3175 = vld [vmem:[%s6 + $0x70] sm:$0xff]
        %v3176 = vld [vmem:[%s6 + $0x78] sm:$0xff]
        %v3177 = vld [vmem:[%s6 + $0x80] sm:$0xff]
        %v3178 = vld [vmem:[%s6 + $0x88] sm:$0xff]
        %v3179 = vmul.f32 %v3101, %v3161
        %v3180 = vmul.f32 %v3103, %v3162
        %v3181 = vmul.f32 %v3108, %v3163
        %v3182 = vmul.f32 %v3110, %v3164
        %v3183 = vmul.f32 %v3115, %v3165
        %v3184 = vmul.f32 %v3117, %v3166
        %v3185 = vmul.f32 %v3122, %v3167
        %v3186 = vmul.f32 %v3124, %v3168
        %v3187 = vmul.f32 %v3129, %v3169
        %v3188 = vmul.f32 %v3131, %v3170
        %v3189 = vmul.f32 %v3136, %v3171
        %v3190 = vmul.f32 %v3138, %v3172
        %v3191 = vmul.f32 %v3143, %v3173
        %v3192 = vmul.f32 %v3145, %v3174
        %v3193 = vmul.f32 %v3150, %v3175
        %v3194 = vmul.f32 %v3152, %v3176
        %v3195 = vmul.f32 %v3157, %v3177
        %v3196 = vmul.f32 %v3159, %v3178
        %3197 = vrot.lane.b32.xlu0 %v3179, 17
        %v3198 = vpop.permute.xlu0 %3197
        %3199 = vrot.lane.b32.xlu0 %v3180, 17
        %v3200 = vpop.permute.xlu0 %3199
        %v3201 = vlaneseq
        %v3202 = vand.u32 %v3201, 127
        %vm3203 = vcmp.lt.s32.totalorder %v3202, 17
        %v3204 = vsel %vm3203, %v3198, %v3200
        %v3205 = vsel %vm3203, %v3200, %v3198
        %v3206 = vadd.f32 %v3187, %v3205
        %v3207 = vadd.f32 %v3188, %v3204
        %3208 = vrot.lane.b32.xlu0 %v3181, 16
        %v3209 = vpop.permute.xlu0 %3208
        %3210 = vrot.lane.b32.xlu0 %v3182, 16
        %v3211 = vpop.permute.xlu0 %3210
        %vm3212 = vcmp.lt.s32.totalorder %v3202, 16
        %v3213 = vsel %vm3212, %v3209, %v3211
        %v3214 = vsel %vm3212, %v3211, %v3209
        %v3215 = vadd.f32 %v3206, %v3214
        %v3216 = vadd.f32 %v3207, %v3213
        %3217 = vrot.lane.b32.xlu0 %v3183, 15
        %v3218 = vpop.permute.xlu0 %3217
        %3219 = vrot.lane.b32.xlu0 %v3184, 15
        %v3220 = vpop.permute.xlu0 %3219
        %vm3221 = vcmp.lt.s32.totalorder %v3202, 15
        %v3222 = vsel %vm3221, %v3218, %v3220
        %v3223 = vsel %vm3221, %v3220, %v3218
        %v3224 = vadd.f32 %v3215, %v3223
        %v3225 = vadd.f32 %v3216, %v3222
        %3226 = vrot.lane.b32.xlu0 %v3185, 1
        %v3227 = vpop.permute.xlu0 %3226
        %3228 = vrot.lane.b32.xlu0 %v3186, 1
        %v3229 = vpop.permute.xlu0 %3228
        %vm3230 = vcmp.lt.s32.totalorder %v3202, 1
        %v3231 = vsel %vm3230, %v3227, %v3229
        %v3232 = vsel %vm3230, %v3229, %v3227
        %v3233 = vadd.f32 %v3224, %v3232
        %v3234 = vadd.f32 %v3225, %v3231
        %3235 = vrot.lane.b32.xlu0 %v3189, 127
        %v3236 = vpop.permute.xlu0 %3235
        %3237 = vrot.lane.b32.xlu0 %v3190, 127
        %v3238 = vpop.permute.xlu0 %3237
        %vm3239 = vcmp.lt.s32.totalorder %v3202, 127
        %v3240 = vsel %vm3239, %v3236, %v3238
        %v3241 = vsel %vm3239, %v3238, %v3236
        %v3242 = vadd.f32 %v3233, %v3240
        %v3243 = vadd.f32 %v3234, %v3241
        %3244 = vrot.lane.b32.xlu0 %v3191, 113
        %v3245 = vpop.permute.xlu0 %3244
        %3246 = vrot.lane.b32.xlu0 %v3192, 113
        %v3247 = vpop.permute.xlu0 %3246
        %vm3248 = vcmp.lt.s32.totalorder %v3202, 113
        %v3249 = vsel %vm3248, %v3245, %v3247
        %v3250 = vsel %vm3248, %v3247, %v3245
        %v3251 = vadd.f32 %v3242, %v3249
        %v3252 = vadd.f32 %v3243, %v3250
        %3253 = vrot.lane.b32.xlu0 %v3193, 112
        %v3254 = vpop.permute.xlu0 %3253
        %3255 = vrot.lane.b32.xlu0 %v3194, 112
        %v3256 = vpop.permute.xlu0 %3255
        %vm3257 = vcmp.lt.s32.totalorder %v3202, 112
        %v3258 = vsel %vm3257, %v3254, %v3256
        %v3259 = vsel %vm3257, %v3256, %v3254
        %v3260 = vadd.f32 %v3251, %v3258
        %v3261 = vadd.f32 %v3252, %v3259
        %3262 = vrot.lane.b32.xlu0 %v3195, 111
        %v3263 = vpop.permute.xlu0 %3262
        %3264 = vrot.lane.b32.xlu0 %v3196, 111
        %v3265 = vpop.permute.xlu0 %3264
        %vm3266 = vcmp.lt.s32.totalorder %v3202, 111
        %v3267 = vsel %vm3266, %v3263, %v3265
        %v3268 = vsel %vm3266, %v3265, %v3263
        %v3269 = vadd.f32 %v3260, %v3267
        %v3270 = vadd.f32 %v3261, %v3268
        %v3271 = vld [vmem:[%s7] sm:$0xff]
        %3273 = vset.pattern.permute.xlu0 0
        %3274 = vperm.xlu0 %3273, %v3271
        %v3275 = vpop.permute.xlu0 %3274
        %v3277 = vmul.f32 %v3269, %v3275
        %v3278 = vmul.f32 %v3270, %v3275
        %v3279 = vld [vmem:[%s8] sm:$0xff]
        %3281 = vset.pattern.permute.xlu0 0
        %3282 = vperm.xlu0 %3281, %v3279
        %v3283 = vpop.permute.xlu0 %3282
        %v3285 = vadd.f32 %v3277, %v3283
        %v3286 = vadd.f32 %v3278, %v3283
        %3287 = vst [vmem:[%s326] sm:$0xff] %v3285
        %3288 = vst [vmem:[%s326 + $0x8] sm:$0xff] %v3286
        %s3289 = sand.u32 %s225, 1
        %s3290 = scalar_lea.sflag [#allocation3], %s3289
        %s3291 = sand.u32 %s225, 1
        %s3292 = smul.addr %s3291, 16
        %s3293 = scalar_lea.vmem [#allocation2], %s3292
        // Predicated region
        $region57: #{tpu_custom_call.1} parent=55 // pred_check
          %p3294 = pneg %p235
        $region58: #{tpu_custom_call.1} parent=55 // pred_check_branch
          %3296 = sbr.rel (%p3294) target = $region60
        $region59: #{tpu_custom_call.1} parent=55 // pred_region
          %s3297 = smul.u32 2, %s23
          %s3299 = ssub.s32 256, 256
          %3300 = vsyncadd %s3290, %s3299
          %s3301 = smul.addr %s3297, 128
          %s3302 = scalar_lea.hbm %s9, %s3301
          %s3304 = sshll.u32 %s3293, 4
          %s3305 = int_to_ptr.vmem [resolvable:$true] %s3304
          %3307 = dma.vmem_to_hbm [thread:$0]  %s3305, 256, %s3302, %s3290
        $region60: #{tpu_custom_call.1} parent=55 // pred_fallthru
          _
      $region56: #{tpu_custom_call.1} parent=5 // pred_fallthru
        _
      %p3308 = scmp.le.s32.totalorder 2, %s18
      // Predicated region
      $region61: #{tpu_custom_call.1} parent=5 // pred_check
        %p3309 = pneg %p3308
      $region62: #{tpu_custom_call.1} parent=5 // pred_check_branch
        %3311 = sbr.rel (%p3309) target = $region64
      $region63: #{tpu_custom_call.1} parent=5 // pred_region
        %s3312 = ssub.s32 %s18, 2
        // Predicated region
        $region65: #{tpu_custom_call.1} parent=63 // pred_check
          %p3313 = pneg %p241
        $region66: #{tpu_custom_call.1} parent=63 // pred_check_branch
          %3315 = sbr.rel (%p3313) target = $region68
        $region67: #{tpu_custom_call.1} parent=63 // pred_region
          %s3316 = sand.u32 %s226, 1
          %s3317 = scalar_lea.sflag [#allocation3], %s3316
          %s3318 = sand.u32 %s226, 1
          %s3319 = smul.addr %s3318, 16
          %s3320 = scalar_lea.vmem [#allocation2], %s3319
          %3321 = dma.done %s3317, 256
        $region68: #{tpu_custom_call.1} parent=63 // pred_fallthru
          _
      $region64: #{tpu_custom_call.1} parent=5 // pred_fallthru
        _
    $region6: #{tpu_custom_call.1} parent=1 // loop_footer
      %s22 = sadd.s32 1, %s18
    $region7: #{tpu_custom_call.1} parent=1 // loop_footer_branch
      %17 = sbr.rel target = $region3
    $region8: #{tpu_custom_call.1} parent=1 // loop_exit
      _
    %3322 = vsyncpa [#allocation3], 1
    %s3323 = scalar_lea.sflag [#allocation3], 1
    %3324 = vsyncpa %s3323, 1

</llo_original>
